<compile_context>
chip_gen: v7x
topology: tpu7x:2x2x1
jax: 0.10.0
libtpu: 0.0.40
codegen_flags: <defaults>
</compile_context>

<pallas_src>
import jax
import jax.numpy as jnp
from jax import lax
from jax.experimental import pallas as pl
from jax.experimental.pallas import tpu as pltpu


def _round_up(v, m):
    return ((v + m - 1) // m) * m


def make_maml_kernel(steps: int, lr: float, num_classes: int):
    lr = float(lr)

    def kernel(y_ref,                      # [Tb, B, 1] int32 labels (VMEM)
               x_ref, w1_ref, b1_ref, w2_ref, b2_ref,
               w1_o, b1_o, w2_o, b2_o, logits_o):
        Tb, B, Cp = logits_o.shape
        inv_b = jnp.float32(1.0 / B)

        # hoisted constants (shared across tasks and steps)
        col = lax.broadcasted_iota(jnp.int32, (B, Cp), 1)
        class_mask = col < num_classes          # padded class columns
        neg_big = jnp.float32(-1e30)            # exp underflows to 0 in f32

        for tt in range(Tb):                    # static per-task loop (amortizes grid overhead)
            x = x_ref[tt]                       # [B, Dp]

            # one-hot from a [B,1] label tile: a single vector compare
            yoh = (col == y_ref[tt]).astype(jnp.float32)       # [B, Cp]

            # working parameters live in the per-task output VMEM tiles:
            # no register-resident 128x128 matrices carried across steps.
            w1_o[tt] = w1_ref[...]              # [Dp, Hp]
            b1_o[tt] = b1_ref[...]              # [1, Hp]
            w2_o[tt] = w2_ref[...]              # [Hp, Cp]
            b2_o[tt] = b2_ref[...]              # [1, Cp]

            # ---- fully unrolled inner SGD loop (steps is small & static) ----
            for _ in range(steps):
                w1 = w1_o[tt]
                w2 = w2_o[tt]

                # forward
                z1 = jnp.dot(x, w1, preferred_element_type=jnp.float32) + b1_o[tt]   # [B, Hp]
                a1 = jnp.maximum(z1, 0.0)
                logits = jnp.dot(a1, w2, preferred_element_type=jnp.float32) + b2_o[tt]  # [B, Cp]
                logits = jnp.where(class_mask, logits, neg_big)

                # softmax cross-entropy backward (mean reduction); exact divide on a
                # [B,1] tile is essentially free (review correctness item)
                m = jnp.max(logits, axis=-1, keepdims=True)
                e = jnp.exp(logits - m)
                p = e / jnp.sum(e, axis=-1, keepdims=True)
                dlogits = (p - yoh) * inv_b                                           # [B, Cp]

                # grads via dot_general contraction dims (no XLU transposes);
                # da1 uses the pre-update w2, then w2/dw2 go dead.
                da1 = lax.dot_general(dlogits, w2, (((1,), (1,)), ((), ())),
                                      preferred_element_type=jnp.float32)             # [B, Hp]
                dw2 = lax.dot_general(a1, dlogits, (((0,), (0,)), ((), ())),
                                      preferred_element_type=jnp.float32)             # [Hp, Cp]
                w2_o[tt] = w2 - lr * dw2
                b2_o[tt] = b2_o[tt] - lr * jnp.sum(dlogits, axis=0, keepdims=True)

                dz1 = jnp.where(z1 > 0.0, da1, 0.0)
                dw1 = lax.dot_general(x, dz1, (((0,), (0,)), ((), ())),
                                      preferred_element_type=jnp.float32)             # [Dp, Hp]
                w1_o[tt] = w1 - lr * dw1
                b1_o[tt] = b1_o[tt] - lr * jnp.sum(dz1, axis=0, keepdims=True)

            # adapted ("functional") model applied to the support batch
            z1 = jnp.dot(x, w1_o[tt], preferred_element_type=jnp.float32) + b1_o[tt]
            a1 = jnp.maximum(z1, 0.0)
            logits_o[tt] = jnp.dot(a1, w2_o[tt],
                                   preferred_element_type=jnp.float32) + b2_o[tt]

        # TODO(synk): low priority — pack b1/b2 into sublane rows of the weight
        # outputs to make the 1-sublane bias writebacks unmasked.

    return kernel


def maml_adapt(x, y, params, *, steps, lr, num_classes, tasks_per_block=2):
    """MAML inner loop for a meta-batch of tasks in one Pallas call.

    x: [T, B, D] f32 support inputs, y: [T, B] int labels,
    params: shared initial (W1[D,H], b1[1,H], W2[H,C], b2[1,C]).
    Returns per-task adapted params and adapted logits on x.
    """
    w1, b1, w2, b2 = params
    T, B, D = x.shape
    H = w1.shape[1]
    C = num_classes

    # D only appears as a full-extent lane dim of x and a sublane dim of
    # w1/dw1 -> multiple of 8 is enough.  H/C are lane dims -> multiple of 128.
    Dp = _round_up(D, 8)
    Hp = _round_up(H, 128)
    Cp = _round_up(C, 128)

    Tb = max(1, min(int(tasks_per_block), T))
    Tp = _round_up(T, Tb)

    # lane-dense padding (zero-padded weights/inputs -> zero gradients there;
    # padded class columns are masked inside the kernel before the softmax)
    xp = jnp.zeros((Tp, B, Dp), jnp.float32).at[:T, :, :D].set(x)
    yv = jnp.zeros((Tp, B, 1), jnp.int32).at[:T, :, 0].set(y.astype(jnp.int32))
    w1p = jnp.zeros((Dp, Hp), jnp.float32).at[:D, :H].set(w1)
    b1p = jnp.zeros((1, Hp), jnp.float32).at[:, :H].set(b1)
    w2p = jnp.zeros((Hp, Cp), jnp.float32).at[:H, :C].set(w2)
    b2p = jnp.zeros((1, Cp), jnp.float32).at[:, :C].set(b2)

    kernel = make_maml_kernel(steps, lr, C)

    grid = (Tp // Tb,)
    in_specs = [
        pl.BlockSpec((Tb, B, 1), lambda g: (g, 0, 0)),     # labels (per task group)
        pl.BlockSpec((Tb, B, Dp), lambda g: (g, 0, 0)),    # x (per task group)
        pl.BlockSpec((Dp, Hp), lambda g: (0, 0)),          # shared initial params
        pl.BlockSpec((1, Hp), lambda g: (0, 0)),
        pl.BlockSpec((Hp, Cp), lambda g: (0, 0)),
        pl.BlockSpec((1, Cp), lambda g: (0, 0)),
    ]
    out_specs = [
        pl.BlockSpec((Tb, Dp, Hp), lambda g: (g, 0, 0)),   # adapted params per task
        pl.BlockSpec((Tb, 1, Hp), lambda g: (g, 0, 0)),
        pl.BlockSpec((Tb, Hp, Cp), lambda g: (g, 0, 0)),
        pl.BlockSpec((Tb, 1, Cp), lambda g: (g, 0, 0)),
        pl.BlockSpec((Tb, B, Cp), lambda g: (g, 0, 0)),    # adapted logits
    ]
    out_shapes = (
        jax.ShapeDtypeStruct((Tp, Dp, Hp), jnp.float32),
        jax.ShapeDtypeStruct((Tp, 1, Hp), jnp.float32),
        jax.ShapeDtypeStruct((Tp, Hp, Cp), jnp.float32),
        jax.ShapeDtypeStruct((Tp, 1, Cp), jnp.float32),
        jax.ShapeDtypeStruct((Tp, B, Cp), jnp.float32),
    )

    w1o, b1o, w2o, b2o, lo = pl.pallas_call(
        kernel,
        out_shape=out_shapes,
        grid=grid,
        in_specs=in_specs,
        out_specs=out_specs,
        compiler_params=pltpu.CompilerParams(
            dimension_semantics=("parallel",)),     # task groups split across TCs on v7x
    )(yv, xp, w1p, b1p, w2p, b2p)

    # strip task / lane padding
    return (w1o[:T, :D, :H], b1o[:T, :, :H],
            w2o[:T, :H, :C], b2o[:T, :, :C], lo[:T, :, :C])


def maml_adapt_ref(x, y, params, *, steps, lr, num_classes):
    """Pure-JAX reference for the same inner loop, vmapped over tasks."""
    hp = lax.Precision.HIGHEST   # match the kernel's full-f32 MXU matmuls

    def single(xt, yt):
        w1, b1, w2, b2 = params
        yoh = jax.nn.one_hot(yt, num_classes, dtype=jnp.float32)
        B = xt.shape[0]
        for _ in range(steps):
            z1 = jnp.dot(xt, w1, precision=hp) + b1
            a1 = jnp.maximum(z1, 0.0)
            logits = jnp.dot(a1, w2, precision=hp) + b2
            p = jax.nn.softmax(logits, axis=-1)
            dlogits = (p - yoh) / B
            dw2 = jnp.dot(a1.T, dlogits, precision=hp)
            db2 = jnp.sum(dlogits, axis=0, keepdims=True)
            da1 = jnp.dot(dlogits, w2.T, precision=hp)
            dz1 = jnp.where(z1 > 0, da1, 0.0)
            dw1 = jnp.dot(xt.T, dz1, precision=hp)
            db1 = jnp.sum(dz1, axis=0, keepdims=True)
            w1, b1, w2, b2 = w1 - lr * dw1, b1 - lr * db1, w2 - lr * dw2, b2 - lr * db2
        z1 = jnp.dot(xt, w1, precision=hp) + b1
        a1 = jnp.maximum(z1, 0.0)
        return (w1, b1, w2, b2, jnp.dot(a1, w2, precision=hp) + b2)

    return jax.vmap(single)(x, y)


if __name__ == "__main__":
    # small shapes consistent with a few-shot MAML classification meta-batch
    T, B, D, H, C = 4, 8, 32, 32, 8
    steps_train, lr = 3, 0.1   # MAML.forward() always builds GDLearner(steps_train, lr)

    key = jax.random.PRNGKey(0)
    kx, ky, k1, k2 = jax.random.split(key, 4)
    x = jax.random.normal(kx, (T, B, D), dtype=jnp.float32)
    y = jax.random.randint(ky, (T, B), 0, C, dtype=jnp.int32)

    w1 = jax.random.normal(k1, (D, H), dtype=jnp.float32) * 0.1
    b1 = jnp.zeros((1, H), dtype=jnp.float32)
    w2 = jax.random.normal(k2, (H, C), dtype=jnp.float32) * 0.1
    b2 = jnp.zeros((1, C), dtype=jnp.float32)
    params = (w1, b1, w2, b2)

    out = maml_adapt(x, y, params, steps=steps_train, lr=lr, num_classes=C)
    out = jax.block_until_ready(out)

    ref = maml_adapt_ref(x, y, params, steps=steps_train, lr=lr, num_classes=C)
    # exact softmax divide in the kernel -> tolerance tightened vs. the
    # previous approx-reciprocal version (1e-3 -> 1e-4)
    for o, r in zip(out, ref):
        assert o.shape == r.shape, (o.shape, r.shape)
        assert jnp.allclose(o, r, atol=1e-4, rtol=1e-4), \
            f"mismatch vs reference: max|diff|={float(jnp.max(jnp.abs(o - r)))}"

    print("KERNEL_OK")
</pallas_src>

<mosaic_0001>
module attributes {stable_mosaic.version = 11 : i64} {
  func.func @kernel(%arg0: i32, %arg1: memref<2x8x1xi32, #tpu.memory_space<vmem>>, %arg2: memref<2x8x32xf32, #tpu.memory_space<vmem>>, %arg3: memref<32x128xf32, #tpu.memory_space<vmem>>, %arg4: memref<1x128xf32, #tpu.memory_space<vmem>>, %arg5: memref<128x128xf32, #tpu.memory_space<vmem>>, %arg6: memref<1x128xf32, #tpu.memory_space<vmem>>, %arg7: memref<2x32x128xf32, #tpu.memory_space<vmem>>, %arg8: memref<2x1x128xf32, #tpu.memory_space<vmem>>, %arg9: memref<2x128x128xf32, #tpu.memory_space<vmem>>, %arg10: memref<2x1x128xf32, #tpu.memory_space<vmem>>, %arg11: memref<2x8x128xf32, #tpu.memory_space<vmem>>) attributes {dimension_semantics = [#tpu.dimension_semantics<parallel>], iteration_bounds = array<i64: 2>, scalar_prefetch = 0 : i64, scratch_operands = 0 : i64, tpu.core_type = #tpu.core_type<tc>, window_params = [{transform_indices = @transform_0, window_bounds = array<i64: 2, 8, 1>}, {transform_indices = @transform_1, window_bounds = array<i64: 2, 8, 32>}, {pipeline_mode = #tpu.pipeline_mode<synchronous>, transform_indices = @transform_2, window_bounds = array<i64: 32, 128>}, {pipeline_mode = #tpu.pipeline_mode<synchronous>, transform_indices = @transform_3, window_bounds = array<i64: 1, 128>}, {pipeline_mode = #tpu.pipeline_mode<synchronous>, transform_indices = @transform_4, window_bounds = array<i64: 128, 128>}, {pipeline_mode = #tpu.pipeline_mode<synchronous>, transform_indices = @transform_5, window_bounds = array<i64: 1, 128>}, {transform_indices = @transform_6, window_bounds = array<i64: 2, 32, 128>}, {transform_indices = @transform_7, window_bounds = array<i64: 2, 1, 128>}, {transform_indices = @transform_8, window_bounds = array<i64: 2, 128, 128>}, {transform_indices = @transform_9, window_bounds = array<i64: 2, 1, 128>}, {transform_indices = @transform_10, window_bounds = array<i64: 2, 8, 128>}]} {
    %0 = tpu.iota {dimensions = array<i32: 1>} : vector<8x128xi32>
    %c8_i32 = arith.constant 8 : i32
    %1 = vector.broadcast %c8_i32 : i32 to vector<8x128xi32>
    %2 = arith.cmpi slt, %0, %1 : vector<8x128xi32>
    %c0 = arith.constant 0 : index
    %c0_0 = arith.constant 0 : index
    %c0_1 = arith.constant 0 : index
    %3 = vector.load %arg2[%c0, %c0_0, %c0_1] : memref<2x8x32xf32, #tpu.memory_space<vmem>>, vector<1x8x32xf32>
    %4 = vector.shape_cast %3 : vector<1x8x32xf32> to vector<8x32xf32>
    %c0_2 = arith.constant 0 : index
    %c0_3 = arith.constant 0 : index
    %c0_4 = arith.constant 0 : index
    %5 = vector.load %arg1[%c0_2, %c0_3, %c0_4] : memref<2x8x1xi32, #tpu.memory_space<vmem>>, vector<1x8x1xi32>
    %6 = vector.shape_cast %5 : vector<1x8x1xi32> to vector<8x1xi32>
    %7 = vector.broadcast %6 : vector<8x1xi32> to vector<8x128xi32>
    %8 = arith.cmpi eq, %0, %7 : vector<8x128xi32>
    %9 = arith.extui %8 : vector<8x128xi1> to vector<8x128xi32>
    %10 = arith.sitofp %9 : vector<8x128xi32> to vector<8x128xf32>
    %c0_5 = arith.constant 0 : index
    %c0_6 = arith.constant 0 : index
    %11 = vector.load %arg3[%c0_5, %c0_6] : memref<32x128xf32, #tpu.memory_space<vmem>>, vector<32x128xf32>
    %c0_7 = arith.constant 0 : index
    %c0_8 = arith.constant 0 : index
    %c0_9 = arith.constant 0 : index
    %12 = vector.load %arg7[%c0_7, %c0_8, %c0_9] : memref<2x32x128xf32, #tpu.memory_space<vmem>>, vector<1x32x128xf32>
    %13 = vector.shape_cast %12 : vector<1x32x128xf32> to vector<32x128xf32>
    %14 = vector.shape_cast %11 : vector<32x128xf32> to vector<1x32x128xf32>
    tpu.vector_store %arg7[%c0_7, %c0_8, %c0_9], %14 {strides = array<i32>} : memref<2x32x128xf32, #tpu.memory_space<vmem>>, vector<1x32x128xf32>,
    %c0_10 = arith.constant 0 : index
    %c0_11 = arith.constant 0 : index
    %15 = vector.load %arg4[%c0_10, %c0_11] : memref<1x128xf32, #tpu.memory_space<vmem>>, vector<1x128xf32>
    %c0_12 = arith.constant 0 : index
    %c0_13 = arith.constant 0 : index
    %c0_14 = arith.constant 0 : index
    %16 = vector.load %arg8[%c0_12, %c0_13, %c0_14] : memref<2x1x128xf32, #tpu.memory_space<vmem>>, vector<1x1x128xf32>
    %17 = vector.shape_cast %16 : vector<1x1x128xf32> to vector<1x128xf32>
    %18 = vector.shape_cast %15 : vector<1x128xf32> to vector<1x1x128xf32>
    tpu.vector_store %arg8[%c0_12, %c0_13, %c0_14], %18 {strides = array<i32>} : memref<2x1x128xf32, #tpu.memory_space<vmem>>, vector<1x1x128xf32>,
    %c0_15 = arith.constant 0 : index
    %c0_16 = arith.constant 0 : index
    %19 = vector.load %arg5[%c0_15, %c0_16] : memref<128x128xf32, #tpu.memory_space<vmem>>, vector<128x128xf32>
    %c0_17 = arith.constant 0 : index
    %c0_18 = arith.constant 0 : index
    %c0_19 = arith.constant 0 : index
    %20 = vector.load %arg9[%c0_17, %c0_18, %c0_19] : memref<2x128x128xf32, #tpu.memory_space<vmem>>, vector<1x128x128xf32>
    %21 = vector.shape_cast %20 : vector<1x128x128xf32> to vector<128x128xf32>
    %22 = vector.shape_cast %19 : vector<128x128xf32> to vector<1x128x128xf32>
    tpu.vector_store %arg9[%c0_17, %c0_18, %c0_19], %22 {strides = array<i32>} : memref<2x128x128xf32, #tpu.memory_space<vmem>>, vector<1x128x128xf32>,
    %c0_20 = arith.constant 0 : index
    %c0_21 = arith.constant 0 : index
    %23 = vector.load %arg6[%c0_20, %c0_21] : memref<1x128xf32, #tpu.memory_space<vmem>>, vector<1x128xf32>
    %c0_22 = arith.constant 0 : index
    %c0_23 = arith.constant 0 : index
    %c0_24 = arith.constant 0 : index
    %24 = vector.load %arg10[%c0_22, %c0_23, %c0_24] : memref<2x1x128xf32, #tpu.memory_space<vmem>>, vector<1x1x128xf32>
    %25 = vector.shape_cast %24 : vector<1x1x128xf32> to vector<1x128xf32>
    %26 = vector.shape_cast %23 : vector<1x128xf32> to vector<1x1x128xf32>
    tpu.vector_store %arg10[%c0_22, %c0_23, %c0_24], %26 {strides = array<i32>} : memref<2x1x128xf32, #tpu.memory_space<vmem>>, vector<1x1x128xf32>,
    %c0_25 = arith.constant 0 : index
    %c0_26 = arith.constant 0 : index
    %c0_27 = arith.constant 0 : index
    %27 = vector.load %arg7[%c0_25, %c0_26, %c0_27] : memref<2x32x128xf32, #tpu.memory_space<vmem>>, vector<1x32x128xf32>
    %28 = vector.shape_cast %27 : vector<1x32x128xf32> to vector<32x128xf32>
    %c0_28 = arith.constant 0 : index
    %c0_29 = arith.constant 0 : index
    %c0_30 = arith.constant 0 : index
    %29 = vector.load %arg9[%c0_28, %c0_29, %c0_30] : memref<2x128x128xf32, #tpu.memory_space<vmem>>, vector<1x128x128xf32>
    %30 = vector.shape_cast %29 : vector<1x128x128xf32> to vector<128x128xf32>
    %cst = arith.constant dense<0.000000e+00> : vector<8x128xf32>
    %31 = tpu.matmul %4, %28, %cst {dimension_numbers = #tpu.dot_dimension_numbers<[1], [0], [0], [1], [0, 0, 1, 1], [], []>} : vector<8x32xf32>, vector<32x128xf32>, vector<8x128xf32> -> vector<8x128xf32>
    %c0_31 = arith.constant 0 : index
    %c0_32 = arith.constant 0 : index
    %c0_33 = arith.constant 0 : index
    %32 = vector.load %arg8[%c0_31, %c0_32, %c0_33] : memref<2x1x128xf32, #tpu.memory_space<vmem>>, vector<1x1x128xf32>
    %33 = vector.shape_cast %32 : vector<1x1x128xf32> to vector<1x128xf32>
    %34 = vector.broadcast %33 : vector<1x128xf32> to vector<8x128xf32>
    %35 = arith.addf %31, %34 : vector<8x128xf32>
    %cst_34 = arith.constant 0.000000e+00 : f32
    %36 = vector.broadcast %cst_34 : f32 to vector<8x128xf32>
    %37 = arith.maximumf %35, %36 : vector<8x128xf32>
    %cst_35 = arith.constant dense<0.000000e+00> : vector<8x128xf32>
    %38 = tpu.matmul %37, %30, %cst_35 {dimension_numbers = #tpu.dot_dimension_numbers<[1], [0], [0], [1], [0, 0, 1, 1], [], []>} : vector<8x128xf32>, vector<128x128xf32>, vector<8x128xf32> -> vector<8x128xf32>
    %c0_36 = arith.constant 0 : index
    %c0_37 = arith.constant 0 : index
    %c0_38 = arith.constant 0 : index
    %39 = vector.load %arg10[%c0_36, %c0_37, %c0_38] : memref<2x1x128xf32, #tpu.memory_space<vmem>>, vector<1x1x128xf32>
    %40 = vector.shape_cast %39 : vector<1x1x128xf32> to vector<1x128xf32>
    %41 = vector.broadcast %40 : vector<1x128xf32> to vector<8x128xf32>
    %42 = arith.addf %38, %41 : vector<8x128xf32>
    %cst_39 = arith.constant -1.000000e+30 : f32
    %43 = vector.broadcast %cst_39 : f32 to vector<8x128xf32>
    %44 = arith.select %2, %42, %43 : vector<8x128xi1>, vector<8x128xf32>
    %cst_40 = arith.constant dense<0xFF800000> : vector<8xf32>
    %45 = vector.multi_reduction <maximumf>, %44, %cst_40 [1] : vector<8x128xf32> to vector<8xf32>
    %46 = vector.shape_cast %45 : vector<8xf32> to vector<8x1xf32>
    %47 = vector.broadcast %46 : vector<8x1xf32> to vector<8x128xf32>
    %48 = arith.subf %44, %47 : vector<8x128xf32>
    %49 = math.exp %48 : vector<8x128xf32>
    %cst_41 = arith.constant dense<0.000000e+00> : vector<8xf32>
    %50 = vector.multi_reduction <add>, %49, %cst_41 [1] : vector<8x128xf32> to vector<8xf32>
    %51 = vector.shape_cast %50 : vector<8xf32> to vector<8x1xf32>
    %52 = vector.broadcast %51 : vector<8x1xf32> to vector<8x128xf32>
    %53 = arith.divf %49, %52 : vector<8x128xf32>
    %54 = arith.subf %53, %10 : vector<8x128xf32>
    %cst_42 = arith.constant 1.250000e-01 : f32
    %55 = vector.broadcast %cst_42 : f32 to vector<8x128xf32>
    %56 = arith.mulf %54, %55 : vector<8x128xf32>
    %cst_43 = arith.constant dense<0.000000e+00> : vector<8x128xf32>
    %57 = tpu.matmul %56, %30, %cst_43 {dimension_numbers = #tpu.dot_dimension_numbers<[1], [1], [0], [0], [0, 0, 1, 0], [], []>} : vector<8x128xf32>, vector<128x128xf32>, vector<8x128xf32> -> vector<8x128xf32>
    %cst_44 = arith.constant dense<0.000000e+00> : vector<128x128xf32>
    %58 = tpu.matmul %37, %56, %cst_44 {dimension_numbers = #tpu.dot_dimension_numbers<[0], [0], [1], [1], [0, 1, 1, 1], [], []>} : vector<8x128xf32>, vector<8x128xf32>, vector<128x128xf32> -> vector<128x128xf32>
    %cst_45 = arith.constant 1.000000e-01 : f32
    %59 = vector.broadcast %cst_45 : f32 to vector<128x128xf32>
    %60 = arith.mulf %59, %58 : vector<128x128xf32>
    %61 = arith.subf %30, %60 : vector<128x128xf32>
    %c0_46 = arith.constant 0 : index
    %c0_47 = arith.constant 0 : index
    %c0_48 = arith.constant 0 : index
    %62 = vector.load %arg9[%c0_46, %c0_47, %c0_48] : memref<2x128x128xf32, #tpu.memory_space<vmem>>, vector<1x128x128xf32>
    %63 = vector.shape_cast %62 : vector<1x128x128xf32> to vector<128x128xf32>
    %64 = vector.shape_cast %61 : vector<128x128xf32> to vector<1x128x128xf32>
    tpu.vector_store %arg9[%c0_46, %c0_47, %c0_48], %64 {strides = array<i32>} : memref<2x128x128xf32, #tpu.memory_space<vmem>>, vector<1x128x128xf32>,
    %c0_49 = arith.constant 0 : index
    %c0_50 = arith.constant 0 : index
    %c0_51 = arith.constant 0 : index
    %65 = vector.load %arg10[%c0_49, %c0_50, %c0_51] : memref<2x1x128xf32, #tpu.memory_space<vmem>>, vector<1x1x128xf32>
    %66 = vector.shape_cast %65 : vector<1x1x128xf32> to vector<1x128xf32>
    %cst_52 = arith.constant dense<0.000000e+00> : vector<128xf32>
    %67 = vector.multi_reduction <add>, %56, %cst_52 [0] : vector<8x128xf32> to vector<128xf32>
    %68 = vector.shape_cast %67 : vector<128xf32> to vector<1x128xf32>
    %cst_53 = arith.constant 1.000000e-01 : f32
    %69 = vector.broadcast %cst_53 : f32 to vector<1x128xf32>
    %70 = arith.mulf %69, %68 : vector<1x128xf32>
    %71 = arith.subf %66, %70 : vector<1x128xf32>
    %c0_54 = arith.constant 0 : index
    %c0_55 = arith.constant 0 : index
    %c0_56 = arith.constant 0 : index
    %72 = vector.load %arg10[%c0_54, %c0_55, %c0_56] : memref<2x1x128xf32, #tpu.memory_space<vmem>>, vector<1x1x128xf32>
    %73 = vector.shape_cast %72 : vector<1x1x128xf32> to vector<1x128xf32>
    %74 = vector.shape_cast %71 : vector<1x128xf32> to vector<1x1x128xf32>
    tpu.vector_store %arg10[%c0_54, %c0_55, %c0_56], %74 {strides = array<i32>} : memref<2x1x128xf32, #tpu.memory_space<vmem>>, vector<1x1x128xf32>,
    %cst_57 = arith.constant 0.000000e+00 : f32
    %75 = vector.broadcast %cst_57 : f32 to vector<8x128xf32>
    %76 = arith.cmpf ogt, %35, %75 : vector<8x128xf32>
    %cst_58 = arith.constant 0.000000e+00 : f32
    %77 = vector.broadcast %cst_58 : f32 to vector<8x128xf32>
    %78 = arith.select %76, %57, %77 : vector<8x128xi1>, vector<8x128xf32>
    %cst_59 = arith.constant dense<0.000000e+00> : vector<32x128xf32>
    %79 = tpu.matmul %4, %78, %cst_59 {dimension_numbers = #tpu.dot_dimension_numbers<[0], [0], [1], [1], [0, 1, 1, 1], [], []>} : vector<8x32xf32>, vector<8x128xf32>, vector<32x128xf32> -> vector<32x128xf32>
    %cst_60 = arith.constant 1.000000e-01 : f32
    %80 = vector.broadcast %cst_60 : f32 to vector<32x128xf32>
    %81 = arith.mulf %80, %79 : vector<32x128xf32>
    %82 = arith.subf %28, %81 : vector<32x128xf32>
    %c0_61 = arith.constant 0 : index
    %c0_62 = arith.constant 0 : index
    %c0_63 = arith.constant 0 : index
    %83 = vector.load %arg7[%c0_61, %c0_62, %c0_63] : memref<2x32x128xf32, #tpu.memory_space<vmem>>, vector<1x32x128xf32>
    %84 = vector.shape_cast %83 : vector<1x32x128xf32> to vector<32x128xf32>
    %85 = vector.shape_cast %82 : vector<32x128xf32> to vector<1x32x128xf32>
    tpu.vector_store %arg7[%c0_61, %c0_62, %c0_63], %85 {strides = array<i32>} : memref<2x32x128xf32, #tpu.memory_space<vmem>>, vector<1x32x128xf32>,
    %c0_64 = arith.constant 0 : index
    %c0_65 = arith.constant 0 : index
    %c0_66 = arith.constant 0 : index
    %86 = vector.load %arg8[%c0_64, %c0_65, %c0_66] : memref<2x1x128xf32, #tpu.memory_space<vmem>>, vector<1x1x128xf32>
    %87 = vector.shape_cast %86 : vector<1x1x128xf32> to vector<1x128xf32>
    %cst_67 = arith.constant dense<0.000000e+00> : vector<128xf32>
    %88 = vector.multi_reduction <add>, %78, %cst_67 [0] : vector<8x128xf32> to vector<128xf32>
    %89 = vector.shape_cast %88 : vector<128xf32> to vector<1x128xf32>
    %cst_68 = arith.constant 1.000000e-01 : f32
    %90 = vector.broadcast %cst_68 : f32 to vector<1x128xf32>
    %91 = arith.mulf %90, %89 : vector<1x128xf32>
    %92 = arith.subf %87, %91 : vector<1x128xf32>
    %c0_69 = arith.constant 0 : index
    %c0_70 = arith.constant 0 : index
    %c0_71 = arith.constant 0 : index
    %93 = vector.load %arg8[%c0_69, %c0_70, %c0_71] : memref<2x1x128xf32, #tpu.memory_space<vmem>>, vector<1x1x128xf32>
    %94 = vector.shape_cast %93 : vector<1x1x128xf32> to vector<1x128xf32>
    %95 = vector.shape_cast %92 : vector<1x128xf32> to vector<1x1x128xf32>
    tpu.vector_store %arg8[%c0_69, %c0_70, %c0_71], %95 {strides = array<i32>} : memref<2x1x128xf32, #tpu.memory_space<vmem>>, vector<1x1x128xf32>,
    %c0_72 = arith.constant 0 : index
    %c0_73 = arith.constant 0 : index
    %c0_74 = arith.constant 0 : index
    %96 = vector.load %arg7[%c0_72, %c0_73, %c0_74] : memref<2x32x128xf32, #tpu.memory_space<vmem>>, vector<1x32x128xf32>
    %97 = vector.shape_cast %96 : vector<1x32x128xf32> to vector<32x128xf32>
    %c0_75 = arith.constant 0 : index
    %c0_76 = arith.constant 0 : index
    %c0_77 = arith.constant 0 : index
    %98 = vector.load %arg9[%c0_75, %c0_76, %c0_77] : memref<2x128x128xf32, #tpu.memory_space<vmem>>, vector<1x128x128xf32>
    %99 = vector.shape_cast %98 : vector<1x128x128xf32> to vector<128x128xf32>
    %cst_78 = arith.constant dense<0.000000e+00> : vector<8x128xf32>
    %100 = tpu.matmul %4, %97, %cst_78 {dimension_numbers = #tpu.dot_dimension_numbers<[1], [0], [0], [1], [0, 0, 1, 1], [], []>} : vector<8x32xf32>, vector<32x128xf32>, vector<8x128xf32> -> vector<8x128xf32>
    %c0_79 = arith.constant 0 : index
    %c0_80 = arith.constant 0 : index
    %c0_81 = arith.constant 0 : index
    %101 = vector.load %arg8[%c0_79, %c0_80, %c0_81] : memref<2x1x128xf32, #tpu.memory_space<vmem>>, vector<1x1x128xf32>
    %102 = vector.shape_cast %101 : vector<1x1x128xf32> to vector<1x128xf32>
    %103 = vector.broadcast %102 : vector<1x128xf32> to vector<8x128xf32>
    %104 = arith.addf %100, %103 : vector<8x128xf32>
    %cst_82 = arith.constant 0.000000e+00 : f32
    %105 = vector.broadcast %cst_82 : f32 to vector<8x128xf32>
    %106 = arith.maximumf %104, %105 : vector<8x128xf32>
    %cst_83 = arith.constant dense<0.000000e+00> : vector<8x128xf32>
    %107 = tpu.matmul %106, %99, %cst_83 {dimension_numbers = #tpu.dot_dimension_numbers<[1], [0], [0], [1], [0, 0, 1, 1], [], []>} : vector<8x128xf32>, vector<128x128xf32>, vector<8x128xf32> -> vector<8x128xf32>
    %c0_84 = arith.constant 0 : index
    %c0_85 = arith.constant 0 : index
    %c0_86 = arith.constant 0 : index
    %108 = vector.load %arg10[%c0_84, %c0_85, %c0_86] : memref<2x1x128xf32, #tpu.memory_space<vmem>>, vector<1x1x128xf32>
    %109 = vector.shape_cast %108 : vector<1x1x128xf32> to vector<1x128xf32>
    %110 = vector.broadcast %109 : vector<1x128xf32> to vector<8x128xf32>
    %111 = arith.addf %107, %110 : vector<8x128xf32>
    %cst_87 = arith.constant -1.000000e+30 : f32
    %112 = vector.broadcast %cst_87 : f32 to vector<8x128xf32>
    %113 = arith.select %2, %111, %112 : vector<8x128xi1>, vector<8x128xf32>
    %cst_88 = arith.constant dense<0xFF800000> : vector<8xf32>
    %114 = vector.multi_reduction <maximumf>, %113, %cst_88 [1] : vector<8x128xf32> to vector<8xf32>
    %115 = vector.shape_cast %114 : vector<8xf32> to vector<8x1xf32>
    %116 = vector.broadcast %115 : vector<8x1xf32> to vector<8x128xf32>
    %117 = arith.subf %113, %116 : vector<8x128xf32>
    %118 = math.exp %117 : vector<8x128xf32>
    %cst_89 = arith.constant dense<0.000000e+00> : vector<8xf32>
    %119 = vector.multi_reduction <add>, %118, %cst_89 [1] : vector<8x128xf32> to vector<8xf32>
    %120 = vector.shape_cast %119 : vector<8xf32> to vector<8x1xf32>
    %121 = vector.broadcast %120 : vector<8x1xf32> to vector<8x128xf32>
    %122 = arith.divf %118, %121 : vector<8x128xf32>
    %123 = arith.subf %122, %10 : vector<8x128xf32>
    %cst_90 = arith.constant 1.250000e-01 : f32
    %124 = vector.broadcast %cst_90 : f32 to vector<8x128xf32>
    %125 = arith.mulf %123, %124 : vector<8x128xf32>
    %cst_91 = arith.constant dense<0.000000e+00> : vector<8x128xf32>
    %126 = tpu.matmul %125, %99, %cst_91 {dimension_numbers = #tpu.dot_dimension_numbers<[1], [1], [0], [0], [0, 0, 1, 0], [], []>} : vector<8x128xf32>, vector<128x128xf32>, vector<8x128xf32> -> vector<8x128xf32>
    %cst_92 = arith.constant dense<0.000000e+00> : vector<128x128xf32>
    %127 = tpu.matmul %106, %125, %cst_92 {dimension_numbers = #tpu.dot_dimension_numbers<[0], [0], [1], [1], [0, 1, 1, 1], [], []>} : vector<8x128xf32>, vector<8x128xf32>, vector<128x128xf32> -> vector<128x128xf32>
    %cst_93 = arith.constant 1.000000e-01 : f32
    %128 = vector.broadcast %cst_93 : f32 to vector<128x128xf32>
    %129 = arith.mulf %128, %127 : vector<128x128xf32>
    %130 = arith.subf %99, %129 : vector<128x128xf32>
    %c0_94 = arith.constant 0 : index
    %c0_95 = arith.constant 0 : index
    %c0_96 = arith.constant 0 : index
    %131 = vector.load %arg9[%c0_94, %c0_95, %c0_96] : memref<2x128x128xf32, #tpu.memory_space<vmem>>, vector<1x128x128xf32>
    %132 = vector.shape_cast %131 : vector<1x128x128xf32> to vector<128x128xf32>
    %133 = vector.shape_cast %130 : vector<128x128xf32> to vector<1x128x128xf32>
    tpu.vector_store %arg9[%c0_94, %c0_95, %c0_96], %133 {strides = array<i32>} : memref<2x128x128xf32, #tpu.memory_space<vmem>>, vector<1x128x128xf32>,
    %c0_97 = arith.constant 0 : index
    %c0_98 = arith.constant 0 : index
    %c0_99 = arith.constant 0 : index
    %134 = vector.load %arg10[%c0_97, %c0_98, %c0_99] : memref<2x1x128xf32, #tpu.memory_space<vmem>>, vector<1x1x128xf32>
    %135 = vector.shape_cast %134 : vector<1x1x128xf32> to vector<1x128xf32>
    %cst_100 = arith.constant dense<0.000000e+00> : vector<128xf32>
    %136 = vector.multi_reduction <add>, %125, %cst_100 [0] : vector<8x128xf32> to vector<128xf32>
    %137 = vector.shape_cast %136 : vector<128xf32> to vector<1x128xf32>
    %cst_101 = arith.constant 1.000000e-01 : f32
    %138 = vector.broadcast %cst_101 : f32 to vector<1x128xf32>
    %139 = arith.mulf %138, %137 : vector<1x128xf32>
    %140 = arith.subf %135, %139 : vector<1x128xf32>
    %c0_102 = arith.constant 0 : index
    %c0_103 = arith.constant 0 : index
    %c0_104 = arith.constant 0 : index
    %141 = vector.load %arg10[%c0_102, %c0_103, %c0_104] : memref<2x1x128xf32, #tpu.memory_space<vmem>>, vector<1x1x128xf32>
    %142 = vector.shape_cast %141 : vector<1x1x128xf32> to vector<1x128xf32>
    %143 = vector.shape_cast %140 : vector<1x128xf32> to vector<1x1x128xf32>
    tpu.vector_store %arg10[%c0_102, %c0_103, %c0_104], %143 {strides = array<i32>} : memref<2x1x128xf32, #tpu.memory_space<vmem>>, vector<1x1x128xf32>,
    %cst_105 = arith.constant 0.000000e+00 : f32
    %144 = vector.broadcast %cst_105 : f32 to vector<8x128xf32>
    %145 = arith.cmpf ogt, %104, %144 : vector<8x128xf32>
    %cst_106 = arith.constant 0.000000e+00 : f32
    %146 = vector.broadcast %cst_106 : f32 to vector<8x128xf32>
    %147 = arith.select %145, %126, %146 : vector<8x128xi1>, vector<8x128xf32>
    %cst_107 = arith.constant dense<0.000000e+00> : vector<32x128xf32>
    %148 = tpu.matmul %4, %147, %cst_107 {dimension_numbers = #tpu.dot_dimension_numbers<[0], [0], [1], [1], [0, 1, 1, 1], [], []>} : vector<8x32xf32>, vector<8x128xf32>, vector<32x128xf32> -> vector<32x128xf32>
    %cst_108 = arith.constant 1.000000e-01 : f32
    %149 = vector.broadcast %cst_108 : f32 to vector<32x128xf32>
    %150 = arith.mulf %149, %148 : vector<32x128xf32>
    %151 = arith.subf %97, %150 : vector<32x128xf32>
    %c0_109 = arith.constant 0 : index
    %c0_110 = arith.constant 0 : index
    %c0_111 = arith.constant 0 : index
    %152 = vector.load %arg7[%c0_109, %c0_110, %c0_111] : memref<2x32x128xf32, #tpu.memory_space<vmem>>, vector<1x32x128xf32>
    %153 = vector.shape_cast %152 : vector<1x32x128xf32> to vector<32x128xf32>
    %154 = vector.shape_cast %151 : vector<32x128xf32> to vector<1x32x128xf32>
    tpu.vector_store %arg7[%c0_109, %c0_110, %c0_111], %154 {strides = array<i32>} : memref<2x32x128xf32, #tpu.memory_space<vmem>>, vector<1x32x128xf32>,
    %c0_112 = arith.constant 0 : index
    %c0_113 = arith.constant 0 : index
    %c0_114 = arith.constant 0 : index
    %155 = vector.load %arg8[%c0_112, %c0_113, %c0_114] : memref<2x1x128xf32, #tpu.memory_space<vmem>>, vector<1x1x128xf32>
    %156 = vector.shape_cast %155 : vector<1x1x128xf32> to vector<1x128xf32>
    %cst_115 = arith.constant dense<0.000000e+00> : vector<128xf32>
    %157 = vector.multi_reduction <add>, %147, %cst_115 [0] : vector<8x128xf32> to vector<128xf32>
    %158 = vector.shape_cast %157 : vector<128xf32> to vector<1x128xf32>
    %cst_116 = arith.constant 1.000000e-01 : f32
    %159 = vector.broadcast %cst_116 : f32 to vector<1x128xf32>
    %160 = arith.mulf %159, %158 : vector<1x128xf32>
    %161 = arith.subf %156, %160 : vector<1x128xf32>
    %c0_117 = arith.constant 0 : index
    %c0_118 = arith.constant 0 : index
    %c0_119 = arith.constant 0 : index
    %162 = vector.load %arg8[%c0_117, %c0_118, %c0_119] : memref<2x1x128xf32, #tpu.memory_space<vmem>>, vector<1x1x128xf32>
    %163 = vector.shape_cast %162 : vector<1x1x128xf32> to vector<1x128xf32>
    %164 = vector.shape_cast %161 : vector<1x128xf32> to vector<1x1x128xf32>
    tpu.vector_store %arg8[%c0_117, %c0_118, %c0_119], %164 {strides = array<i32>} : memref<2x1x128xf32, #tpu.memory_space<vmem>>, vector<1x1x128xf32>,
    %c0_120 = arith.constant 0 : index
    %c0_121 = arith.constant 0 : index
    %c0_122 = arith.constant 0 : index
    %165 = vector.load %arg7[%c0_120, %c0_121, %c0_122] : memref<2x32x128xf32, #tpu.memory_space<vmem>>, vector<1x32x128xf32>
    %166 = vector.shape_cast %165 : vector<1x32x128xf32> to vector<32x128xf32>
    %c0_123 = arith.constant 0 : index
    %c0_124 = arith.constant 0 : index
    %c0_125 = arith.constant 0 : index
    %167 = vector.load %arg9[%c0_123, %c0_124, %c0_125] : memref<2x128x128xf32, #tpu.memory_space<vmem>>, vector<1x128x128xf32>
    %168 = vector.shape_cast %167 : vector<1x128x128xf32> to vector<128x128xf32>
    %cst_126 = arith.constant dense<0.000000e+00> : vector<8x128xf32>
    %169 = tpu.matmul %4, %166, %cst_126 {dimension_numbers = #tpu.dot_dimension_numbers<[1], [0], [0], [1], [0, 0, 1, 1], [], []>} : vector<8x32xf32>, vector<32x128xf32>, vector<8x128xf32> -> vector<8x128xf32>
    %c0_127 = arith.constant 0 : index
    %c0_128 = arith.constant 0 : index
    %c0_129 = arith.constant 0 : index
    %170 = vector.load %arg8[%c0_127, %c0_128, %c0_129] : memref<2x1x128xf32, #tpu.memory_space<vmem>>, vector<1x1x128xf32>
    %171 = vector.shape_cast %170 : vector<1x1x128xf32> to vector<1x128xf32>
    %172 = vector.broadcast %171 : vector<1x128xf32> to vector<8x128xf32>
    %173 = arith.addf %169, %172 : vector<8x128xf32>
    %cst_130 = arith.constant 0.000000e+00 : f32
    %174 = vector.broadcast %cst_130 : f32 to vector<8x128xf32>
    %175 = arith.maximumf %173, %174 : vector<8x128xf32>
    %cst_131 = arith.constant dense<0.000000e+00> : vector<8x128xf32>
    %176 = tpu.matmul %175, %168, %cst_131 {dimension_numbers = #tpu.dot_dimension_numbers<[1], [0], [0], [1], [0, 0, 1, 1], [], []>} : vector<8x128xf32>, vector<128x128xf32>, vector<8x128xf32> -> vector<8x128xf32>
    %c0_132 = arith.constant 0 : index
    %c0_133 = arith.constant 0 : index
    %c0_134 = arith.constant 0 : index
    %177 = vector.load %arg10[%c0_132, %c0_133, %c0_134] : memref<2x1x128xf32, #tpu.memory_space<vmem>>, vector<1x1x128xf32>
    %178 = vector.shape_cast %177 : vector<1x1x128xf32> to vector<1x128xf32>
    %179 = vector.broadcast %178 : vector<1x128xf32> to vector<8x128xf32>
    %180 = arith.addf %176, %179 : vector<8x128xf32>
    %cst_135 = arith.constant -1.000000e+30 : f32
    %181 = vector.broadcast %cst_135 : f32 to vector<8x128xf32>
    %182 = arith.select %2, %180, %181 : vector<8x128xi1>, vector<8x128xf32>
    %cst_136 = arith.constant dense<0xFF800000> : vector<8xf32>
    %183 = vector.multi_reduction <maximumf>, %182, %cst_136 [1] : vector<8x128xf32> to vector<8xf32>
    %184 = vector.shape_cast %183 : vector<8xf32> to vector<8x1xf32>
    %185 = vector.broadcast %184 : vector<8x1xf32> to vector<8x128xf32>
    %186 = arith.subf %182, %185 : vector<8x128xf32>
    %187 = math.exp %186 : vector<8x128xf32>
    %cst_137 = arith.constant dense<0.000000e+00> : vector<8xf32>
    %188 = vector.multi_reduction <add>, %187, %cst_137 [1] : vector<8x128xf32> to vector<8xf32>
    %189 = vector.shape_cast %188 : vector<8xf32> to vector<8x1xf32>
    %190 = vector.broadcast %189 : vector<8x1xf32> to vector<8x128xf32>
    %191 = arith.divf %187, %190 : vector<8x128xf32>
    %192 = arith.subf %191, %10 : vector<8x128xf32>
    %cst_138 = arith.constant 1.250000e-01 : f32
    %193 = vector.broadcast %cst_138 : f32 to vector<8x128xf32>
    %194 = arith.mulf %192, %193 : vector<8x128xf32>
    %cst_139 = arith.constant dense<0.000000e+00> : vector<8x128xf32>
    %195 = tpu.matmul %194, %168, %cst_139 {dimension_numbers = #tpu.dot_dimension_numbers<[1], [1], [0], [0], [0, 0, 1, 0], [], []>} : vector<8x128xf32>, vector<128x128xf32>, vector<8x128xf32> -> vector<8x128xf32>
    %cst_140 = arith.constant dense<0.000000e+00> : vector<128x128xf32>
    %196 = tpu.matmul %175, %194, %cst_140 {dimension_numbers = #tpu.dot_dimension_numbers<[0], [0], [1], [1], [0, 1, 1, 1], [], []>} : vector<8x128xf32>, vector<8x128xf32>, vector<128x128xf32> -> vector<128x128xf32>
    %cst_141 = arith.constant 1.000000e-01 : f32
    %197 = vector.broadcast %cst_141 : f32 to vector<128x128xf32>
    %198 = arith.mulf %197, %196 : vector<128x128xf32>
    %199 = arith.subf %168, %198 : vector<128x128xf32>
    %c0_142 = arith.constant 0 : index
    %c0_143 = arith.constant 0 : index
    %c0_144 = arith.constant 0 : index
    %200 = vector.load %arg9[%c0_142, %c0_143, %c0_144] : memref<2x128x128xf32, #tpu.memory_space<vmem>>, vector<1x128x128xf32>
    %201 = vector.shape_cast %200 : vector<1x128x128xf32> to vector<128x128xf32>
    %202 = vector.shape_cast %199 : vector<128x128xf32> to vector<1x128x128xf32>
    tpu.vector_store %arg9[%c0_142, %c0_143, %c0_144], %202 {strides = array<i32>} : memref<2x128x128xf32, #tpu.memory_space<vmem>>, vector<1x128x128xf32>,
    %c0_145 = arith.constant 0 : index
    %c0_146 = arith.constant 0 : index
    %c0_147 = arith.constant 0 : index
    %203 = vector.load %arg10[%c0_145, %c0_146, %c0_147] : memref<2x1x128xf32, #tpu.memory_space<vmem>>, vector<1x1x128xf32>
    %204 = vector.shape_cast %203 : vector<1x1x128xf32> to vector<1x128xf32>
    %cst_148 = arith.constant dense<0.000000e+00> : vector<128xf32>
    %205 = vector.multi_reduction <add>, %194, %cst_148 [0] : vector<8x128xf32> to vector<128xf32>
    %206 = vector.shape_cast %205 : vector<128xf32> to vector<1x128xf32>
    %cst_149 = arith.constant 1.000000e-01 : f32
    %207 = vector.broadcast %cst_149 : f32 to vector<1x128xf32>
    %208 = arith.mulf %207, %206 : vector<1x128xf32>
    %209 = arith.subf %204, %208 : vector<1x128xf32>
    %c0_150 = arith.constant 0 : index
    %c0_151 = arith.constant 0 : index
    %c0_152 = arith.constant 0 : index
    %210 = vector.load %arg10[%c0_150, %c0_151, %c0_152] : memref<2x1x128xf32, #tpu.memory_space<vmem>>, vector<1x1x128xf32>
    %211 = vector.shape_cast %210 : vector<1x1x128xf32> to vector<1x128xf32>
    %212 = vector.shape_cast %209 : vector<1x128xf32> to vector<1x1x128xf32>
    tpu.vector_store %arg10[%c0_150, %c0_151, %c0_152], %212 {strides = array<i32>} : memref<2x1x128xf32, #tpu.memory_space<vmem>>, vector<1x1x128xf32>,
    %cst_153 = arith.constant 0.000000e+00 : f32
    %213 = vector.broadcast %cst_153 : f32 to vector<8x128xf32>
    %214 = arith.cmpf ogt, %173, %213 : vector<8x128xf32>
    %cst_154 = arith.constant 0.000000e+00 : f32
    %215 = vector.broadcast %cst_154 : f32 to vector<8x128xf32>
    %216 = arith.select %214, %195, %215 : vector<8x128xi1>, vector<8x128xf32>
    %cst_155 = arith.constant dense<0.000000e+00> : vector<32x128xf32>
    %217 = tpu.matmul %4, %216, %cst_155 {dimension_numbers = #tpu.dot_dimension_numbers<[0], [0], [1], [1], [0, 1, 1, 1], [], []>} : vector<8x32xf32>, vector<8x128xf32>, vector<32x128xf32> -> vector<32x128xf32>
    %cst_156 = arith.constant 1.000000e-01 : f32
    %218 = vector.broadcast %cst_156 : f32 to vector<32x128xf32>
    %219 = arith.mulf %218, %217 : vector<32x128xf32>
    %220 = arith.subf %166, %219 : vector<32x128xf32>
    %c0_157 = arith.constant 0 : index
    %c0_158 = arith.constant 0 : index
    %c0_159 = arith.constant 0 : index
    %221 = vector.load %arg7[%c0_157, %c0_158, %c0_159] : memref<2x32x128xf32, #tpu.memory_space<vmem>>, vector<1x32x128xf32>
    %222 = vector.shape_cast %221 : vector<1x32x128xf32> to vector<32x128xf32>
    %223 = vector.shape_cast %220 : vector<32x128xf32> to vector<1x32x128xf32>
    tpu.vector_store %arg7[%c0_157, %c0_158, %c0_159], %223 {strides = array<i32>} : memref<2x32x128xf32, #tpu.memory_space<vmem>>, vector<1x32x128xf32>,
    %c0_160 = arith.constant 0 : index
    %c0_161 = arith.constant 0 : index
    %c0_162 = arith.constant 0 : index
    %224 = vector.load %arg8[%c0_160, %c0_161, %c0_162] : memref<2x1x128xf32, #tpu.memory_space<vmem>>, vector<1x1x128xf32>
    %225 = vector.shape_cast %224 : vector<1x1x128xf32> to vector<1x128xf32>
    %cst_163 = arith.constant dense<0.000000e+00> : vector<128xf32>
    %226 = vector.multi_reduction <add>, %216, %cst_163 [0] : vector<8x128xf32> to vector<128xf32>
    %227 = vector.shape_cast %226 : vector<128xf32> to vector<1x128xf32>
    %cst_164 = arith.constant 1.000000e-01 : f32
    %228 = vector.broadcast %cst_164 : f32 to vector<1x128xf32>
    %229 = arith.mulf %228, %227 : vector<1x128xf32>
    %230 = arith.subf %225, %229 : vector<1x128xf32>
    %c0_165 = arith.constant 0 : index
    %c0_166 = arith.constant 0 : index
    %c0_167 = arith.constant 0 : index
    %231 = vector.load %arg8[%c0_165, %c0_166, %c0_167] : memref<2x1x128xf32, #tpu.memory_space<vmem>>, vector<1x1x128xf32>
    %232 = vector.shape_cast %231 : vector<1x1x128xf32> to vector<1x128xf32>
    %233 = vector.shape_cast %230 : vector<1x128xf32> to vector<1x1x128xf32>
    tpu.vector_store %arg8[%c0_165, %c0_166, %c0_167], %233 {strides = array<i32>} : memref<2x1x128xf32, #tpu.memory_space<vmem>>, vector<1x1x128xf32>,
    %c0_168 = arith.constant 0 : index
    %c0_169 = arith.constant 0 : index
    %c0_170 = arith.constant 0 : index
    %234 = vector.load %arg7[%c0_168, %c0_169, %c0_170] : memref<2x32x128xf32, #tpu.memory_space<vmem>>, vector<1x32x128xf32>
    %235 = vector.shape_cast %234 : vector<1x32x128xf32> to vector<32x128xf32>
    %cst_171 = arith.constant dense<0.000000e+00> : vector<8x128xf32>
    %236 = tpu.matmul %4, %235, %cst_171 {dimension_numbers = #tpu.dot_dimension_numbers<[1], [0], [0], [1], [0, 0, 1, 1], [], []>} : vector<8x32xf32>, vector<32x128xf32>, vector<8x128xf32> -> vector<8x128xf32>
    %c0_172 = arith.constant 0 : index
    %c0_173 = arith.constant 0 : index
    %c0_174 = arith.constant 0 : index
    %237 = vector.load %arg8[%c0_172, %c0_173, %c0_174] : memref<2x1x128xf32, #tpu.memory_space<vmem>>, vector<1x1x128xf32>
    %238 = vector.shape_cast %237 : vector<1x1x128xf32> to vector<1x128xf32>
    %239 = vector.broadcast %238 : vector<1x128xf32> to vector<8x128xf32>
    %240 = arith.addf %236, %239 : vector<8x128xf32>
    %cst_175 = arith.constant 0.000000e+00 : f32
    %241 = vector.broadcast %cst_175 : f32 to vector<8x128xf32>
    %242 = arith.maximumf %240, %241 : vector<8x128xf32>
    %c0_176 = arith.constant 0 : index
    %c0_177 = arith.constant 0 : index
    %c0_178 = arith.constant 0 : index
    %243 = vector.load %arg9[%c0_176, %c0_177, %c0_178] : memref<2x128x128xf32, #tpu.memory_space<vmem>>, vector<1x128x128xf32>
    %244 = vector.shape_cast %243 : vector<1x128x128xf32> to vector<128x128xf32>
    %cst_179 = arith.constant dense<0.000000e+00> : vector<8x128xf32>
    %245 = tpu.matmul %242, %244, %cst_179 {dimension_numbers = #tpu.dot_dimension_numbers<[1], [0], [0], [1], [0, 0, 1, 1], [], []>} : vector<8x128xf32>, vector<128x128xf32>, vector<8x128xf32> -> vector<8x128xf32>
    %c0_180 = arith.constant 0 : index
    %c0_181 = arith.constant 0 : index
    %c0_182 = arith.constant 0 : index
    %246 = vector.load %arg10[%c0_180, %c0_181, %c0_182] : memref<2x1x128xf32, #tpu.memory_space<vmem>>, vector<1x1x128xf32>
    %247 = vector.shape_cast %246 : vector<1x1x128xf32> to vector<1x128xf32>
    %248 = vector.broadcast %247 : vector<1x128xf32> to vector<8x128xf32>
    %249 = arith.addf %245, %248 : vector<8x128xf32>
    %c0_183 = arith.constant 0 : index
    %c0_184 = arith.constant 0 : index
    %c0_185 = arith.constant 0 : index
    %250 = vector.load %arg11[%c0_183, %c0_184, %c0_185] : memref<2x8x128xf32, #tpu.memory_space<vmem>>, vector<1x8x128xf32>
    %251 = vector.shape_cast %250 : vector<1x8x128xf32> to vector<8x128xf32>
    %252 = vector.shape_cast %249 : vector<8x128xf32> to vector<1x8x128xf32>
    tpu.vector_store %arg11[%c0_183, %c0_184, %c0_185], %252 {strides = array<i32>} : memref<2x8x128xf32, #tpu.memory_space<vmem>>, vector<1x8x128xf32>,
    %c1 = arith.constant 1 : index
    %c0_186 = arith.constant 0 : index
    %c0_187 = arith.constant 0 : index
    %253 = vector.load %arg2[%c1, %c0_186, %c0_187] : memref<2x8x32xf32, #tpu.memory_space<vmem>>, vector<1x8x32xf32>
    %254 = vector.shape_cast %253 : vector<1x8x32xf32> to vector<8x32xf32>
    %c1_188 = arith.constant 1 : index
    %c0_189 = arith.constant 0 : index
    %c0_190 = arith.constant 0 : index
    %255 = vector.load %arg1[%c1_188, %c0_189, %c0_190] : memref<2x8x1xi32, #tpu.memory_space<vmem>>, vector<1x8x1xi32>
    %256 = vector.shape_cast %255 : vector<1x8x1xi32> to vector<8x1xi32>
    %257 = vector.broadcast %256 : vector<8x1xi32> to vector<8x128xi32>
    %258 = arith.cmpi eq, %0, %257 : vector<8x128xi32>
    %259 = arith.extui %258 : vector<8x128xi1> to vector<8x128xi32>
    %260 = arith.sitofp %259 : vector<8x128xi32> to vector<8x128xf32>
    %c0_191 = arith.constant 0 : index
    %c0_192 = arith.constant 0 : index
    %261 = vector.load %arg3[%c0_191, %c0_192] : memref<32x128xf32, #tpu.memory_space<vmem>>, vector<32x128xf32>
    %c1_193 = arith.constant 1 : index
    %c0_194 = arith.constant 0 : index
    %c0_195 = arith.constant 0 : index
    %262 = vector.load %arg7[%c1_193, %c0_194, %c0_195] : memref<2x32x128xf32, #tpu.memory_space<vmem>>, vector<1x32x128xf32>
    %263 = vector.shape_cast %262 : vector<1x32x128xf32> to vector<32x128xf32>
    %264 = vector.shape_cast %261 : vector<32x128xf32> to vector<1x32x128xf32>
    tpu.vector_store %arg7[%c1_193, %c0_194, %c0_195], %264 {strides = array<i32>} : memref<2x32x128xf32, #tpu.memory_space<vmem>>, vector<1x32x128xf32>,
    %c0_196 = arith.constant 0 : index
    %c0_197 = arith.constant 0 : index
    %265 = vector.load %arg4[%c0_196, %c0_197] : memref<1x128xf32, #tpu.memory_space<vmem>>, vector<1x128xf32>
    %c1_198 = arith.constant 1 : index
    %c0_199 = arith.constant 0 : index
    %c0_200 = arith.constant 0 : index
    %266 = vector.load %arg8[%c1_198, %c0_199, %c0_200] : memref<2x1x128xf32, #tpu.memory_space<vmem>>, vector<1x1x128xf32>
    %267 = vector.shape_cast %266 : vector<1x1x128xf32> to vector<1x128xf32>
    %268 = vector.shape_cast %265 : vector<1x128xf32> to vector<1x1x128xf32>
    tpu.vector_store %arg8[%c1_198, %c0_199, %c0_200], %268 {strides = array<i32>} : memref<2x1x128xf32, #tpu.memory_space<vmem>>, vector<1x1x128xf32>,
    %c0_201 = arith.constant 0 : index
    %c0_202 = arith.constant 0 : index
    %269 = vector.load %arg5[%c0_201, %c0_202] : memref<128x128xf32, #tpu.memory_space<vmem>>, vector<128x128xf32>
    %c1_203 = arith.constant 1 : index
    %c0_204 = arith.constant 0 : index
    %c0_205 = arith.constant 0 : index
    %270 = vector.load %arg9[%c1_203, %c0_204, %c0_205] : memref<2x128x128xf32, #tpu.memory_space<vmem>>, vector<1x128x128xf32>
    %271 = vector.shape_cast %270 : vector<1x128x128xf32> to vector<128x128xf32>
    %272 = vector.shape_cast %269 : vector<128x128xf32> to vector<1x128x128xf32>
    tpu.vector_store %arg9[%c1_203, %c0_204, %c0_205], %272 {strides = array<i32>} : memref<2x128x128xf32, #tpu.memory_space<vmem>>, vector<1x128x128xf32>,
    %c0_206 = arith.constant 0 : index
    %c0_207 = arith.constant 0 : index
    %273 = vector.load %arg6[%c0_206, %c0_207] : memref<1x128xf32, #tpu.memory_space<vmem>>, vector<1x128xf32>
    %c1_208 = arith.constant 1 : index
    %c0_209 = arith.constant 0 : index
    %c0_210 = arith.constant 0 : index
    %274 = vector.load %arg10[%c1_208, %c0_209, %c0_210] : memref<2x1x128xf32, #tpu.memory_space<vmem>>, vector<1x1x128xf32>
    %275 = vector.shape_cast %274 : vector<1x1x128xf32> to vector<1x128xf32>
    %276 = vector.shape_cast %273 : vector<1x128xf32> to vector<1x1x128xf32>
    tpu.vector_store %arg10[%c1_208, %c0_209, %c0_210], %276 {strides = array<i32>} : memref<2x1x128xf32, #tpu.memory_space<vmem>>, vector<1x1x128xf32>,
    %c1_211 = arith.constant 1 : index
    %c0_212 = arith.constant 0 : index
    %c0_213 = arith.constant 0 : index
    %277 = vector.load %arg7[%c1_211, %c0_212, %c0_213] : memref<2x32x128xf32, #tpu.memory_space<vmem>>, vector<1x32x128xf32>
    %278 = vector.shape_cast %277 : vector<1x32x128xf32> to vector<32x128xf32>
    %c1_214 = arith.constant 1 : index
    %c0_215 = arith.constant 0 : index
    %c0_216 = arith.constant 0 : index
    %279 = vector.load %arg9[%c1_214, %c0_215, %c0_216] : memref<2x128x128xf32, #tpu.memory_space<vmem>>, vector<1x128x128xf32>
    %280 = vector.shape_cast %279 : vector<1x128x128xf32> to vector<128x128xf32>
    %cst_217 = arith.constant dense<0.000000e+00> : vector<8x128xf32>
    %281 = tpu.matmul %254, %278, %cst_217 {dimension_numbers = #tpu.dot_dimension_numbers<[1], [0], [0], [1], [0, 0, 1, 1], [], []>} : vector<8x32xf32>, vector<32x128xf32>, vector<8x128xf32> -> vector<8x128xf32>
    %c1_218 = arith.constant 1 : index
    %c0_219 = arith.constant 0 : index
    %c0_220 = arith.constant 0 : index
    %282 = vector.load %arg8[%c1_218, %c0_219, %c0_220] : memref<2x1x128xf32, #tpu.memory_space<vmem>>, vector<1x1x128xf32>
    %283 = vector.shape_cast %282 : vector<1x1x128xf32> to vector<1x128xf32>
    %284 = vector.broadcast %283 : vector<1x128xf32> to vector<8x128xf32>
    %285 = arith.addf %281, %284 : vector<8x128xf32>
    %cst_221 = arith.constant 0.000000e+00 : f32
    %286 = vector.broadcast %cst_221 : f32 to vector<8x128xf32>
    %287 = arith.maximumf %285, %286 : vector<8x128xf32>
    %cst_222 = arith.constant dense<0.000000e+00> : vector<8x128xf32>
    %288 = tpu.matmul %287, %280, %cst_222 {dimension_numbers = #tpu.dot_dimension_numbers<[1], [0], [0], [1], [0, 0, 1, 1], [], []>} : vector<8x128xf32>, vector<128x128xf32>, vector<8x128xf32> -> vector<8x128xf32>
    %c1_223 = arith.constant 1 : index
    %c0_224 = arith.constant 0 : index
    %c0_225 = arith.constant 0 : index
    %289 = vector.load %arg10[%c1_223, %c0_224, %c0_225] : memref<2x1x128xf32, #tpu.memory_space<vmem>>, vector<1x1x128xf32>
    %290 = vector.shape_cast %289 : vector<1x1x128xf32> to vector<1x128xf32>
    %291 = vector.broadcast %290 : vector<1x128xf32> to vector<8x128xf32>
    %292 = arith.addf %288, %291 : vector<8x128xf32>
    %cst_226 = arith.constant -1.000000e+30 : f32
    %293 = vector.broadcast %cst_226 : f32 to vector<8x128xf32>
    %294 = arith.select %2, %292, %293 : vector<8x128xi1>, vector<8x128xf32>
    %cst_227 = arith.constant dense<0xFF800000> : vector<8xf32>
    %295 = vector.multi_reduction <maximumf>, %294, %cst_227 [1] : vector<8x128xf32> to vector<8xf32>
    %296 = vector.shape_cast %295 : vector<8xf32> to vector<8x1xf32>
    %297 = vector.broadcast %296 : vector<8x1xf32> to vector<8x128xf32>
    %298 = arith.subf %294, %297 : vector<8x128xf32>
    %299 = math.exp %298 : vector<8x128xf32>
    %cst_228 = arith.constant dense<0.000000e+00> : vector<8xf32>
    %300 = vector.multi_reduction <add>, %299, %cst_228 [1] : vector<8x128xf32> to vector<8xf32>
    %301 = vector.shape_cast %300 : vector<8xf32> to vector<8x1xf32>
    %302 = vector.broadcast %301 : vector<8x1xf32> to vector<8x128xf32>
    %303 = arith.divf %299, %302 : vector<8x128xf32>
    %304 = arith.subf %303, %260 : vector<8x128xf32>
    %cst_229 = arith.constant 1.250000e-01 : f32
    %305 = vector.broadcast %cst_229 : f32 to vector<8x128xf32>
    %306 = arith.mulf %304, %305 : vector<8x128xf32>
    %cst_230 = arith.constant dense<0.000000e+00> : vector<8x128xf32>
    %307 = tpu.matmul %306, %280, %cst_230 {dimension_numbers = #tpu.dot_dimension_numbers<[1], [1], [0], [0], [0, 0, 1, 0], [], []>} : vector<8x128xf32>, vector<128x128xf32>, vector<8x128xf32> -> vector<8x128xf32>
    %cst_231 = arith.constant dense<0.000000e+00> : vector<128x128xf32>
    %308 = tpu.matmul %287, %306, %cst_231 {dimension_numbers = #tpu.dot_dimension_numbers<[0], [0], [1], [1], [0, 1, 1, 1], [], []>} : vector<8x128xf32>, vector<8x128xf32>, vector<128x128xf32> -> vector<128x128xf32>
    %cst_232 = arith.constant 1.000000e-01 : f32
    %309 = vector.broadcast %cst_232 : f32 to vector<128x128xf32>
    %310 = arith.mulf %309, %308 : vector<128x128xf32>
    %311 = arith.subf %280, %310 : vector<128x128xf32>
    %c1_233 = arith.constant 1 : index
    %c0_234 = arith.constant 0 : index
    %c0_235 = arith.constant 0 : index
    %312 = vector.load %arg9[%c1_233, %c0_234, %c0_235] : memref<2x128x128xf32, #tpu.memory_space<vmem>>, vector<1x128x128xf32>
    %313 = vector.shape_cast %312 : vector<1x128x128xf32> to vector<128x128xf32>
    %314 = vector.shape_cast %311 : vector<128x128xf32> to vector<1x128x128xf32>
    tpu.vector_store %arg9[%c1_233, %c0_234, %c0_235], %314 {strides = array<i32>} : memref<2x128x128xf32, #tpu.memory_space<vmem>>, vector<1x128x128xf32>,
    %c1_236 = arith.constant 1 : index
    %c0_237 = arith.constant 0 : index
    %c0_238 = arith.constant 0 : index
    %315 = vector.load %arg10[%c1_236, %c0_237, %c0_238] : memref<2x1x128xf32, #tpu.memory_space<vmem>>, vector<1x1x128xf32>
    %316 = vector.shape_cast %315 : vector<1x1x128xf32> to vector<1x128xf32>
    %cst_239 = arith.constant dense<0.000000e+00> : vector<128xf32>
    %317 = vector.multi_reduction <add>, %306, %cst_239 [0] : vector<8x128xf32> to vector<128xf32>
    %318 = vector.shape_cast %317 : vector<128xf32> to vector<1x128xf32>
    %cst_240 = arith.constant 1.000000e-01 : f32
    %319 = vector.broadcast %cst_240 : f32 to vector<1x128xf32>
    %320 = arith.mulf %319, %318 : vector<1x128xf32>
    %321 = arith.subf %316, %320 : vector<1x128xf32>
    %c1_241 = arith.constant 1 : index
    %c0_242 = arith.constant 0 : index
    %c0_243 = arith.constant 0 : index
    %322 = vector.load %arg10[%c1_241, %c0_242, %c0_243] : memref<2x1x128xf32, #tpu.memory_space<vmem>>, vector<1x1x128xf32>
    %323 = vector.shape_cast %322 : vector<1x1x128xf32> to vector<1x128xf32>
    %324 = vector.shape_cast %321 : vector<1x128xf32> to vector<1x1x128xf32>
    tpu.vector_store %arg10[%c1_241, %c0_242, %c0_243], %324 {strides = array<i32>} : memref<2x1x128xf32, #tpu.memory_space<vmem>>, vector<1x1x128xf32>,
    %cst_244 = arith.constant 0.000000e+00 : f32
    %325 = vector.broadcast %cst_244 : f32 to vector<8x128xf32>
    %326 = arith.cmpf ogt, %285, %325 : vector<8x128xf32>
    %cst_245 = arith.constant 0.000000e+00 : f32
    %327 = vector.broadcast %cst_245 : f32 to vector<8x128xf32>
    %328 = arith.select %326, %307, %327 : vector<8x128xi1>, vector<8x128xf32>
    %cst_246 = arith.constant dense<0.000000e+00> : vector<32x128xf32>
    %329 = tpu.matmul %254, %328, %cst_246 {dimension_numbers = #tpu.dot_dimension_numbers<[0], [0], [1], [1], [0, 1, 1, 1], [], []>} : vector<8x32xf32>, vector<8x128xf32>, vector<32x128xf32> -> vector<32x128xf32>
    %cst_247 = arith.constant 1.000000e-01 : f32
    %330 = vector.broadcast %cst_247 : f32 to vector<32x128xf32>
    %331 = arith.mulf %330, %329 : vector<32x128xf32>
    %332 = arith.subf %278, %331 : vector<32x128xf32>
    %c1_248 = arith.constant 1 : index
    %c0_249 = arith.constant 0 : index
    %c0_250 = arith.constant 0 : index
    %333 = vector.load %arg7[%c1_248, %c0_249, %c0_250] : memref<2x32x128xf32, #tpu.memory_space<vmem>>, vector<1x32x128xf32>
    %334 = vector.shape_cast %333 : vector<1x32x128xf32> to vector<32x128xf32>
    %335 = vector.shape_cast %332 : vector<32x128xf32> to vector<1x32x128xf32>
    tpu.vector_store %arg7[%c1_248, %c0_249, %c0_250], %335 {strides = array<i32>} : memref<2x32x128xf32, #tpu.memory_space<vmem>>, vector<1x32x128xf32>,
    %c1_251 = arith.constant 1 : index
    %c0_252 = arith.constant 0 : index
    %c0_253 = arith.constant 0 : index
    %336 = vector.load %arg8[%c1_251, %c0_252, %c0_253] : memref<2x1x128xf32, #tpu.memory_space<vmem>>, vector<1x1x128xf32>
    %337 = vector.shape_cast %336 : vector<1x1x128xf32> to vector<1x128xf32>
    %cst_254 = arith.constant dense<0.000000e+00> : vector<128xf32>
    %338 = vector.multi_reduction <add>, %328, %cst_254 [0] : vector<8x128xf32> to vector<128xf32>
    %339 = vector.shape_cast %338 : vector<128xf32> to vector<1x128xf32>
    %cst_255 = arith.constant 1.000000e-01 : f32
    %340 = vector.broadcast %cst_255 : f32 to vector<1x128xf32>
    %341 = arith.mulf %340, %339 : vector<1x128xf32>
    %342 = arith.subf %337, %341 : vector<1x128xf32>
    %c1_256 = arith.constant 1 : index
    %c0_257 = arith.constant 0 : index
    %c0_258 = arith.constant 0 : index
    %343 = vector.load %arg8[%c1_256, %c0_257, %c0_258] : memref<2x1x128xf32, #tpu.memory_space<vmem>>, vector<1x1x128xf32>
    %344 = vector.shape_cast %343 : vector<1x1x128xf32> to vector<1x128xf32>
    %345 = vector.shape_cast %342 : vector<1x128xf32> to vector<1x1x128xf32>
    tpu.vector_store %arg8[%c1_256, %c0_257, %c0_258], %345 {strides = array<i32>} : memref<2x1x128xf32, #tpu.memory_space<vmem>>, vector<1x1x128xf32>,
    %c1_259 = arith.constant 1 : index
    %c0_260 = arith.constant 0 : index
    %c0_261 = arith.constant 0 : index
    %346 = vector.load %arg7[%c1_259, %c0_260, %c0_261] : memref<2x32x128xf32, #tpu.memory_space<vmem>>, vector<1x32x128xf32>
    %347 = vector.shape_cast %346 : vector<1x32x128xf32> to vector<32x128xf32>
    %c1_262 = arith.constant 1 : index
    %c0_263 = arith.constant 0 : index
    %c0_264 = arith.constant 0 : index
    %348 = vector.load %arg9[%c1_262, %c0_263, %c0_264] : memref<2x128x128xf32, #tpu.memory_space<vmem>>, vector<1x128x128xf32>
    %349 = vector.shape_cast %348 : vector<1x128x128xf32> to vector<128x128xf32>
    %cst_265 = arith.constant dense<0.000000e+00> : vector<8x128xf32>
    %350 = tpu.matmul %254, %347, %cst_265 {dimension_numbers = #tpu.dot_dimension_numbers<[1], [0], [0], [1], [0, 0, 1, 1], [], []>} : vector<8x32xf32>, vector<32x128xf32>, vector<8x128xf32> -> vector<8x128xf32>
    %c1_266 = arith.constant 1 : index
    %c0_267 = arith.constant 0 : index
    %c0_268 = arith.constant 0 : index
    %351 = vector.load %arg8[%c1_266, %c0_267, %c0_268] : memref<2x1x128xf32, #tpu.memory_space<vmem>>, vector<1x1x128xf32>
    %352 = vector.shape_cast %351 : vector<1x1x128xf32> to vector<1x128xf32>
    %353 = vector.broadcast %352 : vector<1x128xf32> to vector<8x128xf32>
    %354 = arith.addf %350, %353 : vector<8x128xf32>
    %cst_269 = arith.constant 0.000000e+00 : f32
    %355 = vector.broadcast %cst_269 : f32 to vector<8x128xf32>
    %356 = arith.maximumf %354, %355 : vector<8x128xf32>
    %cst_270 = arith.constant dense<0.000000e+00> : vector<8x128xf32>
    %357 = tpu.matmul %356, %349, %cst_270 {dimension_numbers = #tpu.dot_dimension_numbers<[1], [0], [0], [1], [0, 0, 1, 1], [], []>} : vector<8x128xf32>, vector<128x128xf32>, vector<8x128xf32> -> vector<8x128xf32>
    %c1_271 = arith.constant 1 : index
    %c0_272 = arith.constant 0 : index
    %c0_273 = arith.constant 0 : index
    %358 = vector.load %arg10[%c1_271, %c0_272, %c0_273] : memref<2x1x128xf32, #tpu.memory_space<vmem>>, vector<1x1x128xf32>
    %359 = vector.shape_cast %358 : vector<1x1x128xf32> to vector<1x128xf32>
    %360 = vector.broadcast %359 : vector<1x128xf32> to vector<8x128xf32>
    %361 = arith.addf %357, %360 : vector<8x128xf32>
    %cst_274 = arith.constant -1.000000e+30 : f32
    %362 = vector.broadcast %cst_274 : f32 to vector<8x128xf32>
    %363 = arith.select %2, %361, %362 : vector<8x128xi1>, vector<8x128xf32>
    %cst_275 = arith.constant dense<0xFF800000> : vector<8xf32>
    %364 = vector.multi_reduction <maximumf>, %363, %cst_275 [1] : vector<8x128xf32> to vector<8xf32>
    %365 = vector.shape_cast %364 : vector<8xf32> to vector<8x1xf32>
    %366 = vector.broadcast %365 : vector<8x1xf32> to vector<8x128xf32>
    %367 = arith.subf %363, %366 : vector<8x128xf32>
    %368 = math.exp %367 : vector<8x128xf32>
    %cst_276 = arith.constant dense<0.000000e+00> : vector<8xf32>
    %369 = vector.multi_reduction <add>, %368, %cst_276 [1] : vector<8x128xf32> to vector<8xf32>
    %370 = vector.shape_cast %369 : vector<8xf32> to vector<8x1xf32>
    %371 = vector.broadcast %370 : vector<8x1xf32> to vector<8x128xf32>
    %372 = arith.divf %368, %371 : vector<8x128xf32>
    %373 = arith.subf %372, %260 : vector<8x128xf32>
    %cst_277 = arith.constant 1.250000e-01 : f32
    %374 = vector.broadcast %cst_277 : f32 to vector<8x128xf32>
    %375 = arith.mulf %373, %374 : vector<8x128xf32>
    %cst_278 = arith.constant dense<0.000000e+00> : vector<8x128xf32>
    %376 = tpu.matmul %375, %349, %cst_278 {dimension_numbers = #tpu.dot_dimension_numbers<[1], [1], [0], [0], [0, 0, 1, 0], [], []>} : vector<8x128xf32>, vector<128x128xf32>, vector<8x128xf32> -> vector<8x128xf32>
    %cst_279 = arith.constant dense<0.000000e+00> : vector<128x128xf32>
    %377 = tpu.matmul %356, %375, %cst_279 {dimension_numbers = #tpu.dot_dimension_numbers<[0], [0], [1], [1], [0, 1, 1, 1], [], []>} : vector<8x128xf32>, vector<8x128xf32>, vector<128x128xf32> -> vector<128x128xf32>
    %cst_280 = arith.constant 1.000000e-01 : f32
    %378 = vector.broadcast %cst_280 : f32 to vector<128x128xf32>
    %379 = arith.mulf %378, %377 : vector<128x128xf32>
    %380 = arith.subf %349, %379 : vector<128x128xf32>
    %c1_281 = arith.constant 1 : index
    %c0_282 = arith.constant 0 : index
    %c0_283 = arith.constant 0 : index
    %381 = vector.load %arg9[%c1_281, %c0_282, %c0_283] : memref<2x128x128xf32, #tpu.memory_space<vmem>>, vector<1x128x128xf32>
    %382 = vector.shape_cast %381 : vector<1x128x128xf32> to vector<128x128xf32>
    %383 = vector.shape_cast %380 : vector<128x128xf32> to vector<1x128x128xf32>
    tpu.vector_store %arg9[%c1_281, %c0_282, %c0_283], %383 {strides = array<i32>} : memref<2x128x128xf32, #tpu.memory_space<vmem>>, vector<1x128x128xf32>,
    %c1_284 = arith.constant 1 : index
    %c0_285 = arith.constant 0 : index
    %c0_286 = arith.constant 0 : index
    %384 = vector.load %arg10[%c1_284, %c0_285, %c0_286] : memref<2x1x128xf32, #tpu.memory_space<vmem>>, vector<1x1x128xf32>
    %385 = vector.shape_cast %384 : vector<1x1x128xf32> to vector<1x128xf32>
    %cst_287 = arith.constant dense<0.000000e+00> : vector<128xf32>
    %386 = vector.multi_reduction <add>, %375, %cst_287 [0] : vector<8x128xf32> to vector<128xf32>
    %387 = vector.shape_cast %386 : vector<128xf32> to vector<1x128xf32>
    %cst_288 = arith.constant 1.000000e-01 : f32
    %388 = vector.broadcast %cst_288 : f32 to vector<1x128xf32>
    %389 = arith.mulf %388, %387 : vector<1x128xf32>
    %390 = arith.subf %385, %389 : vector<1x128xf32>
    %c1_289 = arith.constant 1 : index
    %c0_290 = arith.constant 0 : index
    %c0_291 = arith.constant 0 : index
    %391 = vector.load %arg10[%c1_289, %c0_290, %c0_291] : memref<2x1x128xf32, #tpu.memory_space<vmem>>, vector<1x1x128xf32>
    %392 = vector.shape_cast %391 : vector<1x1x128xf32> to vector<1x128xf32>
    %393 = vector.shape_cast %390 : vector<1x128xf32> to vector<1x1x128xf32>
    tpu.vector_store %arg10[%c1_289, %c0_290, %c0_291], %393 {strides = array<i32>} : memref<2x1x128xf32, #tpu.memory_space<vmem>>, vector<1x1x128xf32>,
    %cst_292 = arith.constant 0.000000e+00 : f32
    %394 = vector.broadcast %cst_292 : f32 to vector<8x128xf32>
    %395 = arith.cmpf ogt, %354, %394 : vector<8x128xf32>
    %cst_293 = arith.constant 0.000000e+00 : f32
    %396 = vector.broadcast %cst_293 : f32 to vector<8x128xf32>
    %397 = arith.select %395, %376, %396 : vector<8x128xi1>, vector<8x128xf32>
    %cst_294 = arith.constant dense<0.000000e+00> : vector<32x128xf32>
    %398 = tpu.matmul %254, %397, %cst_294 {dimension_numbers = #tpu.dot_dimension_numbers<[0], [0], [1], [1], [0, 1, 1, 1], [], []>} : vector<8x32xf32>, vector<8x128xf32>, vector<32x128xf32> -> vector<32x128xf32>
    %cst_295 = arith.constant 1.000000e-01 : f32
    %399 = vector.broadcast %cst_295 : f32 to vector<32x128xf32>
    %400 = arith.mulf %399, %398 : vector<32x128xf32>
    %401 = arith.subf %347, %400 : vector<32x128xf32>
    %c1_296 = arith.constant 1 : index
    %c0_297 = arith.constant 0 : index
    %c0_298 = arith.constant 0 : index
    %402 = vector.load %arg7[%c1_296, %c0_297, %c0_298] : memref<2x32x128xf32, #tpu.memory_space<vmem>>, vector<1x32x128xf32>
    %403 = vector.shape_cast %402 : vector<1x32x128xf32> to vector<32x128xf32>
    %404 = vector.shape_cast %401 : vector<32x128xf32> to vector<1x32x128xf32>
    tpu.vector_store %arg7[%c1_296, %c0_297, %c0_298], %404 {strides = array<i32>} : memref<2x32x128xf32, #tpu.memory_space<vmem>>, vector<1x32x128xf32>,
    %c1_299 = arith.constant 1 : index
    %c0_300 = arith.constant 0 : index
    %c0_301 = arith.constant 0 : index
    %405 = vector.load %arg8[%c1_299, %c0_300, %c0_301] : memref<2x1x128xf32, #tpu.memory_space<vmem>>, vector<1x1x128xf32>
    %406 = vector.shape_cast %405 : vector<1x1x128xf32> to vector<1x128xf32>
    %cst_302 = arith.constant dense<0.000000e+00> : vector<128xf32>
    %407 = vector.multi_reduction <add>, %397, %cst_302 [0] : vector<8x128xf32> to vector<128xf32>
    %408 = vector.shape_cast %407 : vector<128xf32> to vector<1x128xf32>
    %cst_303 = arith.constant 1.000000e-01 : f32
    %409 = vector.broadcast %cst_303 : f32 to vector<1x128xf32>
    %410 = arith.mulf %409, %408 : vector<1x128xf32>
    %411 = arith.subf %406, %410 : vector<1x128xf32>
    %c1_304 = arith.constant 1 : index
    %c0_305 = arith.constant 0 : index
    %c0_306 = arith.constant 0 : index
    %412 = vector.load %arg8[%c1_304, %c0_305, %c0_306] : memref<2x1x128xf32, #tpu.memory_space<vmem>>, vector<1x1x128xf32>
    %413 = vector.shape_cast %412 : vector<1x1x128xf32> to vector<1x128xf32>
    %414 = vector.shape_cast %411 : vector<1x128xf32> to vector<1x1x128xf32>
    tpu.vector_store %arg8[%c1_304, %c0_305, %c0_306], %414 {strides = array<i32>} : memref<2x1x128xf32, #tpu.memory_space<vmem>>, vector<1x1x128xf32>,
    %c1_307 = arith.constant 1 : index
    %c0_308 = arith.constant 0 : index
    %c0_309 = arith.constant 0 : index
    %415 = vector.load %arg7[%c1_307, %c0_308, %c0_309] : memref<2x32x128xf32, #tpu.memory_space<vmem>>, vector<1x32x128xf32>
    %416 = vector.shape_cast %415 : vector<1x32x128xf32> to vector<32x128xf32>
    %c1_310 = arith.constant 1 : index
    %c0_311 = arith.constant 0 : index
    %c0_312 = arith.constant 0 : index
    %417 = vector.load %arg9[%c1_310, %c0_311, %c0_312] : memref<2x128x128xf32, #tpu.memory_space<vmem>>, vector<1x128x128xf32>
    %418 = vector.shape_cast %417 : vector<1x128x128xf32> to vector<128x128xf32>
    %cst_313 = arith.constant dense<0.000000e+00> : vector<8x128xf32>
    %419 = tpu.matmul %254, %416, %cst_313 {dimension_numbers = #tpu.dot_dimension_numbers<[1], [0], [0], [1], [0, 0, 1, 1], [], []>} : vector<8x32xf32>, vector<32x128xf32>, vector<8x128xf32> -> vector<8x128xf32>
    %c1_314 = arith.constant 1 : index
    %c0_315 = arith.constant 0 : index
    %c0_316 = arith.constant 0 : index
    %420 = vector.load %arg8[%c1_314, %c0_315, %c0_316] : memref<2x1x128xf32, #tpu.memory_space<vmem>>, vector<1x1x128xf32>
    %421 = vector.shape_cast %420 : vector<1x1x128xf32> to vector<1x128xf32>
    %422 = vector.broadcast %421 : vector<1x128xf32> to vector<8x128xf32>
    %423 = arith.addf %419, %422 : vector<8x128xf32>
    %cst_317 = arith.constant 0.000000e+00 : f32
    %424 = vector.broadcast %cst_317 : f32 to vector<8x128xf32>
    %425 = arith.maximumf %423, %424 : vector<8x128xf32>
    %cst_318 = arith.constant dense<0.000000e+00> : vector<8x128xf32>
    %426 = tpu.matmul %425, %418, %cst_318 {dimension_numbers = #tpu.dot_dimension_numbers<[1], [0], [0], [1], [0, 0, 1, 1], [], []>} : vector<8x128xf32>, vector<128x128xf32>, vector<8x128xf32> -> vector<8x128xf32>
    %c1_319 = arith.constant 1 : index
    %c0_320 = arith.constant 0 : index
    %c0_321 = arith.constant 0 : index
    %427 = vector.load %arg10[%c1_319, %c0_320, %c0_321] : memref<2x1x128xf32, #tpu.memory_space<vmem>>, vector<1x1x128xf32>
    %428 = vector.shape_cast %427 : vector<1x1x128xf32> to vector<1x128xf32>
    %429 = vector.broadcast %428 : vector<1x128xf32> to vector<8x128xf32>
    %430 = arith.addf %426, %429 : vector<8x128xf32>
    %cst_322 = arith.constant -1.000000e+30 : f32
    %431 = vector.broadcast %cst_322 : f32 to vector<8x128xf32>
    %432 = arith.select %2, %430, %431 : vector<8x128xi1>, vector<8x128xf32>
    %cst_323 = arith.constant dense<0xFF800000> : vector<8xf32>
    %433 = vector.multi_reduction <maximumf>, %432, %cst_323 [1] : vector<8x128xf32> to vector<8xf32>
    %434 = vector.shape_cast %433 : vector<8xf32> to vector<8x1xf32>
    %435 = vector.broadcast %434 : vector<8x1xf32> to vector<8x128xf32>
    %436 = arith.subf %432, %435 : vector<8x128xf32>
    %437 = math.exp %436 : vector<8x128xf32>
    %cst_324 = arith.constant dense<0.000000e+00> : vector<8xf32>
    %438 = vector.multi_reduction <add>, %437, %cst_324 [1] : vector<8x128xf32> to vector<8xf32>
    %439 = vector.shape_cast %438 : vector<8xf32> to vector<8x1xf32>
    %440 = vector.broadcast %439 : vector<8x1xf32> to vector<8x128xf32>
    %441 = arith.divf %437, %440 : vector<8x128xf32>
    %442 = arith.subf %441, %260 : vector<8x128xf32>
    %cst_325 = arith.constant 1.250000e-01 : f32
    %443 = vector.broadcast %cst_325 : f32 to vector<8x128xf32>
    %444 = arith.mulf %442, %443 : vector<8x128xf32>
    %cst_326 = arith.constant dense<0.000000e+00> : vector<8x128xf32>
    %445 = tpu.matmul %444, %418, %cst_326 {dimension_numbers = #tpu.dot_dimension_numbers<[1], [1], [0], [0], [0, 0, 1, 0], [], []>} : vector<8x128xf32>, vector<128x128xf32>, vector<8x128xf32> -> vector<8x128xf32>
    %cst_327 = arith.constant dense<0.000000e+00> : vector<128x128xf32>
    %446 = tpu.matmul %425, %444, %cst_327 {dimension_numbers = #tpu.dot_dimension_numbers<[0], [0], [1], [1], [0, 1, 1, 1], [], []>} : vector<8x128xf32>, vector<8x128xf32>, vector<128x128xf32> -> vector<128x128xf32>
    %cst_328 = arith.constant 1.000000e-01 : f32
    %447 = vector.broadcast %cst_328 : f32 to vector<128x128xf32>
    %448 = arith.mulf %447, %446 : vector<128x128xf32>
    %449 = arith.subf %418, %448 : vector<128x128xf32>
    %c1_329 = arith.constant 1 : index
    %c0_330 = arith.constant 0 : index
    %c0_331 = arith.constant 0 : index
    %450 = vector.load %arg9[%c1_329, %c0_330, %c0_331] : memref<2x128x128xf32, #tpu.memory_space<vmem>>, vector<1x128x128xf32>
    %451 = vector.shape_cast %450 : vector<1x128x128xf32> to vector<128x128xf32>
    %452 = vector.shape_cast %449 : vector<128x128xf32> to vector<1x128x128xf32>
    tpu.vector_store %arg9[%c1_329, %c0_330, %c0_331], %452 {strides = array<i32>} : memref<2x128x128xf32, #tpu.memory_space<vmem>>, vector<1x128x128xf32>,
    %c1_332 = arith.constant 1 : index
    %c0_333 = arith.constant 0 : index
    %c0_334 = arith.constant 0 : index
    %453 = vector.load %arg10[%c1_332, %c0_333, %c0_334] : memref<2x1x128xf32, #tpu.memory_space<vmem>>, vector<1x1x128xf32>
    %454 = vector.shape_cast %453 : vector<1x1x128xf32> to vector<1x128xf32>
    %cst_335 = arith.constant dense<0.000000e+00> : vector<128xf32>
    %455 = vector.multi_reduction <add>, %444, %cst_335 [0] : vector<8x128xf32> to vector<128xf32>
    %456 = vector.shape_cast %455 : vector<128xf32> to vector<1x128xf32>
    %cst_336 = arith.constant 1.000000e-01 : f32
    %457 = vector.broadcast %cst_336 : f32 to vector<1x128xf32>
    %458 = arith.mulf %457, %456 : vector<1x128xf32>
    %459 = arith.subf %454, %458 : vector<1x128xf32>
    %c1_337 = arith.constant 1 : index
    %c0_338 = arith.constant 0 : index
    %c0_339 = arith.constant 0 : index
    %460 = vector.load %arg10[%c1_337, %c0_338, %c0_339] : memref<2x1x128xf32, #tpu.memory_space<vmem>>, vector<1x1x128xf32>
    %461 = vector.shape_cast %460 : vector<1x1x128xf32> to vector<1x128xf32>
    %462 = vector.shape_cast %459 : vector<1x128xf32> to vector<1x1x128xf32>
    tpu.vector_store %arg10[%c1_337, %c0_338, %c0_339], %462 {strides = array<i32>} : memref<2x1x128xf32, #tpu.memory_space<vmem>>, vector<1x1x128xf32>,
    %cst_340 = arith.constant 0.000000e+00 : f32
    %463 = vector.broadcast %cst_340 : f32 to vector<8x128xf32>
    %464 = arith.cmpf ogt, %423, %463 : vector<8x128xf32>
    %cst_341 = arith.constant 0.000000e+00 : f32
    %465 = vector.broadcast %cst_341 : f32 to vector<8x128xf32>
    %466 = arith.select %464, %445, %465 : vector<8x128xi1>, vector<8x128xf32>
    %cst_342 = arith.constant dense<0.000000e+00> : vector<32x128xf32>
    %467 = tpu.matmul %254, %466, %cst_342 {dimension_numbers = #tpu.dot_dimension_numbers<[0], [0], [1], [1], [0, 1, 1, 1], [], []>} : vector<8x32xf32>, vector<8x128xf32>, vector<32x128xf32> -> vector<32x128xf32>
    %cst_343 = arith.constant 1.000000e-01 : f32
    %468 = vector.broadcast %cst_343 : f32 to vector<32x128xf32>
    %469 = arith.mulf %468, %467 : vector<32x128xf32>
    %470 = arith.subf %416, %469 : vector<32x128xf32>
    %c1_344 = arith.constant 1 : index
    %c0_345 = arith.constant 0 : index
    %c0_346 = arith.constant 0 : index
    %471 = vector.load %arg7[%c1_344, %c0_345, %c0_346] : memref<2x32x128xf32, #tpu.memory_space<vmem>>, vector<1x32x128xf32>
    %472 = vector.shape_cast %471 : vector<1x32x128xf32> to vector<32x128xf32>
    %473 = vector.shape_cast %470 : vector<32x128xf32> to vector<1x32x128xf32>
    tpu.vector_store %arg7[%c1_344, %c0_345, %c0_346], %473 {strides = array<i32>} : memref<2x32x128xf32, #tpu.memory_space<vmem>>, vector<1x32x128xf32>,
    %c1_347 = arith.constant 1 : index
    %c0_348 = arith.constant 0 : index
    %c0_349 = arith.constant 0 : index
    %474 = vector.load %arg8[%c1_347, %c0_348, %c0_349] : memref<2x1x128xf32, #tpu.memory_space<vmem>>, vector<1x1x128xf32>
    %475 = vector.shape_cast %474 : vector<1x1x128xf32> to vector<1x128xf32>
    %cst_350 = arith.constant dense<0.000000e+00> : vector<128xf32>
    %476 = vector.multi_reduction <add>, %466, %cst_350 [0] : vector<8x128xf32> to vector<128xf32>
    %477 = vector.shape_cast %476 : vector<128xf32> to vector<1x128xf32>
    %cst_351 = arith.constant 1.000000e-01 : f32
    %478 = vector.broadcast %cst_351 : f32 to vector<1x128xf32>
    %479 = arith.mulf %478, %477 : vector<1x128xf32>
    %480 = arith.subf %475, %479 : vector<1x128xf32>
    %c1_352 = arith.constant 1 : index
    %c0_353 = arith.constant 0 : index
    %c0_354 = arith.constant 0 : index
    %481 = vector.load %arg8[%c1_352, %c0_353, %c0_354] : memref<2x1x128xf32, #tpu.memory_space<vmem>>, vector<1x1x128xf32>
    %482 = vector.shape_cast %481 : vector<1x1x128xf32> to vector<1x128xf32>
    %483 = vector.shape_cast %480 : vector<1x128xf32> to vector<1x1x128xf32>
    tpu.vector_store %arg8[%c1_352, %c0_353, %c0_354], %483 {strides = array<i32>} : memref<2x1x128xf32, #tpu.memory_space<vmem>>, vector<1x1x128xf32>,
    %c1_355 = arith.constant 1 : index
    %c0_356 = arith.constant 0 : index
    %c0_357 = arith.constant 0 : index
    %484 = vector.load %arg7[%c1_355, %c0_356, %c0_357] : memref<2x32x128xf32, #tpu.memory_space<vmem>>, vector<1x32x128xf32>
    %485 = vector.shape_cast %484 : vector<1x32x128xf32> to vector<32x128xf32>
    %cst_358 = arith.constant dense<0.000000e+00> : vector<8x128xf32>
    %486 = tpu.matmul %254, %485, %cst_358 {dimension_numbers = #tpu.dot_dimension_numbers<[1], [0], [0], [1], [0, 0, 1, 1], [], []>} : vector<8x32xf32>, vector<32x128xf32>, vector<8x128xf32> -> vector<8x128xf32>
    %c1_359 = arith.constant 1 : index
    %c0_360 = arith.constant 0 : index
    %c0_361 = arith.constant 0 : index
    %487 = vector.load %arg8[%c1_359, %c0_360, %c0_361] : memref<2x1x128xf32, #tpu.memory_space<vmem>>, vector<1x1x128xf32>
    %488 = vector.shape_cast %487 : vector<1x1x128xf32> to vector<1x128xf32>
    %489 = vector.broadcast %488 : vector<1x128xf32> to vector<8x128xf32>
    %490 = arith.addf %486, %489 : vector<8x128xf32>
    %cst_362 = arith.constant 0.000000e+00 : f32
    %491 = vector.broadcast %cst_362 : f32 to vector<8x128xf32>
    %492 = arith.maximumf %490, %491 : vector<8x128xf32>
    %c1_363 = arith.constant 1 : index
    %c0_364 = arith.constant 0 : index
    %c0_365 = arith.constant 0 : index
    %493 = vector.load %arg9[%c1_363, %c0_364, %c0_365] : memref<2x128x128xf32, #tpu.memory_space<vmem>>, vector<1x128x128xf32>
    %494 = vector.shape_cast %493 : vector<1x128x128xf32> to vector<128x128xf32>
    %cst_366 = arith.constant dense<0.000000e+00> : vector<8x128xf32>
    %495 = tpu.matmul %492, %494, %cst_366 {dimension_numbers = #tpu.dot_dimension_numbers<[1], [0], [0], [1], [0, 0, 1, 1], [], []>} : vector<8x128xf32>, vector<128x128xf32>, vector<8x128xf32> -> vector<8x128xf32>
    %c1_367 = arith.constant 1 : index
    %c0_368 = arith.constant 0 : index
    %c0_369 = arith.constant 0 : index
    %496 = vector.load %arg10[%c1_367, %c0_368, %c0_369] : memref<2x1x128xf32, #tpu.memory_space<vmem>>, vector<1x1x128xf32>
    %497 = vector.shape_cast %496 : vector<1x1x128xf32> to vector<1x128xf32>
    %498 = vector.broadcast %497 : vector<1x128xf32> to vector<8x128xf32>
    %499 = arith.addf %495, %498 : vector<8x128xf32>
    %c1_370 = arith.constant 1 : index
    %c0_371 = arith.constant 0 : index
    %c0_372 = arith.constant 0 : index
    %500 = vector.load %arg11[%c1_370, %c0_371, %c0_372] : memref<2x8x128xf32, #tpu.memory_space<vmem>>, vector<1x8x128xf32>
    %501 = vector.shape_cast %500 : vector<1x8x128xf32> to vector<8x128xf32>
    %502 = vector.shape_cast %499 : vector<8x128xf32> to vector<1x8x128xf32>
    tpu.vector_store %arg11[%c1_370, %c0_371, %c0_372], %502 {strides = array<i32>} : memref<2x8x128xf32, #tpu.memory_space<vmem>>, vector<1x8x128xf32>,
    return
  }
  func.func @transform_0(%arg0: i32) -> (i32, i32, i32) {
    %c0_i32 = arith.constant 0 : i32
    %c0_i32_0 = arith.constant 0 : i32
    %c0_i32_1 = arith.constant 0 : i32
    return %arg0, %c0_i32, %c0_i32_0 : i32, i32, i32
  }
  func.func @transform_1(%arg0: i32) -> (i32, i32, i32) {
    %c0_i32 = arith.constant 0 : i32
    %c0_i32_0 = arith.constant 0 : i32
    %c0_i32_1 = arith.constant 0 : i32
    return %arg0, %c0_i32, %c0_i32_0 : i32, i32, i32
  }
  func.func @transform_2(%arg0: i32) -> (i32, i32) {
    %c0_i32 = arith.constant 0 : i32
    %c0_i32_0 = arith.constant 0 : i32
    %c0_i32_1 = arith.constant 0 : i32
    return %c0_i32, %c0_i32_0 : i32, i32
  }
  func.func @transform_3(%arg0: i32) -> (i32, i32) {
    %c0_i32 = arith.constant 0 : i32
    %c0_i32_0 = arith.constant 0 : i32
    %c0_i32_1 = arith.constant 0 : i32
    return %c0_i32, %c0_i32_0 : i32, i32
  }
  func.func @transform_4(%arg0: i32) -> (i32, i32) {
    %c0_i32 = arith.constant 0 : i32
    %c0_i32_0 = arith.constant 0 : i32
    %c0_i32_1 = arith.constant 0 : i32
    return %c0_i32, %c0_i32_0 : i32, i32
  }
  func.func @transform_5(%arg0: i32) -> (i32, i32) {
    %c0_i32 = arith.constant 0 : i32
    %c0_i32_0 = arith.constant 0 : i32
    %c0_i32_1 = arith.constant 0 : i32
    return %c0_i32, %c0_i32_0 : i32, i32
  }
  func.func @transform_6(%arg0: i32) -> (i32, i32, i32) {
    %c0_i32 = arith.constant 0 : i32
    %c0_i32_0 = arith.constant 0 : i32
    %c0_i32_1 = arith.constant 0 : i32
    return %arg0, %c0_i32, %c0_i32_0 : i32, i32, i32
  }
  func.func @transform_7(%arg0: i32) -> (i32, i32, i32) {
    %c0_i32 = arith.constant 0 : i32
    %c0_i32_0 = arith.constant 0 : i32
    %c0_i32_1 = arith.constant 0 : i32
    return %arg0, %c0_i32, %c0_i32_0 : i32, i32, i32
  }
  func.func @transform_8(%arg0: i32) -> (i32, i32, i32) {
    %c0_i32 = arith.constant 0 : i32
    %c0_i32_0 = arith.constant 0 : i32
    %c0_i32_1 = arith.constant 0 : i32
    return %arg0, %c0_i32, %c0_i32_0 : i32, i32, i32
  }
  func.func @transform_9(%arg0: i32) -> (i32, i32, i32) {
    %c0_i32 = arith.constant 0 : i32
    %c0_i32_0 = arith.constant 0 : i32
    %c0_i32_1 = arith.constant 0 : i32
    return %arg0, %c0_i32, %c0_i32_0 : i32, i32, i32
  }
  func.func @transform_10(%arg0: i32) -> (i32, i32, i32) {
    %c0_i32 = arith.constant 0 : i32
    %c0_i32_0 = arith.constant 0 : i32
    %c0_i32_1 = arith.constant 0 : i32
    return %arg0, %c0_i32, %c0_i32_0 : i32, i32, i32
  }
}

</mosaic_0001>

<llo_original>
// kernel: tpu_custom_call.1
$region0: #{tpu_custom_call.1}
  #allocation0 [shape = 'u32[]', space=smem, size = 0x4, offset = 0x4, fixed_abs, tag = 'smem constant byte address 0x4 - core index']
  #allocation1 [shape = 'u32[144,128]{1,0:T(1,128)}', space=vmem, size = 0x12000, scoped, tag = 'internal scratch']
  %s0 = inlined_call_operand.vmem [shape: s32[4,8,1], index: 0, kind: input, shape index: {}]
  %s1 = inlined_call_operand.vmem [shape: f32[4,8,32], index: 1, kind: input, shape index: {}]
  %s2 = inlined_call_operand.hbm [shape: f32[32,128], index: 2, kind: input, shape index: {}]
  %s3 = inlined_call_operand.vmem [shape: f32[1,128], index: 3, kind: input, shape index: {}]
  %s4 = inlined_call_operand.hbm [shape: f32[128,128], index: 4, kind: input, shape index: {}]
  %s5 = inlined_call_operand.vmem [shape: f32[1,128], index: 5, kind: input, shape index: {}]
  %s6 = inlined_call_operand.hbm [shape: f32[4,32,128], index: 6, kind: output, shape index: {0}]
  %s7 = inlined_call_operand.hbm [shape: f32[4,1,128], index: 7, kind: output, shape index: {1}]
  %s8 = inlined_call_operand.hbm [shape: f32[4,128,128], index: 8, kind: output, shape index: {2}]
  %s9 = inlined_call_operand.hbm [shape: f32[4,1,128], index: 9, kind: output, shape index: {3}]
  %s10 = inlined_call_operand.hbm [shape: f32[4,8,128], index: 10, kind: output, shape index: {4}]
  %11 = xla_tuple %s6, %s7, %s8, %s9, %s10
  %s12 = sld [smem:[#allocation0]]
  $region97: #{tpu_custom_call.1} parent=0
    _
  %s14 = ssub.s32 1, %s12
  %s15 = scalar_select 0, %s14, %s12
  $region1: #{tpu_custom_call.1} parent=0
    #allocation2 [shape = 'u8[16384]{0}', space=vmem, size = 0x4000, scoped, tag = 'input window, operand 2, single buffered']
    #allocation3 [shape = 's32[2]{0}', space=sflag, size = 0x8, scoped, tag = 'scoped memory for tpu_custom_call.1']
    #allocation4 [shape = 's32[2]{0}', space=sflag, size = 0x8, scoped, tag = 'scoped memory for tpu_custom_call.1']
    #allocation5 [shape = 'u8[65536]{0}', space=vmem, size = 0x10000, scoped, tag = 'input window, operand 4, single buffered']
    #allocation6 [shape = 's32[1]{0}', space=sflag, size = 0x4, scoped, tag = 'scoped memory for tpu_custom_call.1']
    #allocation7 [shape = 'u8[65536]{0}', space=vmem, size = 0x10000, scoped, tag = 'output window, operand 0']
    #allocation8 [shape = 'u8[2048]{0}', space=vmem, size = 0x800, scoped, tag = 'output window, operand 1']
    #allocation9 [shape = 's32[2]{0}', space=sflag, size = 0x8, scoped, tag = 'scoped memory for tpu_custom_call.1']
    #allocation10 [shape = 'u8[262144]{0}', space=vmem, size = 0x40000, scoped, tag = 'output window, operand 2']
    #allocation11 [shape = 'u8[2048]{0}', space=vmem, size = 0x800, scoped, tag = 'output window, operand 3']
    #allocation12 [shape = 's32[2]{0}', space=sflag, size = 0x8, scoped, tag = 'scoped memory for tpu_custom_call.1']
    #allocation13 [shape = 'u8[16384]{0}', space=vmem, size = 0x4000, scoped, tag = 'output window, operand 4']
    %16 = vsyncpa [#allocation3], 0
    %17 = vsyncpa [#allocation6], 0
    %18 = vsyncpa [#allocation4], 0
    %s19 = scalar_lea.sflag [#allocation4], 1
    %20 = vsyncpa %s19, 0
    %21 = vsyncpa [#allocation9], 0
    %s22 = scalar_lea.sflag [#allocation9], 1
    %23 = vsyncpa %s22, 0
    %24 = vsyncpa [#allocation12], 0
    %s25 = scalar_lea.sflag [#allocation12], 1
    %26 = vsyncpa %s25, 0
    loop: start=0, step=1, limit=4
    $region2: #{tpu_custom_call.1} parent=1 // loop_pre_header
      _
    $region3: #{tpu_custom_call.1} parent=1 // loop_header
      %s28 = sphi 0, %s32
      %p29 = scmp.ge.s32.totalorder %s28, 4
      %s38 = sphi 0, %s40
      %s41 = sphi 0, %s38
      %s42 = sphi 0, %s41
      %s58 = sphi 0, %s42
      %s64 = sphi 0, %s66
      %s67 = sphi 0, %s64
      %s68 = sphi 0, %s67
      %s84 = sphi 0, %s68
      %s88 = sphi 0, %s88
      %s90 = sphi 0, %s88
      %s91 = sphi 0, %s90
      %s105 = sphi 0, %s91
      %s109 = sphi 0, %s109
      %s111 = sphi 0, %s109
      %s112 = sphi 0, %s111
      %s126 = sphi 0, %s112
      %s130 = sphi 0, %s130
      %s132 = sphi 0, %s130
      %s133 = sphi 0, %s132
      %s147 = sphi 0, %s133
      %s151 = sphi 0, %s151
      %s153 = sphi 0, %s151
      %s154 = sphi 0, %s153
      %s168 = sphi 0, %s154
      %s174 = sphi 0, %s176
      %s177 = sphi 0, %s174
      %s178 = sphi 0, %s177
      %s194 = sphi 0, %s178
      %s200 = sphi 0, %s202
      %s203 = sphi 0, %s200
      %s204 = sphi 0, %s203
      %s220 = sphi 0, %s204
      %s226 = sphi 0, %s228
      %s229 = sphi 0, %s226
      %s230 = sphi 0, %s229
      %s246 = sphi 0, %s230
      %s252 = sphi 0, %s254
      %s255 = sphi 0, %s252
      %s256 = sphi 0, %s255
      %s272 = sphi 0, %s256
      %s278 = sphi 0, %s280
      %s281 = sphi 0, %s278
      %s282 = sphi 0, %s281
      %s298 = sphi 0, %s282
    $region4: #{tpu_custom_call.1} parent=1 // loop_header_branch
      %31 = sbr.rel (%p29) target = $region8
    $region5: #{tpu_custom_call.1} parent=1 // loop_body
      %s33 = ssub.s32 %s28, 1
      %s34 = ssub.s32 %s28, 2
      %s35 = sadd.s32 %s28, 1
      %s36 = ssub.s32 %s28, %s35
      %p37 = scmp.eq.s32.totalorder %s36, 0
      %s39 = sadd.s32 %s38, 1
      %s40 = scalar_select %p37, %s38, %s39
      %p43 = pneg %p37
      %p44 = scmp.eq.s32.totalorder %s28, 1
      %p45 = por %p43, %p44
      %p46 = scmp.ne.s32.totalorder %s38, %s41
      %p47 = scmp.eq.s32.totalorder %s28, 0
      %p48 = por %p46, %p47
      %p49 = scmp.ne.s32.totalorder %s38, %s41
      %p50 = scmp.eq.s32.totalorder %s33, 1
      %p51 = por %p49, %p50
      %p52 = scmp.ne.s32.totalorder %s41, %s42
      %p53 = scmp.eq.s32.totalorder %s33, 0
      %p54 = por %p52, %p53
      %p55 = scmp.ne.s32.totalorder %s41, %s42
      %p56 = scmp.eq.s32.totalorder %s34, 1
      %p57 = por %p55, %p56
      %p59 = scmp.ne.s32.totalorder %s42, %s58
      %p60 = scmp.eq.s32.totalorder %s34, 0
      %p61 = por %p59, %p60
      %s62 = ssub.s32 %s28, %s35
      %p63 = scmp.eq.s32.totalorder %s62, 0
      %s65 = sadd.s32 %s64, 1
      %s66 = scalar_select %p63, %s64, %s65
      %p69 = pneg %p63
      %p70 = scmp.eq.s32.totalorder %s28, 1
      %p71 = por %p69, %p70
      %p72 = scmp.ne.s32.totalorder %s64, %s67
      %p73 = scmp.eq.s32.totalorder %s28, 0
      %p74 = por %p72, %p73
      %p75 = scmp.ne.s32.totalorder %s64, %s67
      %p76 = scmp.eq.s32.totalorder %s33, 1
      %p77 = por %p75, %p76
      %p78 = scmp.ne.s32.totalorder %s67, %s68
      %p79 = scmp.eq.s32.totalorder %s33, 0
      %p80 = por %p78, %p79
      %p81 = scmp.ne.s32.totalorder %s67, %s68
      %p82 = scmp.eq.s32.totalorder %s34, 1
      %p83 = por %p81, %p82
      %p85 = scmp.ne.s32.totalorder %s68, %s84
      %p86 = scmp.eq.s32.totalorder %s34, 0
      %p87 = por %p85, %p86
      %s89 = sadd.s32 %s88, 1
      %p92 = scmp.eq.s32.totalorder %s28, 1
      %p93 = scmp.ne.s32.totalorder %s88, %s90
      %p94 = scmp.eq.s32.totalorder %s28, 0
      %p95 = por %p93, %p94
      %p96 = scmp.ne.s32.totalorder %s88, %s90
      %p97 = scmp.eq.s32.totalorder %s33, 1
      %p98 = por %p96, %p97
      %p99 = scmp.ne.s32.totalorder %s90, %s91
      %p100 = scmp.eq.s32.totalorder %s33, 0
      %p101 = por %p99, %p100
      %p102 = scmp.ne.s32.totalorder %s90, %s91
      %p103 = scmp.eq.s32.totalorder %s34, 1
      %p104 = por %p102, %p103
      %p106 = scmp.ne.s32.totalorder %s91, %s105
      %p107 = scmp.eq.s32.totalorder %s34, 0
      %p108 = por %p106, %p107
      %s110 = sadd.s32 %s109, 1
      %p113 = scmp.eq.s32.totalorder %s28, 1
      %p114 = scmp.ne.s32.totalorder %s109, %s111
      %p115 = scmp.eq.s32.totalorder %s28, 0
      %p116 = por %p114, %p115
      %p117 = scmp.ne.s32.totalorder %s109, %s111
      %p118 = scmp.eq.s32.totalorder %s33, 1
      %p119 = por %p117, %p118
      %p120 = scmp.ne.s32.totalorder %s111, %s112
      %p121 = scmp.eq.s32.totalorder %s33, 0
      %p122 = por %p120, %p121
      %p123 = scmp.ne.s32.totalorder %s111, %s112
      %p124 = scmp.eq.s32.totalorder %s34, 1
      %p125 = por %p123, %p124
      %p127 = scmp.ne.s32.totalorder %s112, %s126
      %p128 = scmp.eq.s32.totalorder %s34, 0
      %p129 = por %p127, %p128
      %s131 = sadd.s32 %s130, 1
      %p134 = scmp.eq.s32.totalorder %s28, 1
      %p135 = scmp.ne.s32.totalorder %s130, %s132
      %p136 = scmp.eq.s32.totalorder %s28, 0
      %p137 = por %p135, %p136
      %p138 = scmp.ne.s32.totalorder %s130, %s132
      %p139 = scmp.eq.s32.totalorder %s33, 1
      %p140 = por %p138, %p139
      %p141 = scmp.ne.s32.totalorder %s132, %s133
      %p142 = scmp.eq.s32.totalorder %s33, 0
      %p143 = por %p141, %p142
      %p144 = scmp.ne.s32.totalorder %s132, %s133
      %p145 = scmp.eq.s32.totalorder %s34, 1
      %p146 = por %p144, %p145
      %p148 = scmp.ne.s32.totalorder %s133, %s147
      %p149 = scmp.eq.s32.totalorder %s34, 0
      %p150 = por %p148, %p149
      %s152 = sadd.s32 %s151, 1
      %p155 = scmp.eq.s32.totalorder %s28, 1
      %p156 = scmp.ne.s32.totalorder %s151, %s153
      %p157 = scmp.eq.s32.totalorder %s28, 0
      %p158 = por %p156, %p157
      %p159 = scmp.ne.s32.totalorder %s151, %s153
      %p160 = scmp.eq.s32.totalorder %s33, 1
      %p161 = por %p159, %p160
      %p162 = scmp.ne.s32.totalorder %s153, %s154
      %p163 = scmp.eq.s32.totalorder %s33, 0
      %p164 = por %p162, %p163
      %p165 = scmp.ne.s32.totalorder %s153, %s154
      %p166 = scmp.eq.s32.totalorder %s34, 1
      %p167 = por %p165, %p166
      %p169 = scmp.ne.s32.totalorder %s154, %s168
      %p170 = scmp.eq.s32.totalorder %s34, 0
      %p171 = por %p169, %p170
      %s172 = ssub.s32 %s28, %s35
      %p173 = scmp.eq.s32.totalorder %s172, 0
      %s175 = sadd.s32 %s174, 1
      %s176 = scalar_select %p173, %s174, %s175
      %p179 = pneg %p173
      %p180 = scmp.eq.s32.totalorder %s28, 1
      %p181 = por %p179, %p180
      %p182 = scmp.ne.s32.totalorder %s174, %s177
      %p183 = scmp.eq.s32.totalorder %s28, 0
      %p184 = por %p182, %p183
      %p185 = scmp.ne.s32.totalorder %s174, %s177
      %p186 = scmp.eq.s32.totalorder %s33, 1
      %p187 = por %p185, %p186
      %p188 = scmp.ne.s32.totalorder %s177, %s178
      %p189 = scmp.eq.s32.totalorder %s33, 0
      %p190 = por %p188, %p189
      %p191 = scmp.ne.s32.totalorder %s177, %s178
      %p192 = scmp.eq.s32.totalorder %s34, 1
      %p193 = por %p191, %p192
      %p195 = scmp.ne.s32.totalorder %s178, %s194
      %p196 = scmp.eq.s32.totalorder %s34, 0
      %p197 = por %p195, %p196
      %s198 = ssub.s32 %s28, %s35
      %p199 = scmp.eq.s32.totalorder %s198, 0
      %s201 = sadd.s32 %s200, 1
      %s202 = scalar_select %p199, %s200, %s201
      %p205 = pneg %p199
      %p206 = scmp.eq.s32.totalorder %s28, 1
      %p207 = por %p205, %p206
      %p208 = scmp.ne.s32.totalorder %s200, %s203
      %p209 = scmp.eq.s32.totalorder %s28, 0
      %p210 = por %p208, %p209
      %p211 = scmp.ne.s32.totalorder %s200, %s203
      %p212 = scmp.eq.s32.totalorder %s33, 1
      %p213 = por %p211, %p212
      %p214 = scmp.ne.s32.totalorder %s203, %s204
      %p215 = scmp.eq.s32.totalorder %s33, 0
      %p216 = por %p214, %p215
      %p217 = scmp.ne.s32.totalorder %s203, %s204
      %p218 = scmp.eq.s32.totalorder %s34, 1
      %p219 = por %p217, %p218
      %p221 = scmp.ne.s32.totalorder %s204, %s220
      %p222 = scmp.eq.s32.totalorder %s34, 0
      %p223 = por %p221, %p222
      %s224 = ssub.s32 %s28, %s35
      %p225 = scmp.eq.s32.totalorder %s224, 0
      %s227 = sadd.s32 %s226, 1
      %s228 = scalar_select %p225, %s226, %s227
      %p231 = pneg %p225
      %p232 = scmp.eq.s32.totalorder %s28, 1
      %p233 = por %p231, %p232
      %p234 = scmp.ne.s32.totalorder %s226, %s229
      %p235 = scmp.eq.s32.totalorder %s28, 0
      %p236 = por %p234, %p235
      %p237 = scmp.ne.s32.totalorder %s226, %s229
      %p238 = scmp.eq.s32.totalorder %s33, 1
      %p239 = por %p237, %p238
      %p240 = scmp.ne.s32.totalorder %s229, %s230
      %p241 = scmp.eq.s32.totalorder %s33, 0
      %p242 = por %p240, %p241
      %p243 = scmp.ne.s32.totalorder %s229, %s230
      %p244 = scmp.eq.s32.totalorder %s34, 1
      %p245 = por %p243, %p244
      %p247 = scmp.ne.s32.totalorder %s230, %s246
      %p248 = scmp.eq.s32.totalorder %s34, 0
      %p249 = por %p247, %p248
      %s250 = ssub.s32 %s28, %s35
      %p251 = scmp.eq.s32.totalorder %s250, 0
      %s253 = sadd.s32 %s252, 1
      %s254 = scalar_select %p251, %s252, %s253
      %p257 = pneg %p251
      %p258 = scmp.eq.s32.totalorder %s28, 1
      %p259 = por %p257, %p258
      %p260 = scmp.ne.s32.totalorder %s252, %s255
      %p261 = scmp.eq.s32.totalorder %s28, 0
      %p262 = por %p260, %p261
      %p263 = scmp.ne.s32.totalorder %s252, %s255
      %p264 = scmp.eq.s32.totalorder %s33, 1
      %p265 = por %p263, %p264
      %p266 = scmp.ne.s32.totalorder %s255, %s256
      %p267 = scmp.eq.s32.totalorder %s33, 0
      %p268 = por %p266, %p267
      %p269 = scmp.ne.s32.totalorder %s255, %s256
      %p270 = scmp.eq.s32.totalorder %s34, 1
      %p271 = por %p269, %p270
      %p273 = scmp.ne.s32.totalorder %s256, %s272
      %p274 = scmp.eq.s32.totalorder %s34, 0
      %p275 = por %p273, %p274
      %s276 = ssub.s32 %s28, %s35
      %p277 = scmp.eq.s32.totalorder %s276, 0
      %s279 = sadd.s32 %s278, 1
      %s280 = scalar_select %p277, %s278, %s279
      %p283 = pneg %p277
      %p284 = scmp.eq.s32.totalorder %s28, 1
      %p285 = por %p283, %p284
      %p286 = scmp.ne.s32.totalorder %s278, %s281
      %p287 = scmp.eq.s32.totalorder %s28, 0
      %p288 = por %p286, %p287
      %p289 = scmp.ne.s32.totalorder %s278, %s281
      %p290 = scmp.eq.s32.totalorder %s33, 1
      %p291 = por %p289, %p290
      %p292 = scmp.ne.s32.totalorder %s281, %s282
      %p293 = scmp.eq.s32.totalorder %s33, 0
      %p294 = por %p292, %p293
      %p295 = scmp.ne.s32.totalorder %s281, %s282
      %p296 = scmp.eq.s32.totalorder %s34, 1
      %p297 = por %p295, %p296
      %p299 = scmp.ne.s32.totalorder %s282, %s298
      %p300 = scmp.eq.s32.totalorder %s34, 0
      %p301 = por %p299, %p300
      %p302 = scmp.le.s32.totalorder 1, %s28
      %p303 = scmp.lt.s32.totalorder %s28, 3
      %p304 = pnand %p302, %p303
      %p305 = pneg %p304
      // Predicated region
      $region9: #{tpu_custom_call.1} parent=5 // pred_check
        _
      $region10: #{tpu_custom_call.1} parent=5 // pred_check_branch
        %307 = sbr.rel (%p304) target = $region12
      $region11: #{tpu_custom_call.1} parent=5 // pred_region
        %s308 = ssub.s32 %s28, 1
        // Predicated region
        $region13: #{tpu_custom_call.1} parent=11 // pred_check
          %p309 = pneg %p101
        $region14: #{tpu_custom_call.1} parent=11 // pred_check_branch
          %311 = sbr.rel (%p309) target = $region16
        $region15: #{tpu_custom_call.1} parent=11 // pred_region
          %s313 = ssub.s32 512, 512
          %314 = vsyncadd [#allocation3], %s313
          %s315 = sshll.u32 [#allocation2], 4
          %s316 = int_to_ptr.vmem [resolvable:$true] %s315
          %321 = dma.hbm_to_vmem [thread:$0]  %s2, 512, %s316, [#allocation3], 128, 128, 8
        $region16: #{tpu_custom_call.1} parent=11 // pred_fallthru
          _
        // Predicated region
        $region17: #{tpu_custom_call.1} parent=11 // pred_check
          %p322 = pneg %p122
        $region18: #{tpu_custom_call.1} parent=11 // pred_check_branch
          %324 = sbr.rel (%p322) target = $region20
        $region19: #{tpu_custom_call.1} parent=11 // pred_region
          _
        $region20: #{tpu_custom_call.1} parent=11 // pred_fallthru
          _
        // Predicated region
        $region21: #{tpu_custom_call.1} parent=11 // pred_check
          %p325 = pneg %p143
        $region22: #{tpu_custom_call.1} parent=11 // pred_check_branch
          %327 = sbr.rel (%p325) target = $region24
        $region23: #{tpu_custom_call.1} parent=11 // pred_region
          %s329 = ssub.s32 2048, 2048
          %330 = vsyncadd [#allocation6], %s329
          %s331 = sshll.u32 [#allocation5], 4
          %s332 = int_to_ptr.vmem [resolvable:$true] %s331
          %337 = dma.hbm_to_vmem [thread:$0]  %s4, 2048, %s332, [#allocation6], 128, 128, 8
        $region24: #{tpu_custom_call.1} parent=11 // pred_fallthru
          _
        // Predicated region
        $region25: #{tpu_custom_call.1} parent=11 // pred_check
          %p338 = pneg %p164
        $region26: #{tpu_custom_call.1} parent=11 // pred_check_branch
          %340 = sbr.rel (%p338) target = $region28
        $region27: #{tpu_custom_call.1} parent=11 // pred_region
          _
        $region28: #{tpu_custom_call.1} parent=11 // pred_fallthru
          _
      $region12: #{tpu_custom_call.1} parent=5 // pred_fallthru
        _
      %p341 = scmp.lt.s32.totalorder %s28, 2
      // Predicated region
      $region29: #{tpu_custom_call.1} parent=5 // pred_check
        %p342 = pneg %p341
      $region30: #{tpu_custom_call.1} parent=5 // pred_check_branch
        %344 = sbr.rel (%p342) target = $region32
      $region31: #{tpu_custom_call.1} parent=5 // pred_region
        // Predicated region
        $region33: #{tpu_custom_call.1} parent=31 // pred_check
          %p345 = pneg %p48
        $region34: #{tpu_custom_call.1} parent=31 // pred_check_branch
          %347 = sbr.rel (%p345) target = $region36
        $region35: #{tpu_custom_call.1} parent=31 // pred_region
          %s348 = smul.u32 2, %s28
          %p349 = scmp.lt.s32.totalorder %s348, 3
          %s350 = scalar_select %p349, %s348, 3
          %s351 = smul.addr %s350, 8
          %s352 = scalar_lea.vmem %s0, %s351
          %s353 = smul.u32 2, %s28
        $region36: #{tpu_custom_call.1} parent=31 // pred_fallthru
          _
        // Predicated region
        $region37: #{tpu_custom_call.1} parent=31 // pred_check
          %p354 = pneg %p74
        $region38: #{tpu_custom_call.1} parent=31 // pred_check_branch
          %356 = sbr.rel (%p354) target = $region40
        $region39: #{tpu_custom_call.1} parent=31 // pred_region
          %s357 = smul.u32 2, %s28
          %p358 = scmp.lt.s32.totalorder %s357, 3
          %s359 = scalar_select %p358, %s357, 3
          %s360 = smul.addr %s359, 8
          %s361 = scalar_lea.vmem %s1, %s360
          %s362 = smul.u32 2, %s28
        $region40: #{tpu_custom_call.1} parent=31 // pred_fallthru
          _
      $region32: #{tpu_custom_call.1} parent=5 // pred_fallthru
        _
      %p363 = scmp.le.s32.totalorder 1, %s28
      %p364 = scmp.lt.s32.totalorder %s28, 3
      %p365 = pnand %p363, %p364
      %p366 = pneg %p365
      // Predicated region
      $region41: #{tpu_custom_call.1} parent=5 // pred_check
        _
      $region42: #{tpu_custom_call.1} parent=5 // pred_check_branch
        %368 = sbr.rel (%p365) target = $region44
      $region43: #{tpu_custom_call.1} parent=5 // pred_region
        %s369 = ssub.s32 %s28, 1
        // Predicated region
        $region45: #{tpu_custom_call.1} parent=43 // pred_check
          %p370 = pneg %p101
        $region46: #{tpu_custom_call.1} parent=43 // pred_check_branch
          %372 = sbr.rel (%p370) target = $region48
        $region47: #{tpu_custom_call.1} parent=43 // pred_region
          %373 = dma.done [#allocation3], 512
        $region48: #{tpu_custom_call.1} parent=43 // pred_fallthru
          _
        // Predicated region
        $region49: #{tpu_custom_call.1} parent=43 // pred_check
          %p374 = pneg %p143
        $region50: #{tpu_custom_call.1} parent=43 // pred_check_branch
          %376 = sbr.rel (%p374) target = $region52
        $region51: #{tpu_custom_call.1} parent=43 // pred_region
          %377 = dma.done [#allocation6], 2048
        $region52: #{tpu_custom_call.1} parent=43 // pred_fallthru
          _
        %s378 = smul.u32 2, %s33
        %p379 = scmp.lt.s32.totalorder %s378, 3
        %s380 = scalar_select %p379, %s378, 3
        %s381 = smul.addr %s380, 8
        %s382 = scalar_lea.vmem %s0, %s381
        %p383 = pneg %p54
        %p384 = pneg %p51
        %s385 = smul.u32 2, %s33
        %p386 = scmp.lt.s32.totalorder %s385, 3
        %s387 = scalar_select %p386, %s385, 3
        %s388 = smul.addr %s387, 8
        %s389 = scalar_lea.vmem %s1, %s388
        %p390 = pneg %p80
        %p391 = pneg %p77
        %p392 = pneg %p101
        %p393 = pneg %p98
        %p394 = pneg %p122
        %p395 = pneg %p119
        %p396 = pneg %p143
        %p397 = pneg %p140
        %p398 = pneg %p164
        %p399 = pneg %p161
        %p400 = pneg %p190
        %p401 = pneg %p187
        %s402 = sand.u32 %s177, 1
        %s403 = scalar_lea.sflag [#allocation4], %s402
        %s404 = sand.u32 %s177, 1
        %s405 = smul.addr %s404, 64
        %s406 = scalar_lea.vmem [#allocation7], %s405
        %p407 = pneg %p216
        %p408 = pneg %p213
        %s409 = sand.u32 %s33, 1
        %s410 = scalar_lea.sflag [#allocation9], %s409
        %s411 = sand.u32 %s203, 1
        %s412 = smul.addr %s411, 2
        %s413 = scalar_lea.vmem [#allocation8], %s412
        %p414 = pneg %p242
        %p415 = pneg %p239
        %s416 = sand.u32 %s33, 1
        %s417 = scalar_lea.sflag [#allocation9], %s416
        %s418 = sand.u32 %s229, 1
        %s419 = smul.addr %s418, 256
        %s420 = scalar_lea.vmem [#allocation10], %s419
        %p421 = pneg %p268
        %p422 = pneg %p265
        %s423 = sand.u32 %s33, 1
        %s424 = scalar_lea.sflag [#allocation12], %s423
        %s425 = sand.u32 %s255, 1
        %s426 = smul.addr %s425, 2
        %s427 = scalar_lea.vmem [#allocation11], %s426
        %p428 = pneg %p294
        %p429 = pneg %p291
        %s430 = sand.u32 %s33, 1
        %s431 = scalar_lea.sflag [#allocation12], %s430
        %s432 = sand.u32 %s281, 1
        %s433 = smul.addr %s432, 16
        %s434 = scalar_lea.vmem [#allocation13], %s433
        %s435 = smul.u32 2, %s33
        %p436 = scmp.lt.s32.totalorder %s435, 3
        %s437 = scalar_select %p436, %s435, 3
        %s438 = smul.addr %s437, 8
        %s439 = scalar_lea.vmem %s0, %s438
        %s440 = smul.u32 2, %s33
        %s441 = smul.u32 2, %s33
        %p442 = scmp.lt.s32.totalorder %s441, 3
        %s443 = scalar_select %p442, %s441, 3
        %s444 = smul.addr %s443, 8
        %s445 = scalar_lea.vmem %s1, %s444
        %s446 = smul.u32 2, %s33
        %s447 = smul.u32 2, %s33
        %s448 = smul.u32 2, %s33
        %s449 = smul.u32 2, %s33
        %s450 = smul.u32 2, %s33
        %s451 = smul.u32 2, %s33
        %v452 = vlaneseq
        %v453 = vand.u32 %v452, 127
        %vm454 = vcmp.lt.s32.totalorder %v453, 8
        %v455 = vld [vmem:[%s445] sm:$0xff]
        %v456 = vld [vmem:[%s439] sm:$0xff]
        %457 = vset.pattern.permute.xlu0 0
        %458 = vperm.xlu0 %457, %v456
        %v459 = vpop.permute.xlu0 %458
        %vm460 = vcmp.eq.s32.totalorder %v453, %v459
        %v461 = vsel %vm460, 1, 0
        %v462 = vcvt.s32.f32 %v461
        %v463 = vld [vmem:[#allocation2] sm:$0xff]
        %v464 = vld [vmem:[#allocation2 + $0x8] sm:$0xff]
        %v465 = vld [vmem:[#allocation2 + $0x10] sm:$0xff]
        %v466 = vld [vmem:[#allocation2 + $0x18] sm:$0xff]
        %467 = vst [vmem:[%s406] sm:$0xff] %v463
        %468 = vst [vmem:[%s406 + $0x8] sm:$0xff] %v464
        %469 = vst [vmem:[%s406 + $0x10] sm:$0xff] %v465
        %470 = vst [vmem:[%s406 + $0x18] sm:$0xff] %v466
        %v471 = vld [vmem:[%s3] sm:$0x1]
        %472 = vst [vmem:[%s413] sm:$0x1] %v471
        %v473 = vld [vmem:[#allocation5] sm:$0xff]
        %v474 = vld [vmem:[#allocation5 + $0x8] sm:$0xff]
        %v475 = vld [vmem:[#allocation5 + $0x10] sm:$0xff]
        %v476 = vld [vmem:[#allocation5 + $0x18] sm:$0xff]
        %v477 = vld [vmem:[#allocation5 + $0x20] sm:$0xff]
        %v478 = vld [vmem:[#allocation5 + $0x28] sm:$0xff]
        %v479 = vld [vmem:[#allocation5 + $0x30] sm:$0xff]
        %v480 = vld [vmem:[#allocation5 + $0x38] sm:$0xff]
        %v481 = vld [vmem:[#allocation5 + $0x40] sm:$0xff]
        %v482 = vld [vmem:[#allocation5 + $0x48] sm:$0xff]
        %v483 = vld [vmem:[#allocation5 + $0x50] sm:$0xff]
        %v484 = vld [vmem:[#allocation5 + $0x58] sm:$0xff]
        %v485 = vld [vmem:[#allocation5 + $0x60] sm:$0xff]
        %v486 = vld [vmem:[#allocation5 + $0x68] sm:$0xff]
        %v487 = vld [vmem:[#allocation5 + $0x70] sm:$0xff]
        %v488 = vld [vmem:[#allocation5 + $0x78] sm:$0xff]
        %489 = vst [vmem:[%s420] sm:$0xff] %v473
        %490 = vst [vmem:[%s420 + $0x8] sm:$0xff] %v474
        %491 = vst [vmem:[%s420 + $0x10] sm:$0xff] %v475
        %492 = vst [vmem:[%s420 + $0x18] sm:$0xff] %v476
        %493 = vst [vmem:[%s420 + $0x20] sm:$0xff] %v477
        %494 = vst [vmem:[%s420 + $0x28] sm:$0xff] %v478
        %495 = vst [vmem:[%s420 + $0x30] sm:$0xff] %v479
        %496 = vst [vmem:[%s420 + $0x38] sm:$0xff] %v480
        %497 = vst [vmem:[%s420 + $0x40] sm:$0xff] %v481
        %498 = vst [vmem:[%s420 + $0x48] sm:$0xff] %v482
        %499 = vst [vmem:[%s420 + $0x50] sm:$0xff] %v483
        %500 = vst [vmem:[%s420 + $0x58] sm:$0xff] %v484
        %501 = vst [vmem:[%s420 + $0x60] sm:$0xff] %v485
        %502 = vst [vmem:[%s420 + $0x68] sm:$0xff] %v486
        %503 = vst [vmem:[%s420 + $0x70] sm:$0xff] %v487
        %504 = vst [vmem:[%s420 + $0x78] sm:$0xff] %v488
        %v505 = vld [vmem:[%s5] sm:$0x1]
        %506 = vst [vmem:[%s427] sm:$0x1] %v505
        %v507 = vld [vmem:[%s406] sm:$0xff]
        %v508 = vld [vmem:[%s406 + $0x8] sm:$0xff]
        %v509 = vld [vmem:[%s406 + $0x10] sm:$0xff]
        %v510 = vld [vmem:[%s406 + $0x18] sm:$0xff]
        %v511 = vld [vmem:[%s420] sm:$0xff]
        %v512 = vld [vmem:[%s420 + $0x8] sm:$0xff]
        %v513 = vld [vmem:[%s420 + $0x10] sm:$0xff]
        %v514 = vld [vmem:[%s420 + $0x18] sm:$0xff]
        %v515 = vld [vmem:[%s420 + $0x20] sm:$0xff]
        %v516 = vld [vmem:[%s420 + $0x28] sm:$0xff]
        %v517 = vld [vmem:[%s420 + $0x30] sm:$0xff]
        %v518 = vld [vmem:[%s420 + $0x38] sm:$0xff]
        %v519 = vld [vmem:[%s420 + $0x40] sm:$0xff]
        %v520 = vld [vmem:[%s420 + $0x48] sm:$0xff]
        %v521 = vld [vmem:[%s420 + $0x50] sm:$0xff]
        %v522 = vld [vmem:[%s420 + $0x58] sm:$0xff]
        %v523 = vld [vmem:[%s420 + $0x60] sm:$0xff]
        %v524 = vld [vmem:[%s420 + $0x68] sm:$0xff]
        %v525 = vld [vmem:[%s420 + $0x70] sm:$0xff]
        %v526 = vld [vmem:[%s420 + $0x78] sm:$0xff]
        %v527 = vld [vmem:[%s413] sm:$0x1]
        %v529 = vlaneseq
        %v530 = vshrl.u32 %v529, 7
        %v531 = vsub.s32 0, %v530
        %v532 = vrot.slane %v527, %v531
        %vm534 = vcmask 261120
        %v536 = vsel %vm534, %v455, 0
        %538 = vmatprep.subr.mxu0 0.0
        %539 = vmatpush1.msra.mxu0 %v507
        %540 = vmatprep.subr.mxu0 0.0
        %541 = vmatpush1.msra.mxu0 %v508
        %542 = vmatprep.subr.mxu0 0.0
        %543 = vmatpush1.msra.mxu0 %v509
        %544 = vmatprep.subr.mxu0 0.0
        %545 = vmatpush1.msra.mxu0 %v510
        %546 = vmatprep.subr.mxu0 0.0
        %547 = vmatpush1.msra.mxu0 0.0
        %548 = vmatprep.subr.mxu0 0.0
        %549 = vmatpush1.msra.mxu0 0.0
        %550 = vmatprep.subr.mxu0 0.0
        %551 = vmatpush1.msra.mxu0 0.0
        %552 = vmatprep.subr.mxu0 0.0
        %553 = vmatpush1.msra.mxu0 0.0
        %554 = vmatprep.subr.mxu0 0.0
        %555 = vmatpush1.msra.mxu0 0.0
        %556 = vmatprep.subr.mxu0 0.0
        %557 = vmatpush1.msra.mxu0 0.0
        %558 = vmatprep.subr.mxu0 0.0
        %559 = vmatpush1.msra.mxu0 0.0
        %560 = vmatprep.subr.mxu0 0.0
        %561 = vmatpush1.msra.mxu0 0.0
        %562 = vmatprep.subr.mxu0 0.0
        %563 = vmatpush1.msra.mxu0 0.0
        %564 = vmatprep.subr.mxu0 0.0
        %565 = vmatpush1.msra.mxu0 0.0
        %566 = vmatprep.subr.mxu0 0.0
        %567 = vmatpush1.msra.mxu0 0.0
        %568 = vmatprep.subr.mxu0 0.0
        %569 = vmatpush1.msra.mxu0 0.0
        %570 = vmatprep.subr.mxu0 0.0
        %571 = vmatpush1.msra.mxu0 0.0
        %572 = vmatprep.subr.mxu0 0.0
        %573 = vmatpush1.msra.mxu0 0.0
        %574 = vmatprep.subr.mxu0 0.0
        %575 = vmatpush1.msra.mxu0 0.0
        %576 = vmatprep.subr.mxu0 0.0
        %577 = vmatpush1.msra.mxu0 0.0
        %578 = vmatprep.subr.mxu0 0.0
        %579 = vmatpush1.msra.mxu0 0.0
        %580 = vmatprep.subr.mxu0 0.0
        %581 = vmatpush1.msra.mxu0 0.0
        %582 = vmatprep.subr.mxu0 0.0
        %583 = vmatpush1.msra.mxu0 0.0
        %584 = vmatprep.subr.mxu0 0.0
        %585 = vmatpush1.msra.mxu0 0.0
        %586 = vmatprep.subr.mxu0 0.0
        %587 = vmatpush1.msra.mxu0 0.0
        %588 = vmatprep.subr.mxu0 0.0
        %589 = vmatpush1.msra.mxu0 0.0
        %590 = vmatprep.subr.mxu0 0.0
        %591 = vmatpush1.msra.mxu0 0.0
        %592 = vmatprep.subr.mxu0 0.0
        %593 = vmatpush1.msra.mxu0 0.0
        %594 = vmatprep.subr.mxu0 0.0
        %595 = vmatpush1.msra.mxu0 0.0
        %596 = vmatprep.subr.mxu0 0.0
        %597 = vmatpush1.msra.mxu0 0.0
        %598 = vmatprep.subr.mxu0 0.0
        %599 = vmatpush1.msra.mxu0 0.0
        %600 = vmatprep.subr.mxu0 0.0
        %601 = vmatpush1.msra.mxu0 0.0
        %602 = vmatprep.mubr.f32.mxu0 0.0
        %603 = vmatmul.mubr.f32.gmra.mrb[0].mxu0 %v536
        %v604 = vpop.f32.mrb[0].mxu0
        %v605 = vadd.f32 %v532, %v604
        %v606 = vpop.f32.mrb[0].mxu0
        %607 = vdwg.mxu0
        %v608 = vmax.f32 %v605, 0.0
        %v609 = vld [vmem:[%s427] sm:$0x1]
        %v611 = vlaneseq
        %v612 = vshrl.u32 %v611, 7
        %v613 = vsub.s32 0, %v612
        %v614 = vrot.slane %v609, %v613
        %616 = vmatprep.subr.mxu0 0.0
        %617 = vmatpush1.msra.mxu0 %v511
        %618 = vmatprep.subr.mxu0 0.0
        %619 = vmatpush1.msra.mxu0 %v512
        %620 = vmatprep.subr.mxu0 0.0
        %621 = vmatpush1.msra.mxu0 %v513
        %622 = vmatprep.subr.mxu0 0.0
        %623 = vmatpush1.msra.mxu0 %v514
        %624 = vmatprep.subr.mxu0 0.0
        %625 = vmatpush1.msra.mxu0 %v515
        %626 = vmatprep.subr.mxu0 0.0
        %627 = vmatpush1.msra.mxu0 %v516
        %628 = vmatprep.subr.mxu0 0.0
        %629 = vmatpush1.msra.mxu0 %v517
        %630 = vmatprep.subr.mxu0 0.0
        %631 = vmatpush1.msra.mxu0 %v518
        %632 = vmatprep.subr.mxu0 0.0
        %633 = vmatpush1.msra.mxu0 %v519
        %634 = vmatprep.subr.mxu0 0.0
        %635 = vmatpush1.msra.mxu0 %v520
        %636 = vmatprep.subr.mxu0 0.0
        %637 = vmatpush1.msra.mxu0 %v521
        %638 = vmatprep.subr.mxu0 0.0
        %639 = vmatpush1.msra.mxu0 %v522
        %640 = vmatprep.subr.mxu0 0.0
        %641 = vmatpush1.msra.mxu0 %v523
        %642 = vmatprep.subr.mxu0 0.0
        %643 = vmatpush1.msra.mxu0 %v524
        %644 = vmatprep.subr.mxu0 0.0
        %645 = vmatpush1.msra.mxu0 %v525
        %646 = vmatprep.subr.mxu0 0.0
        %647 = vmatpush1.msra.mxu0 %v526
        %648 = vmatprep.subr.mxu0 0.0
        %649 = vmatpush1.msra.mxu0 0.0
        %650 = vmatprep.subr.mxu0 0.0
        %651 = vmatpush1.msra.mxu0 0.0
        %652 = vmatprep.subr.mxu0 0.0
        %653 = vmatpush1.msra.mxu0 0.0
        %654 = vmatprep.subr.mxu0 0.0
        %655 = vmatpush1.msra.mxu0 0.0
        %656 = vmatprep.subr.mxu0 0.0
        %657 = vmatpush1.msra.mxu0 0.0
        %658 = vmatprep.subr.mxu0 0.0
        %659 = vmatpush1.msra.mxu0 0.0
        %660 = vmatprep.subr.mxu0 0.0
        %661 = vmatpush1.msra.mxu0 0.0
        %662 = vmatprep.subr.mxu0 0.0
        %663 = vmatpush1.msra.mxu0 0.0
        %664 = vmatprep.subr.mxu0 0.0
        %665 = vmatpush1.msra.mxu0 0.0
        %666 = vmatprep.subr.mxu0 0.0
        %667 = vmatpush1.msra.mxu0 0.0
        %668 = vmatprep.subr.mxu0 0.0
        %669 = vmatpush1.msra.mxu0 0.0
        %670 = vmatprep.subr.mxu0 0.0
        %671 = vmatpush1.msra.mxu0 0.0
        %672 = vmatprep.subr.mxu0 0.0
        %673 = vmatpush1.msra.mxu0 0.0
        %674 = vmatprep.subr.mxu0 0.0
        %675 = vmatpush1.msra.mxu0 0.0
        %676 = vmatprep.subr.mxu0 0.0
        %677 = vmatpush1.msra.mxu0 0.0
        %678 = vmatprep.subr.mxu0 0.0
        %679 = vmatpush1.msra.mxu0 0.0
        %680 = vmatprep.mubr.f32.mxu0 0.0
        %681 = vmatmul.mubr.f32.gmra.mrb[0].mxu0 %v608
        %v682 = vpop.f32.mrb[0].mxu0
        %v683 = vadd.f32 %v614, %v682
        %v684 = vpop.f32.mrb[0].mxu0
        %685 = vdwg.mxu0
        %v686 = vsel %vm454, %v683, -1e+30
        %687 = vmax.xlane.f32.xlu0 %v686
        %v688 = vpop.xlane.xlu0 %687
        %v689 = vsub.f32 %v686, %v688
        %v690 = vmul.f32 %v689, 1.442695
        %v691 = vpow.pop %v690
        %692 = vadd.xlane.f32.xlu0 %v691
        %v693 = vpop.xlane.xlu0 %692
        %v694 = vrcp.pop %v693
        %v695 = vmul.f32 %v691, %v694
        %v696 = vsub.f32 %v695, %v462
        %v697 = vmul.f32 %v696, 0.125
        %698 = vmatprep.subr.mxu0 0.0
        %699 = vmatpush1.xpose.msra.mxu0 %v511
        %700 = vmatprep.subr.mxu0 0.0
        %701 = vmatpush1.xpose.msra.mxu0 %v512
        %702 = vmatprep.subr.mxu0 0.0
        %703 = vmatpush1.xpose.msra.mxu0 %v513
        %704 = vmatprep.subr.mxu0 0.0
        %705 = vmatpush1.xpose.msra.mxu0 %v514
        %706 = vmatprep.subr.mxu0 0.0
        %707 = vmatpush1.xpose.msra.mxu0 %v515
        %708 = vmatprep.subr.mxu0 0.0
        %709 = vmatpush1.xpose.msra.mxu0 %v516
        %710 = vmatprep.subr.mxu0 0.0
        %711 = vmatpush1.xpose.msra.mxu0 %v517
        %712 = vmatprep.subr.mxu0 0.0
        %713 = vmatpush1.xpose.msra.mxu0 %v518
        %714 = vmatprep.subr.mxu0 0.0
        %715 = vmatpush1.xpose.msra.mxu0 %v519
        %716 = vmatprep.subr.mxu0 0.0
        %717 = vmatpush1.xpose.msra.mxu0 %v520
        %718 = vmatprep.subr.mxu0 0.0
        %719 = vmatpush1.xpose.msra.mxu0 %v521
        %720 = vmatprep.subr.mxu0 0.0
        %721 = vmatpush1.xpose.msra.mxu0 %v522
        %722 = vmatprep.subr.mxu0 0.0
        %723 = vmatpush1.xpose.msra.mxu0 %v523
        %724 = vmatprep.subr.mxu0 0.0
        %725 = vmatpush1.xpose.msra.mxu0 %v524
        %726 = vmatprep.subr.mxu0 0.0
        %727 = vmatpush1.xpose.msra.mxu0 %v525
        %728 = vmatprep.subr.mxu0 0.0
        %729 = vmatpush1.xpose.msra.mxu0 %v526
        %730 = vmatprep.subr.mxu0 0.0
        %731 = vmatpush1.xpose.msra.mxu0 0.0
        %732 = vmatprep.subr.mxu0 0.0
        %733 = vmatpush1.xpose.msra.mxu0 0.0
        %734 = vmatprep.subr.mxu0 0.0
        %735 = vmatpush1.xpose.msra.mxu0 0.0
        %736 = vmatprep.subr.mxu0 0.0
        %737 = vmatpush1.xpose.msra.mxu0 0.0
        %738 = vmatprep.subr.mxu0 0.0
        %739 = vmatpush1.xpose.msra.mxu0 0.0
        %740 = vmatprep.subr.mxu0 0.0
        %741 = vmatpush1.xpose.msra.mxu0 0.0
        %742 = vmatprep.subr.mxu0 0.0
        %743 = vmatpush1.xpose.msra.mxu0 0.0
        %744 = vmatprep.subr.mxu0 0.0
        %745 = vmatpush1.xpose.msra.mxu0 0.0
        %746 = vmatprep.subr.mxu0 0.0
        %747 = vmatpush1.xpose.msra.mxu0 0.0
        %748 = vmatprep.subr.mxu0 0.0
        %749 = vmatpush1.xpose.msra.mxu0 0.0
        %750 = vmatprep.subr.mxu0 0.0
        %751 = vmatpush1.xpose.msra.mxu0 0.0
        %752 = vmatprep.subr.mxu0 0.0
        %753 = vmatpush1.xpose.msra.mxu0 0.0
        %754 = vmatprep.subr.mxu0 0.0
        %755 = vmatpush1.xpose.msra.mxu0 0.0
        %756 = vmatprep.subr.mxu0 0.0
        %757 = vmatpush1.xpose.msra.mxu0 0.0
        %758 = vmatprep.subr.mxu0 0.0
        %759 = vmatpush1.xpose.msra.mxu0 0.0
        %760 = vmatprep.subr.mxu0 0.0
        %761 = vmatpush1.xpose.msra.mxu0 0.0
        %762 = vmatprep.mubr.f32.mxu0 0.0
        %763 = vmatmul.mubr.f32.gmra.mrb[0].mxu0 %v697
        %v764 = vpop.f32.mrb[0].mxu0
        %v765 = vadd.f32 0.0, %v764
        %v766 = vpop.f32.mrb[0].mxu0
        %767 = vdwg.mxu0
        %768 = vxpose.xlu0.b32.start [1/16] %v608, 128
        %769 = vxpose.xlu0.b32.cont [2/16] 0.0, 128
        %770 = vxpose.xlu0.b32.cont [3/16] 0.0, 128
        %771 = vxpose.xlu0.b32.cont [4/16] 0.0, 128
        %772 = vxpose.xlu0.b32.cont [5/16] 0.0, 128
        %773 = vxpose.xlu0.b32.cont [6/16] 0.0, 128
        %774 = vxpose.xlu0.b32.cont [7/16] 0.0, 128
        %775 = vxpose.xlu0.b32.cont [8/16] 0.0, 128
        %776 = vxpose.xlu0.b32.cont [9/16] 0.0, 128
        %777 = vxpose.xlu0.b32.cont [10/16] 0.0, 128
        %778 = vxpose.xlu0.b32.cont [11/16] 0.0, 128
        %779 = vxpose.xlu0.b32.cont [12/16] 0.0, 128
        %780 = vxpose.xlu0.b32.cont [13/16] 0.0, 128
        %781 = vxpose.xlu0.b32.cont [14/16] 0.0, 128
        %782 = vxpose.xlu0.b32.cont [15/16] 0.0, 128
        %783 = vxpose.xlu0.b32.end [16/16] 0.0, 128
        %v784 = vpop.trf.xlu0
        %v785 = vpop.trf.xlu0
        %v786 = vpop.trf.xlu0
        %v787 = vpop.trf.xlu0
        %v788 = vpop.trf.xlu0
        %v789 = vpop.trf.xlu0
        %v790 = vpop.trf.xlu0
        %v791 = vpop.trf.xlu0
        %v792 = vpop.trf.xlu0
        %v793 = vpop.trf.xlu0
        %v794 = vpop.trf.xlu0
        %v795 = vpop.trf.xlu0
        %v796 = vpop.trf.xlu0
        %v797 = vpop.trf.xlu0
        %v798 = vpop.trf.xlu0
        %v799 = vpop.trf.xlu0
        %vm800 = vcmask 64512
        %v802 = vsel %vm800, %v784, 0
        %v805 = vsel %vm800, %v785, 0
        %v808 = vsel %vm800, %v786, 0
        %v811 = vsel %vm800, %v787, 0
        %v814 = vsel %vm800, %v788, 0
        %v817 = vsel %vm800, %v789, 0
        %v820 = vsel %vm800, %v790, 0
        %v823 = vsel %vm800, %v791, 0
        %v826 = vsel %vm800, %v792, 0
        %v829 = vsel %vm800, %v793, 0
        %v832 = vsel %vm800, %v794, 0
        %v835 = vsel %vm800, %v795, 0
        %v838 = vsel %vm800, %v796, 0
        %v841 = vsel %vm800, %v797, 0
        %v844 = vsel %vm800, %v798, 0
        %v847 = vsel %vm800, %v799, 0
        %849 = vmatprep.subr.mxu0 0.0
        %850 = vmatpush1.msra.mxu0 %v697
        %851 = vmatprep.subr.mxu0 0.0
        %852 = vmatpush1.msra.mxu0 0.0
        %853 = vmatprep.subr.mxu0 0.0
        %854 = vmatpush1.msra.mxu0 0.0
        %855 = vmatprep.subr.mxu0 0.0
        %856 = vmatpush1.msra.mxu0 0.0
        %857 = vmatprep.subr.mxu0 0.0
        %858 = vmatpush1.msra.mxu0 0.0
        %859 = vmatprep.subr.mxu0 0.0
        %860 = vmatpush1.msra.mxu0 0.0
        %861 = vmatprep.subr.mxu0 0.0
        %862 = vmatpush1.msra.mxu0 0.0
        %863 = vmatprep.subr.mxu0 0.0
        %864 = vmatpush1.msra.mxu0 0.0
        %865 = vmatprep.subr.mxu0 0.0
        %866 = vmatpush1.msra.mxu0 0.0
        %867 = vmatprep.subr.mxu0 0.0
        %868 = vmatpush1.msra.mxu0 0.0
        %869 = vmatprep.subr.mxu0 0.0
        %870 = vmatpush1.msra.mxu0 0.0
        %871 = vmatprep.subr.mxu0 0.0
        %872 = vmatpush1.msra.mxu0 0.0
        %873 = vmatprep.subr.mxu0 0.0
        %874 = vmatpush1.msra.mxu0 0.0
        %875 = vmatprep.subr.mxu0 0.0
        %876 = vmatpush1.msra.mxu0 0.0
        %877 = vmatprep.subr.mxu0 0.0
        %878 = vmatpush1.msra.mxu0 0.0
        %879 = vmatprep.subr.mxu0 0.0
        %880 = vmatpush1.msra.mxu0 0.0
        %881 = vmatprep.subr.mxu0 0.0
        %882 = vmatpush1.msra.mxu0 0.0
        %883 = vmatprep.subr.mxu0 0.0
        %884 = vmatpush1.msra.mxu0 0.0
        %885 = vmatprep.subr.mxu0 0.0
        %886 = vmatpush1.msra.mxu0 0.0
        %887 = vmatprep.subr.mxu0 0.0
        %888 = vmatpush1.msra.mxu0 0.0
        %889 = vmatprep.subr.mxu0 0.0
        %890 = vmatpush1.msra.mxu0 0.0
        %891 = vmatprep.subr.mxu0 0.0
        %892 = vmatpush1.msra.mxu0 0.0
        %893 = vmatprep.subr.mxu0 0.0
        %894 = vmatpush1.msra.mxu0 0.0
        %895 = vmatprep.subr.mxu0 0.0
        %896 = vmatpush1.msra.mxu0 0.0
        %897 = vmatprep.subr.mxu0 0.0
        %898 = vmatpush1.msra.mxu0 0.0
        %899 = vmatprep.subr.mxu0 0.0
        %900 = vmatpush1.msra.mxu0 0.0
        %901 = vmatprep.subr.mxu0 0.0
        %902 = vmatpush1.msra.mxu0 0.0
        %903 = vmatprep.subr.mxu0 0.0
        %904 = vmatpush1.msra.mxu0 0.0
        %905 = vmatprep.subr.mxu0 0.0
        %906 = vmatpush1.msra.mxu0 0.0
        %907 = vmatprep.subr.mxu0 0.0
        %908 = vmatpush1.msra.mxu0 0.0
        %909 = vmatprep.subr.mxu0 0.0
        %910 = vmatpush1.msra.mxu0 0.0
        %911 = vmatprep.subr.mxu0 0.0
        %912 = vmatpush1.msra.mxu0 0.0
        %913 = vmatprep.mubr.f32.mxu0 0.0
        %914 = vmatmul.mubr.f32.gmra.mrb[0].mxu0 %v802
        %v915 = vpop.f32.mrb[0].mxu0
        %v916 = vadd.f32 0.0, %v915
        %v917 = vpop.f32.mrb[0].mxu0
        %918 = vmatprep.mubr.f32.mxu0 0.0
        %919 = vmatmul.mubr.f32.gmra.mrb[0].mxu0 %v805
        %v920 = vpop.f32.mrb[0].mxu0
        %v921 = vadd.f32 0.0, %v920
        %v922 = vpop.f32.mrb[0].mxu0
        %923 = vmatprep.mubr.f32.mxu0 0.0
        %924 = vmatmul.mubr.f32.gmra.mrb[0].mxu0 %v808
        %v925 = vpop.f32.mrb[0].mxu0
        %v926 = vadd.f32 0.0, %v925
        %v927 = vpop.f32.mrb[0].mxu0
        %928 = vmatprep.mubr.f32.mxu0 0.0
        %929 = vmatmul.mubr.f32.gmra.mrb[0].mxu0 %v811
        %v930 = vpop.f32.mrb[0].mxu0
        %v931 = vadd.f32 0.0, %v930
        %v932 = vpop.f32.mrb[0].mxu0
        %933 = vmatprep.mubr.f32.mxu0 0.0
        %934 = vmatmul.mubr.f32.gmra.mrb[0].mxu0 %v814
        %v935 = vpop.f32.mrb[0].mxu0
        %v936 = vadd.f32 0.0, %v935
        %v937 = vpop.f32.mrb[0].mxu0
        %938 = vmatprep.mubr.f32.mxu0 0.0
        %939 = vmatmul.mubr.f32.gmra.mrb[0].mxu0 %v817
        %v940 = vpop.f32.mrb[0].mxu0
        %v941 = vadd.f32 0.0, %v940
        %v942 = vpop.f32.mrb[0].mxu0
        %943 = vmatprep.mubr.f32.mxu0 0.0
        %944 = vmatmul.mubr.f32.gmra.mrb[0].mxu0 %v820
        %v945 = vpop.f32.mrb[0].mxu0
        %v946 = vadd.f32 0.0, %v945
        %v947 = vpop.f32.mrb[0].mxu0
        %948 = vmatprep.mubr.f32.mxu0 0.0
        %949 = vmatmul.mubr.f32.gmra.mrb[0].mxu0 %v823
        %v950 = vpop.f32.mrb[0].mxu0
        %v951 = vadd.f32 0.0, %v950
        %v952 = vpop.f32.mrb[0].mxu0
        %953 = vmatprep.mubr.f32.mxu0 0.0
        %954 = vmatmul.mubr.f32.gmra.mrb[0].mxu0 %v826
        %v955 = vpop.f32.mrb[0].mxu0
        %v956 = vadd.f32 0.0, %v955
        %v957 = vpop.f32.mrb[0].mxu0
        %958 = vmatprep.mubr.f32.mxu0 0.0
        %959 = vmatmul.mubr.f32.gmra.mrb[0].mxu0 %v829
        %v960 = vpop.f32.mrb[0].mxu0
        %v961 = vadd.f32 0.0, %v960
        %v962 = vpop.f32.mrb[0].mxu0
        %963 = vmatprep.mubr.f32.mxu0 0.0
        %964 = vmatmul.mubr.f32.gmra.mrb[0].mxu0 %v832
        %v965 = vpop.f32.mrb[0].mxu0
        %v966 = vadd.f32 0.0, %v965
        %v967 = vpop.f32.mrb[0].mxu0
        %968 = vmatprep.mubr.f32.mxu0 0.0
        %969 = vmatmul.mubr.f32.gmra.mrb[0].mxu0 %v835
        %v970 = vpop.f32.mrb[0].mxu0
        %v971 = vadd.f32 0.0, %v970
        %v972 = vpop.f32.mrb[0].mxu0
        %973 = vmatprep.mubr.f32.mxu0 0.0
        %974 = vmatmul.mubr.f32.gmra.mrb[0].mxu0 %v838
        %v975 = vpop.f32.mrb[0].mxu0
        %v976 = vadd.f32 0.0, %v975
        %v977 = vpop.f32.mrb[0].mxu0
        %978 = vmatprep.mubr.f32.mxu0 0.0
        %979 = vmatmul.mubr.f32.gmra.mrb[0].mxu0 %v841
        %v980 = vpop.f32.mrb[0].mxu0
        %v981 = vadd.f32 0.0, %v980
        %v982 = vpop.f32.mrb[0].mxu0
        %983 = vmatprep.mubr.f32.mxu0 0.0
        %984 = vmatmul.mubr.f32.gmra.mrb[0].mxu0 %v844
        %v985 = vpop.f32.mrb[0].mxu0
        %v986 = vadd.f32 0.0, %v985
        %v987 = vpop.f32.mrb[0].mxu0
        %988 = vmatprep.mubr.f32.mxu0 0.0
        %989 = vmatmul.mubr.f32.gmra.mrb[0].mxu0 %v847
        %v990 = vpop.f32.mrb[0].mxu0
        %v991 = vadd.f32 0.0, %v990
        %v992 = vpop.f32.mrb[0].mxu0
        %993 = vdwg.mxu0
        %v994 = vmul.f32 %v916, 0.1
        %v995 = vmul.f32 %v921, 0.1
        %v996 = vmul.f32 %v926, 0.1
        %v997 = vmul.f32 %v931, 0.1
        %v998 = vmul.f32 %v936, 0.1
        %v999 = vmul.f32 %v941, 0.1
        %v1000 = vmul.f32 %v946, 0.1
        %v1001 = vmul.f32 %v951, 0.1
        %v1002 = vmul.f32 %v956, 0.1
        %v1003 = vmul.f32 %v961, 0.1
        %v1004 = vmul.f32 %v966, 0.1
        %v1005 = vmul.f32 %v971, 0.1
        %v1006 = vmul.f32 %v976, 0.1
        %v1007 = vmul.f32 %v981, 0.1
        %v1008 = vmul.f32 %v986, 0.1
        %v1009 = vmul.f32 %v991, 0.1
        %v1010 = vsub.f32 %v511, %v994
        %v1011 = vsub.f32 %v512, %v995
        %v1012 = vsub.f32 %v513, %v996
        %v1013 = vsub.f32 %v514, %v997
        %v1014 = vsub.f32 %v515, %v998
        %v1015 = vsub.f32 %v516, %v999
        %v1016 = vsub.f32 %v517, %v1000
        %v1017 = vsub.f32 %v518, %v1001
        %v1018 = vsub.f32 %v519, %v1002
        %v1019 = vsub.f32 %v520, %v1003
        %v1020 = vsub.f32 %v521, %v1004
        %v1021 = vsub.f32 %v522, %v1005
        %v1022 = vsub.f32 %v523, %v1006
        %v1023 = vsub.f32 %v524, %v1007
        %v1024 = vsub.f32 %v525, %v1008
        %v1025 = vsub.f32 %v526, %v1009
        %1026 = vst [vmem:[%s420] sm:$0xff] %v1010
        %1027 = vst [vmem:[%s420 + $0x8] sm:$0xff] %v1011
        %1028 = vst [vmem:[%s420 + $0x10] sm:$0xff] %v1012
        %1029 = vst [vmem:[%s420 + $0x18] sm:$0xff] %v1013
        %1030 = vst [vmem:[%s420 + $0x20] sm:$0xff] %v1014
        %1031 = vst [vmem:[%s420 + $0x28] sm:$0xff] %v1015
        %1032 = vst [vmem:[%s420 + $0x30] sm:$0xff] %v1016
        %1033 = vst [vmem:[%s420 + $0x38] sm:$0xff] %v1017
        %1034 = vst [vmem:[%s420 + $0x40] sm:$0xff] %v1018
        %1035 = vst [vmem:[%s420 + $0x48] sm:$0xff] %v1019
        %1036 = vst [vmem:[%s420 + $0x50] sm:$0xff] %v1020
        %1037 = vst [vmem:[%s420 + $0x58] sm:$0xff] %v1021
        %1038 = vst [vmem:[%s420 + $0x60] sm:$0xff] %v1022
        %1039 = vst [vmem:[%s420 + $0x68] sm:$0xff] %v1023
        %1040 = vst [vmem:[%s420 + $0x70] sm:$0xff] %v1024
        %1041 = vst [vmem:[%s420 + $0x78] sm:$0xff] %v1025
        %v1042 = vld [vmem:[%s427] sm:$0x1]
        %v1043 = vrot.slane %v697, 4
        %v1044 = vadd.f32 %v697, %v1043
        %v1045 = vrot.slane %v1044, 2
        %v1046 = vadd.f32 %v1044, %v1045
        %v1047 = vrot.slane %v1046, 1
        %v1048 = vadd.f32 %v1046, %v1047
        %v1049 = vmul.f32 %v1048, 0.1
        %v1050 = vsub.f32 %v1042, %v1049
        %1051 = vst [vmem:[%s427] sm:$0x1] %v1050
        %vm1052 = vcmp.gt.f32.partialorder %v605, 0.0
        %v1053 = vsel %vm1052, %v765, 0.0
        %1054 = vxpose.xlu0.b32.start [1/16] %v455, 128
        %1055 = vxpose.xlu0.b32.cont [2/16] 0.0, 128
        %1056 = vxpose.xlu0.b32.cont [3/16] 0.0, 128
        %1057 = vxpose.xlu0.b32.cont [4/16] 0.0, 128
        %1058 = vxpose.xlu0.b32.cont [5/16] 0.0, 128
        %1059 = vxpose.xlu0.b32.cont [6/16] 0.0, 128
        %1060 = vxpose.xlu0.b32.cont [7/16] 0.0, 128
        %1061 = vxpose.xlu0.b32.cont [8/16] 0.0, 128
        %1062 = vxpose.xlu0.b32.cont [9/16] 0.0, 128
        %1063 = vxpose.xlu0.b32.cont [10/16] 0.0, 128
        %1064 = vxpose.xlu0.b32.cont [11/16] 0.0, 128
        %1065 = vxpose.xlu0.b32.cont [12/16] 0.0, 128
        %1066 = vxpose.xlu0.b32.cont [13/16] 0.0, 128
        %1067 = vxpose.xlu0.b32.cont [14/16] 0.0, 128
        %1068 = vxpose.xlu0.b32.cont [15/16] 0.0, 128
        %1069 = vxpose.xlu0.b32.end [16/16] 0.0, 128
        %v1070 = vpop.trf.xlu0
        %v1071 = vpop.trf.xlu0
        %v1072 = vpop.trf.xlu0
        %v1073 = vpop.trf.xlu0
        %v1074 = vpop.trf.xlu0
        %v1075 = vpop.trf.xlu0
        %v1076 = vpop.trf.xlu0
        %v1077 = vpop.trf.xlu0
        %v1078 = vpop.trf.xlu0
        %v1079 = vpop.trf.xlu0
        %v1080 = vpop.trf.xlu0
        %v1081 = vpop.trf.xlu0
        %v1082 = vpop.trf.xlu0
        %v1083 = vpop.trf.xlu0
        %v1084 = vpop.trf.xlu0
        %v1085 = vpop.trf.xlu0
        %v1087 = vsel %vm800, %v1070, 0
        %v1090 = vsel %vm800, %v1071, 0
        %v1093 = vsel %vm800, %v1072, 0
        %v1096 = vsel %vm800, %v1073, 0
        %1098 = vmatprep.subr.mxu0 0.0
        %1099 = vmatpush1.msra.mxu0 %v1053
        %1100 = vmatprep.subr.mxu0 0.0
        %1101 = vmatpush1.msra.mxu0 0.0
        %1102 = vmatprep.subr.mxu0 0.0
        %1103 = vmatpush1.msra.mxu0 0.0
        %1104 = vmatprep.subr.mxu0 0.0
        %1105 = vmatpush1.msra.mxu0 0.0
        %1106 = vmatprep.subr.mxu0 0.0
        %1107 = vmatpush1.msra.mxu0 0.0
        %1108 = vmatprep.subr.mxu0 0.0
        %1109 = vmatpush1.msra.mxu0 0.0
        %1110 = vmatprep.subr.mxu0 0.0
        %1111 = vmatpush1.msra.mxu0 0.0
        %1112 = vmatprep.subr.mxu0 0.0
        %1113 = vmatpush1.msra.mxu0 0.0
        %1114 = vmatprep.subr.mxu0 0.0
        %1115 = vmatpush1.msra.mxu0 0.0
        %1116 = vmatprep.subr.mxu0 0.0
        %1117 = vmatpush1.msra.mxu0 0.0
        %1118 = vmatprep.subr.mxu0 0.0
        %1119 = vmatpush1.msra.mxu0 0.0
        %1120 = vmatprep.subr.mxu0 0.0
        %1121 = vmatpush1.msra.mxu0 0.0
        %1122 = vmatprep.subr.mxu0 0.0
        %1123 = vmatpush1.msra.mxu0 0.0
        %1124 = vmatprep.subr.mxu0 0.0
        %1125 = vmatpush1.msra.mxu0 0.0
        %1126 = vmatprep.subr.mxu0 0.0
        %1127 = vmatpush1.msra.mxu0 0.0
        %1128 = vmatprep.subr.mxu0 0.0
        %1129 = vmatpush1.msra.mxu0 0.0
        %1130 = vmatprep.subr.mxu0 0.0
        %1131 = vmatpush1.msra.mxu0 0.0
        %1132 = vmatprep.subr.mxu0 0.0
        %1133 = vmatpush1.msra.mxu0 0.0
        %1134 = vmatprep.subr.mxu0 0.0
        %1135 = vmatpush1.msra.mxu0 0.0
        %1136 = vmatprep.subr.mxu0 0.0
        %1137 = vmatpush1.msra.mxu0 0.0
        %1138 = vmatprep.subr.mxu0 0.0
        %1139 = vmatpush1.msra.mxu0 0.0
        %1140 = vmatprep.subr.mxu0 0.0
        %1141 = vmatpush1.msra.mxu0 0.0
        %1142 = vmatprep.subr.mxu0 0.0
        %1143 = vmatpush1.msra.mxu0 0.0
        %1144 = vmatprep.subr.mxu0 0.0
        %1145 = vmatpush1.msra.mxu0 0.0
        %1146 = vmatprep.subr.mxu0 0.0
        %1147 = vmatpush1.msra.mxu0 0.0
        %1148 = vmatprep.subr.mxu0 0.0
        %1149 = vmatpush1.msra.mxu0 0.0
        %1150 = vmatprep.subr.mxu0 0.0
        %1151 = vmatpush1.msra.mxu0 0.0
        %1152 = vmatprep.subr.mxu0 0.0
        %1153 = vmatpush1.msra.mxu0 0.0
        %1154 = vmatprep.subr.mxu0 0.0
        %1155 = vmatpush1.msra.mxu0 0.0
        %1156 = vmatprep.subr.mxu0 0.0
        %1157 = vmatpush1.msra.mxu0 0.0
        %1158 = vmatprep.subr.mxu0 0.0
        %1159 = vmatpush1.msra.mxu0 0.0
        %1160 = vmatprep.subr.mxu0 0.0
        %1161 = vmatpush1.msra.mxu0 0.0
        %1162 = vmatprep.mubr.f32.mxu0 0.0
        %1163 = vmatmul.mubr.f32.gmra.mrb[0].mxu0 %v1087
        %v1164 = vpop.f32.mrb[0].mxu0
        %v1165 = vadd.f32 0.0, %v1164
        %v1166 = vpop.f32.mrb[0].mxu0
        %1167 = vmatprep.mubr.f32.mxu0 0.0
        %1168 = vmatmul.mubr.f32.gmra.mrb[0].mxu0 %v1090
        %v1169 = vpop.f32.mrb[0].mxu0
        %v1170 = vadd.f32 0.0, %v1169
        %v1171 = vpop.f32.mrb[0].mxu0
        %1172 = vmatprep.mubr.f32.mxu0 0.0
        %1173 = vmatmul.mubr.f32.gmra.mrb[0].mxu0 %v1093
        %v1174 = vpop.f32.mrb[0].mxu0
        %v1175 = vadd.f32 0.0, %v1174
        %v1176 = vpop.f32.mrb[0].mxu0
        %1177 = vmatprep.mubr.f32.mxu0 0.0
        %1178 = vmatmul.mubr.f32.gmra.mrb[0].mxu0 %v1096
        %v1179 = vpop.f32.mrb[0].mxu0
        %v1180 = vadd.f32 0.0, %v1179
        %v1181 = vpop.f32.mrb[0].mxu0
        %1182 = vdwg.mxu0
        %v1183 = vmul.f32 %v1165, 0.1
        %v1184 = vmul.f32 %v1170, 0.1
        %v1185 = vmul.f32 %v1175, 0.1
        %v1186 = vmul.f32 %v1180, 0.1
        %v1187 = vsub.f32 %v507, %v1183
        %v1188 = vsub.f32 %v508, %v1184
        %v1189 = vsub.f32 %v509, %v1185
        %v1190 = vsub.f32 %v510, %v1186
        %1191 = vst [vmem:[%s406] sm:$0xff] %v1187
        %1192 = vst [vmem:[%s406 + $0x8] sm:$0xff] %v1188
        %1193 = vst [vmem:[%s406 + $0x10] sm:$0xff] %v1189
        %1194 = vst [vmem:[%s406 + $0x18] sm:$0xff] %v1190
        %v1195 = vld [vmem:[%s413] sm:$0x1]
        %v1196 = vrot.slane %v1053, 4
        %v1197 = vadd.f32 %v1053, %v1196
        %v1198 = vrot.slane %v1197, 2
        %v1199 = vadd.f32 %v1197, %v1198
        %v1200 = vrot.slane %v1199, 1
        %v1201 = vadd.f32 %v1199, %v1200
        %v1202 = vmul.f32 %v1201, 0.1
        %v1203 = vsub.f32 %v1195, %v1202
        %1204 = vst [vmem:[%s413] sm:$0x1] %v1203
        %v1205 = vld [vmem:[%s406] sm:$0xff]
        %v1206 = vld [vmem:[%s406 + $0x8] sm:$0xff]
        %v1207 = vld [vmem:[%s406 + $0x10] sm:$0xff]
        %v1208 = vld [vmem:[%s406 + $0x18] sm:$0xff]
        %v1209 = vld [vmem:[%s420] sm:$0xff]
        %v1210 = vld [vmem:[%s420 + $0x8] sm:$0xff]
        %v1211 = vld [vmem:[%s420 + $0x10] sm:$0xff]
        %v1212 = vld [vmem:[%s420 + $0x18] sm:$0xff]
        %v1213 = vld [vmem:[%s420 + $0x20] sm:$0xff]
        %v1214 = vld [vmem:[%s420 + $0x28] sm:$0xff]
        %v1215 = vld [vmem:[%s420 + $0x30] sm:$0xff]
        %v1216 = vld [vmem:[%s420 + $0x38] sm:$0xff]
        %v1217 = vld [vmem:[%s420 + $0x40] sm:$0xff]
        %v1218 = vld [vmem:[%s420 + $0x48] sm:$0xff]
        %v1219 = vld [vmem:[%s420 + $0x50] sm:$0xff]
        %v1220 = vld [vmem:[%s420 + $0x58] sm:$0xff]
        %v1221 = vld [vmem:[%s420 + $0x60] sm:$0xff]
        %v1222 = vld [vmem:[%s420 + $0x68] sm:$0xff]
        %v1223 = vld [vmem:[%s420 + $0x70] sm:$0xff]
        %v1224 = vld [vmem:[%s420 + $0x78] sm:$0xff]
        %v1225 = vld [vmem:[%s413] sm:$0x1]
        %v1227 = vlaneseq
        %v1228 = vshrl.u32 %v1227, 7
        %v1229 = vsub.s32 0, %v1228
        %v1230 = vrot.slane %v1225, %v1229
        %1232 = vmatprep.subr.mxu0 0.0
        %1233 = vmatpush1.msra.mxu0 %v1205
        %1234 = vmatprep.subr.mxu0 0.0
        %1235 = vmatpush1.msra.mxu0 %v1206
        %1236 = vmatprep.subr.mxu0 0.0
        %1237 = vmatpush1.msra.mxu0 %v1207
        %1238 = vmatprep.subr.mxu0 0.0
        %1239 = vmatpush1.msra.mxu0 %v1208
        %1240 = vmatprep.subr.mxu0 0.0
        %1241 = vmatpush1.msra.mxu0 0.0
        %1242 = vmatprep.subr.mxu0 0.0
        %1243 = vmatpush1.msra.mxu0 0.0
        %1244 = vmatprep.subr.mxu0 0.0
        %1245 = vmatpush1.msra.mxu0 0.0
        %1246 = vmatprep.subr.mxu0 0.0
        %1247 = vmatpush1.msra.mxu0 0.0
        %1248 = vmatprep.subr.mxu0 0.0
        %1249 = vmatpush1.msra.mxu0 0.0
        %1250 = vmatprep.subr.mxu0 0.0
        %1251 = vmatpush1.msra.mxu0 0.0
        %1252 = vmatprep.subr.mxu0 0.0
        %1253 = vmatpush1.msra.mxu0 0.0
        %1254 = vmatprep.subr.mxu0 0.0
        %1255 = vmatpush1.msra.mxu0 0.0
        %1256 = vmatprep.subr.mxu0 0.0
        %1257 = vmatpush1.msra.mxu0 0.0
        %1258 = vmatprep.subr.mxu0 0.0
        %1259 = vmatpush1.msra.mxu0 0.0
        %1260 = vmatprep.subr.mxu0 0.0
        %1261 = vmatpush1.msra.mxu0 0.0
        %1262 = vmatprep.subr.mxu0 0.0
        %1263 = vmatpush1.msra.mxu0 0.0
        %1264 = vmatprep.subr.mxu0 0.0
        %1265 = vmatpush1.msra.mxu0 0.0
        %1266 = vmatprep.subr.mxu0 0.0
        %1267 = vmatpush1.msra.mxu0 0.0
        %1268 = vmatprep.subr.mxu0 0.0
        %1269 = vmatpush1.msra.mxu0 0.0
        %1270 = vmatprep.subr.mxu0 0.0
        %1271 = vmatpush1.msra.mxu0 0.0
        %1272 = vmatprep.subr.mxu0 0.0
        %1273 = vmatpush1.msra.mxu0 0.0
        %1274 = vmatprep.subr.mxu0 0.0
        %1275 = vmatpush1.msra.mxu0 0.0
        %1276 = vmatprep.subr.mxu0 0.0
        %1277 = vmatpush1.msra.mxu0 0.0
        %1278 = vmatprep.subr.mxu0 0.0
        %1279 = vmatpush1.msra.mxu0 0.0
        %1280 = vmatprep.subr.mxu0 0.0
        %1281 = vmatpush1.msra.mxu0 0.0
        %1282 = vmatprep.subr.mxu0 0.0
        %1283 = vmatpush1.msra.mxu0 0.0
        %1284 = vmatprep.subr.mxu0 0.0
        %1285 = vmatpush1.msra.mxu0 0.0
        %1286 = vmatprep.subr.mxu0 0.0
        %1287 = vmatpush1.msra.mxu0 0.0
        %1288 = vmatprep.subr.mxu0 0.0
        %1289 = vmatpush1.msra.mxu0 0.0
        %1290 = vmatprep.subr.mxu0 0.0
        %1291 = vmatpush1.msra.mxu0 0.0
        %1292 = vmatprep.subr.mxu0 0.0
        %1293 = vmatpush1.msra.mxu0 0.0
        %1294 = vmatprep.subr.mxu0 0.0
        %1295 = vmatpush1.msra.mxu0 0.0
        %1296 = vmatprep.mubr.f32.mxu0 0.0
        %1297 = vmatmul.mubr.f32.gmra.mrb[0].mxu0 %v536
        %v1298 = vpop.f32.mrb[0].mxu0
        %v1299 = vadd.f32 %v1230, %v1298
        %v1300 = vpop.f32.mrb[0].mxu0
        %1301 = vdwg.mxu0
        %v1302 = vmax.f32 %v1299, 0.0
        %v1303 = vld [vmem:[%s427] sm:$0x1]
        %v1305 = vlaneseq
        %v1306 = vshrl.u32 %v1305, 7
        %v1307 = vsub.s32 0, %v1306
        %v1308 = vrot.slane %v1303, %v1307
        %1310 = vmatprep.subr.mxu0 0.0
        %1311 = vmatpush1.msra.mxu0 %v1209
        %1312 = vmatprep.subr.mxu0 0.0
        %1313 = vmatpush1.msra.mxu0 %v1210
        %1314 = vmatprep.subr.mxu0 0.0
        %1315 = vmatpush1.msra.mxu0 %v1211
        %1316 = vmatprep.subr.mxu0 0.0
        %1317 = vmatpush1.msra.mxu0 %v1212
        %1318 = vmatprep.subr.mxu0 0.0
        %1319 = vmatpush1.msra.mxu0 %v1213
        %1320 = vmatprep.subr.mxu0 0.0
        %1321 = vmatpush1.msra.mxu0 %v1214
        %1322 = vmatprep.subr.mxu0 0.0
        %1323 = vmatpush1.msra.mxu0 %v1215
        %1324 = vmatprep.subr.mxu0 0.0
        %1325 = vmatpush1.msra.mxu0 %v1216
        %1326 = vmatprep.subr.mxu0 0.0
        %1327 = vmatpush1.msra.mxu0 %v1217
        %1328 = vmatprep.subr.mxu0 0.0
        %1329 = vmatpush1.msra.mxu0 %v1218
        %1330 = vmatprep.subr.mxu0 0.0
        %1331 = vmatpush1.msra.mxu0 %v1219
        %1332 = vmatprep.subr.mxu0 0.0
        %1333 = vmatpush1.msra.mxu0 %v1220
        %1334 = vmatprep.subr.mxu0 0.0
        %1335 = vmatpush1.msra.mxu0 %v1221
        %1336 = vmatprep.subr.mxu0 0.0
        %1337 = vmatpush1.msra.mxu0 %v1222
        %1338 = vmatprep.subr.mxu0 0.0
        %1339 = vmatpush1.msra.mxu0 %v1223
        %1340 = vmatprep.subr.mxu0 0.0
        %1341 = vmatpush1.msra.mxu0 %v1224
        %1342 = vmatprep.subr.mxu0 0.0
        %1343 = vmatpush1.msra.mxu0 0.0
        %1344 = vmatprep.subr.mxu0 0.0
        %1345 = vmatpush1.msra.mxu0 0.0
        %1346 = vmatprep.subr.mxu0 0.0
        %1347 = vmatpush1.msra.mxu0 0.0
        %1348 = vmatprep.subr.mxu0 0.0
        %1349 = vmatpush1.msra.mxu0 0.0
        %1350 = vmatprep.subr.mxu0 0.0
        %1351 = vmatpush1.msra.mxu0 0.0
        %1352 = vmatprep.subr.mxu0 0.0
        %1353 = vmatpush1.msra.mxu0 0.0
        %1354 = vmatprep.subr.mxu0 0.0
        %1355 = vmatpush1.msra.mxu0 0.0
        %1356 = vmatprep.subr.mxu0 0.0
        %1357 = vmatpush1.msra.mxu0 0.0
        %1358 = vmatprep.subr.mxu0 0.0
        %1359 = vmatpush1.msra.mxu0 0.0
        %1360 = vmatprep.subr.mxu0 0.0
        %1361 = vmatpush1.msra.mxu0 0.0
        %1362 = vmatprep.subr.mxu0 0.0
        %1363 = vmatpush1.msra.mxu0 0.0
        %1364 = vmatprep.subr.mxu0 0.0
        %1365 = vmatpush1.msra.mxu0 0.0
        %1366 = vmatprep.subr.mxu0 0.0
        %1367 = vmatpush1.msra.mxu0 0.0
        %1368 = vmatprep.subr.mxu0 0.0
        %1369 = vmatpush1.msra.mxu0 0.0
        %1370 = vmatprep.subr.mxu0 0.0
        %1371 = vmatpush1.msra.mxu0 0.0
        %1372 = vmatprep.subr.mxu0 0.0
        %1373 = vmatpush1.msra.mxu0 0.0
        %1374 = vmatprep.mubr.f32.mxu0 0.0
        %1375 = vmatmul.mubr.f32.gmra.mrb[0].mxu0 %v1302
        %v1376 = vpop.f32.mrb[0].mxu0
        %v1377 = vadd.f32 %v1308, %v1376
        %v1378 = vpop.f32.mrb[0].mxu0
        %1379 = vdwg.mxu0
        %v1380 = vsel %vm454, %v1377, -1e+30
        %1381 = vmax.xlane.f32.xlu0 %v1380
        %v1382 = vpop.xlane.xlu0 %1381
        %v1383 = vsub.f32 %v1380, %v1382
        %v1384 = vmul.f32 %v1383, 1.442695
        %v1385 = vpow.pop %v1384
        %1386 = vadd.xlane.f32.xlu0 %v1385
        %v1387 = vpop.xlane.xlu0 %1386
        %v1388 = vrcp.pop %v1387
        %v1389 = vmul.f32 %v1385, %v1388
        %v1390 = vsub.f32 %v1389, %v462
        %v1391 = vmul.f32 %v1390, 0.125
        %1392 = vmatprep.subr.mxu0 0.0
        %1393 = vmatpush1.xpose.msra.mxu0 %v1209
        %1394 = vmatprep.subr.mxu0 0.0
        %1395 = vmatpush1.xpose.msra.mxu0 %v1210
        %1396 = vmatprep.subr.mxu0 0.0
        %1397 = vmatpush1.xpose.msra.mxu0 %v1211
        %1398 = vmatprep.subr.mxu0 0.0
        %1399 = vmatpush1.xpose.msra.mxu0 %v1212
        %1400 = vmatprep.subr.mxu0 0.0
        %1401 = vmatpush1.xpose.msra.mxu0 %v1213
        %1402 = vmatprep.subr.mxu0 0.0
        %1403 = vmatpush1.xpose.msra.mxu0 %v1214
        %1404 = vmatprep.subr.mxu0 0.0
        %1405 = vmatpush1.xpose.msra.mxu0 %v1215
        %1406 = vmatprep.subr.mxu0 0.0
        %1407 = vmatpush1.xpose.msra.mxu0 %v1216
        %1408 = vmatprep.subr.mxu0 0.0
        %1409 = vmatpush1.xpose.msra.mxu0 %v1217
        %1410 = vmatprep.subr.mxu0 0.0
        %1411 = vmatpush1.xpose.msra.mxu0 %v1218
        %1412 = vmatprep.subr.mxu0 0.0
        %1413 = vmatpush1.xpose.msra.mxu0 %v1219
        %1414 = vmatprep.subr.mxu0 0.0
        %1415 = vmatpush1.xpose.msra.mxu0 %v1220
        %1416 = vmatprep.subr.mxu0 0.0
        %1417 = vmatpush1.xpose.msra.mxu0 %v1221
        %1418 = vmatprep.subr.mxu0 0.0
        %1419 = vmatpush1.xpose.msra.mxu0 %v1222
        %1420 = vmatprep.subr.mxu0 0.0
        %1421 = vmatpush1.xpose.msra.mxu0 %v1223
        %1422 = vmatprep.subr.mxu0 0.0
        %1423 = vmatpush1.xpose.msra.mxu0 %v1224
        %1424 = vmatprep.subr.mxu0 0.0
        %1425 = vmatpush1.xpose.msra.mxu0 0.0
        %1426 = vmatprep.subr.mxu0 0.0
        %1427 = vmatpush1.xpose.msra.mxu0 0.0
        %1428 = vmatprep.subr.mxu0 0.0
        %1429 = vmatpush1.xpose.msra.mxu0 0.0
        %1430 = vmatprep.subr.mxu0 0.0
        %1431 = vmatpush1.xpose.msra.mxu0 0.0
        %1432 = vmatprep.subr.mxu0 0.0
        %1433 = vmatpush1.xpose.msra.mxu0 0.0
        %1434 = vmatprep.subr.mxu0 0.0
        %1435 = vmatpush1.xpose.msra.mxu0 0.0
        %1436 = vmatprep.subr.mxu0 0.0
        %1437 = vmatpush1.xpose.msra.mxu0 0.0
        %1438 = vmatprep.subr.mxu0 0.0
        %1439 = vmatpush1.xpose.msra.mxu0 0.0
        %1440 = vmatprep.subr.mxu0 0.0
        %1441 = vmatpush1.xpose.msra.mxu0 0.0
        %1442 = vmatprep.subr.mxu0 0.0
        %1443 = vmatpush1.xpose.msra.mxu0 0.0
        %1444 = vmatprep.subr.mxu0 0.0
        %1445 = vmatpush1.xpose.msra.mxu0 0.0
        %1446 = vmatprep.subr.mxu0 0.0
        %1447 = vmatpush1.xpose.msra.mxu0 0.0
        %1448 = vmatprep.subr.mxu0 0.0
        %1449 = vmatpush1.xpose.msra.mxu0 0.0
        %1450 = vmatprep.subr.mxu0 0.0
        %1451 = vmatpush1.xpose.msra.mxu0 0.0
        %1452 = vmatprep.subr.mxu0 0.0
        %1453 = vmatpush1.xpose.msra.mxu0 0.0
        %1454 = vmatprep.subr.mxu0 0.0
        %1455 = vmatpush1.xpose.msra.mxu0 0.0
        %1456 = vmatprep.mubr.f32.mxu0 0.0
        %1457 = vmatmul.mubr.f32.gmra.mrb[0].mxu0 %v1391
        %v1458 = vpop.f32.mrb[0].mxu0
        %v1459 = vadd.f32 0.0, %v1458
        %v1460 = vpop.f32.mrb[0].mxu0
        %1461 = vdwg.mxu0
        %1462 = vxpose.xlu0.b32.start [1/16] %v1302, 128
        %1463 = vxpose.xlu0.b32.cont [2/16] 0.0, 128
        %1464 = vxpose.xlu0.b32.cont [3/16] 0.0, 128
        %1465 = vxpose.xlu0.b32.cont [4/16] 0.0, 128
        %1466 = vxpose.xlu0.b32.cont [5/16] 0.0, 128
        %1467 = vxpose.xlu0.b32.cont [6/16] 0.0, 128
        %1468 = vxpose.xlu0.b32.cont [7/16] 0.0, 128
        %1469 = vxpose.xlu0.b32.cont [8/16] 0.0, 128
        %1470 = vxpose.xlu0.b32.cont [9/16] 0.0, 128
        %1471 = vxpose.xlu0.b32.cont [10/16] 0.0, 128
        %1472 = vxpose.xlu0.b32.cont [11/16] 0.0, 128
        %1473 = vxpose.xlu0.b32.cont [12/16] 0.0, 128
        %1474 = vxpose.xlu0.b32.cont [13/16] 0.0, 128
        %1475 = vxpose.xlu0.b32.cont [14/16] 0.0, 128
        %1476 = vxpose.xlu0.b32.cont [15/16] 0.0, 128
        %1477 = vxpose.xlu0.b32.end [16/16] 0.0, 128
        %v1478 = vpop.trf.xlu0
        %v1479 = vpop.trf.xlu0
        %v1480 = vpop.trf.xlu0
        %v1481 = vpop.trf.xlu0
        %v1482 = vpop.trf.xlu0
        %v1483 = vpop.trf.xlu0
        %v1484 = vpop.trf.xlu0
        %v1485 = vpop.trf.xlu0
        %v1486 = vpop.trf.xlu0
        %v1487 = vpop.trf.xlu0
        %v1488 = vpop.trf.xlu0
        %v1489 = vpop.trf.xlu0
        %v1490 = vpop.trf.xlu0
        %v1491 = vpop.trf.xlu0
        %v1492 = vpop.trf.xlu0
        %v1493 = vpop.trf.xlu0
        %v1495 = vsel %vm800, %v1478, 0
        %v1498 = vsel %vm800, %v1479, 0
        %v1501 = vsel %vm800, %v1480, 0
        %v1504 = vsel %vm800, %v1481, 0
        %v1507 = vsel %vm800, %v1482, 0
        %v1510 = vsel %vm800, %v1483, 0
        %v1513 = vsel %vm800, %v1484, 0
        %v1516 = vsel %vm800, %v1485, 0
        %v1519 = vsel %vm800, %v1486, 0
        %v1522 = vsel %vm800, %v1487, 0
        %v1525 = vsel %vm800, %v1488, 0
        %v1528 = vsel %vm800, %v1489, 0
        %v1531 = vsel %vm800, %v1490, 0
        %v1534 = vsel %vm800, %v1491, 0
        %v1537 = vsel %vm800, %v1492, 0
        %v1540 = vsel %vm800, %v1493, 0
        %1542 = vmatprep.subr.mxu0 0.0
        %1543 = vmatpush1.msra.mxu0 %v1391
        %1544 = vmatprep.subr.mxu0 0.0
        %1545 = vmatpush1.msra.mxu0 0.0
        %1546 = vmatprep.subr.mxu0 0.0
        %1547 = vmatpush1.msra.mxu0 0.0
        %1548 = vmatprep.subr.mxu0 0.0
        %1549 = vmatpush1.msra.mxu0 0.0
        %1550 = vmatprep.subr.mxu0 0.0
        %1551 = vmatpush1.msra.mxu0 0.0
        %1552 = vmatprep.subr.mxu0 0.0
        %1553 = vmatpush1.msra.mxu0 0.0
        %1554 = vmatprep.subr.mxu0 0.0
        %1555 = vmatpush1.msra.mxu0 0.0
        %1556 = vmatprep.subr.mxu0 0.0
        %1557 = vmatpush1.msra.mxu0 0.0
        %1558 = vmatprep.subr.mxu0 0.0
        %1559 = vmatpush1.msra.mxu0 0.0
        %1560 = vmatprep.subr.mxu0 0.0
        %1561 = vmatpush1.msra.mxu0 0.0
        %1562 = vmatprep.subr.mxu0 0.0
        %1563 = vmatpush1.msra.mxu0 0.0
        %1564 = vmatprep.subr.mxu0 0.0
        %1565 = vmatpush1.msra.mxu0 0.0
        %1566 = vmatprep.subr.mxu0 0.0
        %1567 = vmatpush1.msra.mxu0 0.0
        %1568 = vmatprep.subr.mxu0 0.0
        %1569 = vmatpush1.msra.mxu0 0.0
        %1570 = vmatprep.subr.mxu0 0.0
        %1571 = vmatpush1.msra.mxu0 0.0
        %1572 = vmatprep.subr.mxu0 0.0
        %1573 = vmatpush1.msra.mxu0 0.0
        %1574 = vmatprep.subr.mxu0 0.0
        %1575 = vmatpush1.msra.mxu0 0.0
        %1576 = vmatprep.subr.mxu0 0.0
        %1577 = vmatpush1.msra.mxu0 0.0
        %1578 = vmatprep.subr.mxu0 0.0
        %1579 = vmatpush1.msra.mxu0 0.0
        %1580 = vmatprep.subr.mxu0 0.0
        %1581 = vmatpush1.msra.mxu0 0.0
        %1582 = vmatprep.subr.mxu0 0.0
        %1583 = vmatpush1.msra.mxu0 0.0
        %1584 = vmatprep.subr.mxu0 0.0
        %1585 = vmatpush1.msra.mxu0 0.0
        %1586 = vmatprep.subr.mxu0 0.0
        %1587 = vmatpush1.msra.mxu0 0.0
        %1588 = vmatprep.subr.mxu0 0.0
        %1589 = vmatpush1.msra.mxu0 0.0
        %1590 = vmatprep.subr.mxu0 0.0
        %1591 = vmatpush1.msra.mxu0 0.0
        %1592 = vmatprep.subr.mxu0 0.0
        %1593 = vmatpush1.msra.mxu0 0.0
        %1594 = vmatprep.subr.mxu0 0.0
        %1595 = vmatpush1.msra.mxu0 0.0
        %1596 = vmatprep.subr.mxu0 0.0
        %1597 = vmatpush1.msra.mxu0 0.0
        %1598 = vmatprep.subr.mxu0 0.0
        %1599 = vmatpush1.msra.mxu0 0.0
        %1600 = vmatprep.subr.mxu0 0.0
        %1601 = vmatpush1.msra.mxu0 0.0
        %1602 = vmatprep.subr.mxu0 0.0
        %1603 = vmatpush1.msra.mxu0 0.0
        %1604 = vmatprep.subr.mxu0 0.0
        %1605 = vmatpush1.msra.mxu0 0.0
        %1606 = vmatprep.mubr.f32.mxu0 0.0
        %1607 = vmatmul.mubr.f32.gmra.mrb[0].mxu0 %v1495
        %v1608 = vpop.f32.mrb[0].mxu0
        %v1609 = vadd.f32 0.0, %v1608
        %v1610 = vpop.f32.mrb[0].mxu0
        %1611 = vmatprep.mubr.f32.mxu0 0.0
        %1612 = vmatmul.mubr.f32.gmra.mrb[0].mxu0 %v1498
        %v1613 = vpop.f32.mrb[0].mxu0
        %v1614 = vadd.f32 0.0, %v1613
        %v1615 = vpop.f32.mrb[0].mxu0
        %1616 = vmatprep.mubr.f32.mxu0 0.0
        %1617 = vmatmul.mubr.f32.gmra.mrb[0].mxu0 %v1501
        %v1618 = vpop.f32.mrb[0].mxu0
        %v1619 = vadd.f32 0.0, %v1618
        %v1620 = vpop.f32.mrb[0].mxu0
        %1621 = vmatprep.mubr.f32.mxu0 0.0
        %1622 = vmatmul.mubr.f32.gmra.mrb[0].mxu0 %v1504
        %v1623 = vpop.f32.mrb[0].mxu0
        %v1624 = vadd.f32 0.0, %v1623
        %v1625 = vpop.f32.mrb[0].mxu0
        %1626 = vmatprep.mubr.f32.mxu0 0.0
        %1627 = vmatmul.mubr.f32.gmra.mrb[0].mxu0 %v1507
        %v1628 = vpop.f32.mrb[0].mxu0
        %v1629 = vadd.f32 0.0, %v1628
        %v1630 = vpop.f32.mrb[0].mxu0
        %1631 = vmatprep.mubr.f32.mxu0 0.0
        %1632 = vmatmul.mubr.f32.gmra.mrb[0].mxu0 %v1510
        %v1633 = vpop.f32.mrb[0].mxu0
        %v1634 = vadd.f32 0.0, %v1633
        %v1635 = vpop.f32.mrb[0].mxu0
        %1636 = vmatprep.mubr.f32.mxu0 0.0
        %1637 = vmatmul.mubr.f32.gmra.mrb[0].mxu0 %v1513
        %v1638 = vpop.f32.mrb[0].mxu0
        %v1639 = vadd.f32 0.0, %v1638
        %v1640 = vpop.f32.mrb[0].mxu0
        %1641 = vmatprep.mubr.f32.mxu0 0.0
        %1642 = vmatmul.mubr.f32.gmra.mrb[0].mxu0 %v1516
        %v1643 = vpop.f32.mrb[0].mxu0
        %v1644 = vadd.f32 0.0, %v1643
        %v1645 = vpop.f32.mrb[0].mxu0
        %1646 = vmatprep.mubr.f32.mxu0 0.0
        %1647 = vmatmul.mubr.f32.gmra.mrb[0].mxu0 %v1519
        %v1648 = vpop.f32.mrb[0].mxu0
        %v1649 = vadd.f32 0.0, %v1648
        %v1650 = vpop.f32.mrb[0].mxu0
        %1651 = vmatprep.mubr.f32.mxu0 0.0
        %1652 = vmatmul.mubr.f32.gmra.mrb[0].mxu0 %v1522
        %v1653 = vpop.f32.mrb[0].mxu0
        %v1654 = vadd.f32 0.0, %v1653
        %v1655 = vpop.f32.mrb[0].mxu0
        %1656 = vmatprep.mubr.f32.mxu0 0.0
        %1657 = vmatmul.mubr.f32.gmra.mrb[0].mxu0 %v1525
        %v1658 = vpop.f32.mrb[0].mxu0
        %v1659 = vadd.f32 0.0, %v1658
        %v1660 = vpop.f32.mrb[0].mxu0
        %1661 = vmatprep.mubr.f32.mxu0 0.0
        %1662 = vmatmul.mubr.f32.gmra.mrb[0].mxu0 %v1528
        %v1663 = vpop.f32.mrb[0].mxu0
        %v1664 = vadd.f32 0.0, %v1663
        %v1665 = vpop.f32.mrb[0].mxu0
        %1666 = vmatprep.mubr.f32.mxu0 0.0
        %1667 = vmatmul.mubr.f32.gmra.mrb[0].mxu0 %v1531
        %v1668 = vpop.f32.mrb[0].mxu0
        %v1669 = vadd.f32 0.0, %v1668
        %v1670 = vpop.f32.mrb[0].mxu0
        %1671 = vmatprep.mubr.f32.mxu0 0.0
        %1672 = vmatmul.mubr.f32.gmra.mrb[0].mxu0 %v1534
        %v1673 = vpop.f32.mrb[0].mxu0
        %v1674 = vadd.f32 0.0, %v1673
        %v1675 = vpop.f32.mrb[0].mxu0
        %1676 = vmatprep.mubr.f32.mxu0 0.0
        %1677 = vmatmul.mubr.f32.gmra.mrb[0].mxu0 %v1537
        %v1678 = vpop.f32.mrb[0].mxu0
        %v1679 = vadd.f32 0.0, %v1678
        %v1680 = vpop.f32.mrb[0].mxu0
        %1681 = vmatprep.mubr.f32.mxu0 0.0
        %1682 = vmatmul.mubr.f32.gmra.mrb[0].mxu0 %v1540
        %v1683 = vpop.f32.mrb[0].mxu0
        %v1684 = vadd.f32 0.0, %v1683
        %v1685 = vpop.f32.mrb[0].mxu0
        %1686 = vdwg.mxu0
        %v1687 = vmul.f32 %v1609, 0.1
        %v1688 = vmul.f32 %v1614, 0.1
        %v1689 = vmul.f32 %v1619, 0.1
        %v1690 = vmul.f32 %v1624, 0.1
        %v1691 = vmul.f32 %v1629, 0.1
        %v1692 = vmul.f32 %v1634, 0.1
        %v1693 = vmul.f32 %v1639, 0.1
        %v1694 = vmul.f32 %v1644, 0.1
        %v1695 = vmul.f32 %v1649, 0.1
        %v1696 = vmul.f32 %v1654, 0.1
        %v1697 = vmul.f32 %v1659, 0.1
        %v1698 = vmul.f32 %v1664, 0.1
        %v1699 = vmul.f32 %v1669, 0.1
        %v1700 = vmul.f32 %v1674, 0.1
        %v1701 = vmul.f32 %v1679, 0.1
        %v1702 = vmul.f32 %v1684, 0.1
        %v1703 = vsub.f32 %v1209, %v1687
        %v1704 = vsub.f32 %v1210, %v1688
        %v1705 = vsub.f32 %v1211, %v1689
        %v1706 = vsub.f32 %v1212, %v1690
        %v1707 = vsub.f32 %v1213, %v1691
        %v1708 = vsub.f32 %v1214, %v1692
        %v1709 = vsub.f32 %v1215, %v1693
        %v1710 = vsub.f32 %v1216, %v1694
        %v1711 = vsub.f32 %v1217, %v1695
        %v1712 = vsub.f32 %v1218, %v1696
        %v1713 = vsub.f32 %v1219, %v1697
        %v1714 = vsub.f32 %v1220, %v1698
        %v1715 = vsub.f32 %v1221, %v1699
        %v1716 = vsub.f32 %v1222, %v1700
        %v1717 = vsub.f32 %v1223, %v1701
        %v1718 = vsub.f32 %v1224, %v1702
        %1719 = vst [vmem:[%s420] sm:$0xff] %v1703
        %1720 = vst [vmem:[%s420 + $0x8] sm:$0xff] %v1704
        %1721 = vst [vmem:[%s420 + $0x10] sm:$0xff] %v1705
        %1722 = vst [vmem:[%s420 + $0x18] sm:$0xff] %v1706
        %1723 = vst [vmem:[%s420 + $0x20] sm:$0xff] %v1707
        %1724 = vst [vmem:[%s420 + $0x28] sm:$0xff] %v1708
        %1725 = vst [vmem:[%s420 + $0x30] sm:$0xff] %v1709
        %1726 = vst [vmem:[%s420 + $0x38] sm:$0xff] %v1710
        %1727 = vst [vmem:[%s420 + $0x40] sm:$0xff] %v1711
        %1728 = vst [vmem:[%s420 + $0x48] sm:$0xff] %v1712
        %1729 = vst [vmem:[%s420 + $0x50] sm:$0xff] %v1713
        %1730 = vst [vmem:[%s420 + $0x58] sm:$0xff] %v1714
        %1731 = vst [vmem:[%s420 + $0x60] sm:$0xff] %v1715
        %1732 = vst [vmem:[%s420 + $0x68] sm:$0xff] %v1716
        %1733 = vst [vmem:[%s420 + $0x70] sm:$0xff] %v1717
        %1734 = vst [vmem:[%s420 + $0x78] sm:$0xff] %v1718
        %v1735 = vld [vmem:[%s427] sm:$0x1]
        %v1736 = vrot.slane %v1391, 4
        %v1737 = vadd.f32 %v1391, %v1736
        %v1738 = vrot.slane %v1737, 2
        %v1739 = vadd.f32 %v1737, %v1738
        %v1740 = vrot.slane %v1739, 1
        %v1741 = vadd.f32 %v1739, %v1740
        %v1742 = vmul.f32 %v1741, 0.1
        %v1743 = vsub.f32 %v1735, %v1742
        %1744 = vst [vmem:[%s427] sm:$0x1] %v1743
        %vm1745 = vcmp.gt.f32.partialorder %v1299, 0.0
        %v1746 = vsel %vm1745, %v1459, 0.0
        %1747 = vmatprep.subr.mxu0 0.0
        %1748 = vmatpush1.msra.mxu0 %v1746
        %1749 = vmatprep.subr.mxu0 0.0
        %1750 = vmatpush1.msra.mxu0 0.0
        %1751 = vmatprep.subr.mxu0 0.0
        %1752 = vmatpush1.msra.mxu0 0.0
        %1753 = vmatprep.subr.mxu0 0.0
        %1754 = vmatpush1.msra.mxu0 0.0
        %1755 = vmatprep.subr.mxu0 0.0
        %1756 = vmatpush1.msra.mxu0 0.0
        %1757 = vmatprep.subr.mxu0 0.0
        %1758 = vmatpush1.msra.mxu0 0.0
        %1759 = vmatprep.subr.mxu0 0.0
        %1760 = vmatpush1.msra.mxu0 0.0
        %1761 = vmatprep.subr.mxu0 0.0
        %1762 = vmatpush1.msra.mxu0 0.0
        %1763 = vmatprep.subr.mxu0 0.0
        %1764 = vmatpush1.msra.mxu0 0.0
        %1765 = vmatprep.subr.mxu0 0.0
        %1766 = vmatpush1.msra.mxu0 0.0
        %1767 = vmatprep.subr.mxu0 0.0
        %1768 = vmatpush1.msra.mxu0 0.0
        %1769 = vmatprep.subr.mxu0 0.0
        %1770 = vmatpush1.msra.mxu0 0.0
        %1771 = vmatprep.subr.mxu0 0.0
        %1772 = vmatpush1.msra.mxu0 0.0
        %1773 = vmatprep.subr.mxu0 0.0
        %1774 = vmatpush1.msra.mxu0 0.0
        %1775 = vmatprep.subr.mxu0 0.0
        %1776 = vmatpush1.msra.mxu0 0.0
        %1777 = vmatprep.subr.mxu0 0.0
        %1778 = vmatpush1.msra.mxu0 0.0
        %1779 = vmatprep.subr.mxu0 0.0
        %1780 = vmatpush1.msra.mxu0 0.0
        %1781 = vmatprep.subr.mxu0 0.0
        %1782 = vmatpush1.msra.mxu0 0.0
        %1783 = vmatprep.subr.mxu0 0.0
        %1784 = vmatpush1.msra.mxu0 0.0
        %1785 = vmatprep.subr.mxu0 0.0
        %1786 = vmatpush1.msra.mxu0 0.0
        %1787 = vmatprep.subr.mxu0 0.0
        %1788 = vmatpush1.msra.mxu0 0.0
        %1789 = vmatprep.subr.mxu0 0.0
        %1790 = vmatpush1.msra.mxu0 0.0
        %1791 = vmatprep.subr.mxu0 0.0
        %1792 = vmatpush1.msra.mxu0 0.0
        %1793 = vmatprep.subr.mxu0 0.0
        %1794 = vmatpush1.msra.mxu0 0.0
        %1795 = vmatprep.subr.mxu0 0.0
        %1796 = vmatpush1.msra.mxu0 0.0
        %1797 = vmatprep.subr.mxu0 0.0
        %1798 = vmatpush1.msra.mxu0 0.0
        %1799 = vmatprep.subr.mxu0 0.0
        %1800 = vmatpush1.msra.mxu0 0.0
        %1801 = vmatprep.subr.mxu0 0.0
        %1802 = vmatpush1.msra.mxu0 0.0
        %1803 = vmatprep.subr.mxu0 0.0
        %1804 = vmatpush1.msra.mxu0 0.0
        %1805 = vmatprep.subr.mxu0 0.0
        %1806 = vmatpush1.msra.mxu0 0.0
        %1807 = vmatprep.subr.mxu0 0.0
        %1808 = vmatpush1.msra.mxu0 0.0
        %1809 = vmatprep.subr.mxu0 0.0
        %1810 = vmatpush1.msra.mxu0 0.0
        %1811 = vmatprep.mubr.f32.mxu0 0.0
        %1812 = vmatmul.mubr.f32.gmra.mrb[0].mxu0 %v1087
        %v1813 = vpop.f32.mrb[0].mxu0
        %v1814 = vadd.f32 0.0, %v1813
        %v1815 = vpop.f32.mrb[0].mxu0
        %1816 = vmatprep.mubr.f32.mxu0 0.0
        %1817 = vmatmul.mubr.f32.gmra.mrb[0].mxu0 %v1090
        %v1818 = vpop.f32.mrb[0].mxu0
        %v1819 = vadd.f32 0.0, %v1818
        %v1820 = vpop.f32.mrb[0].mxu0
        %1821 = vmatprep.mubr.f32.mxu0 0.0
        %1822 = vmatmul.mubr.f32.gmra.mrb[0].mxu0 %v1093
        %v1823 = vpop.f32.mrb[0].mxu0
        %v1824 = vadd.f32 0.0, %v1823
        %v1825 = vpop.f32.mrb[0].mxu0
        %1826 = vmatprep.mubr.f32.mxu0 0.0
        %1827 = vmatmul.mubr.f32.gmra.mrb[0].mxu0 %v1096
        %v1828 = vpop.f32.mrb[0].mxu0
        %v1829 = vadd.f32 0.0, %v1828
        %v1830 = vpop.f32.mrb[0].mxu0
        %1831 = vdwg.mxu0
        %v1832 = vmul.f32 %v1814, 0.1
        %v1833 = vmul.f32 %v1819, 0.1
        %v1834 = vmul.f32 %v1824, 0.1
        %v1835 = vmul.f32 %v1829, 0.1
        %v1836 = vsub.f32 %v1205, %v1832
        %v1837 = vsub.f32 %v1206, %v1833
        %v1838 = vsub.f32 %v1207, %v1834
        %v1839 = vsub.f32 %v1208, %v1835
        %1840 = vst [vmem:[%s406] sm:$0xff] %v1836
        %1841 = vst [vmem:[%s406 + $0x8] sm:$0xff] %v1837
        %1842 = vst [vmem:[%s406 + $0x10] sm:$0xff] %v1838
        %1843 = vst [vmem:[%s406 + $0x18] sm:$0xff] %v1839
        %v1844 = vld [vmem:[%s413] sm:$0x1]
        %v1845 = vrot.slane %v1746, 4
        %v1846 = vadd.f32 %v1746, %v1845
        %v1847 = vrot.slane %v1846, 2
        %v1848 = vadd.f32 %v1846, %v1847
        %v1849 = vrot.slane %v1848, 1
        %v1850 = vadd.f32 %v1848, %v1849
        %v1851 = vmul.f32 %v1850, 0.1
        %v1852 = vsub.f32 %v1844, %v1851
        %1853 = vst [vmem:[%s413] sm:$0x1] %v1852
        %v1854 = vld [vmem:[%s406] sm:$0xff]
        %v1855 = vld [vmem:[%s406 + $0x8] sm:$0xff]
        %v1856 = vld [vmem:[%s406 + $0x10] sm:$0xff]
        %v1857 = vld [vmem:[%s406 + $0x18] sm:$0xff]
        %v1858 = vld [vmem:[%s420] sm:$0xff]
        %v1859 = vld [vmem:[%s420 + $0x8] sm:$0xff]
        %v1860 = vld [vmem:[%s420 + $0x10] sm:$0xff]
        %v1861 = vld [vmem:[%s420 + $0x18] sm:$0xff]
        %v1862 = vld [vmem:[%s420 + $0x20] sm:$0xff]
        %v1863 = vld [vmem:[%s420 + $0x28] sm:$0xff]
        %v1864 = vld [vmem:[%s420 + $0x30] sm:$0xff]
        %v1865 = vld [vmem:[%s420 + $0x38] sm:$0xff]
        %v1866 = vld [vmem:[%s420 + $0x40] sm:$0xff]
        %v1867 = vld [vmem:[%s420 + $0x48] sm:$0xff]
        %v1868 = vld [vmem:[%s420 + $0x50] sm:$0xff]
        %v1869 = vld [vmem:[%s420 + $0x58] sm:$0xff]
        %v1870 = vld [vmem:[%s420 + $0x60] sm:$0xff]
        %v1871 = vld [vmem:[%s420 + $0x68] sm:$0xff]
        %v1872 = vld [vmem:[%s420 + $0x70] sm:$0xff]
        %v1873 = vld [vmem:[%s420 + $0x78] sm:$0xff]
        %v1874 = vld [vmem:[%s413] sm:$0x1]
        %v1876 = vlaneseq
        %v1877 = vshrl.u32 %v1876, 7
        %v1878 = vsub.s32 0, %v1877
        %v1879 = vrot.slane %v1874, %v1878
        %1881 = vmatprep.subr.mxu0 0.0
        %1882 = vmatpush1.msra.mxu0 %v1854
        %1883 = vmatprep.subr.mxu0 0.0
        %1884 = vmatpush1.msra.mxu0 %v1855
        %1885 = vmatprep.subr.mxu0 0.0
        %1886 = vmatpush1.msra.mxu0 %v1856
        %1887 = vmatprep.subr.mxu0 0.0
        %1888 = vmatpush1.msra.mxu0 %v1857
        %1889 = vmatprep.subr.mxu0 0.0
        %1890 = vmatpush1.msra.mxu0 0.0
        %1891 = vmatprep.subr.mxu0 0.0
        %1892 = vmatpush1.msra.mxu0 0.0
        %1893 = vmatprep.subr.mxu0 0.0
        %1894 = vmatpush1.msra.mxu0 0.0
        %1895 = vmatprep.subr.mxu0 0.0
        %1896 = vmatpush1.msra.mxu0 0.0
        %1897 = vmatprep.subr.mxu0 0.0
        %1898 = vmatpush1.msra.mxu0 0.0
        %1899 = vmatprep.subr.mxu0 0.0
        %1900 = vmatpush1.msra.mxu0 0.0
        %1901 = vmatprep.subr.mxu0 0.0
        %1902 = vmatpush1.msra.mxu0 0.0
        %1903 = vmatprep.subr.mxu0 0.0
        %1904 = vmatpush1.msra.mxu0 0.0
        %1905 = vmatprep.subr.mxu0 0.0
        %1906 = vmatpush1.msra.mxu0 0.0
        %1907 = vmatprep.subr.mxu0 0.0
        %1908 = vmatpush1.msra.mxu0 0.0
        %1909 = vmatprep.subr.mxu0 0.0
        %1910 = vmatpush1.msra.mxu0 0.0
        %1911 = vmatprep.subr.mxu0 0.0
        %1912 = vmatpush1.msra.mxu0 0.0
        %1913 = vmatprep.subr.mxu0 0.0
        %1914 = vmatpush1.msra.mxu0 0.0
        %1915 = vmatprep.subr.mxu0 0.0
        %1916 = vmatpush1.msra.mxu0 0.0
        %1917 = vmatprep.subr.mxu0 0.0
        %1918 = vmatpush1.msra.mxu0 0.0
        %1919 = vmatprep.subr.mxu0 0.0
        %1920 = vmatpush1.msra.mxu0 0.0
        %1921 = vmatprep.subr.mxu0 0.0
        %1922 = vmatpush1.msra.mxu0 0.0
        %1923 = vmatprep.subr.mxu0 0.0
        %1924 = vmatpush1.msra.mxu0 0.0
        %1925 = vmatprep.subr.mxu0 0.0
        %1926 = vmatpush1.msra.mxu0 0.0
        %1927 = vmatprep.subr.mxu0 0.0
        %1928 = vmatpush1.msra.mxu0 0.0
        %1929 = vmatprep.subr.mxu0 0.0
        %1930 = vmatpush1.msra.mxu0 0.0
        %1931 = vmatprep.subr.mxu0 0.0
        %1932 = vmatpush1.msra.mxu0 0.0
        %1933 = vmatprep.subr.mxu0 0.0
        %1934 = vmatpush1.msra.mxu0 0.0
        %1935 = vmatprep.subr.mxu0 0.0
        %1936 = vmatpush1.msra.mxu0 0.0
        %1937 = vmatprep.subr.mxu0 0.0
        %1938 = vmatpush1.msra.mxu0 0.0
        %1939 = vmatprep.subr.mxu0 0.0
        %1940 = vmatpush1.msra.mxu0 0.0
        %1941 = vmatprep.subr.mxu0 0.0
        %1942 = vmatpush1.msra.mxu0 0.0
        %1943 = vmatprep.subr.mxu0 0.0
        %1944 = vmatpush1.msra.mxu0 0.0
        %1945 = vmatprep.mubr.f32.mxu0 0.0
        %1946 = vmatmul.mubr.f32.gmra.mrb[0].mxu0 %v536
        %v1947 = vpop.f32.mrb[0].mxu0
        %v1948 = vadd.f32 %v1879, %v1947
        %v1949 = vpop.f32.mrb[0].mxu0
        %1950 = vdwg.mxu0
        %v1951 = vmax.f32 %v1948, 0.0
        %v1952 = vld [vmem:[%s427] sm:$0x1]
        %v1954 = vlaneseq
        %v1955 = vshrl.u32 %v1954, 7
        %v1956 = vsub.s32 0, %v1955
        %v1957 = vrot.slane %v1952, %v1956
        %1959 = vmatprep.subr.mxu0 0.0
        %1960 = vmatpush1.msra.mxu0 %v1858
        %1961 = vmatprep.subr.mxu0 0.0
        %1962 = vmatpush1.msra.mxu0 %v1859
        %1963 = vmatprep.subr.mxu0 0.0
        %1964 = vmatpush1.msra.mxu0 %v1860
        %1965 = vmatprep.subr.mxu0 0.0
        %1966 = vmatpush1.msra.mxu0 %v1861
        %1967 = vmatprep.subr.mxu0 0.0
        %1968 = vmatpush1.msra.mxu0 %v1862
        %1969 = vmatprep.subr.mxu0 0.0
        %1970 = vmatpush1.msra.mxu0 %v1863
        %1971 = vmatprep.subr.mxu0 0.0
        %1972 = vmatpush1.msra.mxu0 %v1864
        %1973 = vmatprep.subr.mxu0 0.0
        %1974 = vmatpush1.msra.mxu0 %v1865
        %1975 = vmatprep.subr.mxu0 0.0
        %1976 = vmatpush1.msra.mxu0 %v1866
        %1977 = vmatprep.subr.mxu0 0.0
        %1978 = vmatpush1.msra.mxu0 %v1867
        %1979 = vmatprep.subr.mxu0 0.0
        %1980 = vmatpush1.msra.mxu0 %v1868
        %1981 = vmatprep.subr.mxu0 0.0
        %1982 = vmatpush1.msra.mxu0 %v1869
        %1983 = vmatprep.subr.mxu0 0.0
        %1984 = vmatpush1.msra.mxu0 %v1870
        %1985 = vmatprep.subr.mxu0 0.0
        %1986 = vmatpush1.msra.mxu0 %v1871
        %1987 = vmatprep.subr.mxu0 0.0
        %1988 = vmatpush1.msra.mxu0 %v1872
        %1989 = vmatprep.subr.mxu0 0.0
        %1990 = vmatpush1.msra.mxu0 %v1873
        %1991 = vmatprep.subr.mxu0 0.0
        %1992 = vmatpush1.msra.mxu0 0.0
        %1993 = vmatprep.subr.mxu0 0.0
        %1994 = vmatpush1.msra.mxu0 0.0
        %1995 = vmatprep.subr.mxu0 0.0
        %1996 = vmatpush1.msra.mxu0 0.0
        %1997 = vmatprep.subr.mxu0 0.0
        %1998 = vmatpush1.msra.mxu0 0.0
        %1999 = vmatprep.subr.mxu0 0.0
        %2000 = vmatpush1.msra.mxu0 0.0
        %2001 = vmatprep.subr.mxu0 0.0
        %2002 = vmatpush1.msra.mxu0 0.0
        %2003 = vmatprep.subr.mxu0 0.0
        %2004 = vmatpush1.msra.mxu0 0.0
        %2005 = vmatprep.subr.mxu0 0.0
        %2006 = vmatpush1.msra.mxu0 0.0
        %2007 = vmatprep.subr.mxu0 0.0
        %2008 = vmatpush1.msra.mxu0 0.0
        %2009 = vmatprep.subr.mxu0 0.0
        %2010 = vmatpush1.msra.mxu0 0.0
        %2011 = vmatprep.subr.mxu0 0.0
        %2012 = vmatpush1.msra.mxu0 0.0
        %2013 = vmatprep.subr.mxu0 0.0
        %2014 = vmatpush1.msra.mxu0 0.0
        %2015 = vmatprep.subr.mxu0 0.0
        %2016 = vmatpush1.msra.mxu0 0.0
        %2017 = vmatprep.subr.mxu0 0.0
        %2018 = vmatpush1.msra.mxu0 0.0
        %2019 = vmatprep.subr.mxu0 0.0
        %2020 = vmatpush1.msra.mxu0 0.0
        %2021 = vmatprep.subr.mxu0 0.0
        %2022 = vmatpush1.msra.mxu0 0.0
        %2023 = vmatprep.mubr.f32.mxu0 0.0
        %2024 = vmatmul.mubr.f32.gmra.mrb[0].mxu0 %v1951
        %v2025 = vpop.f32.mrb[0].mxu0
        %v2026 = vadd.f32 %v1957, %v2025
        %v2027 = vpop.f32.mrb[0].mxu0
        %2028 = vdwg.mxu0
        %v2029 = vsel %vm454, %v2026, -1e+30
        %2030 = vmax.xlane.f32.xlu0 %v2029
        %v2031 = vpop.xlane.xlu0 %2030
        %v2032 = vsub.f32 %v2029, %v2031
        %v2033 = vmul.f32 %v2032, 1.442695
        %v2034 = vpow.pop %v2033
        %2035 = vadd.xlane.f32.xlu0 %v2034
        %v2036 = vpop.xlane.xlu0 %2035
        %v2037 = vrcp.pop %v2036
        %v2038 = vmul.f32 %v2034, %v2037
        %v2039 = vsub.f32 %v2038, %v462
        %v2040 = vmul.f32 %v2039, 0.125
        %2041 = vmatprep.subr.mxu0 0.0
        %2042 = vmatpush1.xpose.msra.mxu0 %v1858
        %2043 = vmatprep.subr.mxu0 0.0
        %2044 = vmatpush1.xpose.msra.mxu0 %v1859
        %2045 = vmatprep.subr.mxu0 0.0
        %2046 = vmatpush1.xpose.msra.mxu0 %v1860
        %2047 = vmatprep.subr.mxu0 0.0
        %2048 = vmatpush1.xpose.msra.mxu0 %v1861
        %2049 = vmatprep.subr.mxu0 0.0
        %2050 = vmatpush1.xpose.msra.mxu0 %v1862
        %2051 = vmatprep.subr.mxu0 0.0
        %2052 = vmatpush1.xpose.msra.mxu0 %v1863
        %2053 = vmatprep.subr.mxu0 0.0
        %2054 = vmatpush1.xpose.msra.mxu0 %v1864
        %2055 = vmatprep.subr.mxu0 0.0
        %2056 = vmatpush1.xpose.msra.mxu0 %v1865
        %2057 = vmatprep.subr.mxu0 0.0
        %2058 = vmatpush1.xpose.msra.mxu0 %v1866
        %2059 = vmatprep.subr.mxu0 0.0
        %2060 = vmatpush1.xpose.msra.mxu0 %v1867
        %2061 = vmatprep.subr.mxu0 0.0
        %2062 = vmatpush1.xpose.msra.mxu0 %v1868
        %2063 = vmatprep.subr.mxu0 0.0
        %2064 = vmatpush1.xpose.msra.mxu0 %v1869
        %2065 = vmatprep.subr.mxu0 0.0
        %2066 = vmatpush1.xpose.msra.mxu0 %v1870
        %2067 = vmatprep.subr.mxu0 0.0
        %2068 = vmatpush1.xpose.msra.mxu0 %v1871
        %2069 = vmatprep.subr.mxu0 0.0
        %2070 = vmatpush1.xpose.msra.mxu0 %v1872
        %2071 = vmatprep.subr.mxu0 0.0
        %2072 = vmatpush1.xpose.msra.mxu0 %v1873
        %2073 = vmatprep.subr.mxu0 0.0
        %2074 = vmatpush1.xpose.msra.mxu0 0.0
        %2075 = vmatprep.subr.mxu0 0.0
        %2076 = vmatpush1.xpose.msra.mxu0 0.0
        %2077 = vmatprep.subr.mxu0 0.0
        %2078 = vmatpush1.xpose.msra.mxu0 0.0
        %2079 = vmatprep.subr.mxu0 0.0
        %2080 = vmatpush1.xpose.msra.mxu0 0.0
        %2081 = vmatprep.subr.mxu0 0.0
        %2082 = vmatpush1.xpose.msra.mxu0 0.0
        %2083 = vmatprep.subr.mxu0 0.0
        %2084 = vmatpush1.xpose.msra.mxu0 0.0
        %2085 = vmatprep.subr.mxu0 0.0
        %2086 = vmatpush1.xpose.msra.mxu0 0.0
        %2087 = vmatprep.subr.mxu0 0.0
        %2088 = vmatpush1.xpose.msra.mxu0 0.0
        %2089 = vmatprep.subr.mxu0 0.0
        %2090 = vmatpush1.xpose.msra.mxu0 0.0
        %2091 = vmatprep.subr.mxu0 0.0
        %2092 = vmatpush1.xpose.msra.mxu0 0.0
        %2093 = vmatprep.subr.mxu0 0.0
        %2094 = vmatpush1.xpose.msra.mxu0 0.0
        %2095 = vmatprep.subr.mxu0 0.0
        %2096 = vmatpush1.xpose.msra.mxu0 0.0
        %2097 = vmatprep.subr.mxu0 0.0
        %2098 = vmatpush1.xpose.msra.mxu0 0.0
        %2099 = vmatprep.subr.mxu0 0.0
        %2100 = vmatpush1.xpose.msra.mxu0 0.0
        %2101 = vmatprep.subr.mxu0 0.0
        %2102 = vmatpush1.xpose.msra.mxu0 0.0
        %2103 = vmatprep.subr.mxu0 0.0
        %2104 = vmatpush1.xpose.msra.mxu0 0.0
        %2105 = vmatprep.mubr.f32.mxu0 0.0
        %2106 = vmatmul.mubr.f32.gmra.mrb[0].mxu0 %v2040
        %v2107 = vpop.f32.mrb[0].mxu0
        %v2108 = vadd.f32 0.0, %v2107
        %v2109 = vpop.f32.mrb[0].mxu0
        %2110 = vdwg.mxu0
        %2111 = vxpose.xlu0.b32.start [1/16] %v1951, 128
        %2112 = vxpose.xlu0.b32.cont [2/16] 0.0, 128
        %2113 = vxpose.xlu0.b32.cont [3/16] 0.0, 128
        %2114 = vxpose.xlu0.b32.cont [4/16] 0.0, 128
        %2115 = vxpose.xlu0.b32.cont [5/16] 0.0, 128
        %2116 = vxpose.xlu0.b32.cont [6/16] 0.0, 128
        %2117 = vxpose.xlu0.b32.cont [7/16] 0.0, 128
        %2118 = vxpose.xlu0.b32.cont [8/16] 0.0, 128
        %2119 = vxpose.xlu0.b32.cont [9/16] 0.0, 128
        %2120 = vxpose.xlu0.b32.cont [10/16] 0.0, 128
        %2121 = vxpose.xlu0.b32.cont [11/16] 0.0, 128
        %2122 = vxpose.xlu0.b32.cont [12/16] 0.0, 128
        %2123 = vxpose.xlu0.b32.cont [13/16] 0.0, 128
        %2124 = vxpose.xlu0.b32.cont [14/16] 0.0, 128
        %2125 = vxpose.xlu0.b32.cont [15/16] 0.0, 128
        %2126 = vxpose.xlu0.b32.end [16/16] 0.0, 128
        %v2127 = vpop.trf.xlu0
        %v2128 = vpop.trf.xlu0
        %v2129 = vpop.trf.xlu0
        %v2130 = vpop.trf.xlu0
        %v2131 = vpop.trf.xlu0
        %v2132 = vpop.trf.xlu0
        %v2133 = vpop.trf.xlu0
        %v2134 = vpop.trf.xlu0
        %v2135 = vpop.trf.xlu0
        %v2136 = vpop.trf.xlu0
        %v2137 = vpop.trf.xlu0
        %v2138 = vpop.trf.xlu0
        %v2139 = vpop.trf.xlu0
        %v2140 = vpop.trf.xlu0
        %v2141 = vpop.trf.xlu0
        %v2142 = vpop.trf.xlu0
        %v2144 = vsel %vm800, %v2127, 0
        %v2147 = vsel %vm800, %v2128, 0
        %v2150 = vsel %vm800, %v2129, 0
        %v2153 = vsel %vm800, %v2130, 0
        %v2156 = vsel %vm800, %v2131, 0
        %v2159 = vsel %vm800, %v2132, 0
        %v2162 = vsel %vm800, %v2133, 0
        %v2165 = vsel %vm800, %v2134, 0
        %v2168 = vsel %vm800, %v2135, 0
        %v2171 = vsel %vm800, %v2136, 0
        %v2174 = vsel %vm800, %v2137, 0
        %v2177 = vsel %vm800, %v2138, 0
        %v2180 = vsel %vm800, %v2139, 0
        %v2183 = vsel %vm800, %v2140, 0
        %v2186 = vsel %vm800, %v2141, 0
        %v2189 = vsel %vm800, %v2142, 0
        %2191 = vmatprep.subr.mxu0 0.0
        %2192 = vmatpush1.msra.mxu0 %v2040
        %2193 = vmatprep.subr.mxu0 0.0
        %2194 = vmatpush1.msra.mxu0 0.0
        %2195 = vmatprep.subr.mxu0 0.0
        %2196 = vmatpush1.msra.mxu0 0.0
        %2197 = vmatprep.subr.mxu0 0.0
        %2198 = vmatpush1.msra.mxu0 0.0
        %2199 = vmatprep.subr.mxu0 0.0
        %2200 = vmatpush1.msra.mxu0 0.0
        %2201 = vmatprep.subr.mxu0 0.0
        %2202 = vmatpush1.msra.mxu0 0.0
        %2203 = vmatprep.subr.mxu0 0.0
        %2204 = vmatpush1.msra.mxu0 0.0
        %2205 = vmatprep.subr.mxu0 0.0
        %2206 = vmatpush1.msra.mxu0 0.0
        %2207 = vmatprep.subr.mxu0 0.0
        %2208 = vmatpush1.msra.mxu0 0.0
        %2209 = vmatprep.subr.mxu0 0.0
        %2210 = vmatpush1.msra.mxu0 0.0
        %2211 = vmatprep.subr.mxu0 0.0
        %2212 = vmatpush1.msra.mxu0 0.0
        %2213 = vmatprep.subr.mxu0 0.0
        %2214 = vmatpush1.msra.mxu0 0.0
        %2215 = vmatprep.subr.mxu0 0.0
        %2216 = vmatpush1.msra.mxu0 0.0
        %2217 = vmatprep.subr.mxu0 0.0
        %2218 = vmatpush1.msra.mxu0 0.0
        %2219 = vmatprep.subr.mxu0 0.0
        %2220 = vmatpush1.msra.mxu0 0.0
        %2221 = vmatprep.subr.mxu0 0.0
        %2222 = vmatpush1.msra.mxu0 0.0
        %2223 = vmatprep.subr.mxu0 0.0
        %2224 = vmatpush1.msra.mxu0 0.0
        %2225 = vmatprep.subr.mxu0 0.0
        %2226 = vmatpush1.msra.mxu0 0.0
        %2227 = vmatprep.subr.mxu0 0.0
        %2228 = vmatpush1.msra.mxu0 0.0
        %2229 = vmatprep.subr.mxu0 0.0
        %2230 = vmatpush1.msra.mxu0 0.0
        %2231 = vmatprep.subr.mxu0 0.0
        %2232 = vmatpush1.msra.mxu0 0.0
        %2233 = vmatprep.subr.mxu0 0.0
        %2234 = vmatpush1.msra.mxu0 0.0
        %2235 = vmatprep.subr.mxu0 0.0
        %2236 = vmatpush1.msra.mxu0 0.0
        %2237 = vmatprep.subr.mxu0 0.0
        %2238 = vmatpush1.msra.mxu0 0.0
        %2239 = vmatprep.subr.mxu0 0.0
        %2240 = vmatpush1.msra.mxu0 0.0
        %2241 = vmatprep.subr.mxu0 0.0
        %2242 = vmatpush1.msra.mxu0 0.0
        %2243 = vmatprep.subr.mxu0 0.0
        %2244 = vmatpush1.msra.mxu0 0.0
        %2245 = vmatprep.subr.mxu0 0.0
        %2246 = vmatpush1.msra.mxu0 0.0
        %2247 = vmatprep.subr.mxu0 0.0
        %2248 = vmatpush1.msra.mxu0 0.0
        %2249 = vmatprep.subr.mxu0 0.0
        %2250 = vmatpush1.msra.mxu0 0.0
        %2251 = vmatprep.subr.mxu0 0.0
        %2252 = vmatpush1.msra.mxu0 0.0
        %2253 = vmatprep.subr.mxu0 0.0
        %2254 = vmatpush1.msra.mxu0 0.0
        %2255 = vmatprep.mubr.f32.mxu0 0.0
        %2256 = vmatmul.mubr.f32.gmra.mrb[0].mxu0 %v2144
        %v2257 = vpop.f32.mrb[0].mxu0
        %v2258 = vadd.f32 0.0, %v2257
        %v2259 = vpop.f32.mrb[0].mxu0
        %2260 = vmatprep.mubr.f32.mxu0 0.0
        %2261 = vmatmul.mubr.f32.gmra.mrb[0].mxu0 %v2147
        %v2262 = vpop.f32.mrb[0].mxu0
        %v2263 = vadd.f32 0.0, %v2262
        %v2264 = vpop.f32.mrb[0].mxu0
        %2265 = vmatprep.mubr.f32.mxu0 0.0
        %2266 = vmatmul.mubr.f32.gmra.mrb[0].mxu0 %v2150
        %v2267 = vpop.f32.mrb[0].mxu0
        %v2268 = vadd.f32 0.0, %v2267
        %v2269 = vpop.f32.mrb[0].mxu0
        %2270 = vmatprep.mubr.f32.mxu0 0.0
        %2271 = vmatmul.mubr.f32.gmra.mrb[0].mxu0 %v2153
        %v2272 = vpop.f32.mrb[0].mxu0
        %v2273 = vadd.f32 0.0, %v2272
        %v2274 = vpop.f32.mrb[0].mxu0
        %2275 = vmatprep.mubr.f32.mxu0 0.0
        %2276 = vmatmul.mubr.f32.gmra.mrb[0].mxu0 %v2156
        %v2277 = vpop.f32.mrb[0].mxu0
        %v2278 = vadd.f32 0.0, %v2277
        %v2279 = vpop.f32.mrb[0].mxu0
        %2280 = vmatprep.mubr.f32.mxu0 0.0
        %2281 = vmatmul.mubr.f32.gmra.mrb[0].mxu0 %v2159
        %v2282 = vpop.f32.mrb[0].mxu0
        %v2283 = vadd.f32 0.0, %v2282
        %v2284 = vpop.f32.mrb[0].mxu0
        %2285 = vmatprep.mubr.f32.mxu0 0.0
        %2286 = vmatmul.mubr.f32.gmra.mrb[0].mxu0 %v2162
        %v2287 = vpop.f32.mrb[0].mxu0
        %v2288 = vadd.f32 0.0, %v2287
        %v2289 = vpop.f32.mrb[0].mxu0
        %2290 = vmatprep.mubr.f32.mxu0 0.0
        %2291 = vmatmul.mubr.f32.gmra.mrb[0].mxu0 %v2165
        %v2292 = vpop.f32.mrb[0].mxu0
        %v2293 = vadd.f32 0.0, %v2292
        %v2294 = vpop.f32.mrb[0].mxu0
        %2295 = vmatprep.mubr.f32.mxu0 0.0
        %2296 = vmatmul.mubr.f32.gmra.mrb[0].mxu0 %v2168
        %v2297 = vpop.f32.mrb[0].mxu0
        %v2298 = vadd.f32 0.0, %v2297
        %v2299 = vpop.f32.mrb[0].mxu0
        %2300 = vmatprep.mubr.f32.mxu0 0.0
        %2301 = vmatmul.mubr.f32.gmra.mrb[0].mxu0 %v2171
        %v2302 = vpop.f32.mrb[0].mxu0
        %v2303 = vadd.f32 0.0, %v2302
        %v2304 = vpop.f32.mrb[0].mxu0
        %2305 = vmatprep.mubr.f32.mxu0 0.0
        %2306 = vmatmul.mubr.f32.gmra.mrb[0].mxu0 %v2174
        %v2307 = vpop.f32.mrb[0].mxu0
        %v2308 = vadd.f32 0.0, %v2307
        %v2309 = vpop.f32.mrb[0].mxu0
        %2310 = vmatprep.mubr.f32.mxu0 0.0
        %2311 = vmatmul.mubr.f32.gmra.mrb[0].mxu0 %v2177
        %v2312 = vpop.f32.mrb[0].mxu0
        %v2313 = vadd.f32 0.0, %v2312
        %v2314 = vpop.f32.mrb[0].mxu0
        %2315 = vmatprep.mubr.f32.mxu0 0.0
        %2316 = vmatmul.mubr.f32.gmra.mrb[0].mxu0 %v2180
        %v2317 = vpop.f32.mrb[0].mxu0
        %v2318 = vadd.f32 0.0, %v2317
        %v2319 = vpop.f32.mrb[0].mxu0
        %2320 = vmatprep.mubr.f32.mxu0 0.0
        %2321 = vmatmul.mubr.f32.gmra.mrb[0].mxu0 %v2183
        %v2322 = vpop.f32.mrb[0].mxu0
        %v2323 = vadd.f32 0.0, %v2322
        %v2324 = vpop.f32.mrb[0].mxu0
        %2325 = vmatprep.mubr.f32.mxu0 0.0
        %2326 = vmatmul.mubr.f32.gmra.mrb[0].mxu0 %v2186
        %v2327 = vpop.f32.mrb[0].mxu0
        %v2328 = vadd.f32 0.0, %v2327
        %v2329 = vpop.f32.mrb[0].mxu0
        %2330 = vmatprep.mubr.f32.mxu0 0.0
        %2331 = vmatmul.mubr.f32.gmra.mrb[0].mxu0 %v2189
        %v2332 = vpop.f32.mrb[0].mxu0
        %v2333 = vadd.f32 0.0, %v2332
        %v2334 = vpop.f32.mrb[0].mxu0
        %2335 = vdwg.mxu0
        %v2336 = vmul.f32 %v2258, 0.1
        %v2337 = vmul.f32 %v2263, 0.1
        %v2338 = vmul.f32 %v2268, 0.1
        %v2339 = vmul.f32 %v2273, 0.1
        %v2340 = vmul.f32 %v2278, 0.1
        %v2341 = vmul.f32 %v2283, 0.1
        %v2342 = vmul.f32 %v2288, 0.1
        %v2343 = vmul.f32 %v2293, 0.1
        %v2344 = vmul.f32 %v2298, 0.1
        %v2345 = vmul.f32 %v2303, 0.1
        %v2346 = vmul.f32 %v2308, 0.1
        %v2347 = vmul.f32 %v2313, 0.1
        %v2348 = vmul.f32 %v2318, 0.1
        %v2349 = vmul.f32 %v2323, 0.1
        %v2350 = vmul.f32 %v2328, 0.1
        %v2351 = vmul.f32 %v2333, 0.1
        %v2352 = vsub.f32 %v1858, %v2336
        %v2353 = vsub.f32 %v1859, %v2337
        %v2354 = vsub.f32 %v1860, %v2338
        %v2355 = vsub.f32 %v1861, %v2339
        %v2356 = vsub.f32 %v1862, %v2340
        %v2357 = vsub.f32 %v1863, %v2341
        %v2358 = vsub.f32 %v1864, %v2342
        %v2359 = vsub.f32 %v1865, %v2343
        %v2360 = vsub.f32 %v1866, %v2344
        %v2361 = vsub.f32 %v1867, %v2345
        %v2362 = vsub.f32 %v1868, %v2346
        %v2363 = vsub.f32 %v1869, %v2347
        %v2364 = vsub.f32 %v1870, %v2348
        %v2365 = vsub.f32 %v1871, %v2349
        %v2366 = vsub.f32 %v1872, %v2350
        %v2367 = vsub.f32 %v1873, %v2351
        %2368 = vst [vmem:[%s420] sm:$0xff] %v2352
        %2369 = vst [vmem:[%s420 + $0x8] sm:$0xff] %v2353
        %2370 = vst [vmem:[%s420 + $0x10] sm:$0xff] %v2354
        %2371 = vst [vmem:[%s420 + $0x18] sm:$0xff] %v2355
        %2372 = vst [vmem:[%s420 + $0x20] sm:$0xff] %v2356
        %2373 = vst [vmem:[%s420 + $0x28] sm:$0xff] %v2357
        %2374 = vst [vmem:[%s420 + $0x30] sm:$0xff] %v2358
        %2375 = vst [vmem:[%s420 + $0x38] sm:$0xff] %v2359
        %2376 = vst [vmem:[%s420 + $0x40] sm:$0xff] %v2360
        %2377 = vst [vmem:[%s420 + $0x48] sm:$0xff] %v2361
        %2378 = vst [vmem:[%s420 + $0x50] sm:$0xff] %v2362
        %2379 = vst [vmem:[%s420 + $0x58] sm:$0xff] %v2363
        %2380 = vst [vmem:[%s420 + $0x60] sm:$0xff] %v2364
        %2381 = vst [vmem:[%s420 + $0x68] sm:$0xff] %v2365
        %2382 = vst [vmem:[%s420 + $0x70] sm:$0xff] %v2366
        %2383 = vst [vmem:[%s420 + $0x78] sm:$0xff] %v2367
        %v2384 = vld [vmem:[%s427] sm:$0x1]
        %v2385 = vrot.slane %v2040, 4
        %v2386 = vadd.f32 %v2040, %v2385
        %v2387 = vrot.slane %v2386, 2
        %v2388 = vadd.f32 %v2386, %v2387
        %v2389 = vrot.slane %v2388, 1
        %v2390 = vadd.f32 %v2388, %v2389
        %v2391 = vmul.f32 %v2390, 0.1
        %v2392 = vsub.f32 %v2384, %v2391
        %2393 = vst [vmem:[%s427] sm:$0x1] %v2392
        %vm2394 = vcmp.gt.f32.partialorder %v1948, 0.0
        %v2395 = vsel %vm2394, %v2108, 0.0
        %2396 = vmatprep.subr.mxu0 0.0
        %2397 = vmatpush1.msra.mxu0 %v2395
        %2398 = vmatprep.subr.mxu0 0.0
        %2399 = vmatpush1.msra.mxu0 0.0
        %2400 = vmatprep.subr.mxu0 0.0
        %2401 = vmatpush1.msra.mxu0 0.0
        %2402 = vmatprep.subr.mxu0 0.0
        %2403 = vmatpush1.msra.mxu0 0.0
        %2404 = vmatprep.subr.mxu0 0.0
        %2405 = vmatpush1.msra.mxu0 0.0
        %2406 = vmatprep.subr.mxu0 0.0
        %2407 = vmatpush1.msra.mxu0 0.0
        %2408 = vmatprep.subr.mxu0 0.0
        %2409 = vmatpush1.msra.mxu0 0.0
        %2410 = vmatprep.subr.mxu0 0.0
        %2411 = vmatpush1.msra.mxu0 0.0
        %2412 = vmatprep.subr.mxu0 0.0
        %2413 = vmatpush1.msra.mxu0 0.0
        %2414 = vmatprep.subr.mxu0 0.0
        %2415 = vmatpush1.msra.mxu0 0.0
        %2416 = vmatprep.subr.mxu0 0.0
        %2417 = vmatpush1.msra.mxu0 0.0
        %2418 = vmatprep.subr.mxu0 0.0
        %2419 = vmatpush1.msra.mxu0 0.0
        %2420 = vmatprep.subr.mxu0 0.0
        %2421 = vmatpush1.msra.mxu0 0.0
        %2422 = vmatprep.subr.mxu0 0.0
        %2423 = vmatpush1.msra.mxu0 0.0
        %2424 = vmatprep.subr.mxu0 0.0
        %2425 = vmatpush1.msra.mxu0 0.0
        %2426 = vmatprep.subr.mxu0 0.0
        %2427 = vmatpush1.msra.mxu0 0.0
        %2428 = vmatprep.subr.mxu0 0.0
        %2429 = vmatpush1.msra.mxu0 0.0
        %2430 = vmatprep.subr.mxu0 0.0
        %2431 = vmatpush1.msra.mxu0 0.0
        %2432 = vmatprep.subr.mxu0 0.0
        %2433 = vmatpush1.msra.mxu0 0.0
        %2434 = vmatprep.subr.mxu0 0.0
        %2435 = vmatpush1.msra.mxu0 0.0
        %2436 = vmatprep.subr.mxu0 0.0
        %2437 = vmatpush1.msra.mxu0 0.0
        %2438 = vmatprep.subr.mxu0 0.0
        %2439 = vmatpush1.msra.mxu0 0.0
        %2440 = vmatprep.subr.mxu0 0.0
        %2441 = vmatpush1.msra.mxu0 0.0
        %2442 = vmatprep.subr.mxu0 0.0
        %2443 = vmatpush1.msra.mxu0 0.0
        %2444 = vmatprep.subr.mxu0 0.0
        %2445 = vmatpush1.msra.mxu0 0.0
        %2446 = vmatprep.subr.mxu0 0.0
        %2447 = vmatpush1.msra.mxu0 0.0
        %2448 = vmatprep.subr.mxu0 0.0
        %2449 = vmatpush1.msra.mxu0 0.0
        %2450 = vmatprep.subr.mxu0 0.0
        %2451 = vmatpush1.msra.mxu0 0.0
        %2452 = vmatprep.subr.mxu0 0.0
        %2453 = vmatpush1.msra.mxu0 0.0
        %2454 = vmatprep.subr.mxu0 0.0
        %2455 = vmatpush1.msra.mxu0 0.0
        %2456 = vmatprep.subr.mxu0 0.0
        %2457 = vmatpush1.msra.mxu0 0.0
        %2458 = vmatprep.subr.mxu0 0.0
        %2459 = vmatpush1.msra.mxu0 0.0
        %2460 = vmatprep.mubr.f32.mxu0 0.0
        %2461 = vmatmul.mubr.f32.gmra.mrb[0].mxu0 %v1087
        %v2462 = vpop.f32.mrb[0].mxu0
        %v2463 = vadd.f32 0.0, %v2462
        %v2464 = vpop.f32.mrb[0].mxu0
        %2465 = vmatprep.mubr.f32.mxu0 0.0
        %2466 = vmatmul.mubr.f32.gmra.mrb[0].mxu0 %v1090
        %v2467 = vpop.f32.mrb[0].mxu0
        %v2468 = vadd.f32 0.0, %v2467
        %v2469 = vpop.f32.mrb[0].mxu0
        %2470 = vmatprep.mubr.f32.mxu0 0.0
        %2471 = vmatmul.mubr.f32.gmra.mrb[0].mxu0 %v1093
        %v2472 = vpop.f32.mrb[0].mxu0
        %v2473 = vadd.f32 0.0, %v2472
        %v2474 = vpop.f32.mrb[0].mxu0
        %2475 = vmatprep.mubr.f32.mxu0 0.0
        %2476 = vmatmul.mubr.f32.gmra.mrb[0].mxu0 %v1096
        %v2477 = vpop.f32.mrb[0].mxu0
        %v2478 = vadd.f32 0.0, %v2477
        %v2479 = vpop.f32.mrb[0].mxu0
        %2480 = vdwg.mxu0
        %v2481 = vmul.f32 %v2463, 0.1
        %v2482 = vmul.f32 %v2468, 0.1
        %v2483 = vmul.f32 %v2473, 0.1
        %v2484 = vmul.f32 %v2478, 0.1
        %v2485 = vsub.f32 %v1854, %v2481
        %v2486 = vsub.f32 %v1855, %v2482
        %v2487 = vsub.f32 %v1856, %v2483
        %v2488 = vsub.f32 %v1857, %v2484
        %2489 = vst [vmem:[%s406] sm:$0xff] %v2485
        %2490 = vst [vmem:[%s406 + $0x8] sm:$0xff] %v2486
        %2491 = vst [vmem:[%s406 + $0x10] sm:$0xff] %v2487
        %2492 = vst [vmem:[%s406 + $0x18] sm:$0xff] %v2488
        %v2493 = vld [vmem:[%s413] sm:$0x1]
        %v2494 = vrot.slane %v2395, 4
        %v2495 = vadd.f32 %v2395, %v2494
        %v2496 = vrot.slane %v2495, 2
        %v2497 = vadd.f32 %v2495, %v2496
        %v2498 = vrot.slane %v2497, 1
        %v2499 = vadd.f32 %v2497, %v2498
        %v2500 = vmul.f32 %v2499, 0.1
        %v2501 = vsub.f32 %v2493, %v2500
        %2502 = vst [vmem:[%s413] sm:$0x1] %v2501
        %v2503 = vld [vmem:[%s406] sm:$0xff]
        %v2504 = vld [vmem:[%s406 + $0x8] sm:$0xff]
        %v2505 = vld [vmem:[%s406 + $0x10] sm:$0xff]
        %v2506 = vld [vmem:[%s406 + $0x18] sm:$0xff]
        %v2507 = vld [vmem:[%s413] sm:$0x1]
        %v2509 = vlaneseq
        %v2510 = vshrl.u32 %v2509, 7
        %v2511 = vsub.s32 0, %v2510
        %v2512 = vrot.slane %v2507, %v2511
        %2514 = vmatprep.subr.mxu0 0.0
        %2515 = vmatpush1.msra.mxu0 %v2503
        %2516 = vmatprep.subr.mxu0 0.0
        %2517 = vmatpush1.msra.mxu0 %v2504
        %2518 = vmatprep.subr.mxu0 0.0
        %2519 = vmatpush1.msra.mxu0 %v2505
        %2520 = vmatprep.subr.mxu0 0.0
        %2521 = vmatpush1.msra.mxu0 %v2506
        %2522 = vmatprep.subr.mxu0 0.0
        %2523 = vmatpush1.msra.mxu0 0.0
        %2524 = vmatprep.subr.mxu0 0.0
        %2525 = vmatpush1.msra.mxu0 0.0
        %2526 = vmatprep.subr.mxu0 0.0
        %2527 = vmatpush1.msra.mxu0 0.0
        %2528 = vmatprep.subr.mxu0 0.0
        %2529 = vmatpush1.msra.mxu0 0.0
        %2530 = vmatprep.subr.mxu0 0.0
        %2531 = vmatpush1.msra.mxu0 0.0
        %2532 = vmatprep.subr.mxu0 0.0
        %2533 = vmatpush1.msra.mxu0 0.0
        %2534 = vmatprep.subr.mxu0 0.0
        %2535 = vmatpush1.msra.mxu0 0.0
        %2536 = vmatprep.subr.mxu0 0.0
        %2537 = vmatpush1.msra.mxu0 0.0
        %2538 = vmatprep.subr.mxu0 0.0
        %2539 = vmatpush1.msra.mxu0 0.0
        %2540 = vmatprep.subr.mxu0 0.0
        %2541 = vmatpush1.msra.mxu0 0.0
        %2542 = vmatprep.subr.mxu0 0.0
        %2543 = vmatpush1.msra.mxu0 0.0
        %2544 = vmatprep.subr.mxu0 0.0
        %2545 = vmatpush1.msra.mxu0 0.0
        %2546 = vmatprep.subr.mxu0 0.0
        %2547 = vmatpush1.msra.mxu0 0.0
        %2548 = vmatprep.subr.mxu0 0.0
        %2549 = vmatpush1.msra.mxu0 0.0
        %2550 = vmatprep.subr.mxu0 0.0
        %2551 = vmatpush1.msra.mxu0 0.0
        %2552 = vmatprep.subr.mxu0 0.0
        %2553 = vmatpush1.msra.mxu0 0.0
        %2554 = vmatprep.subr.mxu0 0.0
        %2555 = vmatpush1.msra.mxu0 0.0
        %2556 = vmatprep.subr.mxu0 0.0
        %2557 = vmatpush1.msra.mxu0 0.0
        %2558 = vmatprep.subr.mxu0 0.0
        %2559 = vmatpush1.msra.mxu0 0.0
        %2560 = vmatprep.subr.mxu0 0.0
        %2561 = vmatpush1.msra.mxu0 0.0
        %2562 = vmatprep.subr.mxu0 0.0
        %2563 = vmatpush1.msra.mxu0 0.0
        %2564 = vmatprep.subr.mxu0 0.0
        %2565 = vmatpush1.msra.mxu0 0.0
        %2566 = vmatprep.subr.mxu0 0.0
        %2567 = vmatpush1.msra.mxu0 0.0
        %2568 = vmatprep.subr.mxu0 0.0
        %2569 = vmatpush1.msra.mxu0 0.0
        %2570 = vmatprep.subr.mxu0 0.0
        %2571 = vmatpush1.msra.mxu0 0.0
        %2572 = vmatprep.subr.mxu0 0.0
        %2573 = vmatpush1.msra.mxu0 0.0
        %2574 = vmatprep.subr.mxu0 0.0
        %2575 = vmatpush1.msra.mxu0 0.0
        %2576 = vmatprep.subr.mxu0 0.0
        %2577 = vmatpush1.msra.mxu0 0.0
        %2578 = vmatprep.mubr.f32.mxu0 0.0
        %2579 = vmatmul.mubr.f32.gmra.mrb[0].mxu0 %v536
        %v2580 = vpop.f32.mrb[0].mxu0
        %v2581 = vadd.f32 %v2512, %v2580
        %v2582 = vpop.f32.mrb[0].mxu0
        %2583 = vdwg.mxu0
        %v2584 = vmax.f32 %v2581, 0.0
        %v2585 = vld [vmem:[%s420] sm:$0xff]
        %v2586 = vld [vmem:[%s420 + $0x8] sm:$0xff]
        %v2587 = vld [vmem:[%s420 + $0x10] sm:$0xff]
        %v2588 = vld [vmem:[%s420 + $0x18] sm:$0xff]
        %v2589 = vld [vmem:[%s420 + $0x20] sm:$0xff]
        %v2590 = vld [vmem:[%s420 + $0x28] sm:$0xff]
        %v2591 = vld [vmem:[%s420 + $0x30] sm:$0xff]
        %v2592 = vld [vmem:[%s420 + $0x38] sm:$0xff]
        %v2593 = vld [vmem:[%s420 + $0x40] sm:$0xff]
        %v2594 = vld [vmem:[%s420 + $0x48] sm:$0xff]
        %v2595 = vld [vmem:[%s420 + $0x50] sm:$0xff]
        %v2596 = vld [vmem:[%s420 + $0x58] sm:$0xff]
        %v2597 = vld [vmem:[%s420 + $0x60] sm:$0xff]
        %v2598 = vld [vmem:[%s420 + $0x68] sm:$0xff]
        %v2599 = vld [vmem:[%s420 + $0x70] sm:$0xff]
        %v2600 = vld [vmem:[%s420 + $0x78] sm:$0xff]
        %v2601 = vld [vmem:[%s427] sm:$0x1]
        %v2603 = vlaneseq
        %v2604 = vshrl.u32 %v2603, 7
        %v2605 = vsub.s32 0, %v2604
        %v2606 = vrot.slane %v2601, %v2605
        %2608 = vmatprep.subr.mxu0 0.0
        %2609 = vmatpush1.msra.mxu0 %v2585
        %2610 = vmatprep.subr.mxu0 0.0
        %2611 = vmatpush1.msra.mxu0 %v2586
        %2612 = vmatprep.subr.mxu0 0.0
        %2613 = vmatpush1.msra.mxu0 %v2587
        %2614 = vmatprep.subr.mxu0 0.0
        %2615 = vmatpush1.msra.mxu0 %v2588
        %2616 = vmatprep.subr.mxu0 0.0
        %2617 = vmatpush1.msra.mxu0 %v2589
        %2618 = vmatprep.subr.mxu0 0.0
        %2619 = vmatpush1.msra.mxu0 %v2590
        %2620 = vmatprep.subr.mxu0 0.0
        %2621 = vmatpush1.msra.mxu0 %v2591
        %2622 = vmatprep.subr.mxu0 0.0
        %2623 = vmatpush1.msra.mxu0 %v2592
        %2624 = vmatprep.subr.mxu0 0.0
        %2625 = vmatpush1.msra.mxu0 %v2593
        %2626 = vmatprep.subr.mxu0 0.0
        %2627 = vmatpush1.msra.mxu0 %v2594
        %2628 = vmatprep.subr.mxu0 0.0
        %2629 = vmatpush1.msra.mxu0 %v2595
        %2630 = vmatprep.subr.mxu0 0.0
        %2631 = vmatpush1.msra.mxu0 %v2596
        %2632 = vmatprep.subr.mxu0 0.0
        %2633 = vmatpush1.msra.mxu0 %v2597
        %2634 = vmatprep.subr.mxu0 0.0
        %2635 = vmatpush1.msra.mxu0 %v2598
        %2636 = vmatprep.subr.mxu0 0.0
        %2637 = vmatpush1.msra.mxu0 %v2599
        %2638 = vmatprep.subr.mxu0 0.0
        %2639 = vmatpush1.msra.mxu0 %v2600
        %2640 = vmatprep.subr.mxu0 0.0
        %2641 = vmatpush1.msra.mxu0 0.0
        %2642 = vmatprep.subr.mxu0 0.0
        %2643 = vmatpush1.msra.mxu0 0.0
        %2644 = vmatprep.subr.mxu0 0.0
        %2645 = vmatpush1.msra.mxu0 0.0
        %2646 = vmatprep.subr.mxu0 0.0
        %2647 = vmatpush1.msra.mxu0 0.0
        %2648 = vmatprep.subr.mxu0 0.0
        %2649 = vmatpush1.msra.mxu0 0.0
        %2650 = vmatprep.subr.mxu0 0.0
        %2651 = vmatpush1.msra.mxu0 0.0
        %2652 = vmatprep.subr.mxu0 0.0
        %2653 = vmatpush1.msra.mxu0 0.0
        %2654 = vmatprep.subr.mxu0 0.0
        %2655 = vmatpush1.msra.mxu0 0.0
        %2656 = vmatprep.subr.mxu0 0.0
        %2657 = vmatpush1.msra.mxu0 0.0
        %2658 = vmatprep.subr.mxu0 0.0
        %2659 = vmatpush1.msra.mxu0 0.0
        %2660 = vmatprep.subr.mxu0 0.0
        %2661 = vmatpush1.msra.mxu0 0.0
        %2662 = vmatprep.subr.mxu0 0.0
        %2663 = vmatpush1.msra.mxu0 0.0
        %2664 = vmatprep.subr.mxu0 0.0
        %2665 = vmatpush1.msra.mxu0 0.0
        %2666 = vmatprep.subr.mxu0 0.0
        %2667 = vmatpush1.msra.mxu0 0.0
        %2668 = vmatprep.subr.mxu0 0.0
        %2669 = vmatpush1.msra.mxu0 0.0
        %2670 = vmatprep.subr.mxu0 0.0
        %2671 = vmatpush1.msra.mxu0 0.0
        %2672 = vmatprep.mubr.f32.mxu0 0.0
        %2673 = vmatmul.mubr.f32.gmra.mrb[0].mxu0 %v2584
        %v2674 = vpop.f32.mrb[0].mxu0
        %v2675 = vadd.f32 %v2606, %v2674
        %v2676 = vpop.f32.mrb[0].mxu0
        %2677 = vdwg.mxu0
        %2678 = vst [vmem:[%s434] sm:$0xff] %v2675
        %s2679 = scalar_lea.vmem %s445, 8
        %v2680 = vld [vmem:[%s2679] sm:$0xff]
        %s2681 = scalar_lea.vmem %s439, 8
        %v2682 = vld [vmem:[%s2681] sm:$0xff]
        %2683 = vset.pattern.permute.xlu0 0
        %2684 = vperm.xlu0 %2683, %v2682
        %v2685 = vpop.permute.xlu0 %2684
        %vm2686 = vcmp.eq.s32.totalorder %v453, %v2685
        %v2687 = vsel %vm2686, 1, 0
        %v2688 = vcvt.s32.f32 %v2687
        %v2689 = vld [vmem:[#allocation2] sm:$0xff]
        %v2690 = vld [vmem:[#allocation2 + $0x8] sm:$0xff]
        %v2691 = vld [vmem:[#allocation2 + $0x10] sm:$0xff]
        %v2692 = vld [vmem:[#allocation2 + $0x18] sm:$0xff]
        %s2693 = scalar_lea.vmem %s406, 32 [#allocation7]
        %2694 = vst [vmem:[%s2693] sm:$0xff] %v2689
        %2695 = vst [vmem:[%s2693 + $0x8] sm:$0xff] %v2690
        %2696 = vst [vmem:[%s2693 + $0x10] sm:$0xff] %v2691
        %2697 = vst [vmem:[%s2693 + $0x18] sm:$0xff] %v2692
        %v2698 = vld [vmem:[%s3] sm:$0x1]
        %s2699 = scalar_lea.vmem %s413, 1 [#allocation8]
        %2700 = vst [vmem:[%s2699] sm:$0x1] %v2698
        %v2701 = vld [vmem:[#allocation5] sm:$0xff]
        %v2702 = vld [vmem:[#allocation5 + $0x8] sm:$0xff]
        %v2703 = vld [vmem:[#allocation5 + $0x10] sm:$0xff]
        %v2704 = vld [vmem:[#allocation5 + $0x18] sm:$0xff]
        %v2705 = vld [vmem:[#allocation5 + $0x20] sm:$0xff]
        %v2706 = vld [vmem:[#allocation5 + $0x28] sm:$0xff]
        %v2707 = vld [vmem:[#allocation5 + $0x30] sm:$0xff]
        %v2708 = vld [vmem:[#allocation5 + $0x38] sm:$0xff]
        %v2709 = vld [vmem:[#allocation5 + $0x40] sm:$0xff]
        %v2710 = vld [vmem:[#allocation5 + $0x48] sm:$0xff]
        %v2711 = vld [vmem:[#allocation5 + $0x50] sm:$0xff]
        %v2712 = vld [vmem:[#allocation5 + $0x58] sm:$0xff]
        %v2713 = vld [vmem:[#allocation5 + $0x60] sm:$0xff]
        %v2714 = vld [vmem:[#allocation5 + $0x68] sm:$0xff]
        %v2715 = vld [vmem:[#allocation5 + $0x70] sm:$0xff]
        %v2716 = vld [vmem:[#allocation5 + $0x78] sm:$0xff]
        %s2717 = scalar_lea.vmem %s420, 128 [#allocation10]
        %2718 = vst [vmem:[%s2717] sm:$0xff] %v2701
        %2719 = vst [vmem:[%s2717 + $0x8] sm:$0xff] %v2702
        %2720 = vst [vmem:[%s2717 + $0x10] sm:$0xff] %v2703
        %2721 = vst [vmem:[%s2717 + $0x18] sm:$0xff] %v2704
        %2722 = vst [vmem:[%s2717 + $0x20] sm:$0xff] %v2705
        %2723 = vst [vmem:[%s2717 + $0x28] sm:$0xff] %v2706
        %2724 = vst [vmem:[%s2717 + $0x30] sm:$0xff] %v2707
        %2725 = vst [vmem:[%s2717 + $0x38] sm:$0xff] %v2708
        %2726 = vst [vmem:[%s2717 + $0x40] sm:$0xff] %v2709
        %2727 = vst [vmem:[%s2717 + $0x48] sm:$0xff] %v2710
        %2728 = vst [vmem:[%s2717 + $0x50] sm:$0xff] %v2711
        %2729 = vst [vmem:[%s2717 + $0x58] sm:$0xff] %v2712
        %2730 = vst [vmem:[%s2717 + $0x60] sm:$0xff] %v2713
        %2731 = vst [vmem:[%s2717 + $0x68] sm:$0xff] %v2714
        %2732 = vst [vmem:[%s2717 + $0x70] sm:$0xff] %v2715
        %2733 = vst [vmem:[%s2717 + $0x78] sm:$0xff] %v2716
        %v2734 = vld [vmem:[%s5] sm:$0x1]
        %s2735 = scalar_lea.vmem %s427, 1 [#allocation11]
        %2736 = vst [vmem:[%s2735] sm:$0x1] %v2734
        %v2737 = vld [vmem:[%s2693] sm:$0xff]
        %v2738 = vld [vmem:[%s2693 + $0x8] sm:$0xff]
        %v2739 = vld [vmem:[%s2693 + $0x10] sm:$0xff]
        %v2740 = vld [vmem:[%s2693 + $0x18] sm:$0xff]
        %v2741 = vld [vmem:[%s2717] sm:$0xff]
        %v2742 = vld [vmem:[%s2717 + $0x8] sm:$0xff]
        %v2743 = vld [vmem:[%s2717 + $0x10] sm:$0xff]
        %v2744 = vld [vmem:[%s2717 + $0x18] sm:$0xff]
        %v2745 = vld [vmem:[%s2717 + $0x20] sm:$0xff]
        %v2746 = vld [vmem:[%s2717 + $0x28] sm:$0xff]
        %v2747 = vld [vmem:[%s2717 + $0x30] sm:$0xff]
        %v2748 = vld [vmem:[%s2717 + $0x38] sm:$0xff]
        %v2749 = vld [vmem:[%s2717 + $0x40] sm:$0xff]
        %v2750 = vld [vmem:[%s2717 + $0x48] sm:$0xff]
        %v2751 = vld [vmem:[%s2717 + $0x50] sm:$0xff]
        %v2752 = vld [vmem:[%s2717 + $0x58] sm:$0xff]
        %v2753 = vld [vmem:[%s2717 + $0x60] sm:$0xff]
        %v2754 = vld [vmem:[%s2717 + $0x68] sm:$0xff]
        %v2755 = vld [vmem:[%s2717 + $0x70] sm:$0xff]
        %v2756 = vld [vmem:[%s2717 + $0x78] sm:$0xff]
        %v2757 = vld [vmem:[%s2699] sm:$0x1]
        %v2759 = vlaneseq
        %v2760 = vshrl.u32 %v2759, 7
        %v2761 = vsub.s32 0, %v2760
        %v2762 = vrot.slane %v2757, %v2761
        %v2765 = vsel %vm534, %v2680, 0
        %2767 = vmatprep.subr.mxu0 0.0
        %2768 = vmatpush1.msra.mxu0 %v2737
        %2769 = vmatprep.subr.mxu0 0.0
        %2770 = vmatpush1.msra.mxu0 %v2738
        %2771 = vmatprep.subr.mxu0 0.0
        %2772 = vmatpush1.msra.mxu0 %v2739
        %2773 = vmatprep.subr.mxu0 0.0
        %2774 = vmatpush1.msra.mxu0 %v2740
        %2775 = vmatprep.subr.mxu0 0.0
        %2776 = vmatpush1.msra.mxu0 0.0
        %2777 = vmatprep.subr.mxu0 0.0
        %2778 = vmatpush1.msra.mxu0 0.0
        %2779 = vmatprep.subr.mxu0 0.0
        %2780 = vmatpush1.msra.mxu0 0.0
        %2781 = vmatprep.subr.mxu0 0.0
        %2782 = vmatpush1.msra.mxu0 0.0
        %2783 = vmatprep.subr.mxu0 0.0
        %2784 = vmatpush1.msra.mxu0 0.0
        %2785 = vmatprep.subr.mxu0 0.0
        %2786 = vmatpush1.msra.mxu0 0.0
        %2787 = vmatprep.subr.mxu0 0.0
        %2788 = vmatpush1.msra.mxu0 0.0
        %2789 = vmatprep.subr.mxu0 0.0
        %2790 = vmatpush1.msra.mxu0 0.0
        %2791 = vmatprep.subr.mxu0 0.0
        %2792 = vmatpush1.msra.mxu0 0.0
        %2793 = vmatprep.subr.mxu0 0.0
        %2794 = vmatpush1.msra.mxu0 0.0
        %2795 = vmatprep.subr.mxu0 0.0
        %2796 = vmatpush1.msra.mxu0 0.0
        %2797 = vmatprep.subr.mxu0 0.0
        %2798 = vmatpush1.msra.mxu0 0.0
        %2799 = vmatprep.subr.mxu0 0.0
        %2800 = vmatpush1.msra.mxu0 0.0
        %2801 = vmatprep.subr.mxu0 0.0
        %2802 = vmatpush1.msra.mxu0 0.0
        %2803 = vmatprep.subr.mxu0 0.0
        %2804 = vmatpush1.msra.mxu0 0.0
        %2805 = vmatprep.subr.mxu0 0.0
        %2806 = vmatpush1.msra.mxu0 0.0
        %2807 = vmatprep.subr.mxu0 0.0
        %2808 = vmatpush1.msra.mxu0 0.0
        %2809 = vmatprep.subr.mxu0 0.0
        %2810 = vmatpush1.msra.mxu0 0.0
        %2811 = vmatprep.subr.mxu0 0.0
        %2812 = vmatpush1.msra.mxu0 0.0
        %2813 = vmatprep.subr.mxu0 0.0
        %2814 = vmatpush1.msra.mxu0 0.0
        %2815 = vmatprep.subr.mxu0 0.0
        %2816 = vmatpush1.msra.mxu0 0.0
        %2817 = vmatprep.subr.mxu0 0.0
        %2818 = vmatpush1.msra.mxu0 0.0
        %2819 = vmatprep.subr.mxu0 0.0
        %2820 = vmatpush1.msra.mxu0 0.0
        %2821 = vmatprep.subr.mxu0 0.0
        %2822 = vmatpush1.msra.mxu0 0.0
        %2823 = vmatprep.subr.mxu0 0.0
        %2824 = vmatpush1.msra.mxu0 0.0
        %2825 = vmatprep.subr.mxu0 0.0
        %2826 = vmatpush1.msra.mxu0 0.0
        %2827 = vmatprep.subr.mxu0 0.0
        %2828 = vmatpush1.msra.mxu0 0.0
        %2829 = vmatprep.subr.mxu0 0.0
        %2830 = vmatpush1.msra.mxu0 0.0
        %2831 = vmatprep.mubr.f32.mxu0 0.0
        %2832 = vmatmul.mubr.f32.gmra.mrb[0].mxu0 %v2765
        %v2833 = vpop.f32.mrb[0].mxu0
        %v2834 = vadd.f32 %v2762, %v2833
        %v2835 = vpop.f32.mrb[0].mxu0
        %2836 = vdwg.mxu0
        %v2837 = vmax.f32 %v2834, 0.0
        %v2838 = vld [vmem:[%s2735] sm:$0x1]
        %v2840 = vlaneseq
        %v2841 = vshrl.u32 %v2840, 7
        %v2842 = vsub.s32 0, %v2841
        %v2843 = vrot.slane %v2838, %v2842
        %2845 = vmatprep.subr.mxu0 0.0
        %2846 = vmatpush1.msra.mxu0 %v2741
        %2847 = vmatprep.subr.mxu0 0.0
        %2848 = vmatpush1.msra.mxu0 %v2742
        %2849 = vmatprep.subr.mxu0 0.0
        %2850 = vmatpush1.msra.mxu0 %v2743
        %2851 = vmatprep.subr.mxu0 0.0
        %2852 = vmatpush1.msra.mxu0 %v2744
        %2853 = vmatprep.subr.mxu0 0.0
        %2854 = vmatpush1.msra.mxu0 %v2745
        %2855 = vmatprep.subr.mxu0 0.0
        %2856 = vmatpush1.msra.mxu0 %v2746
        %2857 = vmatprep.subr.mxu0 0.0
        %2858 = vmatpush1.msra.mxu0 %v2747
        %2859 = vmatprep.subr.mxu0 0.0
        %2860 = vmatpush1.msra.mxu0 %v2748
        %2861 = vmatprep.subr.mxu0 0.0
        %2862 = vmatpush1.msra.mxu0 %v2749
        %2863 = vmatprep.subr.mxu0 0.0
        %2864 = vmatpush1.msra.mxu0 %v2750
        %2865 = vmatprep.subr.mxu0 0.0
        %2866 = vmatpush1.msra.mxu0 %v2751
        %2867 = vmatprep.subr.mxu0 0.0
        %2868 = vmatpush1.msra.mxu0 %v2752
        %2869 = vmatprep.subr.mxu0 0.0
        %2870 = vmatpush1.msra.mxu0 %v2753
        %2871 = vmatprep.subr.mxu0 0.0
        %2872 = vmatpush1.msra.mxu0 %v2754
        %2873 = vmatprep.subr.mxu0 0.0
        %2874 = vmatpush1.msra.mxu0 %v2755
        %2875 = vmatprep.subr.mxu0 0.0
        %2876 = vmatpush1.msra.mxu0 %v2756
        %2877 = vmatprep.subr.mxu0 0.0
        %2878 = vmatpush1.msra.mxu0 0.0
        %2879 = vmatprep.subr.mxu0 0.0
        %2880 = vmatpush1.msra.mxu0 0.0
        %2881 = vmatprep.subr.mxu0 0.0
        %2882 = vmatpush1.msra.mxu0 0.0
        %2883 = vmatprep.subr.mxu0 0.0
        %2884 = vmatpush1.msra.mxu0 0.0
        %2885 = vmatprep.subr.mxu0 0.0
        %2886 = vmatpush1.msra.mxu0 0.0
        %2887 = vmatprep.subr.mxu0 0.0
        %2888 = vmatpush1.msra.mxu0 0.0
        %2889 = vmatprep.subr.mxu0 0.0
        %2890 = vmatpush1.msra.mxu0 0.0
        %2891 = vmatprep.subr.mxu0 0.0
        %2892 = vmatpush1.msra.mxu0 0.0
        %2893 = vmatprep.subr.mxu0 0.0
        %2894 = vmatpush1.msra.mxu0 0.0
        %2895 = vmatprep.subr.mxu0 0.0
        %2896 = vmatpush1.msra.mxu0 0.0
        %2897 = vmatprep.subr.mxu0 0.0
        %2898 = vmatpush1.msra.mxu0 0.0
        %2899 = vmatprep.subr.mxu0 0.0
        %2900 = vmatpush1.msra.mxu0 0.0
        %2901 = vmatprep.subr.mxu0 0.0
        %2902 = vmatpush1.msra.mxu0 0.0
        %2903 = vmatprep.subr.mxu0 0.0
        %2904 = vmatpush1.msra.mxu0 0.0
        %2905 = vmatprep.subr.mxu0 0.0
        %2906 = vmatpush1.msra.mxu0 0.0
        %2907 = vmatprep.subr.mxu0 0.0
        %2908 = vmatpush1.msra.mxu0 0.0
        %2909 = vmatprep.mubr.f32.mxu0 0.0
        %2910 = vmatmul.mubr.f32.gmra.mrb[0].mxu0 %v2837
        %v2911 = vpop.f32.mrb[0].mxu0
        %v2912 = vadd.f32 %v2843, %v2911
        %v2913 = vpop.f32.mrb[0].mxu0
        %2914 = vdwg.mxu0
        %v2915 = vsel %vm454, %v2912, -1e+30
        %2916 = vmax.xlane.f32.xlu0 %v2915
        %v2917 = vpop.xlane.xlu0 %2916
        %v2918 = vsub.f32 %v2915, %v2917
        %v2919 = vmul.f32 %v2918, 1.442695
        %v2920 = vpow.pop %v2919
        %2921 = vadd.xlane.f32.xlu0 %v2920
        %v2922 = vpop.xlane.xlu0 %2921
        %v2923 = vrcp.pop %v2922
        %v2924 = vmul.f32 %v2920, %v2923
        %v2925 = vsub.f32 %v2924, %v2688
        %v2926 = vmul.f32 %v2925, 0.125
        %2927 = vmatprep.subr.mxu0 0.0
        %2928 = vmatpush1.xpose.msra.mxu0 %v2741
        %2929 = vmatprep.subr.mxu0 0.0
        %2930 = vmatpush1.xpose.msra.mxu0 %v2742
        %2931 = vmatprep.subr.mxu0 0.0
        %2932 = vmatpush1.xpose.msra.mxu0 %v2743
        %2933 = vmatprep.subr.mxu0 0.0
        %2934 = vmatpush1.xpose.msra.mxu0 %v2744
        %2935 = vmatprep.subr.mxu0 0.0
        %2936 = vmatpush1.xpose.msra.mxu0 %v2745
        %2937 = vmatprep.subr.mxu0 0.0
        %2938 = vmatpush1.xpose.msra.mxu0 %v2746
        %2939 = vmatprep.subr.mxu0 0.0
        %2940 = vmatpush1.xpose.msra.mxu0 %v2747
        %2941 = vmatprep.subr.mxu0 0.0
        %2942 = vmatpush1.xpose.msra.mxu0 %v2748
        %2943 = vmatprep.subr.mxu0 0.0
        %2944 = vmatpush1.xpose.msra.mxu0 %v2749
        %2945 = vmatprep.subr.mxu0 0.0
        %2946 = vmatpush1.xpose.msra.mxu0 %v2750
        %2947 = vmatprep.subr.mxu0 0.0
        %2948 = vmatpush1.xpose.msra.mxu0 %v2751
        %2949 = vmatprep.subr.mxu0 0.0
        %2950 = vmatpush1.xpose.msra.mxu0 %v2752
        %2951 = vmatprep.subr.mxu0 0.0
        %2952 = vmatpush1.xpose.msra.mxu0 %v2753
        %2953 = vmatprep.subr.mxu0 0.0
        %2954 = vmatpush1.xpose.msra.mxu0 %v2754
        %2955 = vmatprep.subr.mxu0 0.0
        %2956 = vmatpush1.xpose.msra.mxu0 %v2755
        %2957 = vmatprep.subr.mxu0 0.0
        %2958 = vmatpush1.xpose.msra.mxu0 %v2756
        %2959 = vmatprep.subr.mxu0 0.0
        %2960 = vmatpush1.xpose.msra.mxu0 0.0
        %2961 = vmatprep.subr.mxu0 0.0
        %2962 = vmatpush1.xpose.msra.mxu0 0.0
        %2963 = vmatprep.subr.mxu0 0.0
        %2964 = vmatpush1.xpose.msra.mxu0 0.0
        %2965 = vmatprep.subr.mxu0 0.0
        %2966 = vmatpush1.xpose.msra.mxu0 0.0
        %2967 = vmatprep.subr.mxu0 0.0
        %2968 = vmatpush1.xpose.msra.mxu0 0.0
        %2969 = vmatprep.subr.mxu0 0.0
        %2970 = vmatpush1.xpose.msra.mxu0 0.0
        %2971 = vmatprep.subr.mxu0 0.0
        %2972 = vmatpush1.xpose.msra.mxu0 0.0
        %2973 = vmatprep.subr.mxu0 0.0
        %2974 = vmatpush1.xpose.msra.mxu0 0.0
        %2975 = vmatprep.subr.mxu0 0.0
        %2976 = vmatpush1.xpose.msra.mxu0 0.0
        %2977 = vmatprep.subr.mxu0 0.0
        %2978 = vmatpush1.xpose.msra.mxu0 0.0
        %2979 = vmatprep.subr.mxu0 0.0
        %2980 = vmatpush1.xpose.msra.mxu0 0.0
        %2981 = vmatprep.subr.mxu0 0.0
        %2982 = vmatpush1.xpose.msra.mxu0 0.0
        %2983 = vmatprep.subr.mxu0 0.0
        %2984 = vmatpush1.xpose.msra.mxu0 0.0
        %2985 = vmatprep.subr.mxu0 0.0
        %2986 = vmatpush1.xpose.msra.mxu0 0.0
        %2987 = vmatprep.subr.mxu0 0.0
        %2988 = vmatpush1.xpose.msra.mxu0 0.0
        %2989 = vmatprep.subr.mxu0 0.0
        %2990 = vmatpush1.xpose.msra.mxu0 0.0
        %2991 = vmatprep.mubr.f32.mxu0 0.0
        %2992 = vmatmul.mubr.f32.gmra.mrb[0].mxu0 %v2926
        %v2993 = vpop.f32.mrb[0].mxu0
        %v2994 = vadd.f32 0.0, %v2993
        %v2995 = vpop.f32.mrb[0].mxu0
        %2996 = vdwg.mxu0
        %2997 = vxpose.xlu0.b32.start [1/16] %v2837, 128
        %2998 = vxpose.xlu0.b32.cont [2/16] 0.0, 128
        %2999 = vxpose.xlu0.b32.cont [3/16] 0.0, 128
        %3000 = vxpose.xlu0.b32.cont [4/16] 0.0, 128
        %3001 = vxpose.xlu0.b32.cont [5/16] 0.0, 128
        %3002 = vxpose.xlu0.b32.cont [6/16] 0.0, 128
        %3003 = vxpose.xlu0.b32.cont [7/16] 0.0, 128
        %3004 = vxpose.xlu0.b32.cont [8/16] 0.0, 128
        %3005 = vxpose.xlu0.b32.cont [9/16] 0.0, 128
        %3006 = vxpose.xlu0.b32.cont [10/16] 0.0, 128
        %3007 = vxpose.xlu0.b32.cont [11/16] 0.0, 128
        %3008 = vxpose.xlu0.b32.cont [12/16] 0.0, 128
        %3009 = vxpose.xlu0.b32.cont [13/16] 0.0, 128
        %3010 = vxpose.xlu0.b32.cont [14/16] 0.0, 128
        %3011 = vxpose.xlu0.b32.cont [15/16] 0.0, 128
        %3012 = vxpose.xlu0.b32.end [16/16] 0.0, 128
        %v3013 = vpop.trf.xlu0
        %v3014 = vpop.trf.xlu0
        %v3015 = vpop.trf.xlu0
        %v3016 = vpop.trf.xlu0
        %v3017 = vpop.trf.xlu0
        %v3018 = vpop.trf.xlu0
        %v3019 = vpop.trf.xlu0
        %v3020 = vpop.trf.xlu0
        %v3021 = vpop.trf.xlu0
        %v3022 = vpop.trf.xlu0
        %v3023 = vpop.trf.xlu0
        %v3024 = vpop.trf.xlu0
        %v3025 = vpop.trf.xlu0
        %v3026 = vpop.trf.xlu0
        %v3027 = vpop.trf.xlu0
        %v3028 = vpop.trf.xlu0
        %v3030 = vsel %vm800, %v3013, 0
        %v3033 = vsel %vm800, %v3014, 0
        %v3036 = vsel %vm800, %v3015, 0
        %v3039 = vsel %vm800, %v3016, 0
        %v3042 = vsel %vm800, %v3017, 0
        %v3045 = vsel %vm800, %v3018, 0
        %v3048 = vsel %vm800, %v3019, 0
        %v3051 = vsel %vm800, %v3020, 0
        %v3054 = vsel %vm800, %v3021, 0
        %v3057 = vsel %vm800, %v3022, 0
        %v3060 = vsel %vm800, %v3023, 0
        %v3063 = vsel %vm800, %v3024, 0
        %v3066 = vsel %vm800, %v3025, 0
        %v3069 = vsel %vm800, %v3026, 0
        %v3072 = vsel %vm800, %v3027, 0
        %v3075 = vsel %vm800, %v3028, 0
        %3077 = vmatprep.subr.mxu0 0.0
        %3078 = vmatpush1.msra.mxu0 %v2926
        %3079 = vmatprep.subr.mxu0 0.0
        %3080 = vmatpush1.msra.mxu0 0.0
        %3081 = vmatprep.subr.mxu0 0.0
        %3082 = vmatpush1.msra.mxu0 0.0
        %3083 = vmatprep.subr.mxu0 0.0
        %3084 = vmatpush1.msra.mxu0 0.0
        %3085 = vmatprep.subr.mxu0 0.0
        %3086 = vmatpush1.msra.mxu0 0.0
        %3087 = vmatprep.subr.mxu0 0.0
        %3088 = vmatpush1.msra.mxu0 0.0
        %3089 = vmatprep.subr.mxu0 0.0
        %3090 = vmatpush1.msra.mxu0 0.0
        %3091 = vmatprep.subr.mxu0 0.0
        %3092 = vmatpush1.msra.mxu0 0.0
        %3093 = vmatprep.subr.mxu0 0.0
        %3094 = vmatpush1.msra.mxu0 0.0
        %3095 = vmatprep.subr.mxu0 0.0
        %3096 = vmatpush1.msra.mxu0 0.0
        %3097 = vmatprep.subr.mxu0 0.0
        %3098 = vmatpush1.msra.mxu0 0.0
        %3099 = vmatprep.subr.mxu0 0.0
        %3100 = vmatpush1.msra.mxu0 0.0
        %3101 = vmatprep.subr.mxu0 0.0
        %3102 = vmatpush1.msra.mxu0 0.0
        %3103 = vmatprep.subr.mxu0 0.0
        %3104 = vmatpush1.msra.mxu0 0.0
        %3105 = vmatprep.subr.mxu0 0.0
        %3106 = vmatpush1.msra.mxu0 0.0
        %3107 = vmatprep.subr.mxu0 0.0
        %3108 = vmatpush1.msra.mxu0 0.0
        %3109 = vmatprep.subr.mxu0 0.0
        %3110 = vmatpush1.msra.mxu0 0.0
        %3111 = vmatprep.subr.mxu0 0.0
        %3112 = vmatpush1.msra.mxu0 0.0
        %3113 = vmatprep.subr.mxu0 0.0
        %3114 = vmatpush1.msra.mxu0 0.0
        %3115 = vmatprep.subr.mxu0 0.0
        %3116 = vmatpush1.msra.mxu0 0.0
        %3117 = vmatprep.subr.mxu0 0.0
        %3118 = vmatpush1.msra.mxu0 0.0
        %3119 = vmatprep.subr.mxu0 0.0
        %3120 = vmatpush1.msra.mxu0 0.0
        %3121 = vmatprep.subr.mxu0 0.0
        %3122 = vmatpush1.msra.mxu0 0.0
        %3123 = vmatprep.subr.mxu0 0.0
        %3124 = vmatpush1.msra.mxu0 0.0
        %3125 = vmatprep.subr.mxu0 0.0
        %3126 = vmatpush1.msra.mxu0 0.0
        %3127 = vmatprep.subr.mxu0 0.0
        %3128 = vmatpush1.msra.mxu0 0.0
        %3129 = vmatprep.subr.mxu0 0.0
        %3130 = vmatpush1.msra.mxu0 0.0
        %3131 = vmatprep.subr.mxu0 0.0
        %3132 = vmatpush1.msra.mxu0 0.0
        %3133 = vmatprep.subr.mxu0 0.0
        %3134 = vmatpush1.msra.mxu0 0.0
        %3135 = vmatprep.subr.mxu0 0.0
        %3136 = vmatpush1.msra.mxu0 0.0
        %3137 = vmatprep.subr.mxu0 0.0
        %3138 = vmatpush1.msra.mxu0 0.0
        %3139 = vmatprep.subr.mxu0 0.0
        %3140 = vmatpush1.msra.mxu0 0.0
        %3141 = vmatprep.mubr.f32.mxu0 0.0
        %3142 = vmatmul.mubr.f32.gmra.mrb[0].mxu0 %v3030
        %v3143 = vpop.f32.mrb[0].mxu0
        %v3144 = vadd.f32 0.0, %v3143
        %v3145 = vpop.f32.mrb[0].mxu0
        %3146 = vmatprep.mubr.f32.mxu0 0.0
        %3147 = vmatmul.mubr.f32.gmra.mrb[0].mxu0 %v3033
        %v3148 = vpop.f32.mrb[0].mxu0
        %v3149 = vadd.f32 0.0, %v3148
        %v3150 = vpop.f32.mrb[0].mxu0
        %3151 = vmatprep.mubr.f32.mxu0 0.0
        %3152 = vmatmul.mubr.f32.gmra.mrb[0].mxu0 %v3036
        %v3153 = vpop.f32.mrb[0].mxu0
        %v3154 = vadd.f32 0.0, %v3153
        %v3155 = vpop.f32.mrb[0].mxu0
        %3156 = vmatprep.mubr.f32.mxu0 0.0
        %3157 = vmatmul.mubr.f32.gmra.mrb[0].mxu0 %v3039
        %v3158 = vpop.f32.mrb[0].mxu0
        %v3159 = vadd.f32 0.0, %v3158
        %v3160 = vpop.f32.mrb[0].mxu0
        %3161 = vmatprep.mubr.f32.mxu0 0.0
        %3162 = vmatmul.mubr.f32.gmra.mrb[0].mxu0 %v3042
        %v3163 = vpop.f32.mrb[0].mxu0
        %v3164 = vadd.f32 0.0, %v3163
        %v3165 = vpop.f32.mrb[0].mxu0
        %3166 = vmatprep.mubr.f32.mxu0 0.0
        %3167 = vmatmul.mubr.f32.gmra.mrb[0].mxu0 %v3045
        %v3168 = vpop.f32.mrb[0].mxu0
        %v3169 = vadd.f32 0.0, %v3168
        %v3170 = vpop.f32.mrb[0].mxu0
        %3171 = vmatprep.mubr.f32.mxu0 0.0
        %3172 = vmatmul.mubr.f32.gmra.mrb[0].mxu0 %v3048
        %v3173 = vpop.f32.mrb[0].mxu0
        %v3174 = vadd.f32 0.0, %v3173
        %v3175 = vpop.f32.mrb[0].mxu0
        %3176 = vmatprep.mubr.f32.mxu0 0.0
        %3177 = vmatmul.mubr.f32.gmra.mrb[0].mxu0 %v3051
        %v3178 = vpop.f32.mrb[0].mxu0
        %v3179 = vadd.f32 0.0, %v3178
        %v3180 = vpop.f32.mrb[0].mxu0
        %3181 = vmatprep.mubr.f32.mxu0 0.0
        %3182 = vmatmul.mubr.f32.gmra.mrb[0].mxu0 %v3054
        %v3183 = vpop.f32.mrb[0].mxu0
        %v3184 = vadd.f32 0.0, %v3183
        %v3185 = vpop.f32.mrb[0].mxu0
        %3186 = vmatprep.mubr.f32.mxu0 0.0
        %3187 = vmatmul.mubr.f32.gmra.mrb[0].mxu0 %v3057
        %v3188 = vpop.f32.mrb[0].mxu0
        %v3189 = vadd.f32 0.0, %v3188
        %v3190 = vpop.f32.mrb[0].mxu0
        %3191 = vmatprep.mubr.f32.mxu0 0.0
        %3192 = vmatmul.mubr.f32.gmra.mrb[0].mxu0 %v3060
        %v3193 = vpop.f32.mrb[0].mxu0
        %v3194 = vadd.f32 0.0, %v3193
        %v3195 = vpop.f32.mrb[0].mxu0
        %3196 = vmatprep.mubr.f32.mxu0 0.0
        %3197 = vmatmul.mubr.f32.gmra.mrb[0].mxu0 %v3063
        %v3198 = vpop.f32.mrb[0].mxu0
        %v3199 = vadd.f32 0.0, %v3198
        %v3200 = vpop.f32.mrb[0].mxu0
        %3201 = vmatprep.mubr.f32.mxu0 0.0
        %3202 = vmatmul.mubr.f32.gmra.mrb[0].mxu0 %v3066
        %v3203 = vpop.f32.mrb[0].mxu0
        %v3204 = vadd.f32 0.0, %v3203
        %v3205 = vpop.f32.mrb[0].mxu0
        %3206 = vmatprep.mubr.f32.mxu0 0.0
        %3207 = vmatmul.mubr.f32.gmra.mrb[0].mxu0 %v3069
        %v3208 = vpop.f32.mrb[0].mxu0
        %v3209 = vadd.f32 0.0, %v3208
        %v3210 = vpop.f32.mrb[0].mxu0
        %3211 = vmatprep.mubr.f32.mxu0 0.0
        %3212 = vmatmul.mubr.f32.gmra.mrb[0].mxu0 %v3072
        %v3213 = vpop.f32.mrb[0].mxu0
        %v3214 = vadd.f32 0.0, %v3213
        %v3215 = vpop.f32.mrb[0].mxu0
        %3216 = vmatprep.mubr.f32.mxu0 0.0
        %3217 = vmatmul.mubr.f32.gmra.mrb[0].mxu0 %v3075
        %v3218 = vpop.f32.mrb[0].mxu0
        %v3219 = vadd.f32 0.0, %v3218
        %v3220 = vpop.f32.mrb[0].mxu0
        %3221 = vdwg.mxu0
        %v3222 = vmul.f32 %v3144, 0.1
        %v3223 = vmul.f32 %v3149, 0.1
        %v3224 = vmul.f32 %v3154, 0.1
        %v3225 = vmul.f32 %v3159, 0.1
        %v3226 = vmul.f32 %v3164, 0.1
        %v3227 = vmul.f32 %v3169, 0.1
        %v3228 = vmul.f32 %v3174, 0.1
        %v3229 = vmul.f32 %v3179, 0.1
        %v3230 = vmul.f32 %v3184, 0.1
        %v3231 = vmul.f32 %v3189, 0.1
        %v3232 = vmul.f32 %v3194, 0.1
        %v3233 = vmul.f32 %v3199, 0.1
        %v3234 = vmul.f32 %v3204, 0.1
        %v3235 = vmul.f32 %v3209, 0.1
        %v3236 = vmul.f32 %v3214, 0.1
        %v3237 = vmul.f32 %v3219, 0.1
        %v3238 = vsub.f32 %v2741, %v3222
        %v3239 = vsub.f32 %v2742, %v3223
        %v3240 = vsub.f32 %v2743, %v3224
        %v3241 = vsub.f32 %v2744, %v3225
        %v3242 = vsub.f32 %v2745, %v3226
        %v3243 = vsub.f32 %v2746, %v3227
        %v3244 = vsub.f32 %v2747, %v3228
        %v3245 = vsub.f32 %v2748, %v3229
        %v3246 = vsub.f32 %v2749, %v3230
        %v3247 = vsub.f32 %v2750, %v3231
        %v3248 = vsub.f32 %v2751, %v3232
        %v3249 = vsub.f32 %v2752, %v3233
        %v3250 = vsub.f32 %v2753, %v3234
        %v3251 = vsub.f32 %v2754, %v3235
        %v3252 = vsub.f32 %v2755, %v3236
        %v3253 = vsub.f32 %v2756, %v3237
        %3254 = vst [vmem:[%s2717] sm:$0xff] %v3238
        %3255 = vst [vmem:[%s2717 + $0x8] sm:$0xff] %v3239
        %3256 = vst [vmem:[%s2717 + $0x10] sm:$0xff] %v3240
        %3257 = vst [vmem:[%s2717 + $0x18] sm:$0xff] %v3241
        %3258 = vst [vmem:[%s2717 + $0x20] sm:$0xff] %v3242
        %3259 = vst [vmem:[%s2717 + $0x28] sm:$0xff] %v3243
        %3260 = vst [vmem:[%s2717 + $0x30] sm:$0xff] %v3244
        %3261 = vst [vmem:[%s2717 + $0x38] sm:$0xff] %v3245
        %3262 = vst [vmem:[%s2717 + $0x40] sm:$0xff] %v3246
        %3263 = vst [vmem:[%s2717 + $0x48] sm:$0xff] %v3247
        %3264 = vst [vmem:[%s2717 + $0x50] sm:$0xff] %v3248
        %3265 = vst [vmem:[%s2717 + $0x58] sm:$0xff] %v3249
        %3266 = vst [vmem:[%s2717 + $0x60] sm:$0xff] %v3250
        %3267 = vst [vmem:[%s2717 + $0x68] sm:$0xff] %v3251
        %3268 = vst [vmem:[%s2717 + $0x70] sm:$0xff] %v3252
        %3269 = vst [vmem:[%s2717 + $0x78] sm:$0xff] %v3253
        %v3270 = vld [vmem:[%s2735] sm:$0x1]
        %v3271 = vrot.slane %v2926, 4
        %v3272 = vadd.f32 %v2926, %v3271
        %v3273 = vrot.slane %v3272, 2
        %v3274 = vadd.f32 %v3272, %v3273
        %v3275 = vrot.slane %v3274, 1
        %v3276 = vadd.f32 %v3274, %v3275
        %v3277 = vmul.f32 %v3276, 0.1
        %v3278 = vsub.f32 %v3270, %v3277
        %3279 = vst [vmem:[%s2735] sm:$0x1] %v3278
        %vm3280 = vcmp.gt.f32.partialorder %v2834, 0.0
        %v3281 = vsel %vm3280, %v2994, 0.0
        %3282 = vxpose.xlu0.b32.start [1/16] %v2680, 128
        %3283 = vxpose.xlu0.b32.cont [2/16] 0.0, 128
        %3284 = vxpose.xlu0.b32.cont [3/16] 0.0, 128
        %3285 = vxpose.xlu0.b32.cont [4/16] 0.0, 128
        %3286 = vxpose.xlu0.b32.cont [5/16] 0.0, 128
        %3287 = vxpose.xlu0.b32.cont [6/16] 0.0, 128
        %3288 = vxpose.xlu0.b32.cont [7/16] 0.0, 128
        %3289 = vxpose.xlu0.b32.cont [8/16] 0.0, 128
        %3290 = vxpose.xlu0.b32.cont [9/16] 0.0, 128
        %3291 = vxpose.xlu0.b32.cont [10/16] 0.0, 128
        %3292 = vxpose.xlu0.b32.cont [11/16] 0.0, 128
        %3293 = vxpose.xlu0.b32.cont [12/16] 0.0, 128
        %3294 = vxpose.xlu0.b32.cont [13/16] 0.0, 128
        %3295 = vxpose.xlu0.b32.cont [14/16] 0.0, 128
        %3296 = vxpose.xlu0.b32.cont [15/16] 0.0, 128
        %3297 = vxpose.xlu0.b32.end [16/16] 0.0, 128
        %v3298 = vpop.trf.xlu0
        %v3299 = vpop.trf.xlu0
        %v3300 = vpop.trf.xlu0
        %v3301 = vpop.trf.xlu0
        %v3302 = vpop.trf.xlu0
        %v3303 = vpop.trf.xlu0
        %v3304 = vpop.trf.xlu0
        %v3305 = vpop.trf.xlu0
        %v3306 = vpop.trf.xlu0
        %v3307 = vpop.trf.xlu0
        %v3308 = vpop.trf.xlu0
        %v3309 = vpop.trf.xlu0
        %v3310 = vpop.trf.xlu0
        %v3311 = vpop.trf.xlu0
        %v3312 = vpop.trf.xlu0
        %v3313 = vpop.trf.xlu0
        %v3315 = vsel %vm800, %v3298, 0
        %v3318 = vsel %vm800, %v3299, 0
        %v3321 = vsel %vm800, %v3300, 0
        %v3324 = vsel %vm800, %v3301, 0
        %3326 = vmatprep.subr.mxu0 0.0
        %3327 = vmatpush1.msra.mxu0 %v3281
        %3328 = vmatprep.subr.mxu0 0.0
        %3329 = vmatpush1.msra.mxu0 0.0
        %3330 = vmatprep.subr.mxu0 0.0
        %3331 = vmatpush1.msra.mxu0 0.0
        %3332 = vmatprep.subr.mxu0 0.0
        %3333 = vmatpush1.msra.mxu0 0.0
        %3334 = vmatprep.subr.mxu0 0.0
        %3335 = vmatpush1.msra.mxu0 0.0
        %3336 = vmatprep.subr.mxu0 0.0
        %3337 = vmatpush1.msra.mxu0 0.0
        %3338 = vmatprep.subr.mxu0 0.0
        %3339 = vmatpush1.msra.mxu0 0.0
        %3340 = vmatprep.subr.mxu0 0.0
        %3341 = vmatpush1.msra.mxu0 0.0
        %3342 = vmatprep.subr.mxu0 0.0
        %3343 = vmatpush1.msra.mxu0 0.0
        %3344 = vmatprep.subr.mxu0 0.0
        %3345 = vmatpush1.msra.mxu0 0.0
        %3346 = vmatprep.subr.mxu0 0.0
        %3347 = vmatpush1.msra.mxu0 0.0
        %3348 = vmatprep.subr.mxu0 0.0
        %3349 = vmatpush1.msra.mxu0 0.0
        %3350 = vmatprep.subr.mxu0 0.0
        %3351 = vmatpush1.msra.mxu0 0.0
        %3352 = vmatprep.subr.mxu0 0.0
        %3353 = vmatpush1.msra.mxu0 0.0
        %3354 = vmatprep.subr.mxu0 0.0
        %3355 = vmatpush1.msra.mxu0 0.0
        %3356 = vmatprep.subr.mxu0 0.0
        %3357 = vmatpush1.msra.mxu0 0.0
        %3358 = vmatprep.subr.mxu0 0.0
        %3359 = vmatpush1.msra.mxu0 0.0
        %3360 = vmatprep.subr.mxu0 0.0
        %3361 = vmatpush1.msra.mxu0 0.0
        %3362 = vmatprep.subr.mxu0 0.0
        %3363 = vmatpush1.msra.mxu0 0.0
        %3364 = vmatprep.subr.mxu0 0.0
        %3365 = vmatpush1.msra.mxu0 0.0
        %3366 = vmatprep.subr.mxu0 0.0
        %3367 = vmatpush1.msra.mxu0 0.0
        %3368 = vmatprep.subr.mxu0 0.0
        %3369 = vmatpush1.msra.mxu0 0.0
        %3370 = vmatprep.subr.mxu0 0.0
        %3371 = vmatpush1.msra.mxu0 0.0
        %3372 = vmatprep.subr.mxu0 0.0
        %3373 = vmatpush1.msra.mxu0 0.0
        %3374 = vmatprep.subr.mxu0 0.0
        %3375 = vmatpush1.msra.mxu0 0.0
        %3376 = vmatprep.subr.mxu0 0.0
        %3377 = vmatpush1.msra.mxu0 0.0
        %3378 = vmatprep.subr.mxu0 0.0
        %3379 = vmatpush1.msra.mxu0 0.0
        %3380 = vmatprep.subr.mxu0 0.0
        %3381 = vmatpush1.msra.mxu0 0.0
        %3382 = vmatprep.subr.mxu0 0.0
        %3383 = vmatpush1.msra.mxu0 0.0
        %3384 = vmatprep.subr.mxu0 0.0
        %3385 = vmatpush1.msra.mxu0 0.0
        %3386 = vmatprep.subr.mxu0 0.0
        %3387 = vmatpush1.msra.mxu0 0.0
        %3388 = vmatprep.subr.mxu0 0.0
        %3389 = vmatpush1.msra.mxu0 0.0
        %3390 = vmatprep.mubr.f32.mxu0 0.0
        %3391 = vmatmul.mubr.f32.gmra.mrb[0].mxu0 %v3315
        %v3392 = vpop.f32.mrb[0].mxu0
        %v3393 = vadd.f32 0.0, %v3392
        %v3394 = vpop.f32.mrb[0].mxu0
        %3395 = vmatprep.mubr.f32.mxu0 0.0
        %3396 = vmatmul.mubr.f32.gmra.mrb[0].mxu0 %v3318
        %v3397 = vpop.f32.mrb[0].mxu0
        %v3398 = vadd.f32 0.0, %v3397
        %v3399 = vpop.f32.mrb[0].mxu0
        %3400 = vmatprep.mubr.f32.mxu0 0.0
        %3401 = vmatmul.mubr.f32.gmra.mrb[0].mxu0 %v3321
        %v3402 = vpop.f32.mrb[0].mxu0
        %v3403 = vadd.f32 0.0, %v3402
        %v3404 = vpop.f32.mrb[0].mxu0
        %3405 = vmatprep.mubr.f32.mxu0 0.0
        %3406 = vmatmul.mubr.f32.gmra.mrb[0].mxu0 %v3324
        %v3407 = vpop.f32.mrb[0].mxu0
        %v3408 = vadd.f32 0.0, %v3407
        %v3409 = vpop.f32.mrb[0].mxu0
        %3410 = vdwg.mxu0
        %v3411 = vmul.f32 %v3393, 0.1
        %v3412 = vmul.f32 %v3398, 0.1
        %v3413 = vmul.f32 %v3403, 0.1
        %v3414 = vmul.f32 %v3408, 0.1
        %v3415 = vsub.f32 %v2737, %v3411
        %v3416 = vsub.f32 %v2738, %v3412
        %v3417 = vsub.f32 %v2739, %v3413
        %v3418 = vsub.f32 %v2740, %v3414
        %3419 = vst [vmem:[%s2693] sm:$0xff] %v3415
        %3420 = vst [vmem:[%s2693 + $0x8] sm:$0xff] %v3416
        %3421 = vst [vmem:[%s2693 + $0x10] sm:$0xff] %v3417
        %3422 = vst [vmem:[%s2693 + $0x18] sm:$0xff] %v3418
        %v3423 = vld [vmem:[%s2699] sm:$0x1]
        %v3424 = vrot.slane %v3281, 4
        %v3425 = vadd.f32 %v3281, %v3424
        %v3426 = vrot.slane %v3425, 2
        %v3427 = vadd.f32 %v3425, %v3426
        %v3428 = vrot.slane %v3427, 1
        %v3429 = vadd.f32 %v3427, %v3428
        %v3430 = vmul.f32 %v3429, 0.1
        %v3431 = vsub.f32 %v3423, %v3430
        %3432 = vst [vmem:[%s2699] sm:$0x1] %v3431
        %v3433 = vld [vmem:[%s2693] sm:$0xff]
        %v3434 = vld [vmem:[%s2693 + $0x8] sm:$0xff]
        %v3435 = vld [vmem:[%s2693 + $0x10] sm:$0xff]
        %v3436 = vld [vmem:[%s2693 + $0x18] sm:$0xff]
        %v3437 = vld [vmem:[%s2717] sm:$0xff]
        %v3438 = vld [vmem:[%s2717 + $0x8] sm:$0xff]
        %v3439 = vld [vmem:[%s2717 + $0x10] sm:$0xff]
        %v3440 = vld [vmem:[%s2717 + $0x18] sm:$0xff]
        %v3441 = vld [vmem:[%s2717 + $0x20] sm:$0xff]
        %v3442 = vld [vmem:[%s2717 + $0x28] sm:$0xff]
        %v3443 = vld [vmem:[%s2717 + $0x30] sm:$0xff]
        %v3444 = vld [vmem:[%s2717 + $0x38] sm:$0xff]
        %v3445 = vld [vmem:[%s2717 + $0x40] sm:$0xff]
        %v3446 = vld [vmem:[%s2717 + $0x48] sm:$0xff]
        %v3447 = vld [vmem:[%s2717 + $0x50] sm:$0xff]
        %v3448 = vld [vmem:[%s2717 + $0x58] sm:$0xff]
        %v3449 = vld [vmem:[%s2717 + $0x60] sm:$0xff]
        %v3450 = vld [vmem:[%s2717 + $0x68] sm:$0xff]
        %v3451 = vld [vmem:[%s2717 + $0x70] sm:$0xff]
        %v3452 = vld [vmem:[%s2717 + $0x78] sm:$0xff]
        %v3453 = vld [vmem:[%s2699] sm:$0x1]
        %v3455 = vlaneseq
        %v3456 = vshrl.u32 %v3455, 7
        %v3457 = vsub.s32 0, %v3456
        %v3458 = vrot.slane %v3453, %v3457
        %3460 = vmatprep.subr.mxu0 0.0
        %3461 = vmatpush1.msra.mxu0 %v3433
        %3462 = vmatprep.subr.mxu0 0.0
        %3463 = vmatpush1.msra.mxu0 %v3434
        %3464 = vmatprep.subr.mxu0 0.0
        %3465 = vmatpush1.msra.mxu0 %v3435
        %3466 = vmatprep.subr.mxu0 0.0
        %3467 = vmatpush1.msra.mxu0 %v3436
        %3468 = vmatprep.subr.mxu0 0.0
        %3469 = vmatpush1.msra.mxu0 0.0
        %3470 = vmatprep.subr.mxu0 0.0
        %3471 = vmatpush1.msra.mxu0 0.0
        %3472 = vmatprep.subr.mxu0 0.0
        %3473 = vmatpush1.msra.mxu0 0.0
        %3474 = vmatprep.subr.mxu0 0.0
        %3475 = vmatpush1.msra.mxu0 0.0
        %3476 = vmatprep.subr.mxu0 0.0
        %3477 = vmatpush1.msra.mxu0 0.0
        %3478 = vmatprep.subr.mxu0 0.0
        %3479 = vmatpush1.msra.mxu0 0.0
        %3480 = vmatprep.subr.mxu0 0.0
        %3481 = vmatpush1.msra.mxu0 0.0
        %3482 = vmatprep.subr.mxu0 0.0
        %3483 = vmatpush1.msra.mxu0 0.0
        %3484 = vmatprep.subr.mxu0 0.0
        %3485 = vmatpush1.msra.mxu0 0.0
        %3486 = vmatprep.subr.mxu0 0.0
        %3487 = vmatpush1.msra.mxu0 0.0
        %3488 = vmatprep.subr.mxu0 0.0
        %3489 = vmatpush1.msra.mxu0 0.0
        %3490 = vmatprep.subr.mxu0 0.0
        %3491 = vmatpush1.msra.mxu0 0.0
        %3492 = vmatprep.subr.mxu0 0.0
        %3493 = vmatpush1.msra.mxu0 0.0
        %3494 = vmatprep.subr.mxu0 0.0
        %3495 = vmatpush1.msra.mxu0 0.0
        %3496 = vmatprep.subr.mxu0 0.0
        %3497 = vmatpush1.msra.mxu0 0.0
        %3498 = vmatprep.subr.mxu0 0.0
        %3499 = vmatpush1.msra.mxu0 0.0
        %3500 = vmatprep.subr.mxu0 0.0
        %3501 = vmatpush1.msra.mxu0 0.0
        %3502 = vmatprep.subr.mxu0 0.0
        %3503 = vmatpush1.msra.mxu0 0.0
        %3504 = vmatprep.subr.mxu0 0.0
        %3505 = vmatpush1.msra.mxu0 0.0
        %3506 = vmatprep.subr.mxu0 0.0
        %3507 = vmatpush1.msra.mxu0 0.0
        %3508 = vmatprep.subr.mxu0 0.0
        %3509 = vmatpush1.msra.mxu0 0.0
        %3510 = vmatprep.subr.mxu0 0.0
        %3511 = vmatpush1.msra.mxu0 0.0
        %3512 = vmatprep.subr.mxu0 0.0
        %3513 = vmatpush1.msra.mxu0 0.0
        %3514 = vmatprep.subr.mxu0 0.0
        %3515 = vmatpush1.msra.mxu0 0.0
        %3516 = vmatprep.subr.mxu0 0.0
        %3517 = vmatpush1.msra.mxu0 0.0
        %3518 = vmatprep.subr.mxu0 0.0
        %3519 = vmatpush1.msra.mxu0 0.0
        %3520 = vmatprep.subr.mxu0 0.0
        %3521 = vmatpush1.msra.mxu0 0.0
        %3522 = vmatprep.subr.mxu0 0.0
        %3523 = vmatpush1.msra.mxu0 0.0
        %3524 = vmatprep.mubr.f32.mxu0 0.0
        %3525 = vmatmul.mubr.f32.gmra.mrb[0].mxu0 %v2765
        %v3526 = vpop.f32.mrb[0].mxu0
        %v3527 = vadd.f32 %v3458, %v3526
        %v3528 = vpop.f32.mrb[0].mxu0
        %3529 = vdwg.mxu0
        %v3530 = vmax.f32 %v3527, 0.0
        %v3531 = vld [vmem:[%s2735] sm:$0x1]
        %v3533 = vlaneseq
        %v3534 = vshrl.u32 %v3533, 7
        %v3535 = vsub.s32 0, %v3534
        %v3536 = vrot.slane %v3531, %v3535
        %3538 = vmatprep.subr.mxu0 0.0
        %3539 = vmatpush1.msra.mxu0 %v3437
        %3540 = vmatprep.subr.mxu0 0.0
        %3541 = vmatpush1.msra.mxu0 %v3438
        %3542 = vmatprep.subr.mxu0 0.0
        %3543 = vmatpush1.msra.mxu0 %v3439
        %3544 = vmatprep.subr.mxu0 0.0
        %3545 = vmatpush1.msra.mxu0 %v3440
        %3546 = vmatprep.subr.mxu0 0.0
        %3547 = vmatpush1.msra.mxu0 %v3441
        %3548 = vmatprep.subr.mxu0 0.0
        %3549 = vmatpush1.msra.mxu0 %v3442
        %3550 = vmatprep.subr.mxu0 0.0
        %3551 = vmatpush1.msra.mxu0 %v3443
        %3552 = vmatprep.subr.mxu0 0.0
        %3553 = vmatpush1.msra.mxu0 %v3444
        %3554 = vmatprep.subr.mxu0 0.0
        %3555 = vmatpush1.msra.mxu0 %v3445
        %3556 = vmatprep.subr.mxu0 0.0
        %3557 = vmatpush1.msra.mxu0 %v3446
        %3558 = vmatprep.subr.mxu0 0.0
        %3559 = vmatpush1.msra.mxu0 %v3447
        %3560 = vmatprep.subr.mxu0 0.0
        %3561 = vmatpush1.msra.mxu0 %v3448
        %3562 = vmatprep.subr.mxu0 0.0
        %3563 = vmatpush1.msra.mxu0 %v3449
        %3564 = vmatprep.subr.mxu0 0.0
        %3565 = vmatpush1.msra.mxu0 %v3450
        %3566 = vmatprep.subr.mxu0 0.0
        %3567 = vmatpush1.msra.mxu0 %v3451
        %3568 = vmatprep.subr.mxu0 0.0
        %3569 = vmatpush1.msra.mxu0 %v3452
        %3570 = vmatprep.subr.mxu0 0.0
        %3571 = vmatpush1.msra.mxu0 0.0
        %3572 = vmatprep.subr.mxu0 0.0
        %3573 = vmatpush1.msra.mxu0 0.0
        %3574 = vmatprep.subr.mxu0 0.0
        %3575 = vmatpush1.msra.mxu0 0.0
        %3576 = vmatprep.subr.mxu0 0.0
        %3577 = vmatpush1.msra.mxu0 0.0
        %3578 = vmatprep.subr.mxu0 0.0
        %3579 = vmatpush1.msra.mxu0 0.0
        %3580 = vmatprep.subr.mxu0 0.0
        %3581 = vmatpush1.msra.mxu0 0.0
        %3582 = vmatprep.subr.mxu0 0.0
        %3583 = vmatpush1.msra.mxu0 0.0
        %3584 = vmatprep.subr.mxu0 0.0
        %3585 = vmatpush1.msra.mxu0 0.0
        %3586 = vmatprep.subr.mxu0 0.0
        %3587 = vmatpush1.msra.mxu0 0.0
        %3588 = vmatprep.subr.mxu0 0.0
        %3589 = vmatpush1.msra.mxu0 0.0
        %3590 = vmatprep.subr.mxu0 0.0
        %3591 = vmatpush1.msra.mxu0 0.0
        %3592 = vmatprep.subr.mxu0 0.0
        %3593 = vmatpush1.msra.mxu0 0.0
        %3594 = vmatprep.subr.mxu0 0.0
        %3595 = vmatpush1.msra.mxu0 0.0
        %3596 = vmatprep.subr.mxu0 0.0
        %3597 = vmatpush1.msra.mxu0 0.0
        %3598 = vmatprep.subr.mxu0 0.0
        %3599 = vmatpush1.msra.mxu0 0.0
        %3600 = vmatprep.subr.mxu0 0.0
        %3601 = vmatpush1.msra.mxu0 0.0
        %3602 = vmatprep.mubr.f32.mxu0 0.0
        %3603 = vmatmul.mubr.f32.gmra.mrb[0].mxu0 %v3530
        %v3604 = vpop.f32.mrb[0].mxu0
        %v3605 = vadd.f32 %v3536, %v3604
        %v3606 = vpop.f32.mrb[0].mxu0
        %3607 = vdwg.mxu0
        %v3608 = vsel %vm454, %v3605, -1e+30
        %3609 = vmax.xlane.f32.xlu0 %v3608
        %v3610 = vpop.xlane.xlu0 %3609
        %v3611 = vsub.f32 %v3608, %v3610
        %v3612 = vmul.f32 %v3611, 1.442695
        %v3613 = vpow.pop %v3612
        %3614 = vadd.xlane.f32.xlu0 %v3613
        %v3615 = vpop.xlane.xlu0 %3614
        %v3616 = vrcp.pop %v3615
        %v3617 = vmul.f32 %v3613, %v3616
        %v3618 = vsub.f32 %v3617, %v2688
        %v3619 = vmul.f32 %v3618, 0.125
        %3620 = vmatprep.subr.mxu0 0.0
        %3621 = vmatpush1.xpose.msra.mxu0 %v3437
        %3622 = vmatprep.subr.mxu0 0.0
        %3623 = vmatpush1.xpose.msra.mxu0 %v3438
        %3624 = vmatprep.subr.mxu0 0.0
        %3625 = vmatpush1.xpose.msra.mxu0 %v3439
        %3626 = vmatprep.subr.mxu0 0.0
        %3627 = vmatpush1.xpose.msra.mxu0 %v3440
        %3628 = vmatprep.subr.mxu0 0.0
        %3629 = vmatpush1.xpose.msra.mxu0 %v3441
        %3630 = vmatprep.subr.mxu0 0.0
        %3631 = vmatpush1.xpose.msra.mxu0 %v3442
        %3632 = vmatprep.subr.mxu0 0.0
        %3633 = vmatpush1.xpose.msra.mxu0 %v3443
        %3634 = vmatprep.subr.mxu0 0.0
        %3635 = vmatpush1.xpose.msra.mxu0 %v3444
        %3636 = vmatprep.subr.mxu0 0.0
        %3637 = vmatpush1.xpose.msra.mxu0 %v3445
        %3638 = vmatprep.subr.mxu0 0.0
        %3639 = vmatpush1.xpose.msra.mxu0 %v3446
        %3640 = vmatprep.subr.mxu0 0.0
        %3641 = vmatpush1.xpose.msra.mxu0 %v3447
        %3642 = vmatprep.subr.mxu0 0.0
        %3643 = vmatpush1.xpose.msra.mxu0 %v3448
        %3644 = vmatprep.subr.mxu0 0.0
        %3645 = vmatpush1.xpose.msra.mxu0 %v3449
        %3646 = vmatprep.subr.mxu0 0.0
        %3647 = vmatpush1.xpose.msra.mxu0 %v3450
        %3648 = vmatprep.subr.mxu0 0.0
        %3649 = vmatpush1.xpose.msra.mxu0 %v3451
        %3650 = vmatprep.subr.mxu0 0.0
        %3651 = vmatpush1.xpose.msra.mxu0 %v3452
        %3652 = vmatprep.subr.mxu0 0.0
        %3653 = vmatpush1.xpose.msra.mxu0 0.0
        %3654 = vmatprep.subr.mxu0 0.0
        %3655 = vmatpush1.xpose.msra.mxu0 0.0
        %3656 = vmatprep.subr.mxu0 0.0
        %3657 = vmatpush1.xpose.msra.mxu0 0.0
        %3658 = vmatprep.subr.mxu0 0.0
        %3659 = vmatpush1.xpose.msra.mxu0 0.0
        %3660 = vmatprep.subr.mxu0 0.0
        %3661 = vmatpush1.xpose.msra.mxu0 0.0
        %3662 = vmatprep.subr.mxu0 0.0
        %3663 = vmatpush1.xpose.msra.mxu0 0.0
        %3664 = vmatprep.subr.mxu0 0.0
        %3665 = vmatpush1.xpose.msra.mxu0 0.0
        %3666 = vmatprep.subr.mxu0 0.0
        %3667 = vmatpush1.xpose.msra.mxu0 0.0
        %3668 = vmatprep.subr.mxu0 0.0
        %3669 = vmatpush1.xpose.msra.mxu0 0.0
        %3670 = vmatprep.subr.mxu0 0.0
        %3671 = vmatpush1.xpose.msra.mxu0 0.0
        %3672 = vmatprep.subr.mxu0 0.0
        %3673 = vmatpush1.xpose.msra.mxu0 0.0
        %3674 = vmatprep.subr.mxu0 0.0
        %3675 = vmatpush1.xpose.msra.mxu0 0.0
        %3676 = vmatprep.subr.mxu0 0.0
        %3677 = vmatpush1.xpose.msra.mxu0 0.0
        %3678 = vmatprep.subr.mxu0 0.0
        %3679 = vmatpush1.xpose.msra.mxu0 0.0
        %3680 = vmatprep.subr.mxu0 0.0
        %3681 = vmatpush1.xpose.msra.mxu0 0.0
        %3682 = vmatprep.subr.mxu0 0.0
        %3683 = vmatpush1.xpose.msra.mxu0 0.0
        %3684 = vmatprep.mubr.f32.mxu0 0.0
        %3685 = vmatmul.mubr.f32.gmra.mrb[0].mxu0 %v3619
        %v3686 = vpop.f32.mrb[0].mxu0
        %v3687 = vadd.f32 0.0, %v3686
        %v3688 = vpop.f32.mrb[0].mxu0
        %3689 = vdwg.mxu0
        %3690 = vxpose.xlu0.b32.start [1/16] %v3530, 128
        %3691 = vxpose.xlu0.b32.cont [2/16] 0.0, 128
        %3692 = vxpose.xlu0.b32.cont [3/16] 0.0, 128
        %3693 = vxpose.xlu0.b32.cont [4/16] 0.0, 128
        %3694 = vxpose.xlu0.b32.cont [5/16] 0.0, 128
        %3695 = vxpose.xlu0.b32.cont [6/16] 0.0, 128
        %3696 = vxpose.xlu0.b32.cont [7/16] 0.0, 128
        %3697 = vxpose.xlu0.b32.cont [8/16] 0.0, 128
        %3698 = vxpose.xlu0.b32.cont [9/16] 0.0, 128
        %3699 = vxpose.xlu0.b32.cont [10/16] 0.0, 128
        %3700 = vxpose.xlu0.b32.cont [11/16] 0.0, 128
        %3701 = vxpose.xlu0.b32.cont [12/16] 0.0, 128
        %3702 = vxpose.xlu0.b32.cont [13/16] 0.0, 128
        %3703 = vxpose.xlu0.b32.cont [14/16] 0.0, 128
        %3704 = vxpose.xlu0.b32.cont [15/16] 0.0, 128
        %3705 = vxpose.xlu0.b32.end [16/16] 0.0, 128
        %v3706 = vpop.trf.xlu0
        %v3707 = vpop.trf.xlu0
        %v3708 = vpop.trf.xlu0
        %v3709 = vpop.trf.xlu0
        %v3710 = vpop.trf.xlu0
        %v3711 = vpop.trf.xlu0
        %v3712 = vpop.trf.xlu0
        %v3713 = vpop.trf.xlu0
        %v3714 = vpop.trf.xlu0
        %v3715 = vpop.trf.xlu0
        %v3716 = vpop.trf.xlu0
        %v3717 = vpop.trf.xlu0
        %v3718 = vpop.trf.xlu0
        %v3719 = vpop.trf.xlu0
        %v3720 = vpop.trf.xlu0
        %v3721 = vpop.trf.xlu0
        %v3723 = vsel %vm800, %v3706, 0
        %v3726 = vsel %vm800, %v3707, 0
        %v3729 = vsel %vm800, %v3708, 0
        %v3732 = vsel %vm800, %v3709, 0
        %v3735 = vsel %vm800, %v3710, 0
        %v3738 = vsel %vm800, %v3711, 0
        %v3741 = vsel %vm800, %v3712, 0
        %v3744 = vsel %vm800, %v3713, 0
        %v3747 = vsel %vm800, %v3714, 0
        %v3750 = vsel %vm800, %v3715, 0
        %v3753 = vsel %vm800, %v3716, 0
        %v3756 = vsel %vm800, %v3717, 0
        %v3759 = vsel %vm800, %v3718, 0
        %v3762 = vsel %vm800, %v3719, 0
        %v3765 = vsel %vm800, %v3720, 0
        %v3768 = vsel %vm800, %v3721, 0
        %3770 = vmatprep.subr.mxu0 0.0
        %3771 = vmatpush1.msra.mxu0 %v3619
        %3772 = vmatprep.subr.mxu0 0.0
        %3773 = vmatpush1.msra.mxu0 0.0
        %3774 = vmatprep.subr.mxu0 0.0
        %3775 = vmatpush1.msra.mxu0 0.0
        %3776 = vmatprep.subr.mxu0 0.0
        %3777 = vmatpush1.msra.mxu0 0.0
        %3778 = vmatprep.subr.mxu0 0.0
        %3779 = vmatpush1.msra.mxu0 0.0
        %3780 = vmatprep.subr.mxu0 0.0
        %3781 = vmatpush1.msra.mxu0 0.0
        %3782 = vmatprep.subr.mxu0 0.0
        %3783 = vmatpush1.msra.mxu0 0.0
        %3784 = vmatprep.subr.mxu0 0.0
        %3785 = vmatpush1.msra.mxu0 0.0
        %3786 = vmatprep.subr.mxu0 0.0
        %3787 = vmatpush1.msra.mxu0 0.0
        %3788 = vmatprep.subr.mxu0 0.0
        %3789 = vmatpush1.msra.mxu0 0.0
        %3790 = vmatprep.subr.mxu0 0.0
        %3791 = vmatpush1.msra.mxu0 0.0
        %3792 = vmatprep.subr.mxu0 0.0
        %3793 = vmatpush1.msra.mxu0 0.0
        %3794 = vmatprep.subr.mxu0 0.0
        %3795 = vmatpush1.msra.mxu0 0.0
        %3796 = vmatprep.subr.mxu0 0.0
        %3797 = vmatpush1.msra.mxu0 0.0
        %3798 = vmatprep.subr.mxu0 0.0
        %3799 = vmatpush1.msra.mxu0 0.0
        %3800 = vmatprep.subr.mxu0 0.0
        %3801 = vmatpush1.msra.mxu0 0.0
        %3802 = vmatprep.subr.mxu0 0.0
        %3803 = vmatpush1.msra.mxu0 0.0
        %3804 = vmatprep.subr.mxu0 0.0
        %3805 = vmatpush1.msra.mxu0 0.0
        %3806 = vmatprep.subr.mxu0 0.0
        %3807 = vmatpush1.msra.mxu0 0.0
        %3808 = vmatprep.subr.mxu0 0.0
        %3809 = vmatpush1.msra.mxu0 0.0
        %3810 = vmatprep.subr.mxu0 0.0
        %3811 = vmatpush1.msra.mxu0 0.0
        %3812 = vmatprep.subr.mxu0 0.0
        %3813 = vmatpush1.msra.mxu0 0.0
        %3814 = vmatprep.subr.mxu0 0.0
        %3815 = vmatpush1.msra.mxu0 0.0
        %3816 = vmatprep.subr.mxu0 0.0
        %3817 = vmatpush1.msra.mxu0 0.0
        %3818 = vmatprep.subr.mxu0 0.0
        %3819 = vmatpush1.msra.mxu0 0.0
        %3820 = vmatprep.subr.mxu0 0.0
        %3821 = vmatpush1.msra.mxu0 0.0
        %3822 = vmatprep.subr.mxu0 0.0
        %3823 = vmatpush1.msra.mxu0 0.0
        %3824 = vmatprep.subr.mxu0 0.0
        %3825 = vmatpush1.msra.mxu0 0.0
        %3826 = vmatprep.subr.mxu0 0.0
        %3827 = vmatpush1.msra.mxu0 0.0
        %3828 = vmatprep.subr.mxu0 0.0
        %3829 = vmatpush1.msra.mxu0 0.0
        %3830 = vmatprep.subr.mxu0 0.0
        %3831 = vmatpush1.msra.mxu0 0.0
        %3832 = vmatprep.subr.mxu0 0.0
        %3833 = vmatpush1.msra.mxu0 0.0
        %3834 = vmatprep.mubr.f32.mxu0 0.0
        %3835 = vmatmul.mubr.f32.gmra.mrb[0].mxu0 %v3723
        %v3836 = vpop.f32.mrb[0].mxu0
        %v3837 = vadd.f32 0.0, %v3836
        %v3838 = vpop.f32.mrb[0].mxu0
        %3839 = vmatprep.mubr.f32.mxu0 0.0
        %3840 = vmatmul.mubr.f32.gmra.mrb[0].mxu0 %v3726
        %v3841 = vpop.f32.mrb[0].mxu0
        %v3842 = vadd.f32 0.0, %v3841
        %v3843 = vpop.f32.mrb[0].mxu0
        %3844 = vmatprep.mubr.f32.mxu0 0.0
        %3845 = vmatmul.mubr.f32.gmra.mrb[0].mxu0 %v3729
        %v3846 = vpop.f32.mrb[0].mxu0
        %v3847 = vadd.f32 0.0, %v3846
        %v3848 = vpop.f32.mrb[0].mxu0
        %3849 = vmatprep.mubr.f32.mxu0 0.0
        %3850 = vmatmul.mubr.f32.gmra.mrb[0].mxu0 %v3732
        %v3851 = vpop.f32.mrb[0].mxu0
        %v3852 = vadd.f32 0.0, %v3851
        %v3853 = vpop.f32.mrb[0].mxu0
        %3854 = vmatprep.mubr.f32.mxu0 0.0
        %3855 = vmatmul.mubr.f32.gmra.mrb[0].mxu0 %v3735
        %v3856 = vpop.f32.mrb[0].mxu0
        %v3857 = vadd.f32 0.0, %v3856
        %v3858 = vpop.f32.mrb[0].mxu0
        %3859 = vmatprep.mubr.f32.mxu0 0.0
        %3860 = vmatmul.mubr.f32.gmra.mrb[0].mxu0 %v3738
        %v3861 = vpop.f32.mrb[0].mxu0
        %v3862 = vadd.f32 0.0, %v3861
        %v3863 = vpop.f32.mrb[0].mxu0
        %3864 = vmatprep.mubr.f32.mxu0 0.0
        %3865 = vmatmul.mubr.f32.gmra.mrb[0].mxu0 %v3741
        %v3866 = vpop.f32.mrb[0].mxu0
        %v3867 = vadd.f32 0.0, %v3866
        %v3868 = vpop.f32.mrb[0].mxu0
        %3869 = vmatprep.mubr.f32.mxu0 0.0
        %3870 = vmatmul.mubr.f32.gmra.mrb[0].mxu0 %v3744
        %v3871 = vpop.f32.mrb[0].mxu0
        %v3872 = vadd.f32 0.0, %v3871
        %v3873 = vpop.f32.mrb[0].mxu0
        %3874 = vmatprep.mubr.f32.mxu0 0.0
        %3875 = vmatmul.mubr.f32.gmra.mrb[0].mxu0 %v3747
        %v3876 = vpop.f32.mrb[0].mxu0
        %v3877 = vadd.f32 0.0, %v3876
        %v3878 = vpop.f32.mrb[0].mxu0
        %3879 = vmatprep.mubr.f32.mxu0 0.0
        %3880 = vmatmul.mubr.f32.gmra.mrb[0].mxu0 %v3750
        %v3881 = vpop.f32.mrb[0].mxu0
        %v3882 = vadd.f32 0.0, %v3881
        %v3883 = vpop.f32.mrb[0].mxu0
        %3884 = vmatprep.mubr.f32.mxu0 0.0
        %3885 = vmatmul.mubr.f32.gmra.mrb[0].mxu0 %v3753
        %v3886 = vpop.f32.mrb[0].mxu0
        %v3887 = vadd.f32 0.0, %v3886
        %v3888 = vpop.f32.mrb[0].mxu0
        %3889 = vmatprep.mubr.f32.mxu0 0.0
        %3890 = vmatmul.mubr.f32.gmra.mrb[0].mxu0 %v3756
        %v3891 = vpop.f32.mrb[0].mxu0
        %v3892 = vadd.f32 0.0, %v3891
        %v3893 = vpop.f32.mrb[0].mxu0
        %3894 = vmatprep.mubr.f32.mxu0 0.0
        %3895 = vmatmul.mubr.f32.gmra.mrb[0].mxu0 %v3759
        %v3896 = vpop.f32.mrb[0].mxu0
        %v3897 = vadd.f32 0.0, %v3896
        %v3898 = vpop.f32.mrb[0].mxu0
        %3899 = vmatprep.mubr.f32.mxu0 0.0
        %3900 = vmatmul.mubr.f32.gmra.mrb[0].mxu0 %v3762
        %v3901 = vpop.f32.mrb[0].mxu0
        %v3902 = vadd.f32 0.0, %v3901
        %v3903 = vpop.f32.mrb[0].mxu0
        %3904 = vmatprep.mubr.f32.mxu0 0.0
        %3905 = vmatmul.mubr.f32.gmra.mrb[0].mxu0 %v3765
        %v3906 = vpop.f32.mrb[0].mxu0
        %v3907 = vadd.f32 0.0, %v3906
        %v3908 = vpop.f32.mrb[0].mxu0
        %3909 = vmatprep.mubr.f32.mxu0 0.0
        %3910 = vmatmul.mubr.f32.gmra.mrb[0].mxu0 %v3768
        %v3911 = vpop.f32.mrb[0].mxu0
        %v3912 = vadd.f32 0.0, %v3911
        %v3913 = vpop.f32.mrb[0].mxu0
        %3914 = vdwg.mxu0
        %v3915 = vmul.f32 %v3837, 0.1
        %v3916 = vmul.f32 %v3842, 0.1
        %v3917 = vmul.f32 %v3847, 0.1
        %v3918 = vmul.f32 %v3852, 0.1
        %v3919 = vmul.f32 %v3857, 0.1
        %v3920 = vmul.f32 %v3862, 0.1
        %v3921 = vmul.f32 %v3867, 0.1
        %v3922 = vmul.f32 %v3872, 0.1
        %v3923 = vmul.f32 %v3877, 0.1
        %v3924 = vmul.f32 %v3882, 0.1
        %v3925 = vmul.f32 %v3887, 0.1
        %v3926 = vmul.f32 %v3892, 0.1
        %v3927 = vmul.f32 %v3897, 0.1
        %v3928 = vmul.f32 %v3902, 0.1
        %v3929 = vmul.f32 %v3907, 0.1
        %v3930 = vmul.f32 %v3912, 0.1
        %v3931 = vsub.f32 %v3437, %v3915
        %v3932 = vsub.f32 %v3438, %v3916
        %v3933 = vsub.f32 %v3439, %v3917
        %v3934 = vsub.f32 %v3440, %v3918
        %v3935 = vsub.f32 %v3441, %v3919
        %v3936 = vsub.f32 %v3442, %v3920
        %v3937 = vsub.f32 %v3443, %v3921
        %v3938 = vsub.f32 %v3444, %v3922
        %v3939 = vsub.f32 %v3445, %v3923
        %v3940 = vsub.f32 %v3446, %v3924
        %v3941 = vsub.f32 %v3447, %v3925
        %v3942 = vsub.f32 %v3448, %v3926
        %v3943 = vsub.f32 %v3449, %v3927
        %v3944 = vsub.f32 %v3450, %v3928
        %v3945 = vsub.f32 %v3451, %v3929
        %v3946 = vsub.f32 %v3452, %v3930
        %3947 = vst [vmem:[%s2717] sm:$0xff] %v3931
        %3948 = vst [vmem:[%s2717 + $0x8] sm:$0xff] %v3932
        %3949 = vst [vmem:[%s2717 + $0x10] sm:$0xff] %v3933
        %3950 = vst [vmem:[%s2717 + $0x18] sm:$0xff] %v3934
        %3951 = vst [vmem:[%s2717 + $0x20] sm:$0xff] %v3935
        %3952 = vst [vmem:[%s2717 + $0x28] sm:$0xff] %v3936
        %3953 = vst [vmem:[%s2717 + $0x30] sm:$0xff] %v3937
        %3954 = vst [vmem:[%s2717 + $0x38] sm:$0xff] %v3938
        %3955 = vst [vmem:[%s2717 + $0x40] sm:$0xff] %v3939
        %3956 = vst [vmem:[%s2717 + $0x48] sm:$0xff] %v3940
        %3957 = vst [vmem:[%s2717 + $0x50] sm:$0xff] %v3941
        %3958 = vst [vmem:[%s2717 + $0x58] sm:$0xff] %v3942
        %3959 = vst [vmem:[%s2717 + $0x60] sm:$0xff] %v3943
        %3960 = vst [vmem:[%s2717 + $0x68] sm:$0xff] %v3944
        %3961 = vst [vmem:[%s2717 + $0x70] sm:$0xff] %v3945
        %3962 = vst [vmem:[%s2717 + $0x78] sm:$0xff] %v3946
        %v3963 = vld [vmem:[%s2735] sm:$0x1]
        %v3964 = vrot.slane %v3619, 4
        %v3965 = vadd.f32 %v3619, %v3964
        %v3966 = vrot.slane %v3965, 2
        %v3967 = vadd.f32 %v3965, %v3966
        %v3968 = vrot.slane %v3967, 1
        %v3969 = vadd.f32 %v3967, %v3968
        %v3970 = vmul.f32 %v3969, 0.1
        %v3971 = vsub.f32 %v3963, %v3970
        %3972 = vst [vmem:[%s2735] sm:$0x1] %v3971
        %vm3973 = vcmp.gt.f32.partialorder %v3527, 0.0
        %v3974 = vsel %vm3973, %v3687, 0.0
        %3975 = vmatprep.subr.mxu0 0.0
        %3976 = vmatpush1.msra.mxu0 %v3974
        %3977 = vmatprep.subr.mxu0 0.0
        %3978 = vmatpush1.msra.mxu0 0.0
        %3979 = vmatprep.subr.mxu0 0.0
        %3980 = vmatpush1.msra.mxu0 0.0
        %3981 = vmatprep.subr.mxu0 0.0
        %3982 = vmatpush1.msra.mxu0 0.0
        %3983 = vmatprep.subr.mxu0 0.0
        %3984 = vmatpush1.msra.mxu0 0.0
        %3985 = vmatprep.subr.mxu0 0.0
        %3986 = vmatpush1.msra.mxu0 0.0
        %3987 = vmatprep.subr.mxu0 0.0
        %3988 = vmatpush1.msra.mxu0 0.0
        %3989 = vmatprep.subr.mxu0 0.0
        %3990 = vmatpush1.msra.mxu0 0.0
        %3991 = vmatprep.subr.mxu0 0.0
        %3992 = vmatpush1.msra.mxu0 0.0
        %3993 = vmatprep.subr.mxu0 0.0
        %3994 = vmatpush1.msra.mxu0 0.0
        %3995 = vmatprep.subr.mxu0 0.0
        %3996 = vmatpush1.msra.mxu0 0.0
        %3997 = vmatprep.subr.mxu0 0.0
        %3998 = vmatpush1.msra.mxu0 0.0
        %3999 = vmatprep.subr.mxu0 0.0
        %4000 = vmatpush1.msra.mxu0 0.0
        %4001 = vmatprep.subr.mxu0 0.0
        %4002 = vmatpush1.msra.mxu0 0.0
        %4003 = vmatprep.subr.mxu0 0.0
        %4004 = vmatpush1.msra.mxu0 0.0
        %4005 = vmatprep.subr.mxu0 0.0
        %4006 = vmatpush1.msra.mxu0 0.0
        %4007 = vmatprep.subr.mxu0 0.0
        %4008 = vmatpush1.msra.mxu0 0.0
        %4009 = vmatprep.subr.mxu0 0.0
        %4010 = vmatpush1.msra.mxu0 0.0
        %4011 = vmatprep.subr.mxu0 0.0
        %4012 = vmatpush1.msra.mxu0 0.0
        %4013 = vmatprep.subr.mxu0 0.0
        %4014 = vmatpush1.msra.mxu0 0.0
        %4015 = vmatprep.subr.mxu0 0.0
        %4016 = vmatpush1.msra.mxu0 0.0
        %4017 = vmatprep.subr.mxu0 0.0
        %4018 = vmatpush1.msra.mxu0 0.0
        %4019 = vmatprep.subr.mxu0 0.0
        %4020 = vmatpush1.msra.mxu0 0.0
        %4021 = vmatprep.subr.mxu0 0.0
        %4022 = vmatpush1.msra.mxu0 0.0
        %4023 = vmatprep.subr.mxu0 0.0
        %4024 = vmatpush1.msra.mxu0 0.0
        %4025 = vmatprep.subr.mxu0 0.0
        %4026 = vmatpush1.msra.mxu0 0.0
        %4027 = vmatprep.subr.mxu0 0.0
        %4028 = vmatpush1.msra.mxu0 0.0
        %4029 = vmatprep.subr.mxu0 0.0
        %4030 = vmatpush1.msra.mxu0 0.0
        %4031 = vmatprep.subr.mxu0 0.0
        %4032 = vmatpush1.msra.mxu0 0.0
        %4033 = vmatprep.subr.mxu0 0.0
        %4034 = vmatpush1.msra.mxu0 0.0
        %4035 = vmatprep.subr.mxu0 0.0
        %4036 = vmatpush1.msra.mxu0 0.0
        %4037 = vmatprep.subr.mxu0 0.0
        %4038 = vmatpush1.msra.mxu0 0.0
        %4039 = vmatprep.mubr.f32.mxu0 0.0
        %4040 = vmatmul.mubr.f32.gmra.mrb[0].mxu0 %v3315
        %v4041 = vpop.f32.mrb[0].mxu0
        %v4042 = vadd.f32 0.0, %v4041
        %v4043 = vpop.f32.mrb[0].mxu0
        %4044 = vmatprep.mubr.f32.mxu0 0.0
        %4045 = vmatmul.mubr.f32.gmra.mrb[0].mxu0 %v3318
        %v4046 = vpop.f32.mrb[0].mxu0
        %v4047 = vadd.f32 0.0, %v4046
        %v4048 = vpop.f32.mrb[0].mxu0
        %4049 = vmatprep.mubr.f32.mxu0 0.0
        %4050 = vmatmul.mubr.f32.gmra.mrb[0].mxu0 %v3321
        %v4051 = vpop.f32.mrb[0].mxu0
        %v4052 = vadd.f32 0.0, %v4051
        %v4053 = vpop.f32.mrb[0].mxu0
        %4054 = vmatprep.mubr.f32.mxu0 0.0
        %4055 = vmatmul.mubr.f32.gmra.mrb[0].mxu0 %v3324
        %v4056 = vpop.f32.mrb[0].mxu0
        %v4057 = vadd.f32 0.0, %v4056
        %v4058 = vpop.f32.mrb[0].mxu0
        %4059 = vdwg.mxu0
        %v4060 = vmul.f32 %v4042, 0.1
        %v4061 = vmul.f32 %v4047, 0.1
        %v4062 = vmul.f32 %v4052, 0.1
        %v4063 = vmul.f32 %v4057, 0.1
        %v4064 = vsub.f32 %v3433, %v4060
        %v4065 = vsub.f32 %v3434, %v4061
        %v4066 = vsub.f32 %v3435, %v4062
        %v4067 = vsub.f32 %v3436, %v4063
        %4068 = vst [vmem:[%s2693] sm:$0xff] %v4064
        %4069 = vst [vmem:[%s2693 + $0x8] sm:$0xff] %v4065
        %4070 = vst [vmem:[%s2693 + $0x10] sm:$0xff] %v4066
        %4071 = vst [vmem:[%s2693 + $0x18] sm:$0xff] %v4067
        %v4072 = vld [vmem:[%s2699] sm:$0x1]
        %v4073 = vrot.slane %v3974, 4
        %v4074 = vadd.f32 %v3974, %v4073
        %v4075 = vrot.slane %v4074, 2
        %v4076 = vadd.f32 %v4074, %v4075
        %v4077 = vrot.slane %v4076, 1
        %v4078 = vadd.f32 %v4076, %v4077
        %v4079 = vmul.f32 %v4078, 0.1
        %v4080 = vsub.f32 %v4072, %v4079
        %4081 = vst [vmem:[%s2699] sm:$0x1] %v4080
        %v4082 = vld [vmem:[%s2693] sm:$0xff]
        %v4083 = vld [vmem:[%s2693 + $0x8] sm:$0xff]
        %v4084 = vld [vmem:[%s2693 + $0x10] sm:$0xff]
        %v4085 = vld [vmem:[%s2693 + $0x18] sm:$0xff]
        %v4086 = vld [vmem:[%s2717] sm:$0xff]
        %v4087 = vld [vmem:[%s2717 + $0x8] sm:$0xff]
        %v4088 = vld [vmem:[%s2717 + $0x10] sm:$0xff]
        %v4089 = vld [vmem:[%s2717 + $0x18] sm:$0xff]
        %v4090 = vld [vmem:[%s2717 + $0x20] sm:$0xff]
        %v4091 = vld [vmem:[%s2717 + $0x28] sm:$0xff]
        %v4092 = vld [vmem:[%s2717 + $0x30] sm:$0xff]
        %v4093 = vld [vmem:[%s2717 + $0x38] sm:$0xff]
        %v4094 = vld [vmem:[%s2717 + $0x40] sm:$0xff]
        %v4095 = vld [vmem:[%s2717 + $0x48] sm:$0xff]
        %v4096 = vld [vmem:[%s2717 + $0x50] sm:$0xff]
        %v4097 = vld [vmem:[%s2717 + $0x58] sm:$0xff]
        %v4098 = vld [vmem:[%s2717 + $0x60] sm:$0xff]
        %v4099 = vld [vmem:[%s2717 + $0x68] sm:$0xff]
        %v4100 = vld [vmem:[%s2717 + $0x70] sm:$0xff]
        %v4101 = vld [vmem:[%s2717 + $0x78] sm:$0xff]
        %v4102 = vld [vmem:[%s2699] sm:$0x1]
        %v4104 = vlaneseq
        %v4105 = vshrl.u32 %v4104, 7
        %v4106 = vsub.s32 0, %v4105
        %v4107 = vrot.slane %v4102, %v4106
        %4109 = vmatprep.subr.mxu0 0.0
        %4110 = vmatpush1.msra.mxu0 %v4082
        %4111 = vmatprep.subr.mxu0 0.0
        %4112 = vmatpush1.msra.mxu0 %v4083
        %4113 = vmatprep.subr.mxu0 0.0
        %4114 = vmatpush1.msra.mxu0 %v4084
        %4115 = vmatprep.subr.mxu0 0.0
        %4116 = vmatpush1.msra.mxu0 %v4085
        %4117 = vmatprep.subr.mxu0 0.0
        %4118 = vmatpush1.msra.mxu0 0.0
        %4119 = vmatprep.subr.mxu0 0.0
        %4120 = vmatpush1.msra.mxu0 0.0
        %4121 = vmatprep.subr.mxu0 0.0
        %4122 = vmatpush1.msra.mxu0 0.0
        %4123 = vmatprep.subr.mxu0 0.0
        %4124 = vmatpush1.msra.mxu0 0.0
        %4125 = vmatprep.subr.mxu0 0.0
        %4126 = vmatpush1.msra.mxu0 0.0
        %4127 = vmatprep.subr.mxu0 0.0
        %4128 = vmatpush1.msra.mxu0 0.0
        %4129 = vmatprep.subr.mxu0 0.0
        %4130 = vmatpush1.msra.mxu0 0.0
        %4131 = vmatprep.subr.mxu0 0.0
        %4132 = vmatpush1.msra.mxu0 0.0
        %4133 = vmatprep.subr.mxu0 0.0
        %4134 = vmatpush1.msra.mxu0 0.0
        %4135 = vmatprep.subr.mxu0 0.0
        %4136 = vmatpush1.msra.mxu0 0.0
        %4137 = vmatprep.subr.mxu0 0.0
        %4138 = vmatpush1.msra.mxu0 0.0
        %4139 = vmatprep.subr.mxu0 0.0
        %4140 = vmatpush1.msra.mxu0 0.0
        %4141 = vmatprep.subr.mxu0 0.0
        %4142 = vmatpush1.msra.mxu0 0.0
        %4143 = vmatprep.subr.mxu0 0.0
        %4144 = vmatpush1.msra.mxu0 0.0
        %4145 = vmatprep.subr.mxu0 0.0
        %4146 = vmatpush1.msra.mxu0 0.0
        %4147 = vmatprep.subr.mxu0 0.0
        %4148 = vmatpush1.msra.mxu0 0.0
        %4149 = vmatprep.subr.mxu0 0.0
        %4150 = vmatpush1.msra.mxu0 0.0
        %4151 = vmatprep.subr.mxu0 0.0
        %4152 = vmatpush1.msra.mxu0 0.0
        %4153 = vmatprep.subr.mxu0 0.0
        %4154 = vmatpush1.msra.mxu0 0.0
        %4155 = vmatprep.subr.mxu0 0.0
        %4156 = vmatpush1.msra.mxu0 0.0
        %4157 = vmatprep.subr.mxu0 0.0
        %4158 = vmatpush1.msra.mxu0 0.0
        %4159 = vmatprep.subr.mxu0 0.0
        %4160 = vmatpush1.msra.mxu0 0.0
        %4161 = vmatprep.subr.mxu0 0.0
        %4162 = vmatpush1.msra.mxu0 0.0
        %4163 = vmatprep.subr.mxu0 0.0
        %4164 = vmatpush1.msra.mxu0 0.0
        %4165 = vmatprep.subr.mxu0 0.0
        %4166 = vmatpush1.msra.mxu0 0.0
        %4167 = vmatprep.subr.mxu0 0.0
        %4168 = vmatpush1.msra.mxu0 0.0
        %4169 = vmatprep.subr.mxu0 0.0
        %4170 = vmatpush1.msra.mxu0 0.0
        %4171 = vmatprep.subr.mxu0 0.0
        %4172 = vmatpush1.msra.mxu0 0.0
        %4173 = vmatprep.mubr.f32.mxu0 0.0
        %4174 = vmatmul.mubr.f32.gmra.mrb[0].mxu0 %v2765
        %v4175 = vpop.f32.mrb[0].mxu0
        %v4176 = vadd.f32 %v4107, %v4175
        %v4177 = vpop.f32.mrb[0].mxu0
        %4178 = vdwg.mxu0
        %v4179 = vmax.f32 %v4176, 0.0
        %v4180 = vld [vmem:[%s2735] sm:$0x1]
        %v4182 = vlaneseq
        %v4183 = vshrl.u32 %v4182, 7
        %v4184 = vsub.s32 0, %v4183
        %v4185 = vrot.slane %v4180, %v4184
        %4187 = vmatprep.subr.mxu0 0.0
        %4188 = vmatpush1.msra.mxu0 %v4086
        %4189 = vmatprep.subr.mxu0 0.0
        %4190 = vmatpush1.msra.mxu0 %v4087
        %4191 = vmatprep.subr.mxu0 0.0
        %4192 = vmatpush1.msra.mxu0 %v4088
        %4193 = vmatprep.subr.mxu0 0.0
        %4194 = vmatpush1.msra.mxu0 %v4089
        %4195 = vmatprep.subr.mxu0 0.0
        %4196 = vmatpush1.msra.mxu0 %v4090
        %4197 = vmatprep.subr.mxu0 0.0
        %4198 = vmatpush1.msra.mxu0 %v4091
        %4199 = vmatprep.subr.mxu0 0.0
        %4200 = vmatpush1.msra.mxu0 %v4092
        %4201 = vmatprep.subr.mxu0 0.0
        %4202 = vmatpush1.msra.mxu0 %v4093
        %4203 = vmatprep.subr.mxu0 0.0
        %4204 = vmatpush1.msra.mxu0 %v4094
        %4205 = vmatprep.subr.mxu0 0.0
        %4206 = vmatpush1.msra.mxu0 %v4095
        %4207 = vmatprep.subr.mxu0 0.0
        %4208 = vmatpush1.msra.mxu0 %v4096
        %4209 = vmatprep.subr.mxu0 0.0
        %4210 = vmatpush1.msra.mxu0 %v4097
        %4211 = vmatprep.subr.mxu0 0.0
        %4212 = vmatpush1.msra.mxu0 %v4098
        %4213 = vmatprep.subr.mxu0 0.0
        %4214 = vmatpush1.msra.mxu0 %v4099
        %4215 = vmatprep.subr.mxu0 0.0
        %4216 = vmatpush1.msra.mxu0 %v4100
        %4217 = vmatprep.subr.mxu0 0.0
        %4218 = vmatpush1.msra.mxu0 %v4101
        %4219 = vmatprep.subr.mxu0 0.0
        %4220 = vmatpush1.msra.mxu0 0.0
        %4221 = vmatprep.subr.mxu0 0.0
        %4222 = vmatpush1.msra.mxu0 0.0
        %4223 = vmatprep.subr.mxu0 0.0
        %4224 = vmatpush1.msra.mxu0 0.0
        %4225 = vmatprep.subr.mxu0 0.0
        %4226 = vmatpush1.msra.mxu0 0.0
        %4227 = vmatprep.subr.mxu0 0.0
        %4228 = vmatpush1.msra.mxu0 0.0
        %4229 = vmatprep.subr.mxu0 0.0
        %4230 = vmatpush1.msra.mxu0 0.0
        %4231 = vmatprep.subr.mxu0 0.0
        %4232 = vmatpush1.msra.mxu0 0.0
        %4233 = vmatprep.subr.mxu0 0.0
        %4234 = vmatpush1.msra.mxu0 0.0
        %4235 = vmatprep.subr.mxu0 0.0
        %4236 = vmatpush1.msra.mxu0 0.0
        %4237 = vmatprep.subr.mxu0 0.0
        %4238 = vmatpush1.msra.mxu0 0.0
        %4239 = vmatprep.subr.mxu0 0.0
        %4240 = vmatpush1.msra.mxu0 0.0
        %4241 = vmatprep.subr.mxu0 0.0
        %4242 = vmatpush1.msra.mxu0 0.0
        %4243 = vmatprep.subr.mxu0 0.0
        %4244 = vmatpush1.msra.mxu0 0.0
        %4245 = vmatprep.subr.mxu0 0.0
        %4246 = vmatpush1.msra.mxu0 0.0
        %4247 = vmatprep.subr.mxu0 0.0
        %4248 = vmatpush1.msra.mxu0 0.0
        %4249 = vmatprep.subr.mxu0 0.0
        %4250 = vmatpush1.msra.mxu0 0.0
        %4251 = vmatprep.mubr.f32.mxu0 0.0
        %4252 = vmatmul.mubr.f32.gmra.mrb[0].mxu0 %v4179
        %v4253 = vpop.f32.mrb[0].mxu0
        %v4254 = vadd.f32 %v4185, %v4253
        %v4255 = vpop.f32.mrb[0].mxu0
        %4256 = vdwg.mxu0
        %v4257 = vsel %vm454, %v4254, -1e+30
        %4258 = vmax.xlane.f32.xlu0 %v4257
        %v4259 = vpop.xlane.xlu0 %4258
        %v4260 = vsub.f32 %v4257, %v4259
        %v4261 = vmul.f32 %v4260, 1.442695
        %v4262 = vpow.pop %v4261
        %4263 = vadd.xlane.f32.xlu0 %v4262
        %v4264 = vpop.xlane.xlu0 %4263
        %v4265 = vrcp.pop %v4264
        %v4266 = vmul.f32 %v4262, %v4265
        %v4267 = vsub.f32 %v4266, %v2688
        %v4268 = vmul.f32 %v4267, 0.125
        %4269 = vmatprep.subr.mxu0 0.0
        %4270 = vmatpush1.xpose.msra.mxu0 %v4086
        %4271 = vmatprep.subr.mxu0 0.0
        %4272 = vmatpush1.xpose.msra.mxu0 %v4087
        %4273 = vmatprep.subr.mxu0 0.0
        %4274 = vmatpush1.xpose.msra.mxu0 %v4088
        %4275 = vmatprep.subr.mxu0 0.0
        %4276 = vmatpush1.xpose.msra.mxu0 %v4089
        %4277 = vmatprep.subr.mxu0 0.0
        %4278 = vmatpush1.xpose.msra.mxu0 %v4090
        %4279 = vmatprep.subr.mxu0 0.0
        %4280 = vmatpush1.xpose.msra.mxu0 %v4091
        %4281 = vmatprep.subr.mxu0 0.0
        %4282 = vmatpush1.xpose.msra.mxu0 %v4092
        %4283 = vmatprep.subr.mxu0 0.0
        %4284 = vmatpush1.xpose.msra.mxu0 %v4093
        %4285 = vmatprep.subr.mxu0 0.0
        %4286 = vmatpush1.xpose.msra.mxu0 %v4094
        %4287 = vmatprep.subr.mxu0 0.0
        %4288 = vmatpush1.xpose.msra.mxu0 %v4095
        %4289 = vmatprep.subr.mxu0 0.0
        %4290 = vmatpush1.xpose.msra.mxu0 %v4096
        %4291 = vmatprep.subr.mxu0 0.0
        %4292 = vmatpush1.xpose.msra.mxu0 %v4097
        %4293 = vmatprep.subr.mxu0 0.0
        %4294 = vmatpush1.xpose.msra.mxu0 %v4098
        %4295 = vmatprep.subr.mxu0 0.0
        %4296 = vmatpush1.xpose.msra.mxu0 %v4099
        %4297 = vmatprep.subr.mxu0 0.0
        %4298 = vmatpush1.xpose.msra.mxu0 %v4100
        %4299 = vmatprep.subr.mxu0 0.0
        %4300 = vmatpush1.xpose.msra.mxu0 %v4101
        %4301 = vmatprep.subr.mxu0 0.0
        %4302 = vmatpush1.xpose.msra.mxu0 0.0
        %4303 = vmatprep.subr.mxu0 0.0
        %4304 = vmatpush1.xpose.msra.mxu0 0.0
        %4305 = vmatprep.subr.mxu0 0.0
        %4306 = vmatpush1.xpose.msra.mxu0 0.0
        %4307 = vmatprep.subr.mxu0 0.0
        %4308 = vmatpush1.xpose.msra.mxu0 0.0
        %4309 = vmatprep.subr.mxu0 0.0
        %4310 = vmatpush1.xpose.msra.mxu0 0.0
        %4311 = vmatprep.subr.mxu0 0.0
        %4312 = vmatpush1.xpose.msra.mxu0 0.0
        %4313 = vmatprep.subr.mxu0 0.0
        %4314 = vmatpush1.xpose.msra.mxu0 0.0
        %4315 = vmatprep.subr.mxu0 0.0
        %4316 = vmatpush1.xpose.msra.mxu0 0.0
        %4317 = vmatprep.subr.mxu0 0.0
        %4318 = vmatpush1.xpose.msra.mxu0 0.0
        %4319 = vmatprep.subr.mxu0 0.0
        %4320 = vmatpush1.xpose.msra.mxu0 0.0
        %4321 = vmatprep.subr.mxu0 0.0
        %4322 = vmatpush1.xpose.msra.mxu0 0.0
        %4323 = vmatprep.subr.mxu0 0.0
        %4324 = vmatpush1.xpose.msra.mxu0 0.0
        %4325 = vmatprep.subr.mxu0 0.0
        %4326 = vmatpush1.xpose.msra.mxu0 0.0
        %4327 = vmatprep.subr.mxu0 0.0
        %4328 = vmatpush1.xpose.msra.mxu0 0.0
        %4329 = vmatprep.subr.mxu0 0.0
        %4330 = vmatpush1.xpose.msra.mxu0 0.0
        %4331 = vmatprep.subr.mxu0 0.0
        %4332 = vmatpush1.xpose.msra.mxu0 0.0
        %4333 = vmatprep.mubr.f32.mxu0 0.0
        %4334 = vmatmul.mubr.f32.gmra.mrb[0].mxu0 %v4268
        %v4335 = vpop.f32.mrb[0].mxu0
        %v4336 = vadd.f32 0.0, %v4335
        %v4337 = vpop.f32.mrb[0].mxu0
        %4338 = vdwg.mxu0
        %4339 = vxpose.xlu0.b32.start [1/16] %v4179, 128
        %4340 = vxpose.xlu0.b32.cont [2/16] 0.0, 128
        %4341 = vxpose.xlu0.b32.cont [3/16] 0.0, 128
        %4342 = vxpose.xlu0.b32.cont [4/16] 0.0, 128
        %4343 = vxpose.xlu0.b32.cont [5/16] 0.0, 128
        %4344 = vxpose.xlu0.b32.cont [6/16] 0.0, 128
        %4345 = vxpose.xlu0.b32.cont [7/16] 0.0, 128
        %4346 = vxpose.xlu0.b32.cont [8/16] 0.0, 128
        %4347 = vxpose.xlu0.b32.cont [9/16] 0.0, 128
        %4348 = vxpose.xlu0.b32.cont [10/16] 0.0, 128
        %4349 = vxpose.xlu0.b32.cont [11/16] 0.0, 128
        %4350 = vxpose.xlu0.b32.cont [12/16] 0.0, 128
        %4351 = vxpose.xlu0.b32.cont [13/16] 0.0, 128
        %4352 = vxpose.xlu0.b32.cont [14/16] 0.0, 128
        %4353 = vxpose.xlu0.b32.cont [15/16] 0.0, 128
        %4354 = vxpose.xlu0.b32.end [16/16] 0.0, 128
        %v4355 = vpop.trf.xlu0
        %v4356 = vpop.trf.xlu0
        %v4357 = vpop.trf.xlu0
        %v4358 = vpop.trf.xlu0
        %v4359 = vpop.trf.xlu0
        %v4360 = vpop.trf.xlu0
        %v4361 = vpop.trf.xlu0
        %v4362 = vpop.trf.xlu0
        %v4363 = vpop.trf.xlu0
        %v4364 = vpop.trf.xlu0
        %v4365 = vpop.trf.xlu0
        %v4366 = vpop.trf.xlu0
        %v4367 = vpop.trf.xlu0
        %v4368 = vpop.trf.xlu0
        %v4369 = vpop.trf.xlu0
        %v4370 = vpop.trf.xlu0
        %v4372 = vsel %vm800, %v4355, 0
        %v4375 = vsel %vm800, %v4356, 0
        %v4378 = vsel %vm800, %v4357, 0
        %v4381 = vsel %vm800, %v4358, 0
        %v4384 = vsel %vm800, %v4359, 0
        %v4387 = vsel %vm800, %v4360, 0
        %v4390 = vsel %vm800, %v4361, 0
        %v4393 = vsel %vm800, %v4362, 0
        %v4396 = vsel %vm800, %v4363, 0
        %v4399 = vsel %vm800, %v4364, 0
        %v4402 = vsel %vm800, %v4365, 0
        %v4405 = vsel %vm800, %v4366, 0
        %v4408 = vsel %vm800, %v4367, 0
        %v4411 = vsel %vm800, %v4368, 0
        %v4414 = vsel %vm800, %v4369, 0
        %v4417 = vsel %vm800, %v4370, 0
        %4419 = vmatprep.subr.mxu0 0.0
        %4420 = vmatpush1.msra.mxu0 %v4268
        %4421 = vmatprep.subr.mxu0 0.0
        %4422 = vmatpush1.msra.mxu0 0.0
        %4423 = vmatprep.subr.mxu0 0.0
        %4424 = vmatpush1.msra.mxu0 0.0
        %4425 = vmatprep.subr.mxu0 0.0
        %4426 = vmatpush1.msra.mxu0 0.0
        %4427 = vmatprep.subr.mxu0 0.0
        %4428 = vmatpush1.msra.mxu0 0.0
        %4429 = vmatprep.subr.mxu0 0.0
        %4430 = vmatpush1.msra.mxu0 0.0
        %4431 = vmatprep.subr.mxu0 0.0
        %4432 = vmatpush1.msra.mxu0 0.0
        %4433 = vmatprep.subr.mxu0 0.0
        %4434 = vmatpush1.msra.mxu0 0.0
        %4435 = vmatprep.subr.mxu0 0.0
        %4436 = vmatpush1.msra.mxu0 0.0
        %4437 = vmatprep.subr.mxu0 0.0
        %4438 = vmatpush1.msra.mxu0 0.0
        %4439 = vmatprep.subr.mxu0 0.0
        %4440 = vmatpush1.msra.mxu0 0.0
        %4441 = vmatprep.subr.mxu0 0.0
        %4442 = vmatpush1.msra.mxu0 0.0
        %4443 = vmatprep.subr.mxu0 0.0
        %4444 = vmatpush1.msra.mxu0 0.0
        %4445 = vmatprep.subr.mxu0 0.0
        %4446 = vmatpush1.msra.mxu0 0.0
        %4447 = vmatprep.subr.mxu0 0.0
        %4448 = vmatpush1.msra.mxu0 0.0
        %4449 = vmatprep.subr.mxu0 0.0
        %4450 = vmatpush1.msra.mxu0 0.0
        %4451 = vmatprep.subr.mxu0 0.0
        %4452 = vmatpush1.msra.mxu0 0.0
        %4453 = vmatprep.subr.mxu0 0.0
        %4454 = vmatpush1.msra.mxu0 0.0
        %4455 = vmatprep.subr.mxu0 0.0
        %4456 = vmatpush1.msra.mxu0 0.0
        %4457 = vmatprep.subr.mxu0 0.0
        %4458 = vmatpush1.msra.mxu0 0.0
        %4459 = vmatprep.subr.mxu0 0.0
        %4460 = vmatpush1.msra.mxu0 0.0
        %4461 = vmatprep.subr.mxu0 0.0
        %4462 = vmatpush1.msra.mxu0 0.0
        %4463 = vmatprep.subr.mxu0 0.0
        %4464 = vmatpush1.msra.mxu0 0.0
        %4465 = vmatprep.subr.mxu0 0.0
        %4466 = vmatpush1.msra.mxu0 0.0
        %4467 = vmatprep.subr.mxu0 0.0
        %4468 = vmatpush1.msra.mxu0 0.0
        %4469 = vmatprep.subr.mxu0 0.0
        %4470 = vmatpush1.msra.mxu0 0.0
        %4471 = vmatprep.subr.mxu0 0.0
        %4472 = vmatpush1.msra.mxu0 0.0
        %4473 = vmatprep.subr.mxu0 0.0
        %4474 = vmatpush1.msra.mxu0 0.0
        %4475 = vmatprep.subr.mxu0 0.0
        %4476 = vmatpush1.msra.mxu0 0.0
        %4477 = vmatprep.subr.mxu0 0.0
        %4478 = vmatpush1.msra.mxu0 0.0
        %4479 = vmatprep.subr.mxu0 0.0
        %4480 = vmatpush1.msra.mxu0 0.0
        %4481 = vmatprep.subr.mxu0 0.0
        %4482 = vmatpush1.msra.mxu0 0.0
        %4483 = vmatprep.mubr.f32.mxu0 0.0
        %4484 = vmatmul.mubr.f32.gmra.mrb[0].mxu0 %v4372
        %v4485 = vpop.f32.mrb[0].mxu0
        %v4486 = vadd.f32 0.0, %v4485
        %v4487 = vpop.f32.mrb[0].mxu0
        %4488 = vmatprep.mubr.f32.mxu0 0.0
        %4489 = vmatmul.mubr.f32.gmra.mrb[0].mxu0 %v4375
        %v4490 = vpop.f32.mrb[0].mxu0
        %v4491 = vadd.f32 0.0, %v4490
        %v4492 = vpop.f32.mrb[0].mxu0
        %4493 = vmatprep.mubr.f32.mxu0 0.0
        %4494 = vmatmul.mubr.f32.gmra.mrb[0].mxu0 %v4378
        %v4495 = vpop.f32.mrb[0].mxu0
        %v4496 = vadd.f32 0.0, %v4495
        %v4497 = vpop.f32.mrb[0].mxu0
        %4498 = vmatprep.mubr.f32.mxu0 0.0
        %4499 = vmatmul.mubr.f32.gmra.mrb[0].mxu0 %v4381
        %v4500 = vpop.f32.mrb[0].mxu0
        %v4501 = vadd.f32 0.0, %v4500
        %v4502 = vpop.f32.mrb[0].mxu0
        %4503 = vmatprep.mubr.f32.mxu0 0.0
        %4504 = vmatmul.mubr.f32.gmra.mrb[0].mxu0 %v4384
        %v4505 = vpop.f32.mrb[0].mxu0
        %v4506 = vadd.f32 0.0, %v4505
        %v4507 = vpop.f32.mrb[0].mxu0
        %4508 = vmatprep.mubr.f32.mxu0 0.0
        %4509 = vmatmul.mubr.f32.gmra.mrb[0].mxu0 %v4387
        %v4510 = vpop.f32.mrb[0].mxu0
        %v4511 = vadd.f32 0.0, %v4510
        %v4512 = vpop.f32.mrb[0].mxu0
        %4513 = vmatprep.mubr.f32.mxu0 0.0
        %4514 = vmatmul.mubr.f32.gmra.mrb[0].mxu0 %v4390
        %v4515 = vpop.f32.mrb[0].mxu0
        %v4516 = vadd.f32 0.0, %v4515
        %v4517 = vpop.f32.mrb[0].mxu0
        %4518 = vmatprep.mubr.f32.mxu0 0.0
        %4519 = vmatmul.mubr.f32.gmra.mrb[0].mxu0 %v4393
        %v4520 = vpop.f32.mrb[0].mxu0
        %v4521 = vadd.f32 0.0, %v4520
        %v4522 = vpop.f32.mrb[0].mxu0
        %4523 = vmatprep.mubr.f32.mxu0 0.0
        %4524 = vmatmul.mubr.f32.gmra.mrb[0].mxu0 %v4396
        %v4525 = vpop.f32.mrb[0].mxu0
        %v4526 = vadd.f32 0.0, %v4525
        %v4527 = vpop.f32.mrb[0].mxu0
        %4528 = vmatprep.mubr.f32.mxu0 0.0
        %4529 = vmatmul.mubr.f32.gmra.mrb[0].mxu0 %v4399
        %v4530 = vpop.f32.mrb[0].mxu0
        %v4531 = vadd.f32 0.0, %v4530
        %v4532 = vpop.f32.mrb[0].mxu0
        %4533 = vmatprep.mubr.f32.mxu0 0.0
        %4534 = vmatmul.mubr.f32.gmra.mrb[0].mxu0 %v4402
        %v4535 = vpop.f32.mrb[0].mxu0
        %v4536 = vadd.f32 0.0, %v4535
        %v4537 = vpop.f32.mrb[0].mxu0
        %4538 = vmatprep.mubr.f32.mxu0 0.0
        %4539 = vmatmul.mubr.f32.gmra.mrb[0].mxu0 %v4405
        %v4540 = vpop.f32.mrb[0].mxu0
        %v4541 = vadd.f32 0.0, %v4540
        %v4542 = vpop.f32.mrb[0].mxu0
        %4543 = vmatprep.mubr.f32.mxu0 0.0
        %4544 = vmatmul.mubr.f32.gmra.mrb[0].mxu0 %v4408
        %v4545 = vpop.f32.mrb[0].mxu0
        %v4546 = vadd.f32 0.0, %v4545
        %v4547 = vpop.f32.mrb[0].mxu0
        %4548 = vmatprep.mubr.f32.mxu0 0.0
        %4549 = vmatmul.mubr.f32.gmra.mrb[0].mxu0 %v4411
        %v4550 = vpop.f32.mrb[0].mxu0
        %v4551 = vadd.f32 0.0, %v4550
        %v4552 = vpop.f32.mrb[0].mxu0
        %4553 = vmatprep.mubr.f32.mxu0 0.0
        %4554 = vmatmul.mubr.f32.gmra.mrb[0].mxu0 %v4414
        %v4555 = vpop.f32.mrb[0].mxu0
        %v4556 = vadd.f32 0.0, %v4555
        %v4557 = vpop.f32.mrb[0].mxu0
        %4558 = vmatprep.mubr.f32.mxu0 0.0
        %4559 = vmatmul.mubr.f32.gmra.mrb[0].mxu0 %v4417
        %v4560 = vpop.f32.mrb[0].mxu0
        %v4561 = vadd.f32 0.0, %v4560
        %v4562 = vpop.f32.mrb[0].mxu0
        %4563 = vdwg.mxu0
        %v4564 = vmul.f32 %v4486, 0.1
        %v4565 = vmul.f32 %v4491, 0.1
        %v4566 = vmul.f32 %v4496, 0.1
        %v4567 = vmul.f32 %v4501, 0.1
        %v4568 = vmul.f32 %v4506, 0.1
        %v4569 = vmul.f32 %v4511, 0.1
        %v4570 = vmul.f32 %v4516, 0.1
        %v4571 = vmul.f32 %v4521, 0.1
        %v4572 = vmul.f32 %v4526, 0.1
        %v4573 = vmul.f32 %v4531, 0.1
        %v4574 = vmul.f32 %v4536, 0.1
        %v4575 = vmul.f32 %v4541, 0.1
        %v4576 = vmul.f32 %v4546, 0.1
        %v4577 = vmul.f32 %v4551, 0.1
        %v4578 = vmul.f32 %v4556, 0.1
        %v4579 = vmul.f32 %v4561, 0.1
        %v4580 = vsub.f32 %v4086, %v4564
        %v4581 = vsub.f32 %v4087, %v4565
        %v4582 = vsub.f32 %v4088, %v4566
        %v4583 = vsub.f32 %v4089, %v4567
        %v4584 = vsub.f32 %v4090, %v4568
        %v4585 = vsub.f32 %v4091, %v4569
        %v4586 = vsub.f32 %v4092, %v4570
        %v4587 = vsub.f32 %v4093, %v4571
        %v4588 = vsub.f32 %v4094, %v4572
        %v4589 = vsub.f32 %v4095, %v4573
        %v4590 = vsub.f32 %v4096, %v4574
        %v4591 = vsub.f32 %v4097, %v4575
        %v4592 = vsub.f32 %v4098, %v4576
        %v4593 = vsub.f32 %v4099, %v4577
        %v4594 = vsub.f32 %v4100, %v4578
        %v4595 = vsub.f32 %v4101, %v4579
        %4596 = vst [vmem:[%s2717] sm:$0xff] %v4580
        %4597 = vst [vmem:[%s2717 + $0x8] sm:$0xff] %v4581
        %4598 = vst [vmem:[%s2717 + $0x10] sm:$0xff] %v4582
        %4599 = vst [vmem:[%s2717 + $0x18] sm:$0xff] %v4583
        %4600 = vst [vmem:[%s2717 + $0x20] sm:$0xff] %v4584
        %4601 = vst [vmem:[%s2717 + $0x28] sm:$0xff] %v4585
        %4602 = vst [vmem:[%s2717 + $0x30] sm:$0xff] %v4586
        %4603 = vst [vmem:[%s2717 + $0x38] sm:$0xff] %v4587
        %4604 = vst [vmem:[%s2717 + $0x40] sm:$0xff] %v4588
        %4605 = vst [vmem:[%s2717 + $0x48] sm:$0xff] %v4589
        %4606 = vst [vmem:[%s2717 + $0x50] sm:$0xff] %v4590
        %4607 = vst [vmem:[%s2717 + $0x58] sm:$0xff] %v4591
        %4608 = vst [vmem:[%s2717 + $0x60] sm:$0xff] %v4592
        %4609 = vst [vmem:[%s2717 + $0x68] sm:$0xff] %v4593
        %4610 = vst [vmem:[%s2717 + $0x70] sm:$0xff] %v4594
        %4611 = vst [vmem:[%s2717 + $0x78] sm:$0xff] %v4595
        %v4612 = vld [vmem:[%s2735] sm:$0x1]
        %v4613 = vrot.slane %v4268, 4
        %v4614 = vadd.f32 %v4268, %v4613
        %v4615 = vrot.slane %v4614, 2
        %v4616 = vadd.f32 %v4614, %v4615
        %v4617 = vrot.slane %v4616, 1
        %v4618 = vadd.f32 %v4616, %v4617
        %v4619 = vmul.f32 %v4618, 0.1
        %v4620 = vsub.f32 %v4612, %v4619
        %4621 = vst [vmem:[%s2735] sm:$0x1] %v4620
        %vm4622 = vcmp.gt.f32.partialorder %v4176, 0.0
        %v4623 = vsel %vm4622, %v4336, 0.0
        %4624 = vmatprep.subr.mxu0 0.0
        %4625 = vmatpush1.msra.mxu0 %v4623
        %4626 = vmatprep.subr.mxu0 0.0
        %4627 = vmatpush1.msra.mxu0 0.0
        %4628 = vmatprep.subr.mxu0 0.0
        %4629 = vmatpush1.msra.mxu0 0.0
        %4630 = vmatprep.subr.mxu0 0.0
        %4631 = vmatpush1.msra.mxu0 0.0
        %4632 = vmatprep.subr.mxu0 0.0
        %4633 = vmatpush1.msra.mxu0 0.0
        %4634 = vmatprep.subr.mxu0 0.0
        %4635 = vmatpush1.msra.mxu0 0.0
        %4636 = vmatprep.subr.mxu0 0.0
        %4637 = vmatpush1.msra.mxu0 0.0
        %4638 = vmatprep.subr.mxu0 0.0
        %4639 = vmatpush1.msra.mxu0 0.0
        %4640 = vmatprep.subr.mxu0 0.0
        %4641 = vmatpush1.msra.mxu0 0.0
        %4642 = vmatprep.subr.mxu0 0.0
        %4643 = vmatpush1.msra.mxu0 0.0
        %4644 = vmatprep.subr.mxu0 0.0
        %4645 = vmatpush1.msra.mxu0 0.0
        %4646 = vmatprep.subr.mxu0 0.0
        %4647 = vmatpush1.msra.mxu0 0.0
        %4648 = vmatprep.subr.mxu0 0.0
        %4649 = vmatpush1.msra.mxu0 0.0
        %4650 = vmatprep.subr.mxu0 0.0
        %4651 = vmatpush1.msra.mxu0 0.0
        %4652 = vmatprep.subr.mxu0 0.0
        %4653 = vmatpush1.msra.mxu0 0.0
        %4654 = vmatprep.subr.mxu0 0.0
        %4655 = vmatpush1.msra.mxu0 0.0
        %4656 = vmatprep.subr.mxu0 0.0
        %4657 = vmatpush1.msra.mxu0 0.0
        %4658 = vmatprep.subr.mxu0 0.0
        %4659 = vmatpush1.msra.mxu0 0.0
        %4660 = vmatprep.subr.mxu0 0.0
        %4661 = vmatpush1.msra.mxu0 0.0
        %4662 = vmatprep.subr.mxu0 0.0
        %4663 = vmatpush1.msra.mxu0 0.0
        %4664 = vmatprep.subr.mxu0 0.0
        %4665 = vmatpush1.msra.mxu0 0.0
        %4666 = vmatprep.subr.mxu0 0.0
        %4667 = vmatpush1.msra.mxu0 0.0
        %4668 = vmatprep.subr.mxu0 0.0
        %4669 = vmatpush1.msra.mxu0 0.0
        %4670 = vmatprep.subr.mxu0 0.0
        %4671 = vmatpush1.msra.mxu0 0.0
        %4672 = vmatprep.subr.mxu0 0.0
        %4673 = vmatpush1.msra.mxu0 0.0
        %4674 = vmatprep.subr.mxu0 0.0
        %4675 = vmatpush1.msra.mxu0 0.0
        %4676 = vmatprep.subr.mxu0 0.0
        %4677 = vmatpush1.msra.mxu0 0.0
        %4678 = vmatprep.subr.mxu0 0.0
        %4679 = vmatpush1.msra.mxu0 0.0
        %4680 = vmatprep.subr.mxu0 0.0
        %4681 = vmatpush1.msra.mxu0 0.0
        %4682 = vmatprep.subr.mxu0 0.0
        %4683 = vmatpush1.msra.mxu0 0.0
        %4684 = vmatprep.subr.mxu0 0.0
        %4685 = vmatpush1.msra.mxu0 0.0
        %4686 = vmatprep.subr.mxu0 0.0
        %4687 = vmatpush1.msra.mxu0 0.0
        %4688 = vmatprep.mubr.f32.mxu0 0.0
        %4689 = vmatmul.mubr.f32.gmra.mrb[0].mxu0 %v3315
        %v4690 = vpop.f32.mrb[0].mxu0
        %v4691 = vadd.f32 0.0, %v4690
        %v4692 = vpop.f32.mrb[0].mxu0
        %4693 = vmatprep.mubr.f32.mxu0 0.0
        %4694 = vmatmul.mubr.f32.gmra.mrb[0].mxu0 %v3318
        %v4695 = vpop.f32.mrb[0].mxu0
        %v4696 = vadd.f32 0.0, %v4695
        %v4697 = vpop.f32.mrb[0].mxu0
        %4698 = vmatprep.mubr.f32.mxu0 0.0
        %4699 = vmatmul.mubr.f32.gmra.mrb[0].mxu0 %v3321
        %v4700 = vpop.f32.mrb[0].mxu0
        %v4701 = vadd.f32 0.0, %v4700
        %v4702 = vpop.f32.mrb[0].mxu0
        %4703 = vmatprep.mubr.f32.mxu0 0.0
        %4704 = vmatmul.mubr.f32.gmra.mrb[0].mxu0 %v3324
        %v4705 = vpop.f32.mrb[0].mxu0
        %v4706 = vadd.f32 0.0, %v4705
        %v4707 = vpop.f32.mrb[0].mxu0
        %4708 = vdwg.mxu0
        %v4709 = vmul.f32 %v4691, 0.1
        %v4710 = vmul.f32 %v4696, 0.1
        %v4711 = vmul.f32 %v4701, 0.1
        %v4712 = vmul.f32 %v4706, 0.1
        %v4713 = vsub.f32 %v4082, %v4709
        %v4714 = vsub.f32 %v4083, %v4710
        %v4715 = vsub.f32 %v4084, %v4711
        %v4716 = vsub.f32 %v4085, %v4712
        %4717 = vst [vmem:[%s2693] sm:$0xff] %v4713
        %4718 = vst [vmem:[%s2693 + $0x8] sm:$0xff] %v4714
        %4719 = vst [vmem:[%s2693 + $0x10] sm:$0xff] %v4715
        %4720 = vst [vmem:[%s2693 + $0x18] sm:$0xff] %v4716
        %v4721 = vld [vmem:[%s2699] sm:$0x1]
        %v4722 = vrot.slane %v4623, 4
        %v4723 = vadd.f32 %v4623, %v4722
        %v4724 = vrot.slane %v4723, 2
        %v4725 = vadd.f32 %v4723, %v4724
        %v4726 = vrot.slane %v4725, 1
        %v4727 = vadd.f32 %v4725, %v4726
        %v4728 = vmul.f32 %v4727, 0.1
        %v4729 = vsub.f32 %v4721, %v4728
        %4730 = vst [vmem:[%s2699] sm:$0x1] %v4729
        %v4731 = vld [vmem:[%s2693] sm:$0xff]
        %v4732 = vld [vmem:[%s2693 + $0x8] sm:$0xff]
        %v4733 = vld [vmem:[%s2693 + $0x10] sm:$0xff]
        %v4734 = vld [vmem:[%s2693 + $0x18] sm:$0xff]
        %v4735 = vld [vmem:[%s2699] sm:$0x1]
        %v4737 = vlaneseq
        %v4738 = vshrl.u32 %v4737, 7
        %v4739 = vsub.s32 0, %v4738
        %v4740 = vrot.slane %v4735, %v4739
        %4742 = vmatprep.subr.mxu0 0.0
        %4743 = vmatpush1.msra.mxu0 %v4731
        %4744 = vmatprep.subr.mxu0 0.0
        %4745 = vmatpush1.msra.mxu0 %v4732
        %4746 = vmatprep.subr.mxu0 0.0
        %4747 = vmatpush1.msra.mxu0 %v4733
        %4748 = vmatprep.subr.mxu0 0.0
        %4749 = vmatpush1.msra.mxu0 %v4734
        %4750 = vmatprep.subr.mxu0 0.0
        %4751 = vmatpush1.msra.mxu0 0.0
        %4752 = vmatprep.subr.mxu0 0.0
        %4753 = vmatpush1.msra.mxu0 0.0
        %4754 = vmatprep.subr.mxu0 0.0
        %4755 = vmatpush1.msra.mxu0 0.0
        %4756 = vmatprep.subr.mxu0 0.0
        %4757 = vmatpush1.msra.mxu0 0.0
        %4758 = vmatprep.subr.mxu0 0.0
        %4759 = vmatpush1.msra.mxu0 0.0
        %4760 = vmatprep.subr.mxu0 0.0
        %4761 = vmatpush1.msra.mxu0 0.0
        %4762 = vmatprep.subr.mxu0 0.0
        %4763 = vmatpush1.msra.mxu0 0.0
        %4764 = vmatprep.subr.mxu0 0.0
        %4765 = vmatpush1.msra.mxu0 0.0
        %4766 = vmatprep.subr.mxu0 0.0
        %4767 = vmatpush1.msra.mxu0 0.0
        %4768 = vmatprep.subr.mxu0 0.0
        %4769 = vmatpush1.msra.mxu0 0.0
        %4770 = vmatprep.subr.mxu0 0.0
        %4771 = vmatpush1.msra.mxu0 0.0
        %4772 = vmatprep.subr.mxu0 0.0
        %4773 = vmatpush1.msra.mxu0 0.0
        %4774 = vmatprep.subr.mxu0 0.0
        %4775 = vmatpush1.msra.mxu0 0.0
        %4776 = vmatprep.subr.mxu0 0.0
        %4777 = vmatpush1.msra.mxu0 0.0
        %4778 = vmatprep.subr.mxu0 0.0
        %4779 = vmatpush1.msra.mxu0 0.0
        %4780 = vmatprep.subr.mxu0 0.0
        %4781 = vmatpush1.msra.mxu0 0.0
        %4782 = vmatprep.subr.mxu0 0.0
        %4783 = vmatpush1.msra.mxu0 0.0
        %4784 = vmatprep.subr.mxu0 0.0
        %4785 = vmatpush1.msra.mxu0 0.0
        %4786 = vmatprep.subr.mxu0 0.0
        %4787 = vmatpush1.msra.mxu0 0.0
        %4788 = vmatprep.subr.mxu0 0.0
        %4789 = vmatpush1.msra.mxu0 0.0
        %4790 = vmatprep.subr.mxu0 0.0
        %4791 = vmatpush1.msra.mxu0 0.0
        %4792 = vmatprep.subr.mxu0 0.0
        %4793 = vmatpush1.msra.mxu0 0.0
        %4794 = vmatprep.subr.mxu0 0.0
        %4795 = vmatpush1.msra.mxu0 0.0
        %4796 = vmatprep.subr.mxu0 0.0
        %4797 = vmatpush1.msra.mxu0 0.0
        %4798 = vmatprep.subr.mxu0 0.0
        %4799 = vmatpush1.msra.mxu0 0.0
        %4800 = vmatprep.subr.mxu0 0.0
        %4801 = vmatpush1.msra.mxu0 0.0
        %4802 = vmatprep.subr.mxu0 0.0
        %4803 = vmatpush1.msra.mxu0 0.0
        %4804 = vmatprep.subr.mxu0 0.0
        %4805 = vmatpush1.msra.mxu0 0.0
        %4806 = vmatprep.mubr.f32.mxu0 0.0
        %4807 = vmatmul.mubr.f32.gmra.mrb[0].mxu0 %v2765
        %v4808 = vpop.f32.mrb[0].mxu0
        %v4809 = vadd.f32 %v4740, %v4808
        %v4810 = vpop.f32.mrb[0].mxu0
        %4811 = vdwg.mxu0
        %v4812 = vmax.f32 %v4809, 0.0
        %v4813 = vld [vmem:[%s2717] sm:$0xff]
        %v4814 = vld [vmem:[%s2717 + $0x8] sm:$0xff]
        %v4815 = vld [vmem:[%s2717 + $0x10] sm:$0xff]
        %v4816 = vld [vmem:[%s2717 + $0x18] sm:$0xff]
        %v4817 = vld [vmem:[%s2717 + $0x20] sm:$0xff]
        %v4818 = vld [vmem:[%s2717 + $0x28] sm:$0xff]
        %v4819 = vld [vmem:[%s2717 + $0x30] sm:$0xff]
        %v4820 = vld [vmem:[%s2717 + $0x38] sm:$0xff]
        %v4821 = vld [vmem:[%s2717 + $0x40] sm:$0xff]
        %v4822 = vld [vmem:[%s2717 + $0x48] sm:$0xff]
        %v4823 = vld [vmem:[%s2717 + $0x50] sm:$0xff]
        %v4824 = vld [vmem:[%s2717 + $0x58] sm:$0xff]
        %v4825 = vld [vmem:[%s2717 + $0x60] sm:$0xff]
        %v4826 = vld [vmem:[%s2717 + $0x68] sm:$0xff]
        %v4827 = vld [vmem:[%s2717 + $0x70] sm:$0xff]
        %v4828 = vld [vmem:[%s2717 + $0x78] sm:$0xff]
        %v4829 = vld [vmem:[%s2735] sm:$0x1]
        %v4831 = vlaneseq
        %v4832 = vshrl.u32 %v4831, 7
        %v4833 = vsub.s32 0, %v4832
        %v4834 = vrot.slane %v4829, %v4833
        %4836 = vmatprep.subr.mxu0 0.0
        %4837 = vmatpush1.msra.mxu0 %v4813
        %4838 = vmatprep.subr.mxu0 0.0
        %4839 = vmatpush1.msra.mxu0 %v4814
        %4840 = vmatprep.subr.mxu0 0.0
        %4841 = vmatpush1.msra.mxu0 %v4815
        %4842 = vmatprep.subr.mxu0 0.0
        %4843 = vmatpush1.msra.mxu0 %v4816
        %4844 = vmatprep.subr.mxu0 0.0
        %4845 = vmatpush1.msra.mxu0 %v4817
        %4846 = vmatprep.subr.mxu0 0.0
        %4847 = vmatpush1.msra.mxu0 %v4818
        %4848 = vmatprep.subr.mxu0 0.0
        %4849 = vmatpush1.msra.mxu0 %v4819
        %4850 = vmatprep.subr.mxu0 0.0
        %4851 = vmatpush1.msra.mxu0 %v4820
        %4852 = vmatprep.subr.mxu0 0.0
        %4853 = vmatpush1.msra.mxu0 %v4821
        %4854 = vmatprep.subr.mxu0 0.0
        %4855 = vmatpush1.msra.mxu0 %v4822
        %4856 = vmatprep.subr.mxu0 0.0
        %4857 = vmatpush1.msra.mxu0 %v4823
        %4858 = vmatprep.subr.mxu0 0.0
        %4859 = vmatpush1.msra.mxu0 %v4824
        %4860 = vmatprep.subr.mxu0 0.0
        %4861 = vmatpush1.msra.mxu0 %v4825
        %4862 = vmatprep.subr.mxu0 0.0
        %4863 = vmatpush1.msra.mxu0 %v4826
        %4864 = vmatprep.subr.mxu0 0.0
        %4865 = vmatpush1.msra.mxu0 %v4827
        %4866 = vmatprep.subr.mxu0 0.0
        %4867 = vmatpush1.msra.mxu0 %v4828
        %4868 = vmatprep.subr.mxu0 0.0
        %4869 = vmatpush1.msra.mxu0 0.0
        %4870 = vmatprep.subr.mxu0 0.0
        %4871 = vmatpush1.msra.mxu0 0.0
        %4872 = vmatprep.subr.mxu0 0.0
        %4873 = vmatpush1.msra.mxu0 0.0
        %4874 = vmatprep.subr.mxu0 0.0
        %4875 = vmatpush1.msra.mxu0 0.0
        %4876 = vmatprep.subr.mxu0 0.0
        %4877 = vmatpush1.msra.mxu0 0.0
        %4878 = vmatprep.subr.mxu0 0.0
        %4879 = vmatpush1.msra.mxu0 0.0
        %4880 = vmatprep.subr.mxu0 0.0
        %4881 = vmatpush1.msra.mxu0 0.0
        %4882 = vmatprep.subr.mxu0 0.0
        %4883 = vmatpush1.msra.mxu0 0.0
        %4884 = vmatprep.subr.mxu0 0.0
        %4885 = vmatpush1.msra.mxu0 0.0
        %4886 = vmatprep.subr.mxu0 0.0
        %4887 = vmatpush1.msra.mxu0 0.0
        %4888 = vmatprep.subr.mxu0 0.0
        %4889 = vmatpush1.msra.mxu0 0.0
        %4890 = vmatprep.subr.mxu0 0.0
        %4891 = vmatpush1.msra.mxu0 0.0
        %4892 = vmatprep.subr.mxu0 0.0
        %4893 = vmatpush1.msra.mxu0 0.0
        %4894 = vmatprep.subr.mxu0 0.0
        %4895 = vmatpush1.msra.mxu0 0.0
        %4896 = vmatprep.subr.mxu0 0.0
        %4897 = vmatpush1.msra.mxu0 0.0
        %4898 = vmatprep.subr.mxu0 0.0
        %4899 = vmatpush1.msra.mxu0 0.0
        %4900 = vmatprep.mubr.f32.mxu0 0.0
        %4901 = vmatmul.mubr.f32.gmra.mrb[0].mxu0 %v4812
        %v4902 = vpop.f32.mrb[0].mxu0
        %v4903 = vadd.f32 %v4834, %v4902
        %v4904 = vpop.f32.mrb[0].mxu0
        %4905 = vdwg.mxu0
        %s4906 = scalar_lea.vmem %s434, 8 [#allocation13]
        %4907 = vst [vmem:[%s4906] sm:$0xff] %v4903
        %s4908 = sand.u32 %s177, 1
        %s4909 = scalar_lea.sflag [#allocation4], %s4908
        %s4910 = sand.u32 %s177, 1
        %s4911 = smul.addr %s4910, 64
        %s4912 = scalar_lea.vmem [#allocation7], %s4911
        %s4913 = sand.u32 %s33, 1
        %s4914 = scalar_lea.sflag [#allocation9], %s4913
        %s4915 = sand.u32 %s203, 1
        %s4916 = smul.addr %s4915, 2
        %s4917 = scalar_lea.vmem [#allocation8], %s4916
        %s4918 = sand.u32 %s33, 1
        %s4919 = scalar_lea.sflag [#allocation9], %s4918
        %s4920 = sand.u32 %s229, 1
        %s4921 = smul.addr %s4920, 256
        %s4922 = scalar_lea.vmem [#allocation10], %s4921
        %s4923 = sand.u32 %s33, 1
        %s4924 = scalar_lea.sflag [#allocation12], %s4923
        %s4925 = sand.u32 %s255, 1
        %s4926 = smul.addr %s4925, 2
        %s4927 = scalar_lea.vmem [#allocation11], %s4926
        %s4928 = sand.u32 %s33, 1
        %s4929 = scalar_lea.sflag [#allocation12], %s4928
        %s4930 = sand.u32 %s281, 1
        %s4931 = smul.addr %s4930, 16
        %s4932 = scalar_lea.vmem [#allocation13], %s4931
        // Predicated region
        $region53: #{tpu_custom_call.1} parent=43 // pred_check
          %p4933 = pneg %p187
        $region54: #{tpu_custom_call.1} parent=43 // pred_check_branch
          %4935 = sbr.rel (%p4933) target = $region56
        $region55: #{tpu_custom_call.1} parent=43 // pred_region
          %s4936 = smul.u32 2, %s33
          %s4938 = ssub.s32 1024, 1024
          %4939 = vsyncadd %s4909, %s4938
          %s4940 = smul.addr %s4936, 4
          %s4941 = smul.addr %s4940, 128
          %s4942 = scalar_lea.hbm %s6, %s4941
          %s4943 = sshll.u32 %s4912, 4
          %s4944 = int_to_ptr.vmem [resolvable:$true] %s4943
          %4949 = dma.vmem_to_hbm [thread:$0]  %s4944, 1024, %s4942, %s4909, 128, 128, 8
        $region56: #{tpu_custom_call.1} parent=43 // pred_fallthru
          _
        // Predicated region
        $region57: #{tpu_custom_call.1} parent=43 // pred_check
          %p4950 = pneg %p213
        $region58: #{tpu_custom_call.1} parent=43 // pred_check_branch
          %4952 = sbr.rel (%p4950) target = $region60
        $region59: #{tpu_custom_call.1} parent=43 // pred_region
          %s4953 = smul.u32 2, %s33
          %s4955 = ssub.s32 32, 32
          %4956 = vsyncadd %s4914, %s4955
          %s4957 = smul.addr %s4953, 16
          %s4958 = scalar_lea.hbm %s7, %s4957
          %s4959 = sshll.u32 %s4917, 4
          %s4960 = int_to_ptr.vmem [resolvable:$true] %s4959
          %4965 = dma.vmem_to_hbm [thread:$0]  %s4960, 32, %s4958, %s4914, 16, 16, 1
        $region60: #{tpu_custom_call.1} parent=43 // pred_fallthru
          _
        // Predicated region
        $region61: #{tpu_custom_call.1} parent=43 // pred_check
          %p4966 = pneg %p239
        $region62: #{tpu_custom_call.1} parent=43 // pred_check_branch
          %4968 = sbr.rel (%p4966) target = $region64
        $region63: #{tpu_custom_call.1} parent=43 // pred_region
          %s4969 = smul.u32 2, %s33
          %s4971 = ssub.s32 4096, 4096
          %4972 = vsyncadd %s4919, %s4971
          %s4973 = smul.addr %s4969, 16
          %s4974 = smul.addr %s4973, 128
          %s4975 = scalar_lea.hbm %s8, %s4974
          %s4976 = sshll.u32 %s4922, 4
          %s4977 = int_to_ptr.vmem [resolvable:$true] %s4976
          %4982 = dma.vmem_to_hbm [thread:$0]  %s4977, 4096, %s4975, %s4919, 128, 128, 8
        $region64: #{tpu_custom_call.1} parent=43 // pred_fallthru
          _
        // Predicated region
        $region65: #{tpu_custom_call.1} parent=43 // pred_check
          %p4983 = pneg %p265
        $region66: #{tpu_custom_call.1} parent=43 // pred_check_branch
          %4985 = sbr.rel (%p4983) target = $region68
        $region67: #{tpu_custom_call.1} parent=43 // pred_region
          %s4986 = smul.u32 2, %s33
          %s4988 = ssub.s32 32, 32
          %4989 = vsyncadd %s4924, %s4988
          %s4990 = smul.addr %s4986, 16
          %s4991 = scalar_lea.hbm %s9, %s4990
          %s4992 = sshll.u32 %s4927, 4
          %s4993 = int_to_ptr.vmem [resolvable:$true] %s4992
          %4998 = dma.vmem_to_hbm [thread:$0]  %s4993, 32, %s4991, %s4924, 16, 16, 1
        $region68: #{tpu_custom_call.1} parent=43 // pred_fallthru
          _
        // Predicated region
        $region69: #{tpu_custom_call.1} parent=43 // pred_check
          %p4999 = pneg %p291
        $region70: #{tpu_custom_call.1} parent=43 // pred_check_branch
          %5001 = sbr.rel (%p4999) target = $region72
        $region71: #{tpu_custom_call.1} parent=43 // pred_region
          %s5002 = smul.u32 2, %s33
          %s5004 = ssub.s32 256, 256
          %5005 = vsyncadd %s4929, %s5004
          %s5006 = smul.addr %s5002, 128
          %s5007 = scalar_lea.hbm %s10, %s5006
          %s5008 = sshll.u32 %s4932, 4
          %s5009 = int_to_ptr.vmem [resolvable:$true] %s5008
          %5014 = dma.vmem_to_hbm [thread:$0]  %s5009, 256, %s5007, %s4929, 128, 128, 8
        $region72: #{tpu_custom_call.1} parent=43 // pred_fallthru
          _
      $region44: #{tpu_custom_call.1} parent=5 // pred_fallthru
        _
      %p5015 = scmp.le.s32.totalorder 2, %s28
      // Predicated region
      $region73: #{tpu_custom_call.1} parent=5 // pred_check
        %p5016 = pneg %p5015
      $region74: #{tpu_custom_call.1} parent=5 // pred_check_branch
        %5018 = sbr.rel (%p5016) target = $region76
      $region75: #{tpu_custom_call.1} parent=5 // pred_region
        %s5019 = ssub.s32 %s28, 2
        // Predicated region
        $region77: #{tpu_custom_call.1} parent=75 // pred_check
          %p5020 = pneg %p193
        $region78: #{tpu_custom_call.1} parent=75 // pred_check_branch
          %5022 = sbr.rel (%p5020) target = $region80
        $region79: #{tpu_custom_call.1} parent=75 // pred_region
          %s5023 = sand.u32 %s178, 1
          %s5024 = scalar_lea.sflag [#allocation4], %s5023
          %s5025 = sand.u32 %s178, 1
          %s5026 = smul.addr %s5025, 64
          %s5027 = scalar_lea.vmem [#allocation7], %s5026
          %5028 = dma.done %s5024, 1024
        $region80: #{tpu_custom_call.1} parent=75 // pred_fallthru
          _
        // Predicated region
        $region81: #{tpu_custom_call.1} parent=75 // pred_check
          %p5029 = pneg %p219
        $region82: #{tpu_custom_call.1} parent=75 // pred_check_branch
          %5031 = sbr.rel (%p5029) target = $region84
        $region83: #{tpu_custom_call.1} parent=75 // pred_region
          %s5032 = sand.u32 %s34, 1
          %s5033 = scalar_lea.sflag [#allocation9], %s5032
          %s5034 = sand.u32 %s204, 1
          %s5035 = smul.addr %s5034, 2
          %s5036 = scalar_lea.vmem [#allocation8], %s5035
          %5037 = dma.done %s5033, 32
        $region84: #{tpu_custom_call.1} parent=75 // pred_fallthru
          _
        // Predicated region
        $region85: #{tpu_custom_call.1} parent=75 // pred_check
          %p5038 = pneg %p245
        $region86: #{tpu_custom_call.1} parent=75 // pred_check_branch
          %5040 = sbr.rel (%p5038) target = $region88
        $region87: #{tpu_custom_call.1} parent=75 // pred_region
          %s5041 = sand.u32 %s34, 1
          %s5042 = scalar_lea.sflag [#allocation9], %s5041
          %s5043 = sand.u32 %s230, 1
          %s5044 = smul.addr %s5043, 256
          %s5045 = scalar_lea.vmem [#allocation10], %s5044
          %5046 = dma.done %s5042, 4096
        $region88: #{tpu_custom_call.1} parent=75 // pred_fallthru
          _
        // Predicated region
        $region89: #{tpu_custom_call.1} parent=75 // pred_check
          %p5047 = pneg %p271
        $region90: #{tpu_custom_call.1} parent=75 // pred_check_branch
          %5049 = sbr.rel (%p5047) target = $region92
        $region91: #{tpu_custom_call.1} parent=75 // pred_region
          %s5050 = sand.u32 %s34, 1
          %s5051 = scalar_lea.sflag [#allocation12], %s5050
          %s5052 = sand.u32 %s256, 1
          %s5053 = smul.addr %s5052, 2
          %s5054 = scalar_lea.vmem [#allocation11], %s5053
          %5055 = dma.done %s5051, 32
        $region92: #{tpu_custom_call.1} parent=75 // pred_fallthru
          _
        // Predicated region
        $region93: #{tpu_custom_call.1} parent=75 // pred_check
          %p5056 = pneg %p297
        $region94: #{tpu_custom_call.1} parent=75 // pred_check_branch
          %5058 = sbr.rel (%p5056) target = $region96
        $region95: #{tpu_custom_call.1} parent=75 // pred_region
          %s5059 = sand.u32 %s34, 1
          %s5060 = scalar_lea.sflag [#allocation12], %s5059
          %s5061 = sand.u32 %s282, 1
          %s5062 = smul.addr %s5061, 16
          %s5063 = scalar_lea.vmem [#allocation13], %s5062
          %5064 = dma.done %s5060, 256
        $region96: #{tpu_custom_call.1} parent=75 // pred_fallthru
          _
      $region76: #{tpu_custom_call.1} parent=5 // pred_fallthru
        _
    $region6: #{tpu_custom_call.1} parent=1 // loop_footer
      %s32 = sadd.s32 1, %s28
    $region7: #{tpu_custom_call.1} parent=1 // loop_footer_branch
      %27 = sbr.rel target = $region3
    $region8: #{tpu_custom_call.1} parent=1 // loop_exit
      _
    %5065 = vsyncpa [#allocation3], 1
    %s5066 = scalar_lea.sflag [#allocation3], 1
    %5067 = vsyncpa %s5066, 1
    %5068 = vsyncpa [#allocation6], 1
    %5069 = vsyncpa [#allocation4], 1
    %s5070 = scalar_lea.sflag [#allocation4], 1
    %5071 = vsyncpa %s5070, 1
    %5072 = vsyncpa [#allocation9], 1
    %s5073 = scalar_lea.sflag [#allocation9], 1
    %5074 = vsyncpa %s5073, 1
    %5075 = vsyncpa [#allocation12], 1
    %s5076 = scalar_lea.sflag [#allocation12], 1
    %5077 = vsyncpa %s5076, 1

</llo_original>
